<compile_context>
chip_gen: v7x
topology: tpu7x:2x2x1
jax: 0.10.0
libtpu: 0.0.40
codegen_flags: <defaults>
</compile_context>

<pallas_src>
import numpy as np
import jax
import jax.numpy as jnp
from jax import lax
from jax.experimental import pallas as pl
from jax.experimental.pallas import tpu as pltpu

LANE = 128


def _round_up(x, m):
    return (x + m - 1) // m * m


# ----------------------------- fused Pallas kernel ------------------------- #

def _make_kernel(*, H, W, Ho, Wo, cin_p, width_p, cout_p, CB, n_chunks, stride,
                 downsampling):
    """Fused bottleneck body for one (H, W) image plane (all sizes static)."""

    def compute(x_ref, w1_ref, s1_ref, b1_ref, w2_ref, s2_ref, b2_ref,
                w3_ref, s3_ref, b3_ref, wd_ref, sd_ref, bd_ref,
                o_ref, y1p_ref, acc3_ref):
        # Zero the conv2 padding halo; the interior is fully rewritten per band.
        y1p_ref[...] = jnp.zeros_like(y1p_ref)

        x = x_ref[0]                                     # (H, W, cin_p) bf16
        x2d = x.reshape(H * W, cin_p)

        for c in range(n_chunks):                        # 128-wide channel bands
            c0, c1 = c * CB, (c + 1) * CB

            # ---- conv1 (1x1) + bn1 + relu for this band, kept in VMEM -------
            a1 = jnp.dot(x2d, w1_ref[:, c0:c1],
                         preferred_element_type=jnp.float32)
            y1 = jnp.maximum(a1 * s1_ref[:, c0:c1] + b1_ref[:, c0:c1], 0.0)
            y1p_ref[1:H + 1, 1:W + 1, :] = y1.astype(y1p_ref.dtype).reshape(H, W, CB)

            # ---- grouped conv2 (3x3, pad=1, stride) + bn2 + relu ------------
            # Group-aligned band: this output band reads only the same input band,
            # so no off-group zero MACs are issued.
            acc2 = jnp.zeros((Ho * Wo, CB), jnp.float32)
            for kh in range(3):
                for kw in range(3):
                    if stride == 1:
                        tap = y1p_ref[kh:kh + Ho, kw:kw + Wo, :]
                    else:
                        tap = y1p_ref[pl.ds(kh, Ho, stride),
                                      pl.ds(kw, Wo, stride), :]
                    acc2 = acc2 + jnp.dot(tap.reshape(Ho * Wo, CB),
                                          w2_ref[c * 9 + kh * 3 + kw],
                                          preferred_element_type=jnp.float32)
            y2 = jnp.maximum(acc2 * s2_ref[:, c0:c1] + b2_ref[:, c0:c1], 0.0)
            y2 = y2.astype(jnp.bfloat16)

            # ---- conv3 (1x1): accumulate this band's partial product in f32 -
            part = jnp.dot(y2, w3_ref[c0:c1, :],
                           preferred_element_type=jnp.float32)
            if c == 0:
                acc3_ref[...] = part
            else:
                acc3_ref[...] += part

        # ---- residual branch + bn3 + add + final relu -----------------------
        if downsampling:
            if stride == 1:
                xs2d = x2d
            else:
                xs = x_ref[0, pl.ds(0, Ho, stride), pl.ds(0, Wo, stride), :]
                xs2d = xs.reshape(Ho * Wo, cin_p)
            r = jnp.dot(xs2d, wd_ref[...], preferred_element_type=jnp.float32)
            res = r * sd_ref[...] + bd_ref[...]
        else:
            # identity shortcut: wrapper guarantees stride == 1 and cin_p == cout_p
            res = x2d.astype(jnp.float32)

        out = jnp.maximum(acc3_ref[...] * s3_ref[...] + b3_ref[...] + res, 0.0)
        o_ref[0] = out.reshape(Ho, Wo, cout_p).astype(o_ref.dtype)

    if downsampling:
        def kernel(x_ref, w1_ref, s1_ref, b1_ref, w2_ref, s2_ref, b2_ref,
                   w3_ref, s3_ref, b3_ref, wd_ref, sd_ref, bd_ref,
                   o_ref, y1p_ref, acc3_ref):
            compute(x_ref, w1_ref, s1_ref, b1_ref, w2_ref, s2_ref, b2_ref,
                    w3_ref, s3_ref, b3_ref, wd_ref, sd_ref, bd_ref,
                    o_ref, y1p_ref, acc3_ref)
    else:
        def kernel(x_ref, w1_ref, s1_ref, b1_ref, w2_ref, s2_ref, b2_ref,
                   w3_ref, s3_ref, b3_ref, o_ref, y1p_ref, acc3_ref):
            compute(x_ref, w1_ref, s1_ref, b1_ref, w2_ref, s2_ref, b2_ref,
                    w3_ref, s3_ref, b3_ref, None, None, None,
                    o_ref, y1p_ref, acc3_ref)
    return kernel


# ------------------------- weight preprocessing (hoisted) ------------------ #

def _fold_bn(bn, c_pad, eps=1e-5):
    scale = bn['gamma'] / jnp.sqrt(bn['var'] + eps)
    bias = bn['beta'] - bn['mean'] * scale
    pad = c_pad - scale.shape[0]
    scale = jnp.pad(scale, (0, pad))      # pad channels: scale=0, bias=0 -> output 0
    bias = jnp.pad(bias, (0, pad))
    return scale[None, :].astype(jnp.float32), bias[None, :].astype(jnp.float32)


def prepare_bottleneck(p, *, in_ch, stride, groups, downsampling):
    """One-time, pure-jnp (jittable) preprocessing: transposes, BN folding,
    block-diagonal banding of the grouped conv weight, lane padding, bf16 casts."""
    width = p['w1'].shape[0]
    out_exp = p['w3'].shape[0]
    cpg = width // groups
    width_p = _round_up(width, LANE)
    cout_p = _round_up(out_exp, LANE)
    # 128-wide channel bands only if group boundaries align with band boundaries.
    CB = LANE if LANE % cpg == 0 else width_p
    n_chunks = width_p // CB

    if downsampling:
        cin_p = in_ch
    else:
        if stride != 1 or in_ch != out_exp:
            raise ValueError("identity shortcut requires stride == 1 and "
                             "in_channels == out_channels * width_per_group")
        cin_p = cout_p          # pad x so the identity residual is lane-aligned

    bf16 = jnp.bfloat16
    w1 = jnp.transpose(p['w1'][:, :, 0, 0], (1, 0))                    # (in_ch, width)
    w1 = jnp.pad(w1, ((0, cin_p - in_ch), (0, width_p - width))).astype(bf16)
    w3 = jnp.transpose(p['w3'][:, :, 0, 0], (1, 0))                    # (width, out_exp)
    w3 = jnp.pad(w3, ((0, width_p - width), (0, cout_p - out_exp))).astype(bf16)

    # grouped OIHW (width, cpg, 3, 3) -> block-diagonal dense (3, 3, cin, cout)
    w2 = jnp.transpose(p['w2'], (2, 3, 0, 1)).reshape(3, 3, groups, cpg, cpg)
    eye = jnp.eye(groups, dtype=w2.dtype)
    dense = jnp.einsum('hwgoi,gk->hwgiko', w2, eye).reshape(3, 3, width, width)
    dense = jnp.pad(dense, ((0, 0), (0, 0),
                            (0, width_p - width), (0, width_p - width)))
    # keep only the diagonal 128x128 bands (group-aligned) -> (n_chunks*9, CB, CB)
    w2b = jnp.stack([dense[:, :, c * CB:(c + 1) * CB, c * CB:(c + 1) * CB]
                     for c in range(n_chunks)])
    w2b = w2b.reshape(n_chunks * 9, CB, CB).astype(bf16)

    s1, b1 = _fold_bn(p['bn1'], width_p)
    s2, b2 = _fold_bn(p['bn2'], width_p)
    s3, b3 = _fold_bn(p['bn3'], cout_p)

    prep = dict(w1=w1, s1=s1, b1=b1, w2b=w2b, s2=s2, b2=b2, w3=w3, s3=s3, b3=b3)
    if downsampling:
        wd = jnp.transpose(p['wd'][:, :, 0, 0], (1, 0))                # (in_ch, out_exp)
        wd = jnp.pad(wd, ((0, cin_p - in_ch), (0, cout_p - out_exp))).astype(bf16)
        sd, bd = _fold_bn(p['bnd'], cout_p)
        prep.update(wd=wd, sd=sd, bd=bd)

    cfg = dict(in_ch=in_ch, stride=stride, downsampling=downsampling,
               width_p=width_p, cout_p=cout_p, out_exp=out_exp,
               CB=CB, n_chunks=n_chunks, cin_p=cin_p)
    return prep, cfg


# ------------------------------ forward wrapper ----------------------------- #

def make_bottleneck_forward(cfg):
    stride = cfg['stride']
    downsampling = cfg['downsampling']
    width_p, cout_p, out_exp = cfg['width_p'], cfg['cout_p'], cfg['out_exp']
    CB, n_chunks, cin_p = cfg['CB'], cfg['n_chunks'], cfg['cin_p']

    @jax.jit
    def forward(x_nchw, prep):
        N, Cin, H, W = x_nchw.shape
        Ho = (H - 1) // stride + 1
        Wo = (W - 1) // stride + 1

        # NCHW f32 public interface -> NHWC bf16 (lane-padded) internal layout.
        x = jnp.transpose(x_nchw, (0, 2, 3, 1))
        if cin_p > Cin:
            x = jnp.pad(x, ((0, 0), (0, 0), (0, 0), (0, cin_p - Cin)))
        x = x.astype(jnp.bfloat16)

        kernel = _make_kernel(H=H, W=W, Ho=Ho, Wo=Wo, cin_p=cin_p,
                              width_p=width_p, cout_p=cout_p, CB=CB,
                              n_chunks=n_chunks, stride=stride,
                              downsampling=downsampling)

        def full_spec(a):
            nd = a.ndim
            return pl.BlockSpec(a.shape, lambda n: (0,) * nd)

        in_specs = [pl.BlockSpec((1, H, W, cin_p), lambda n: (n, 0, 0, 0)),
                    full_spec(prep['w1']), full_spec(prep['s1']), full_spec(prep['b1']),
                    full_spec(prep['w2b']), full_spec(prep['s2']), full_spec(prep['b2']),
                    full_spec(prep['w3']), full_spec(prep['s3']), full_spec(prep['b3'])]
        args = [x, prep['w1'], prep['s1'], prep['b1'], prep['w2b'], prep['s2'],
                prep['b2'], prep['w3'], prep['s3'], prep['b3']]
        if downsampling:
            in_specs += [full_spec(prep['wd']), full_spec(prep['sd']),
                         full_spec(prep['bd'])]
            args += [prep['wd'], prep['sd'], prep['bd']]

        flops = 2 * N * (H * W * cin_p * width_p
                         + Ho * Wo * 9 * CB * CB * n_chunks
                         + Ho * Wo * width_p * cout_p
                         + (Ho * Wo * cin_p * cout_p if downsampling else 0))
        bytes_accessed = int(x.size) * 2 + N * Ho * Wo * cout_p * 4 + sum(
            int(np.prod(v.shape)) * v.dtype.itemsize for v in prep.values())

        out = pl.pallas_call(
            kernel,
            out_shape=jax.ShapeDtypeStruct((N, Ho, Wo, cout_p), jnp.float32),
            grid_spec=pltpu.PrefetchScalarGridSpec(
                num_scalar_prefetch=0,
                grid=(N,),
                in_specs=in_specs,
                out_specs=pl.BlockSpec((1, Ho, Wo, cout_p),
                                       lambda n: (n, 0, 0, 0)),
                scratch_shapes=[
                    pltpu.VMEM((H + 2, W + 2, CB), jnp.bfloat16),  # padded y1 band
                    pltpu.VMEM((Ho * Wo, cout_p), jnp.float32),    # conv3 accumulator
                ]),
            compiler_params=pltpu.CompilerParams(
                dimension_semantics=("parallel",),
                vmem_limit_bytes=48 * 1024 * 1024),
            cost_estimate=pl.CostEstimate(flops=flops, transcendentals=0,
                                          bytes_accessed=bytes_accessed),
        )(*args)

        out = out[:, :, :, :out_exp]                   # strip channel padding
        return jnp.transpose(out, (0, 3, 1, 2)).astype(jnp.float32)

    return forward


# -------------------------------- parameters -------------------------------- #

def init_params(key, in_ch, out_ch, groups, width_per_group, downsampling):
    width = int(out_ch * (width_per_group / 64.0)) * groups
    out_exp = out_ch * width_per_group
    keys = jax.random.split(key, 8)

    def bn(k, c):
        k1, k2, k3, k4 = jax.random.split(k, 4)
        return dict(
            gamma=jax.random.normal(k1, (c,), jnp.float32) * 0.1 + 1.0,
            beta=jax.random.normal(k2, (c,), jnp.float32) * 0.1,
            mean=jax.random.normal(k3, (c,), jnp.float32) * 0.1,
            var=jax.random.uniform(k4, (c,), jnp.float32, 0.5, 1.5),
        )

    p = {
        'w1': jax.random.normal(keys[0], (width, in_ch, 1, 1), jnp.float32) * 0.1,
        'w2': jax.random.normal(keys[1], (width, width // groups, 3, 3),
                                jnp.float32) * 0.1,
        'w3': jax.random.normal(keys[2], (out_exp, width, 1, 1), jnp.float32) * 0.1,
        'bn1': bn(keys[3], width),
        'bn2': bn(keys[4], width),
        'bn3': bn(keys[5], out_exp),
    }
    if downsampling:
        p['wd'] = jax.random.normal(keys[6], (out_exp, in_ch, 1, 1),
                                    jnp.float32) * 0.1
        p['bnd'] = bn(keys[7], out_exp)
    return p, width, out_exp


# --------------------------- pure-JAX reference ----------------------------- #
# Matched-precision reference: the kernel keeps bf16 activations/weights with f32
# accumulation, so the reference rounds the same tensors to bf16 (conv math in f32).

def reference_forward(x, p, stride, groups, downsampling, eps=1e-5):
    bf = lambda a: a.astype(jnp.bfloat16).astype(jnp.float32)

    def conv(x, w, s, g=1):
        pad = [(1, 1), (1, 1)] if w.shape[-1] == 3 else [(0, 0), (0, 0)]
        return lax.conv_general_dilated(
            x, w, (s, s), pad, feature_group_count=g,
            dimension_numbers=('NCHW', 'OIHW', 'NCHW'))

    def bn(x, b):
        sh = lambda v: v[None, :, None, None]
        return (x - sh(b['mean'])) / jnp.sqrt(sh(b['var']) + eps) \
            * sh(b['gamma']) + sh(b['beta'])

    xq = bf(x)
    out = bf(jax.nn.relu(bn(conv(xq, bf(p['w1']), 1), p['bn1'])))
    out = bf(jax.nn.relu(bn(conv(out, bf(p['w2']), stride, groups), p['bn2'])))
    out = bn(conv(out, bf(p['w3']), 1), p['bn3'])
    orig = bn(conv(xq, bf(p['wd']), stride), p['bnd']) if downsampling else xq
    return jax.nn.relu(out + orig)


# ----------------------------------- main ------------------------------------ #

if __name__ == "__main__":
    root = jax.random.PRNGKey(0)
    k1, k2, k3, k4 = jax.random.split(root, 4)

    # --- config A: projection shortcut (downsample branch), stride 1 ------------
    in_ch, out_ch, groups, wpg = 64, 32, 32, 4   # width=64 (padded to 128), out=128
    stride, downsampling = 1, True
    x = jax.random.normal(k1, (2, in_ch, 16, 16), jnp.float32)       # NCHW input
    params, width, out_exp = init_params(k2, in_ch, out_ch, groups, wpg, downsampling)

    prep, cfg = prepare_bottleneck(params, in_ch=in_ch, stride=stride,
                                   groups=groups, downsampling=downsampling)
    fwd = make_bottleneck_forward(cfg)
    out = jax.block_until_ready(fwd(x, prep))

    ref = reference_forward(x, params, stride, groups, downsampling)
    assert out.shape == ref.shape == (2, out_exp, 16, 16)
    np.testing.assert_allclose(np.asarray(out), np.asarray(ref), rtol=5e-3, atol=5e-3)

    # --- config B: identity shortcut (in_ch == expanded out, no downsample) -----
    in_ch_b = out_exp                                                # 128
    xb = jax.random.normal(k3, (2, in_ch_b, 16, 16), jnp.float32)
    params_b, _, out_exp_b = init_params(k4, in_ch_b, out_ch, groups, wpg, False)

    prep_b, cfg_b = prepare_bottleneck(params_b, in_ch=in_ch_b, stride=1,
                                       groups=groups, downsampling=False)
    fwd_b = make_bottleneck_forward(cfg_b)
    out_b = jax.block_until_ready(fwd_b(xb, prep_b))

    ref_b = reference_forward(xb, params_b, 1, groups, False)
    assert out_b.shape == ref_b.shape == (2, out_exp_b, 16, 16)
    np.testing.assert_allclose(np.asarray(out_b), np.asarray(ref_b),
                               rtol=5e-3, atol=5e-3)

    print("KERNEL_OK")
</pallas_src>

<mosaic_0001>
module attributes {stable_mosaic.version = 11 : i64} {
  func.func @kernel(%arg0: i32, %arg1: memref<1x16x16x64xbf16, #tpu.memory_space<vmem>>, %arg2: memref<64x128xbf16, #tpu.memory_space<vmem>>, %arg3: memref<1x128xf32, #tpu.memory_space<vmem>>, %arg4: memref<1x128xf32, #tpu.memory_space<vmem>>, %arg5: memref<9x128x128xbf16, #tpu.memory_space<vmem>>, %arg6: memref<1x128xf32, #tpu.memory_space<vmem>>, %arg7: memref<1x128xf32, #tpu.memory_space<vmem>>, %arg8: memref<128x128xbf16, #tpu.memory_space<vmem>>, %arg9: memref<1x128xf32, #tpu.memory_space<vmem>>, %arg10: memref<1x128xf32, #tpu.memory_space<vmem>>, %arg11: memref<64x128xbf16, #tpu.memory_space<vmem>>, %arg12: memref<1x128xf32, #tpu.memory_space<vmem>>, %arg13: memref<1x128xf32, #tpu.memory_space<vmem>>, %arg14: memref<1x16x16x128xf32, #tpu.memory_space<vmem>>, %arg15: memref<18x18x128xbf16, #tpu.memory_space<vmem>>, %arg16: memref<256x128xf32, #tpu.memory_space<vmem>>) attributes {dimension_semantics = [#tpu.dimension_semantics<parallel>], iteration_bounds = array<i64: 2>, scalar_prefetch = 0 : i64, scratch_operands = 2 : i64, tpu.core_type = #tpu.core_type<tc>, window_params = [{transform_indices = @transform_0, window_bounds = array<i64: 1, 16, 16, 64>}, {pipeline_mode = #tpu.pipeline_mode<synchronous>, transform_indices = @transform_1, window_bounds = array<i64: 64, 128>}, {pipeline_mode = #tpu.pipeline_mode<synchronous>, transform_indices = @transform_2, window_bounds = array<i64: 1, 128>}, {pipeline_mode = #tpu.pipeline_mode<synchronous>, transform_indices = @transform_3, window_bounds = array<i64: 1, 128>}, {pipeline_mode = #tpu.pipeline_mode<synchronous>, transform_indices = @transform_4, window_bounds = array<i64: 9, 128, 128>}, {pipeline_mode = #tpu.pipeline_mode<synchronous>, transform_indices = @transform_5, window_bounds = array<i64: 1, 128>}, {pipeline_mode = #tpu.pipeline_mode<synchronous>, transform_indices = @transform_6, window_bounds = array<i64: 1, 128>}, {pipeline_mode = #tpu.pipeline_mode<synchronous>, transform_indices = @transform_7, window_bounds = array<i64: 128, 128>}, {pipeline_mode = #tpu.pipeline_mode<synchronous>, transform_indices = @transform_8, window_bounds = array<i64: 1, 128>}, {pipeline_mode = #tpu.pipeline_mode<synchronous>, transform_indices = @transform_9, window_bounds = array<i64: 1, 128>}, {pipeline_mode = #tpu.pipeline_mode<synchronous>, transform_indices = @transform_10, window_bounds = array<i64: 64, 128>}, {pipeline_mode = #tpu.pipeline_mode<synchronous>, transform_indices = @transform_11, window_bounds = array<i64: 1, 128>}, {pipeline_mode = #tpu.pipeline_mode<synchronous>, transform_indices = @transform_12, window_bounds = array<i64: 1, 128>}, {transform_indices = @transform_13, window_bounds = array<i64: 1, 16, 16, 128>}]} {
    %cst = arith.constant 0.000000e+00 : bf16
    %0 = vector.broadcast %cst : bf16 to vector<18x18x128xbf16>
    %c0 = arith.constant 0 : index
    %c0_0 = arith.constant 0 : index
    %c0_1 = arith.constant 0 : index
    %1 = vector.load %arg15[%c0, %c0_0, %c0_1] : memref<18x18x128xbf16, #tpu.memory_space<vmem>>, vector<18x18x128xbf16>
    tpu.vector_store %arg15[%c0, %c0_0, %c0_1], %0 {strides = array<i32>} : memref<18x18x128xbf16, #tpu.memory_space<vmem>>, vector<18x18x128xbf16>,
    %c0_2 = arith.constant 0 : index
    %c0_3 = arith.constant 0 : index
    %c0_4 = arith.constant 0 : index
    %c0_5 = arith.constant 0 : index
    %2 = vector.load %arg1[%c0_2, %c0_3, %c0_4, %c0_5] : memref<1x16x16x64xbf16, #tpu.memory_space<vmem>>, vector<1x16x16x64xbf16>
    %3 = vector.shape_cast %2 : vector<1x16x16x64xbf16> to vector<16x16x64xbf16>
    %4 = vector.shape_cast %3 : vector<16x16x64xbf16> to vector<256x64xbf16>
    %c0_6 = arith.constant 0 : index
    %c0_7 = arith.constant 0 : index
    %5 = vector.load %arg2[%c0_6, %c0_7] : memref<64x128xbf16, #tpu.memory_space<vmem>>, vector<64x128xbf16>
    %cst_8 = arith.constant dense<0.000000e+00> : vector<256x128xf32>
    %6 = tpu.matmul %4, %5, %cst_8 {dimension_numbers = #tpu.dot_dimension_numbers<[1], [0], [0], [1], [0, 0, 1, 1], [], []>} : vector<256x64xbf16>, vector<64x128xbf16>, vector<256x128xf32> -> vector<256x128xf32>
    %c0_9 = arith.constant 0 : index
    %c0_10 = arith.constant 0 : index
    %7 = vector.load %arg3[%c0_9, %c0_10] : memref<1x128xf32, #tpu.memory_space<vmem>>, vector<1x128xf32>
    %8 = vector.broadcast %7 : vector<1x128xf32> to vector<256x128xf32>
    %9 = arith.mulf %6, %8 : vector<256x128xf32>
    %c0_11 = arith.constant 0 : index
    %c0_12 = arith.constant 0 : index
    %10 = vector.load %arg4[%c0_11, %c0_12] : memref<1x128xf32, #tpu.memory_space<vmem>>, vector<1x128xf32>
    %11 = vector.broadcast %10 : vector<1x128xf32> to vector<256x128xf32>
    %12 = arith.addf %9, %11 : vector<256x128xf32>
    %cst_13 = arith.constant 0.000000e+00 : f32
    %13 = vector.broadcast %cst_13 : f32 to vector<256x128xf32>
    %14 = arith.maximumf %12, %13 : vector<256x128xf32>
    %15 = arith.truncf %14 : vector<256x128xf32> to vector<256x128xbf16>
    %16 = vector.shape_cast %15 : vector<256x128xbf16> to vector<16x16x128xbf16>
    %c1 = arith.constant 1 : index
    %c1_14 = arith.constant 1 : index
    %c0_15 = arith.constant 0 : index
    %17 = vector.load %arg15[%c1, %c1_14, %c0_15] : memref<18x18x128xbf16, #tpu.memory_space<vmem>>, vector<16x16x128xbf16>
    tpu.vector_store %arg15[%c1, %c1_14, %c0_15], %16 {strides = array<i32>} : memref<18x18x128xbf16, #tpu.memory_space<vmem>>, vector<16x16x128xbf16>,
    %cst_16 = arith.constant 0.000000e+00 : f32
    %18 = vector.broadcast %cst_16 : f32 to vector<256x128xf32>
    %c0_17 = arith.constant 0 : index
    %c0_18 = arith.constant 0 : index
    %c0_19 = arith.constant 0 : index
    %19 = vector.load %arg15[%c0_17, %c0_18, %c0_19] : memref<18x18x128xbf16, #tpu.memory_space<vmem>>, vector<16x16x128xbf16>
    %20 = vector.shape_cast %19 : vector<16x16x128xbf16> to vector<256x128xbf16>
    %c0_20 = arith.constant 0 : index
    %c0_21 = arith.constant 0 : index
    %c0_22 = arith.constant 0 : index
    %21 = vector.load %arg5[%c0_20, %c0_21, %c0_22] : memref<9x128x128xbf16, #tpu.memory_space<vmem>>, vector<1x128x128xbf16>
    %22 = vector.shape_cast %21 : vector<1x128x128xbf16> to vector<128x128xbf16>
    %cst_23 = arith.constant dense<0.000000e+00> : vector<256x128xf32>
    %23 = tpu.matmul %20, %22, %cst_23 {dimension_numbers = #tpu.dot_dimension_numbers<[1], [0], [0], [1], [0, 0, 1, 1], [], []>} : vector<256x128xbf16>, vector<128x128xbf16>, vector<256x128xf32> -> vector<256x128xf32>
    %24 = arith.addf %18, %23 : vector<256x128xf32>
    %c0_24 = arith.constant 0 : index
    %c1_25 = arith.constant 1 : index
    %c0_26 = arith.constant 0 : index
    %25 = vector.load %arg15[%c0_24, %c1_25, %c0_26] : memref<18x18x128xbf16, #tpu.memory_space<vmem>>, vector<16x16x128xbf16>
    %26 = vector.shape_cast %25 : vector<16x16x128xbf16> to vector<256x128xbf16>
    %c1_27 = arith.constant 1 : index
    %c0_28 = arith.constant 0 : index
    %c0_29 = arith.constant 0 : index
    %27 = vector.load %arg5[%c1_27, %c0_28, %c0_29] : memref<9x128x128xbf16, #tpu.memory_space<vmem>>, vector<1x128x128xbf16>
    %28 = vector.shape_cast %27 : vector<1x128x128xbf16> to vector<128x128xbf16>
    %cst_30 = arith.constant dense<0.000000e+00> : vector<256x128xf32>
    %29 = tpu.matmul %26, %28, %cst_30 {dimension_numbers = #tpu.dot_dimension_numbers<[1], [0], [0], [1], [0, 0, 1, 1], [], []>} : vector<256x128xbf16>, vector<128x128xbf16>, vector<256x128xf32> -> vector<256x128xf32>
    %30 = arith.addf %24, %29 : vector<256x128xf32>
    %c0_31 = arith.constant 0 : index
    %c2 = arith.constant 2 : index
    %c0_32 = arith.constant 0 : index
    %31 = vector.load %arg15[%c0_31, %c2, %c0_32] : memref<18x18x128xbf16, #tpu.memory_space<vmem>>, vector<16x16x128xbf16>
    %32 = vector.shape_cast %31 : vector<16x16x128xbf16> to vector<256x128xbf16>
    %c2_33 = arith.constant 2 : index
    %c0_34 = arith.constant 0 : index
    %c0_35 = arith.constant 0 : index
    %33 = vector.load %arg5[%c2_33, %c0_34, %c0_35] : memref<9x128x128xbf16, #tpu.memory_space<vmem>>, vector<1x128x128xbf16>
    %34 = vector.shape_cast %33 : vector<1x128x128xbf16> to vector<128x128xbf16>
    %cst_36 = arith.constant dense<0.000000e+00> : vector<256x128xf32>
    %35 = tpu.matmul %32, %34, %cst_36 {dimension_numbers = #tpu.dot_dimension_numbers<[1], [0], [0], [1], [0, 0, 1, 1], [], []>} : vector<256x128xbf16>, vector<128x128xbf16>, vector<256x128xf32> -> vector<256x128xf32>
    %36 = arith.addf %30, %35 : vector<256x128xf32>
    %c1_37 = arith.constant 1 : index
    %c0_38 = arith.constant 0 : index
    %c0_39 = arith.constant 0 : index
    %37 = vector.load %arg15[%c1_37, %c0_38, %c0_39] : memref<18x18x128xbf16, #tpu.memory_space<vmem>>, vector<16x16x128xbf16>
    %38 = vector.shape_cast %37 : vector<16x16x128xbf16> to vector<256x128xbf16>
    %c3 = arith.constant 3 : index
    %c0_40 = arith.constant 0 : index
    %c0_41 = arith.constant 0 : index
    %39 = vector.load %arg5[%c3, %c0_40, %c0_41] : memref<9x128x128xbf16, #tpu.memory_space<vmem>>, vector<1x128x128xbf16>
    %40 = vector.shape_cast %39 : vector<1x128x128xbf16> to vector<128x128xbf16>
    %cst_42 = arith.constant dense<0.000000e+00> : vector<256x128xf32>
    %41 = tpu.matmul %38, %40, %cst_42 {dimension_numbers = #tpu.dot_dimension_numbers<[1], [0], [0], [1], [0, 0, 1, 1], [], []>} : vector<256x128xbf16>, vector<128x128xbf16>, vector<256x128xf32> -> vector<256x128xf32>
    %42 = arith.addf %36, %41 : vector<256x128xf32>
    %c1_43 = arith.constant 1 : index
    %c1_44 = arith.constant 1 : index
    %c0_45 = arith.constant 0 : index
    %43 = vector.load %arg15[%c1_43, %c1_44, %c0_45] : memref<18x18x128xbf16, #tpu.memory_space<vmem>>, vector<16x16x128xbf16>
    %44 = vector.shape_cast %43 : vector<16x16x128xbf16> to vector<256x128xbf16>
    %c4 = arith.constant 4 : index
    %c0_46 = arith.constant 0 : index
    %c0_47 = arith.constant 0 : index
    %45 = vector.load %arg5[%c4, %c0_46, %c0_47] : memref<9x128x128xbf16, #tpu.memory_space<vmem>>, vector<1x128x128xbf16>
    %46 = vector.shape_cast %45 : vector<1x128x128xbf16> to vector<128x128xbf16>
    %cst_48 = arith.constant dense<0.000000e+00> : vector<256x128xf32>
    %47 = tpu.matmul %44, %46, %cst_48 {dimension_numbers = #tpu.dot_dimension_numbers<[1], [0], [0], [1], [0, 0, 1, 1], [], []>} : vector<256x128xbf16>, vector<128x128xbf16>, vector<256x128xf32> -> vector<256x128xf32>
    %48 = arith.addf %42, %47 : vector<256x128xf32>
    %c1_49 = arith.constant 1 : index
    %c2_50 = arith.constant 2 : index
    %c0_51 = arith.constant 0 : index
    %49 = vector.load %arg15[%c1_49, %c2_50, %c0_51] : memref<18x18x128xbf16, #tpu.memory_space<vmem>>, vector<16x16x128xbf16>
    %50 = vector.shape_cast %49 : vector<16x16x128xbf16> to vector<256x128xbf16>
    %c5 = arith.constant 5 : index
    %c0_52 = arith.constant 0 : index
    %c0_53 = arith.constant 0 : index
    %51 = vector.load %arg5[%c5, %c0_52, %c0_53] : memref<9x128x128xbf16, #tpu.memory_space<vmem>>, vector<1x128x128xbf16>
    %52 = vector.shape_cast %51 : vector<1x128x128xbf16> to vector<128x128xbf16>
    %cst_54 = arith.constant dense<0.000000e+00> : vector<256x128xf32>
    %53 = tpu.matmul %50, %52, %cst_54 {dimension_numbers = #tpu.dot_dimension_numbers<[1], [0], [0], [1], [0, 0, 1, 1], [], []>} : vector<256x128xbf16>, vector<128x128xbf16>, vector<256x128xf32> -> vector<256x128xf32>
    %54 = arith.addf %48, %53 : vector<256x128xf32>
    %c2_55 = arith.constant 2 : index
    %c0_56 = arith.constant 0 : index
    %c0_57 = arith.constant 0 : index
    %55 = vector.load %arg15[%c2_55, %c0_56, %c0_57] : memref<18x18x128xbf16, #tpu.memory_space<vmem>>, vector<16x16x128xbf16>
    %56 = vector.shape_cast %55 : vector<16x16x128xbf16> to vector<256x128xbf16>
    %c6 = arith.constant 6 : index
    %c0_58 = arith.constant 0 : index
    %c0_59 = arith.constant 0 : index
    %57 = vector.load %arg5[%c6, %c0_58, %c0_59] : memref<9x128x128xbf16, #tpu.memory_space<vmem>>, vector<1x128x128xbf16>
    %58 = vector.shape_cast %57 : vector<1x128x128xbf16> to vector<128x128xbf16>
    %cst_60 = arith.constant dense<0.000000e+00> : vector<256x128xf32>
    %59 = tpu.matmul %56, %58, %cst_60 {dimension_numbers = #tpu.dot_dimension_numbers<[1], [0], [0], [1], [0, 0, 1, 1], [], []>} : vector<256x128xbf16>, vector<128x128xbf16>, vector<256x128xf32> -> vector<256x128xf32>
    %60 = arith.addf %54, %59 : vector<256x128xf32>
    %c2_61 = arith.constant 2 : index
    %c1_62 = arith.constant 1 : index
    %c0_63 = arith.constant 0 : index
    %61 = vector.load %arg15[%c2_61, %c1_62, %c0_63] : memref<18x18x128xbf16, #tpu.memory_space<vmem>>, vector<16x16x128xbf16>
    %62 = vector.shape_cast %61 : vector<16x16x128xbf16> to vector<256x128xbf16>
    %c7 = arith.constant 7 : index
    %c0_64 = arith.constant 0 : index
    %c0_65 = arith.constant 0 : index
    %63 = vector.load %arg5[%c7, %c0_64, %c0_65] : memref<9x128x128xbf16, #tpu.memory_space<vmem>>, vector<1x128x128xbf16>
    %64 = vector.shape_cast %63 : vector<1x128x128xbf16> to vector<128x128xbf16>
    %cst_66 = arith.constant dense<0.000000e+00> : vector<256x128xf32>
    %65 = tpu.matmul %62, %64, %cst_66 {dimension_numbers = #tpu.dot_dimension_numbers<[1], [0], [0], [1], [0, 0, 1, 1], [], []>} : vector<256x128xbf16>, vector<128x128xbf16>, vector<256x128xf32> -> vector<256x128xf32>
    %66 = arith.addf %60, %65 : vector<256x128xf32>
    %c2_67 = arith.constant 2 : index
    %c2_68 = arith.constant 2 : index
    %c0_69 = arith.constant 0 : index
    %67 = vector.load %arg15[%c2_67, %c2_68, %c0_69] : memref<18x18x128xbf16, #tpu.memory_space<vmem>>, vector<16x16x128xbf16>
    %68 = vector.shape_cast %67 : vector<16x16x128xbf16> to vector<256x128xbf16>
    %c8 = arith.constant 8 : index
    %c0_70 = arith.constant 0 : index
    %c0_71 = arith.constant 0 : index
    %69 = vector.load %arg5[%c8, %c0_70, %c0_71] : memref<9x128x128xbf16, #tpu.memory_space<vmem>>, vector<1x128x128xbf16>
    %70 = vector.shape_cast %69 : vector<1x128x128xbf16> to vector<128x128xbf16>
    %cst_72 = arith.constant dense<0.000000e+00> : vector<256x128xf32>
    %71 = tpu.matmul %68, %70, %cst_72 {dimension_numbers = #tpu.dot_dimension_numbers<[1], [0], [0], [1], [0, 0, 1, 1], [], []>} : vector<256x128xbf16>, vector<128x128xbf16>, vector<256x128xf32> -> vector<256x128xf32>
    %72 = arith.addf %66, %71 : vector<256x128xf32>
    %c0_73 = arith.constant 0 : index
    %c0_74 = arith.constant 0 : index
    %73 = vector.load %arg6[%c0_73, %c0_74] : memref<1x128xf32, #tpu.memory_space<vmem>>, vector<1x128xf32>
    %74 = vector.broadcast %73 : vector<1x128xf32> to vector<256x128xf32>
    %75 = arith.mulf %72, %74 : vector<256x128xf32>
    %c0_75 = arith.constant 0 : index
    %c0_76 = arith.constant 0 : index
    %76 = vector.load %arg7[%c0_75, %c0_76] : memref<1x128xf32, #tpu.memory_space<vmem>>, vector<1x128xf32>
    %77 = vector.broadcast %76 : vector<1x128xf32> to vector<256x128xf32>
    %78 = arith.addf %75, %77 : vector<256x128xf32>
    %cst_77 = arith.constant 0.000000e+00 : f32
    %79 = vector.broadcast %cst_77 : f32 to vector<256x128xf32>
    %80 = arith.maximumf %78, %79 : vector<256x128xf32>
    %81 = arith.truncf %80 : vector<256x128xf32> to vector<256x128xbf16>
    %c0_78 = arith.constant 0 : index
    %c0_79 = arith.constant 0 : index
    %82 = vector.load %arg8[%c0_78, %c0_79] : memref<128x128xbf16, #tpu.memory_space<vmem>>, vector<128x128xbf16>
    %cst_80 = arith.constant dense<0.000000e+00> : vector<256x128xf32>
    %83 = tpu.matmul %81, %82, %cst_80 {dimension_numbers = #tpu.dot_dimension_numbers<[1], [0], [0], [1], [0, 0, 1, 1], [], []>} : vector<256x128xbf16>, vector<128x128xbf16>, vector<256x128xf32> -> vector<256x128xf32>
    %c0_81 = arith.constant 0 : index
    %c0_82 = arith.constant 0 : index
    %84 = vector.load %arg16[%c0_81, %c0_82] : memref<256x128xf32, #tpu.memory_space<vmem>>, vector<256x128xf32>
    tpu.vector_store %arg16[%c0_81, %c0_82], %83 {strides = array<i32>} : memref<256x128xf32, #tpu.memory_space<vmem>>, vector<256x128xf32>,
    %c0_83 = arith.constant 0 : index
    %c0_84 = arith.constant 0 : index
    %85 = vector.load %arg11[%c0_83, %c0_84] : memref<64x128xbf16, #tpu.memory_space<vmem>>, vector<64x128xbf16>
    %cst_85 = arith.constant dense<0.000000e+00> : vector<256x128xf32>
    %86 = tpu.matmul %4, %85, %cst_85 {dimension_numbers = #tpu.dot_dimension_numbers<[1], [0], [0], [1], [0, 0, 1, 1], [], []>} : vector<256x64xbf16>, vector<64x128xbf16>, vector<256x128xf32> -> vector<256x128xf32>
    %c0_86 = arith.constant 0 : index
    %c0_87 = arith.constant 0 : index
    %87 = vector.load %arg12[%c0_86, %c0_87] : memref<1x128xf32, #tpu.memory_space<vmem>>, vector<1x128xf32>
    %88 = vector.broadcast %87 : vector<1x128xf32> to vector<256x128xf32>
    %89 = arith.mulf %86, %88 : vector<256x128xf32>
    %c0_88 = arith.constant 0 : index
    %c0_89 = arith.constant 0 : index
    %90 = vector.load %arg13[%c0_88, %c0_89] : memref<1x128xf32, #tpu.memory_space<vmem>>, vector<1x128xf32>
    %91 = vector.broadcast %90 : vector<1x128xf32> to vector<256x128xf32>
    %92 = arith.addf %89, %91 : vector<256x128xf32>
    %c0_90 = arith.constant 0 : index
    %c0_91 = arith.constant 0 : index
    %93 = vector.load %arg16[%c0_90, %c0_91] : memref<256x128xf32, #tpu.memory_space<vmem>>, vector<256x128xf32>
    %c0_92 = arith.constant 0 : index
    %c0_93 = arith.constant 0 : index
    %94 = vector.load %arg9[%c0_92, %c0_93] : memref<1x128xf32, #tpu.memory_space<vmem>>, vector<1x128xf32>
    %95 = vector.broadcast %94 : vector<1x128xf32> to vector<256x128xf32>
    %96 = arith.mulf %93, %95 : vector<256x128xf32>
    %c0_94 = arith.constant 0 : index
    %c0_95 = arith.constant 0 : index
    %97 = vector.load %arg10[%c0_94, %c0_95] : memref<1x128xf32, #tpu.memory_space<vmem>>, vector<1x128xf32>
    %98 = vector.broadcast %97 : vector<1x128xf32> to vector<256x128xf32>
    %99 = arith.addf %96, %98 : vector<256x128xf32>
    %100 = arith.addf %99, %92 : vector<256x128xf32>
    %cst_96 = arith.constant 0.000000e+00 : f32
    %101 = vector.broadcast %cst_96 : f32 to vector<256x128xf32>
    %102 = arith.maximumf %100, %101 : vector<256x128xf32>
    %103 = vector.shape_cast %102 : vector<256x128xf32> to vector<16x16x128xf32>
    %c0_97 = arith.constant 0 : index
    %c0_98 = arith.constant 0 : index
    %c0_99 = arith.constant 0 : index
    %c0_100 = arith.constant 0 : index
    %104 = vector.load %arg14[%c0_97, %c0_98, %c0_99, %c0_100] : memref<1x16x16x128xf32, #tpu.memory_space<vmem>>, vector<1x16x16x128xf32>
    %105 = vector.shape_cast %104 : vector<1x16x16x128xf32> to vector<16x16x128xf32>
    %106 = vector.shape_cast %103 : vector<16x16x128xf32> to vector<1x16x16x128xf32>
    tpu.vector_store %arg14[%c0_97, %c0_98, %c0_99, %c0_100], %106 {strides = array<i32>} : memref<1x16x16x128xf32, #tpu.memory_space<vmem>>, vector<1x16x16x128xf32>,
    return
  }
  func.func @transform_0(%arg0: i32) -> (i32, i32, i32, i32) {
    %c0_i32 = arith.constant 0 : i32
    %c0_i32_0 = arith.constant 0 : i32
    %c0_i32_1 = arith.constant 0 : i32
    %c0_i32_2 = arith.constant 0 : i32
    return %arg0, %c0_i32, %c0_i32_0, %c0_i32_1 : i32, i32, i32, i32
  }
  func.func @transform_1(%arg0: i32) -> (i32, i32) {
    %c0_i32 = arith.constant 0 : i32
    %c0_i32_0 = arith.constant 0 : i32
    %c0_i32_1 = arith.constant 0 : i32
    return %c0_i32, %c0_i32_0 : i32, i32
  }
  func.func @transform_2(%arg0: i32) -> (i32, i32) {
    %c0_i32 = arith.constant 0 : i32
    %c0_i32_0 = arith.constant 0 : i32
    %c0_i32_1 = arith.constant 0 : i32
    return %c0_i32, %c0_i32_0 : i32, i32
  }
  func.func @transform_3(%arg0: i32) -> (i32, i32) {
    %c0_i32 = arith.constant 0 : i32
    %c0_i32_0 = arith.constant 0 : i32
    %c0_i32_1 = arith.constant 0 : i32
    return %c0_i32, %c0_i32_0 : i32, i32
  }
  func.func @transform_4(%arg0: i32) -> (i32, i32, i32) {
    %c0_i32 = arith.constant 0 : i32
    %c0_i32_0 = arith.constant 0 : i32
    %c0_i32_1 = arith.constant 0 : i32
    %c0_i32_2 = arith.constant 0 : i32
    return %c0_i32, %c0_i32_0, %c0_i32_1 : i32, i32, i32
  }
  func.func @transform_5(%arg0: i32) -> (i32, i32) {
    %c0_i32 = arith.constant 0 : i32
    %c0_i32_0 = arith.constant 0 : i32
    %c0_i32_1 = arith.constant 0 : i32
    return %c0_i32, %c0_i32_0 : i32, i32
  }
  func.func @transform_6(%arg0: i32) -> (i32, i32) {
    %c0_i32 = arith.constant 0 : i32
    %c0_i32_0 = arith.constant 0 : i32
    %c0_i32_1 = arith.constant 0 : i32
    return %c0_i32, %c0_i32_0 : i32, i32
  }
  func.func @transform_7(%arg0: i32) -> (i32, i32) {
    %c0_i32 = arith.constant 0 : i32
    %c0_i32_0 = arith.constant 0 : i32
    %c0_i32_1 = arith.constant 0 : i32
    return %c0_i32, %c0_i32_0 : i32, i32
  }
  func.func @transform_8(%arg0: i32) -> (i32, i32) {
    %c0_i32 = arith.constant 0 : i32
    %c0_i32_0 = arith.constant 0 : i32
    %c0_i32_1 = arith.constant 0 : i32
    return %c0_i32, %c0_i32_0 : i32, i32
  }
  func.func @transform_9(%arg0: i32) -> (i32, i32) {
    %c0_i32 = arith.constant 0 : i32
    %c0_i32_0 = arith.constant 0 : i32
    %c0_i32_1 = arith.constant 0 : i32
    return %c0_i32, %c0_i32_0 : i32, i32
  }
  func.func @transform_10(%arg0: i32) -> (i32, i32) {
    %c0_i32 = arith.constant 0 : i32
    %c0_i32_0 = arith.constant 0 : i32
    %c0_i32_1 = arith.constant 0 : i32
    return %c0_i32, %c0_i32_0 : i32, i32
  }
  func.func @transform_11(%arg0: i32) -> (i32, i32) {
    %c0_i32 = arith.constant 0 : i32
    %c0_i32_0 = arith.constant 0 : i32
    %c0_i32_1 = arith.constant 0 : i32
    return %c0_i32, %c0_i32_0 : i32, i32
  }
  func.func @transform_12(%arg0: i32) -> (i32, i32) {
    %c0_i32 = arith.constant 0 : i32
    %c0_i32_0 = arith.constant 0 : i32
    %c0_i32_1 = arith.constant 0 : i32
    return %c0_i32, %c0_i32_0 : i32, i32
  }
  func.func @transform_13(%arg0: i32) -> (i32, i32, i32, i32) {
    %c0_i32 = arith.constant 0 : i32
    %c0_i32_0 = arith.constant 0 : i32
    %c0_i32_1 = arith.constant 0 : i32
    %c0_i32_2 = arith.constant 0 : i32
    return %arg0, %c0_i32, %c0_i32_0, %c0_i32_1 : i32, i32, i32, i32
  }
}

</mosaic_0001>

<llo_original>
// kernel: forward.1
$region0: #{forward.1}
  #allocation0 [shape = 'u32[]', space=smem, size = 0x4, offset = 0x4, fixed_abs, tag = 'smem constant byte address 0x4 - core index']
  #allocation1 [shape = 'u32[144,128]{1,0:T(1,128)}', space=vmem, size = 0x12000, scoped, tag = 'internal scratch']
  #allocation2 [shape = 'bf16[18,18,128]{2,1,0:T(8,128)(2,1)}', space=vmem, size = 0x1b000, scoped, tag = 'scratch operand']
  #allocation3 [shape = 'f32[256,128]{1,0:T(8,128)}', space=vmem, size = 0x20000, scoped, tag = 'scratch operand']
  %s0 = inlined_call_operand.vmem [shape: bf16[2,16,16,64], index: 0, kind: input, shape index: {}]
  %s1 = inlined_call_operand.vmem [shape: bf16[64,128], index: 1, kind: input, shape index: {}]
  %s2 = inlined_call_operand.vmem [shape: f32[1,128], index: 2, kind: input, shape index: {}]
  %s3 = inlined_call_operand.vmem [shape: f32[1,128], index: 3, kind: input, shape index: {}]
  %s4 = inlined_call_operand.vmem [shape: bf16[9,128,128], index: 4, kind: input, shape index: {}]
  %s5 = inlined_call_operand.vmem [shape: f32[1,128], index: 5, kind: input, shape index: {}]
  %s6 = inlined_call_operand.vmem [shape: f32[1,128], index: 6, kind: input, shape index: {}]
  %s7 = inlined_call_operand.vmem [shape: bf16[128,128], index: 7, kind: input, shape index: {}]
  %s8 = inlined_call_operand.vmem [shape: f32[1,128], index: 8, kind: input, shape index: {}]
  %s9 = inlined_call_operand.vmem [shape: f32[1,128], index: 9, kind: input, shape index: {}]
  %s10 = inlined_call_operand.vmem [shape: bf16[64,128], index: 10, kind: input, shape index: {}]
  %s11 = inlined_call_operand.vmem [shape: f32[1,128], index: 11, kind: input, shape index: {}]
  %s12 = inlined_call_operand.vmem [shape: f32[1,128], index: 12, kind: input, shape index: {}]
  %s13 = inlined_call_operand.hbm [shape: f32[2,16,16,128], index: 13, kind: output, shape index: {}]
  %s14 = sld [smem:[#allocation0]]
  $region85: #{forward.1} parent=0
    _
  %s16 = ssub.s32 1, %s14
  %s17 = scalar_select 0, %s16, %s14
  $region1: #{forward.1} parent=0
    #allocation4 [shape = 'u8[262144]{0}', space=vmem, size = 0x40000, scoped, tag = 'output window, operand 0']
    #allocation5 [shape = 's32[2]{0}', space=sflag, size = 0x8, scoped, tag = 'scoped memory for forward.1']
    %18 = vsyncpa [#allocation5], 0
    %s19 = scalar_lea.sflag [#allocation5], 1
    %20 = vsyncpa %s19, 0
    loop: start=0, step=1, limit=4
    $region2: #{forward.1} parent=1 // loop_pre_header
      _
    $region3: #{forward.1} parent=1 // loop_header
      %s22 = sphi 0, %s26
      %p23 = scmp.ge.s32.totalorder %s22, 4
      %s32 = sphi 0, %s34
      %s35 = sphi 0, %s32
      %s36 = sphi 0, %s35
      %s52 = sphi 0, %s36
      %s56 = sphi 0, %s56
      %s58 = sphi 0, %s56
      %s59 = sphi 0, %s58
      %s73 = sphi 0, %s59
      %s77 = sphi 0, %s77
      %s79 = sphi 0, %s77
      %s80 = sphi 0, %s79
      %s94 = sphi 0, %s80
      %s98 = sphi 0, %s98
      %s100 = sphi 0, %s98
      %s101 = sphi 0, %s100
      %s115 = sphi 0, %s101
      %s119 = sphi 0, %s119
      %s121 = sphi 0, %s119
      %s122 = sphi 0, %s121
      %s136 = sphi 0, %s122
      %s140 = sphi 0, %s140
      %s142 = sphi 0, %s140
      %s143 = sphi 0, %s142
      %s157 = sphi 0, %s143
      %s161 = sphi 0, %s161
      %s163 = sphi 0, %s161
      %s164 = sphi 0, %s163
      %s178 = sphi 0, %s164
      %s182 = sphi 0, %s182
      %s184 = sphi 0, %s182
      %s185 = sphi 0, %s184
      %s199 = sphi 0, %s185
      %s203 = sphi 0, %s203
      %s205 = sphi 0, %s203
      %s206 = sphi 0, %s205
      %s220 = sphi 0, %s206
      %s224 = sphi 0, %s224
      %s226 = sphi 0, %s224
      %s227 = sphi 0, %s226
      %s241 = sphi 0, %s227
      %s245 = sphi 0, %s245
      %s247 = sphi 0, %s245
      %s248 = sphi 0, %s247
      %s262 = sphi 0, %s248
      %s266 = sphi 0, %s266
      %s268 = sphi 0, %s266
      %s269 = sphi 0, %s268
      %s283 = sphi 0, %s269
      %s287 = sphi 0, %s287
      %s289 = sphi 0, %s287
      %s290 = sphi 0, %s289
      %s304 = sphi 0, %s290
      %s310 = sphi 0, %s312
      %s313 = sphi 0, %s310
      %s314 = sphi 0, %s313
      %s330 = sphi 0, %s314
    $region4: #{forward.1} parent=1 // loop_header_branch
      %25 = sbr.rel (%p23) target = $region8
    $region5: #{forward.1} parent=1 // loop_body
      %s27 = ssub.s32 %s22, 1
      %s28 = ssub.s32 %s22, 2
      %s29 = sadd.s32 %s22, 1
      %s30 = ssub.s32 %s22, %s29
      %p31 = scmp.eq.s32.totalorder %s30, 0
      %s33 = sadd.s32 %s32, 1
      %s34 = scalar_select %p31, %s32, %s33
      %p37 = pneg %p31
      %p38 = scmp.eq.s32.totalorder %s22, 1
      %p39 = por %p37, %p38
      %p40 = scmp.ne.s32.totalorder %s32, %s35
      %p41 = scmp.eq.s32.totalorder %s22, 0
      %p42 = por %p40, %p41
      %p43 = scmp.ne.s32.totalorder %s32, %s35
      %p44 = scmp.eq.s32.totalorder %s27, 1
      %p45 = por %p43, %p44
      %p46 = scmp.ne.s32.totalorder %s35, %s36
      %p47 = scmp.eq.s32.totalorder %s27, 0
      %p48 = por %p46, %p47
      %p49 = scmp.ne.s32.totalorder %s35, %s36
      %p50 = scmp.eq.s32.totalorder %s28, 1
      %p51 = por %p49, %p50
      %p53 = scmp.ne.s32.totalorder %s36, %s52
      %p54 = scmp.eq.s32.totalorder %s28, 0
      %p55 = por %p53, %p54
      %s57 = sadd.s32 %s56, 1
      %p60 = scmp.eq.s32.totalorder %s22, 1
      %p61 = scmp.ne.s32.totalorder %s56, %s58
      %p62 = scmp.eq.s32.totalorder %s22, 0
      %p63 = por %p61, %p62
      %p64 = scmp.ne.s32.totalorder %s56, %s58
      %p65 = scmp.eq.s32.totalorder %s27, 1
      %p66 = por %p64, %p65
      %p67 = scmp.ne.s32.totalorder %s58, %s59
      %p68 = scmp.eq.s32.totalorder %s27, 0
      %p69 = por %p67, %p68
      %p70 = scmp.ne.s32.totalorder %s58, %s59
      %p71 = scmp.eq.s32.totalorder %s28, 1
      %p72 = por %p70, %p71
      %p74 = scmp.ne.s32.totalorder %s59, %s73
      %p75 = scmp.eq.s32.totalorder %s28, 0
      %p76 = por %p74, %p75
      %s78 = sadd.s32 %s77, 1
      %p81 = scmp.eq.s32.totalorder %s22, 1
      %p82 = scmp.ne.s32.totalorder %s77, %s79
      %p83 = scmp.eq.s32.totalorder %s22, 0
      %p84 = por %p82, %p83
      %p85 = scmp.ne.s32.totalorder %s77, %s79
      %p86 = scmp.eq.s32.totalorder %s27, 1
      %p87 = por %p85, %p86
      %p88 = scmp.ne.s32.totalorder %s79, %s80
      %p89 = scmp.eq.s32.totalorder %s27, 0
      %p90 = por %p88, %p89
      %p91 = scmp.ne.s32.totalorder %s79, %s80
      %p92 = scmp.eq.s32.totalorder %s28, 1
      %p93 = por %p91, %p92
      %p95 = scmp.ne.s32.totalorder %s80, %s94
      %p96 = scmp.eq.s32.totalorder %s28, 0
      %p97 = por %p95, %p96
      %s99 = sadd.s32 %s98, 1
      %p102 = scmp.eq.s32.totalorder %s22, 1
      %p103 = scmp.ne.s32.totalorder %s98, %s100
      %p104 = scmp.eq.s32.totalorder %s22, 0
      %p105 = por %p103, %p104
      %p106 = scmp.ne.s32.totalorder %s98, %s100
      %p107 = scmp.eq.s32.totalorder %s27, 1
      %p108 = por %p106, %p107
      %p109 = scmp.ne.s32.totalorder %s100, %s101
      %p110 = scmp.eq.s32.totalorder %s27, 0
      %p111 = por %p109, %p110
      %p112 = scmp.ne.s32.totalorder %s100, %s101
      %p113 = scmp.eq.s32.totalorder %s28, 1
      %p114 = por %p112, %p113
      %p116 = scmp.ne.s32.totalorder %s101, %s115
      %p117 = scmp.eq.s32.totalorder %s28, 0
      %p118 = por %p116, %p117
      %s120 = sadd.s32 %s119, 1
      %p123 = scmp.eq.s32.totalorder %s22, 1
      %p124 = scmp.ne.s32.totalorder %s119, %s121
      %p125 = scmp.eq.s32.totalorder %s22, 0
      %p126 = por %p124, %p125
      %p127 = scmp.ne.s32.totalorder %s119, %s121
      %p128 = scmp.eq.s32.totalorder %s27, 1
      %p129 = por %p127, %p128
      %p130 = scmp.ne.s32.totalorder %s121, %s122
      %p131 = scmp.eq.s32.totalorder %s27, 0
      %p132 = por %p130, %p131
      %p133 = scmp.ne.s32.totalorder %s121, %s122
      %p134 = scmp.eq.s32.totalorder %s28, 1
      %p135 = por %p133, %p134
      %p137 = scmp.ne.s32.totalorder %s122, %s136
      %p138 = scmp.eq.s32.totalorder %s28, 0
      %p139 = por %p137, %p138
      %s141 = sadd.s32 %s140, 1
      %p144 = scmp.eq.s32.totalorder %s22, 1
      %p145 = scmp.ne.s32.totalorder %s140, %s142
      %p146 = scmp.eq.s32.totalorder %s22, 0
      %p147 = por %p145, %p146
      %p148 = scmp.ne.s32.totalorder %s140, %s142
      %p149 = scmp.eq.s32.totalorder %s27, 1
      %p150 = por %p148, %p149
      %p151 = scmp.ne.s32.totalorder %s142, %s143
      %p152 = scmp.eq.s32.totalorder %s27, 0
      %p153 = por %p151, %p152
      %p154 = scmp.ne.s32.totalorder %s142, %s143
      %p155 = scmp.eq.s32.totalorder %s28, 1
      %p156 = por %p154, %p155
      %p158 = scmp.ne.s32.totalorder %s143, %s157
      %p159 = scmp.eq.s32.totalorder %s28, 0
      %p160 = por %p158, %p159
      %s162 = sadd.s32 %s161, 1
      %p165 = scmp.eq.s32.totalorder %s22, 1
      %p166 = scmp.ne.s32.totalorder %s161, %s163
      %p167 = scmp.eq.s32.totalorder %s22, 0
      %p168 = por %p166, %p167
      %p169 = scmp.ne.s32.totalorder %s161, %s163
      %p170 = scmp.eq.s32.totalorder %s27, 1
      %p171 = por %p169, %p170
      %p172 = scmp.ne.s32.totalorder %s163, %s164
      %p173 = scmp.eq.s32.totalorder %s27, 0
      %p174 = por %p172, %p173
      %p175 = scmp.ne.s32.totalorder %s163, %s164
      %p176 = scmp.eq.s32.totalorder %s28, 1
      %p177 = por %p175, %p176
      %p179 = scmp.ne.s32.totalorder %s164, %s178
      %p180 = scmp.eq.s32.totalorder %s28, 0
      %p181 = por %p179, %p180
      %s183 = sadd.s32 %s182, 1
      %p186 = scmp.eq.s32.totalorder %s22, 1
      %p187 = scmp.ne.s32.totalorder %s182, %s184
      %p188 = scmp.eq.s32.totalorder %s22, 0
      %p189 = por %p187, %p188
      %p190 = scmp.ne.s32.totalorder %s182, %s184
      %p191 = scmp.eq.s32.totalorder %s27, 1
      %p192 = por %p190, %p191
      %p193 = scmp.ne.s32.totalorder %s184, %s185
      %p194 = scmp.eq.s32.totalorder %s27, 0
      %p195 = por %p193, %p194
      %p196 = scmp.ne.s32.totalorder %s184, %s185
      %p197 = scmp.eq.s32.totalorder %s28, 1
      %p198 = por %p196, %p197
      %p200 = scmp.ne.s32.totalorder %s185, %s199
      %p201 = scmp.eq.s32.totalorder %s28, 0
      %p202 = por %p200, %p201
      %s204 = sadd.s32 %s203, 1
      %p207 = scmp.eq.s32.totalorder %s22, 1
      %p208 = scmp.ne.s32.totalorder %s203, %s205
      %p209 = scmp.eq.s32.totalorder %s22, 0
      %p210 = por %p208, %p209
      %p211 = scmp.ne.s32.totalorder %s203, %s205
      %p212 = scmp.eq.s32.totalorder %s27, 1
      %p213 = por %p211, %p212
      %p214 = scmp.ne.s32.totalorder %s205, %s206
      %p215 = scmp.eq.s32.totalorder %s27, 0
      %p216 = por %p214, %p215
      %p217 = scmp.ne.s32.totalorder %s205, %s206
      %p218 = scmp.eq.s32.totalorder %s28, 1
      %p219 = por %p217, %p218
      %p221 = scmp.ne.s32.totalorder %s206, %s220
      %p222 = scmp.eq.s32.totalorder %s28, 0
      %p223 = por %p221, %p222
      %s225 = sadd.s32 %s224, 1
      %p228 = scmp.eq.s32.totalorder %s22, 1
      %p229 = scmp.ne.s32.totalorder %s224, %s226
      %p230 = scmp.eq.s32.totalorder %s22, 0
      %p231 = por %p229, %p230
      %p232 = scmp.ne.s32.totalorder %s224, %s226
      %p233 = scmp.eq.s32.totalorder %s27, 1
      %p234 = por %p232, %p233
      %p235 = scmp.ne.s32.totalorder %s226, %s227
      %p236 = scmp.eq.s32.totalorder %s27, 0
      %p237 = por %p235, %p236
      %p238 = scmp.ne.s32.totalorder %s226, %s227
      %p239 = scmp.eq.s32.totalorder %s28, 1
      %p240 = por %p238, %p239
      %p242 = scmp.ne.s32.totalorder %s227, %s241
      %p243 = scmp.eq.s32.totalorder %s28, 0
      %p244 = por %p242, %p243
      %s246 = sadd.s32 %s245, 1
      %p249 = scmp.eq.s32.totalorder %s22, 1
      %p250 = scmp.ne.s32.totalorder %s245, %s247
      %p251 = scmp.eq.s32.totalorder %s22, 0
      %p252 = por %p250, %p251
      %p253 = scmp.ne.s32.totalorder %s245, %s247
      %p254 = scmp.eq.s32.totalorder %s27, 1
      %p255 = por %p253, %p254
      %p256 = scmp.ne.s32.totalorder %s247, %s248
      %p257 = scmp.eq.s32.totalorder %s27, 0
      %p258 = por %p256, %p257
      %p259 = scmp.ne.s32.totalorder %s247, %s248
      %p260 = scmp.eq.s32.totalorder %s28, 1
      %p261 = por %p259, %p260
      %p263 = scmp.ne.s32.totalorder %s248, %s262
      %p264 = scmp.eq.s32.totalorder %s28, 0
      %p265 = por %p263, %p264
      %s267 = sadd.s32 %s266, 1
      %p270 = scmp.eq.s32.totalorder %s22, 1
      %p271 = scmp.ne.s32.totalorder %s266, %s268
      %p272 = scmp.eq.s32.totalorder %s22, 0
      %p273 = por %p271, %p272
      %p274 = scmp.ne.s32.totalorder %s266, %s268
      %p275 = scmp.eq.s32.totalorder %s27, 1
      %p276 = por %p274, %p275
      %p277 = scmp.ne.s32.totalorder %s268, %s269
      %p278 = scmp.eq.s32.totalorder %s27, 0
      %p279 = por %p277, %p278
      %p280 = scmp.ne.s32.totalorder %s268, %s269
      %p281 = scmp.eq.s32.totalorder %s28, 1
      %p282 = por %p280, %p281
      %p284 = scmp.ne.s32.totalorder %s269, %s283
      %p285 = scmp.eq.s32.totalorder %s28, 0
      %p286 = por %p284, %p285
      %s288 = sadd.s32 %s287, 1
      %p291 = scmp.eq.s32.totalorder %s22, 1
      %p292 = scmp.ne.s32.totalorder %s287, %s289
      %p293 = scmp.eq.s32.totalorder %s22, 0
      %p294 = por %p292, %p293
      %p295 = scmp.ne.s32.totalorder %s287, %s289
      %p296 = scmp.eq.s32.totalorder %s27, 1
      %p297 = por %p295, %p296
      %p298 = scmp.ne.s32.totalorder %s289, %s290
      %p299 = scmp.eq.s32.totalorder %s27, 0
      %p300 = por %p298, %p299
      %p301 = scmp.ne.s32.totalorder %s289, %s290
      %p302 = scmp.eq.s32.totalorder %s28, 1
      %p303 = por %p301, %p302
      %p305 = scmp.ne.s32.totalorder %s290, %s304
      %p306 = scmp.eq.s32.totalorder %s28, 0
      %p307 = por %p305, %p306
      %s308 = ssub.s32 %s22, %s29
      %p309 = scmp.eq.s32.totalorder %s308, 0
      %s311 = sadd.s32 %s310, 1
      %s312 = scalar_select %p309, %s310, %s311
      %p315 = pneg %p309
      %p316 = scmp.eq.s32.totalorder %s22, 1
      %p317 = por %p315, %p316
      %p318 = scmp.ne.s32.totalorder %s310, %s313
      %p319 = scmp.eq.s32.totalorder %s22, 0
      %p320 = por %p318, %p319
      %p321 = scmp.ne.s32.totalorder %s310, %s313
      %p322 = scmp.eq.s32.totalorder %s27, 1
      %p323 = por %p321, %p322
      %p324 = scmp.ne.s32.totalorder %s313, %s314
      %p325 = scmp.eq.s32.totalorder %s27, 0
      %p326 = por %p324, %p325
      %p327 = scmp.ne.s32.totalorder %s313, %s314
      %p328 = scmp.eq.s32.totalorder %s28, 1
      %p329 = por %p327, %p328
      %p331 = scmp.ne.s32.totalorder %s314, %s330
      %p332 = scmp.eq.s32.totalorder %s28, 0
      %p333 = por %p331, %p332
      %p334 = scmp.le.s32.totalorder 1, %s22
      %p335 = scmp.lt.s32.totalorder %s22, 3
      %p336 = pnand %p334, %p335
      %p337 = pneg %p336
      // Predicated region
      $region9: #{forward.1} parent=5 // pred_check
        _
      $region10: #{forward.1} parent=5 // pred_check_branch
        %339 = sbr.rel (%p336) target = $region12
      $region11: #{forward.1} parent=5 // pred_region
        %s340 = ssub.s32 %s22, 1
        // Predicated region
        $region13: #{forward.1} parent=11 // pred_check
          %p341 = pneg %p69
        $region14: #{forward.1} parent=11 // pred_check_branch
          %343 = sbr.rel (%p341) target = $region16
        $region15: #{forward.1} parent=11 // pred_region
          _
        $region16: #{forward.1} parent=11 // pred_fallthru
          _
        // Predicated region
        $region17: #{forward.1} parent=11 // pred_check
          %p344 = pneg %p90
        $region18: #{forward.1} parent=11 // pred_check_branch
          %346 = sbr.rel (%p344) target = $region20
        $region19: #{forward.1} parent=11 // pred_region
          _
        $region20: #{forward.1} parent=11 // pred_fallthru
          _
        // Predicated region
        $region21: #{forward.1} parent=11 // pred_check
          %p347 = pneg %p111
        $region22: #{forward.1} parent=11 // pred_check_branch
          %349 = sbr.rel (%p347) target = $region24
        $region23: #{forward.1} parent=11 // pred_region
          _
        $region24: #{forward.1} parent=11 // pred_fallthru
          _
        // Predicated region
        $region25: #{forward.1} parent=11 // pred_check
          %p350 = pneg %p132
        $region26: #{forward.1} parent=11 // pred_check_branch
          %352 = sbr.rel (%p350) target = $region28
        $region27: #{forward.1} parent=11 // pred_region
          _
        $region28: #{forward.1} parent=11 // pred_fallthru
          _
        // Predicated region
        $region29: #{forward.1} parent=11 // pred_check
          %p353 = pneg %p153
        $region30: #{forward.1} parent=11 // pred_check_branch
          %355 = sbr.rel (%p353) target = $region32
        $region31: #{forward.1} parent=11 // pred_region
          _
        $region32: #{forward.1} parent=11 // pred_fallthru
          _
        // Predicated region
        $region33: #{forward.1} parent=11 // pred_check
          %p356 = pneg %p174
        $region34: #{forward.1} parent=11 // pred_check_branch
          %358 = sbr.rel (%p356) target = $region36
        $region35: #{forward.1} parent=11 // pred_region
          _
        $region36: #{forward.1} parent=11 // pred_fallthru
          _
        // Predicated region
        $region37: #{forward.1} parent=11 // pred_check
          %p359 = pneg %p195
        $region38: #{forward.1} parent=11 // pred_check_branch
          %361 = sbr.rel (%p359) target = $region40
        $region39: #{forward.1} parent=11 // pred_region
          _
        $region40: #{forward.1} parent=11 // pred_fallthru
          _
        // Predicated region
        $region41: #{forward.1} parent=11 // pred_check
          %p362 = pneg %p216
        $region42: #{forward.1} parent=11 // pred_check_branch
          %364 = sbr.rel (%p362) target = $region44
        $region43: #{forward.1} parent=11 // pred_region
          _
        $region44: #{forward.1} parent=11 // pred_fallthru
          _
        // Predicated region
        $region45: #{forward.1} parent=11 // pred_check
          %p365 = pneg %p237
        $region46: #{forward.1} parent=11 // pred_check_branch
          %367 = sbr.rel (%p365) target = $region48
        $region47: #{forward.1} parent=11 // pred_region
          _
        $region48: #{forward.1} parent=11 // pred_fallthru
          _
        // Predicated region
        $region49: #{forward.1} parent=11 // pred_check
          %p368 = pneg %p258
        $region50: #{forward.1} parent=11 // pred_check_branch
          %370 = sbr.rel (%p368) target = $region52
        $region51: #{forward.1} parent=11 // pred_region
          _
        $region52: #{forward.1} parent=11 // pred_fallthru
          _
        // Predicated region
        $region53: #{forward.1} parent=11 // pred_check
          %p371 = pneg %p279
        $region54: #{forward.1} parent=11 // pred_check_branch
          %373 = sbr.rel (%p371) target = $region56
        $region55: #{forward.1} parent=11 // pred_region
          _
        $region56: #{forward.1} parent=11 // pred_fallthru
          _
        // Predicated region
        $region57: #{forward.1} parent=11 // pred_check
          %p374 = pneg %p300
        $region58: #{forward.1} parent=11 // pred_check_branch
          %376 = sbr.rel (%p374) target = $region60
        $region59: #{forward.1} parent=11 // pred_region
          _
        $region60: #{forward.1} parent=11 // pred_fallthru
          _
      $region12: #{forward.1} parent=5 // pred_fallthru
        _
      %p377 = scmp.lt.s32.totalorder %s22, 2
      // Predicated region
      $region61: #{forward.1} parent=5 // pred_check
        %p378 = pneg %p377
      $region62: #{forward.1} parent=5 // pred_check_branch
        %380 = sbr.rel (%p378) target = $region64
      $region63: #{forward.1} parent=5 // pred_region
        // Predicated region
        $region65: #{forward.1} parent=63 // pred_check
          %p381 = pneg %p42
        $region66: #{forward.1} parent=63 // pred_check_branch
          %383 = sbr.rel (%p381) target = $region68
        $region67: #{forward.1} parent=63 // pred_region
          %p384 = scmp.lt.s32.totalorder %s22, 1
          %s385 = scalar_select %p384, %s22, 1
          %s386 = smul.addr %s385, 32
          %s387 = smul.addr %s386, 4
          %s388 = scalar_lea.vmem %s0, %s387
        $region68: #{forward.1} parent=63 // pred_fallthru
          _
      $region64: #{forward.1} parent=5 // pred_fallthru
        _
      %p389 = scmp.le.s32.totalorder 1, %s22
      %p390 = scmp.lt.s32.totalorder %s22, 3
      %p391 = pnand %p389, %p390
      %p392 = pneg %p391
      // Predicated region
      $region69: #{forward.1} parent=5 // pred_check
        _
      $region70: #{forward.1} parent=5 // pred_check_branch
        %394 = sbr.rel (%p391) target = $region72
      $region71: #{forward.1} parent=5 // pred_region
        %s395 = ssub.s32 %s22, 1
        %p396 = scmp.lt.s32.totalorder %s27, 1
        %s397 = scalar_select %p396, %s27, 1
        %s398 = smul.addr %s397, 32
        %s399 = smul.addr %s398, 4
        %s400 = scalar_lea.vmem %s0, %s399
        %p401 = pneg %p48
        %p402 = pneg %p45
        %p403 = pneg %p69
        %p404 = pneg %p66
        %p405 = pneg %p90
        %p406 = pneg %p87
        %p407 = pneg %p111
        %p408 = pneg %p108
        %p409 = pneg %p132
        %p410 = pneg %p129
        %p411 = pneg %p153
        %p412 = pneg %p150
        %p413 = pneg %p174
        %p414 = pneg %p171
        %p415 = pneg %p195
        %p416 = pneg %p192
        %p417 = pneg %p216
        %p418 = pneg %p213
        %p419 = pneg %p237
        %p420 = pneg %p234
        %p421 = pneg %p258
        %p422 = pneg %p255
        %p423 = pneg %p279
        %p424 = pneg %p276
        %p425 = pneg %p300
        %p426 = pneg %p297
        %p427 = pneg %p326
        %p428 = pneg %p323
        %s429 = sand.u32 %s313, 1
        %s430 = scalar_lea.sflag [#allocation5], %s429
        %s431 = sand.u32 %s313, 1
        %s432 = smul.addr %s431, 256
        %s433 = scalar_lea.vmem [#allocation4], %s432
        %p434 = scmp.lt.s32.totalorder %s27, 1
        %s435 = scalar_select %p434, %s27, 1
        %s436 = smul.addr %s435, 32
        %s437 = smul.addr %s436, 4
        %s438 = scalar_lea.vmem %s0, %s437
        %440 = vst [vmem:[#allocation2] sm:$0xf] 0
        %441 = vst [vmem:[#allocation2 + $0x4] sm:$0xf] 0
        %442 = vst [vmem:[#allocation2 + $0x8] sm:$0x1] 0
        %443 = vst [vmem:[#allocation2 + $0xc] sm:$0xf] 0
        %444 = vst [vmem:[#allocation2 + $0x10] sm:$0xf] 0
        %445 = vst [vmem:[#allocation2 + $0x14] sm:$0x1] 0
        %446 = vst [vmem:[#allocation2 + $0x18] sm:$0xf] 0
        %447 = vst [vmem:[#allocation2 + $0x1c] sm:$0xf] 0
        %448 = vst [vmem:[#allocation2 + $0x20] sm:$0x1] 0
        %449 = vst [vmem:[#allocation2 + $0x24] sm:$0xf] 0
        %450 = vst [vmem:[#allocation2 + $0x28] sm:$0xf] 0
        %451 = vst [vmem:[#allocation2 + $0x2c] sm:$0x1] 0
        %452 = vst [vmem:[#allocation2 + $0x30] sm:$0xf] 0
        %453 = vst [vmem:[#allocation2 + $0x34] sm:$0xf] 0
        %454 = vst [vmem:[#allocation2 + $0x38] sm:$0x1] 0
        %455 = vst [vmem:[#allocation2 + $0x3c] sm:$0xf] 0
        %456 = vst [vmem:[#allocation2 + $0x40] sm:$0xf] 0
        %457 = vst [vmem:[#allocation2 + $0x44] sm:$0x1] 0
        %458 = vst [vmem:[#allocation2 + $0x48] sm:$0xf] 0
        %459 = vst [vmem:[#allocation2 + $0x4c] sm:$0xf] 0
        %460 = vst [vmem:[#allocation2 + $0x50] sm:$0x1] 0
        %461 = vst [vmem:[#allocation2 + $0x54] sm:$0xf] 0
        %462 = vst [vmem:[#allocation2 + $0x58] sm:$0xf] 0
        %463 = vst [vmem:[#allocation2 + $0x5c] sm:$0x1] 0
        %464 = vst [vmem:[#allocation2 + $0x60] sm:$0xf] 0
        %465 = vst [vmem:[#allocation2 + $0x64] sm:$0xf] 0
        %466 = vst [vmem:[#allocation2 + $0x68] sm:$0x1] 0
        %467 = vst [vmem:[#allocation2 + $0x6c] sm:$0xf] 0
        %468 = vst [vmem:[#allocation2 + $0x70] sm:$0xf] 0
        %469 = vst [vmem:[#allocation2 + $0x74] sm:$0x1] 0
        %470 = vst [vmem:[#allocation2 + $0x78] sm:$0xf] 0
        %471 = vst [vmem:[#allocation2 + $0x7c] sm:$0xf] 0
        %472 = vst [vmem:[#allocation2 + $0x80] sm:$0x1] 0
        %473 = vst [vmem:[#allocation2 + $0x84] sm:$0xf] 0
        %474 = vst [vmem:[#allocation2 + $0x88] sm:$0xf] 0
        %475 = vst [vmem:[#allocation2 + $0x8c] sm:$0x1] 0
        %476 = vst [vmem:[#allocation2 + $0x90] sm:$0xf] 0
        %477 = vst [vmem:[#allocation2 + $0x94] sm:$0xf] 0
        %478 = vst [vmem:[#allocation2 + $0x98] sm:$0x1] 0
        %479 = vst [vmem:[#allocation2 + $0x9c] sm:$0xf] 0
        %480 = vst [vmem:[#allocation2 + $0xa0] sm:$0xf] 0
        %481 = vst [vmem:[#allocation2 + $0xa4] sm:$0x1] 0
        %482 = vst [vmem:[#allocation2 + $0xa8] sm:$0xf] 0
        %483 = vst [vmem:[#allocation2 + $0xac] sm:$0xf] 0
        %484 = vst [vmem:[#allocation2 + $0xb0] sm:$0x1] 0
        %485 = vst [vmem:[#allocation2 + $0xb4] sm:$0xf] 0
        %486 = vst [vmem:[#allocation2 + $0xb8] sm:$0xf] 0
        %487 = vst [vmem:[#allocation2 + $0xbc] sm:$0x1] 0
        %488 = vst [vmem:[#allocation2 + $0xc0] sm:$0xf] 0
        %489 = vst [vmem:[#allocation2 + $0xc4] sm:$0xf] 0
        %490 = vst [vmem:[#allocation2 + $0xc8] sm:$0x1] 0
        %491 = vst [vmem:[#allocation2 + $0xcc] sm:$0xf] 0
        %492 = vst [vmem:[#allocation2 + $0xd0] sm:$0xf] 0
        %493 = vst [vmem:[#allocation2 + $0xd4] sm:$0x1] 0
        %v494 = vld [vmem:[%s438] sm:$0xf]
        %v495 = vld [vmem:[%s438 + $0x4] sm:$0xf]
        %v496 = vld [vmem:[%s438 + $0x8] sm:$0xf]
        %v497 = vld [vmem:[%s438 + $0xc] sm:$0xf]
        %v498 = vld [vmem:[%s438 + $0x10] sm:$0xf]
        %v499 = vld [vmem:[%s438 + $0x14] sm:$0xf]
        %v500 = vld [vmem:[%s438 + $0x18] sm:$0xf]
        %v501 = vld [vmem:[%s438 + $0x1c] sm:$0xf]
        %v502 = vld [vmem:[%s438 + $0x20] sm:$0xf]
        %v503 = vld [vmem:[%s438 + $0x24] sm:$0xf]
        %v504 = vld [vmem:[%s438 + $0x28] sm:$0xf]
        %v505 = vld [vmem:[%s438 + $0x2c] sm:$0xf]
        %v506 = vld [vmem:[%s438 + $0x30] sm:$0xf]
        %v507 = vld [vmem:[%s438 + $0x34] sm:$0xf]
        %v508 = vld [vmem:[%s438 + $0x38] sm:$0xf]
        %v509 = vld [vmem:[%s438 + $0x3c] sm:$0xf]
        %v510 = vld [vmem:[%s438 + $0x40] sm:$0xf]
        %v511 = vld [vmem:[%s438 + $0x44] sm:$0xf]
        %v512 = vld [vmem:[%s438 + $0x48] sm:$0xf]
        %v513 = vld [vmem:[%s438 + $0x4c] sm:$0xf]
        %v514 = vld [vmem:[%s438 + $0x50] sm:$0xf]
        %v515 = vld [vmem:[%s438 + $0x54] sm:$0xf]
        %v516 = vld [vmem:[%s438 + $0x58] sm:$0xf]
        %v517 = vld [vmem:[%s438 + $0x5c] sm:$0xf]
        %v518 = vld [vmem:[%s438 + $0x60] sm:$0xf]
        %v519 = vld [vmem:[%s438 + $0x64] sm:$0xf]
        %v520 = vld [vmem:[%s438 + $0x68] sm:$0xf]
        %v521 = vld [vmem:[%s438 + $0x6c] sm:$0xf]
        %v522 = vld [vmem:[%s438 + $0x70] sm:$0xf]
        %v523 = vld [vmem:[%s438 + $0x74] sm:$0xf]
        %v524 = vld [vmem:[%s438 + $0x78] sm:$0xf]
        %v525 = vld [vmem:[%s438 + $0x7c] sm:$0xf]
        %v526 = vld [vmem:[%s1] sm:$0xf]
        %v527 = vld [vmem:[%s1 + $0x4] sm:$0xf]
        %v528 = vld [vmem:[%s1 + $0x8] sm:$0xf]
        %v529 = vld [vmem:[%s1 + $0xc] sm:$0xf]
        %v530 = vld [vmem:[%s1 + $0x10] sm:$0xf]
        %v531 = vld [vmem:[%s1 + $0x14] sm:$0xf]
        %v532 = vld [vmem:[%s1 + $0x18] sm:$0xf]
        %v533 = vld [vmem:[%s1 + $0x1c] sm:$0xf]
        %v566 = vunpack.c.l.b16 %v494
        %v567 = vunpack.c.l.b16 %v495
        %v568 = vunpack.c.l.b16 %v496
        %v569 = vunpack.c.l.b16 %v497
        %v570 = vunpack.c.l.b16 %v498
        %v571 = vunpack.c.l.b16 %v499
        %v572 = vunpack.c.l.b16 %v500
        %v573 = vunpack.c.l.b16 %v501
        %v574 = vunpack.c.l.b16 %v502
        %v575 = vunpack.c.l.b16 %v503
        %v576 = vunpack.c.l.b16 %v504
        %v577 = vunpack.c.l.b16 %v505
        %v578 = vunpack.c.l.b16 %v506
        %v579 = vunpack.c.l.b16 %v507
        %v580 = vunpack.c.l.b16 %v508
        %v581 = vunpack.c.l.b16 %v509
        %v582 = vunpack.c.l.b16 %v510
        %v583 = vunpack.c.l.b16 %v511
        %v584 = vunpack.c.l.b16 %v512
        %v585 = vunpack.c.l.b16 %v513
        %v586 = vunpack.c.l.b16 %v514
        %v587 = vunpack.c.l.b16 %v515
        %v588 = vunpack.c.l.b16 %v516
        %v589 = vunpack.c.l.b16 %v517
        %v590 = vunpack.c.l.b16 %v518
        %v591 = vunpack.c.l.b16 %v519
        %v592 = vunpack.c.l.b16 %v520
        %v593 = vunpack.c.l.b16 %v521
        %v594 = vunpack.c.l.b16 %v522
        %v595 = vunpack.c.l.b16 %v523
        %v596 = vunpack.c.l.b16 %v524
        %v597 = vunpack.c.l.b16 %v525
        %v598 = vpack.c.b16 %v567, %v566
        %v599 = vpack.c.b16 %v569, %v568
        %v600 = vpack.c.b16 %v571, %v570
        %v601 = vpack.c.b16 %v573, %v572
        %v602 = vpack.c.b16 %v575, %v574
        %v603 = vpack.c.b16 %v577, %v576
        %v604 = vpack.c.b16 %v579, %v578
        %v605 = vpack.c.b16 %v581, %v580
        %v606 = vpack.c.b16 %v583, %v582
        %v607 = vpack.c.b16 %v585, %v584
        %v608 = vpack.c.b16 %v587, %v586
        %v609 = vpack.c.b16 %v589, %v588
        %v610 = vpack.c.b16 %v591, %v590
        %v611 = vpack.c.b16 %v593, %v592
        %v612 = vpack.c.b16 %v595, %v594
        %v613 = vpack.c.b16 %v597, %v596
        %v622 = vunpack.c.l.b16 %v526
        %v623 = vunpack.c.l.b16 %v527
        %v624 = vunpack.c.l.b16 %v528
        %v625 = vunpack.c.l.b16 %v529
        %v626 = vunpack.c.l.b16 %v530
        %v627 = vunpack.c.l.b16 %v531
        %v628 = vunpack.c.l.b16 %v532
        %v629 = vunpack.c.l.b16 %v533
        %v630 = vpack.c.b16 %v623, %v622
        %v631 = vpack.c.b16 %v625, %v624
        %v632 = vpack.c.b16 %v627, %v626
        %v633 = vpack.c.b16 %v629, %v628
        %vm638 = vcmask 523264
        %v640 = vsel %vm638, %v598, 0
        %v643 = vsel %vm638, %v599, 0
        %v646 = vsel %vm638, %v600, 0
        %v649 = vsel %vm638, %v601, 0
        %v652 = vsel %vm638, %v602, 0
        %v655 = vsel %vm638, %v603, 0
        %v658 = vsel %vm638, %v604, 0
        %v661 = vsel %vm638, %v605, 0
        %v664 = vsel %vm638, %v606, 0
        %v667 = vsel %vm638, %v607, 0
        %v670 = vsel %vm638, %v608, 0
        %v673 = vsel %vm638, %v609, 0
        %v676 = vsel %vm638, %v610, 0
        %v679 = vsel %vm638, %v611, 0
        %v682 = vsel %vm638, %v612, 0
        %v685 = vsel %vm638, %v613, 0
        %687 = vmatprep.subr.bf16.mxu0 0
        %688 = vmatpush1.bf16.msra.mxu0 %v630
        %689 = vmatprep.subr.bf16.mxu0 0
        %690 = vmatpush1.bf16.msra.mxu0 %v631
        %691 = vmatprep.subr.bf16.mxu0 0
        %692 = vmatpush1.bf16.msra.mxu0 %v632
        %693 = vmatprep.subr.bf16.mxu0 0
        %694 = vmatpush1.bf16.msra.mxu0 %v633
        %695 = vmatprep.subr.bf16.mxu0 0
        %696 = vmatpush1.bf16.msra.mxu0 0
        %697 = vmatprep.subr.bf16.mxu0 0
        %698 = vmatpush1.bf16.msra.mxu0 0
        %699 = vmatprep.subr.bf16.mxu0 0
        %700 = vmatpush1.bf16.msra.mxu0 0
        %701 = vmatprep.subr.bf16.mxu0 0
        %702 = vmatpush1.bf16.msra.mxu0 0
        %703 = vmatprep.subr.bf16.mxu0 0
        %704 = vmatpush1.bf16.msra.mxu0 0
        %705 = vmatprep.subr.bf16.mxu0 0
        %706 = vmatpush1.bf16.msra.mxu0 0
        %707 = vmatprep.subr.bf16.mxu0 0
        %708 = vmatpush1.bf16.msra.mxu0 0
        %709 = vmatprep.subr.bf16.mxu0 0
        %710 = vmatpush1.bf16.msra.mxu0 0
        %711 = vmatprep.subr.bf16.mxu0 0
        %712 = vmatpush1.bf16.msra.mxu0 0
        %713 = vmatprep.subr.bf16.mxu0 0
        %714 = vmatpush1.bf16.msra.mxu0 0
        %715 = vmatprep.subr.bf16.mxu0 0
        %716 = vmatpush1.bf16.msra.mxu0 0
        %717 = vmatprep.subr.bf16.mxu0 0
        %718 = vmatpush1.bf16.msra.mxu0 0
        %719 = vmatprep.mubr.bf16.mxu0 0
        %720 = vmatmul.mubr.bf16.gmra.mrb[0].mxu0 %v640
        %v721 = vpop.f32.mrb[0].mxu0
        %v722 = vadd.f32 0.0, %v721
        %v723 = vpop.f32.mrb[0].mxu0
        %v724 = vpop.f32.mrb[0].mxu0
        %v725 = vadd.f32 0.0, %v724
        %v726 = vpop.f32.mrb[0].mxu0
        %727 = vmatprep.mubr.bf16.mxu0 0
        %728 = vmatmul.mubr.bf16.gmra.mrb[0].mxu0 %v643
        %v729 = vpop.f32.mrb[0].mxu0
        %v730 = vadd.f32 0.0, %v729
        %v731 = vpop.f32.mrb[0].mxu0
        %v732 = vpop.f32.mrb[0].mxu0
        %v733 = vadd.f32 0.0, %v732
        %v734 = vpop.f32.mrb[0].mxu0
        %735 = vmatprep.mubr.bf16.mxu0 0
        %736 = vmatmul.mubr.bf16.gmra.mrb[0].mxu0 %v646
        %v737 = vpop.f32.mrb[0].mxu0
        %v738 = vadd.f32 0.0, %v737
        %v739 = vpop.f32.mrb[0].mxu0
        %v740 = vpop.f32.mrb[0].mxu0
        %v741 = vadd.f32 0.0, %v740
        %v742 = vpop.f32.mrb[0].mxu0
        %743 = vmatprep.mubr.bf16.mxu0 0
        %744 = vmatmul.mubr.bf16.gmra.mrb[0].mxu0 %v649
        %v745 = vpop.f32.mrb[0].mxu0
        %v746 = vadd.f32 0.0, %v745
        %v747 = vpop.f32.mrb[0].mxu0
        %v748 = vpop.f32.mrb[0].mxu0
        %v749 = vadd.f32 0.0, %v748
        %v750 = vpop.f32.mrb[0].mxu0
        %751 = vmatprep.mubr.bf16.mxu0 0
        %752 = vmatmul.mubr.bf16.gmra.mrb[0].mxu0 %v652
        %v753 = vpop.f32.mrb[0].mxu0
        %v754 = vadd.f32 0.0, %v753
        %v755 = vpop.f32.mrb[0].mxu0
        %v756 = vpop.f32.mrb[0].mxu0
        %v757 = vadd.f32 0.0, %v756
        %v758 = vpop.f32.mrb[0].mxu0
        %759 = vmatprep.mubr.bf16.mxu0 0
        %760 = vmatmul.mubr.bf16.gmra.mrb[0].mxu0 %v655
        %v761 = vpop.f32.mrb[0].mxu0
        %v762 = vadd.f32 0.0, %v761
        %v763 = vpop.f32.mrb[0].mxu0
        %v764 = vpop.f32.mrb[0].mxu0
        %v765 = vadd.f32 0.0, %v764
        %v766 = vpop.f32.mrb[0].mxu0
        %767 = vmatprep.mubr.bf16.mxu0 0
        %768 = vmatmul.mubr.bf16.gmra.mrb[0].mxu0 %v658
        %v769 = vpop.f32.mrb[0].mxu0
        %v770 = vadd.f32 0.0, %v769
        %v771 = vpop.f32.mrb[0].mxu0
        %v772 = vpop.f32.mrb[0].mxu0
        %v773 = vadd.f32 0.0, %v772
        %v774 = vpop.f32.mrb[0].mxu0
        %775 = vmatprep.mubr.bf16.mxu0 0
        %776 = vmatmul.mubr.bf16.gmra.mrb[0].mxu0 %v661
        %v777 = vpop.f32.mrb[0].mxu0
        %v778 = vadd.f32 0.0, %v777
        %v779 = vpop.f32.mrb[0].mxu0
        %v780 = vpop.f32.mrb[0].mxu0
        %v781 = vadd.f32 0.0, %v780
        %v782 = vpop.f32.mrb[0].mxu0
        %783 = vmatprep.mubr.bf16.mxu0 0
        %784 = vmatmul.mubr.bf16.gmra.mrb[0].mxu0 %v664
        %v785 = vpop.f32.mrb[0].mxu0
        %v786 = vadd.f32 0.0, %v785
        %v787 = vpop.f32.mrb[0].mxu0
        %v788 = vpop.f32.mrb[0].mxu0
        %v789 = vadd.f32 0.0, %v788
        %v790 = vpop.f32.mrb[0].mxu0
        %791 = vmatprep.mubr.bf16.mxu0 0
        %792 = vmatmul.mubr.bf16.gmra.mrb[0].mxu0 %v667
        %v793 = vpop.f32.mrb[0].mxu0
        %v794 = vadd.f32 0.0, %v793
        %v795 = vpop.f32.mrb[0].mxu0
        %v796 = vpop.f32.mrb[0].mxu0
        %v797 = vadd.f32 0.0, %v796
        %v798 = vpop.f32.mrb[0].mxu0
        %799 = vmatprep.mubr.bf16.mxu0 0
        %800 = vmatmul.mubr.bf16.gmra.mrb[0].mxu0 %v670
        %v801 = vpop.f32.mrb[0].mxu0
        %v802 = vadd.f32 0.0, %v801
        %v803 = vpop.f32.mrb[0].mxu0
        %v804 = vpop.f32.mrb[0].mxu0
        %v805 = vadd.f32 0.0, %v804
        %v806 = vpop.f32.mrb[0].mxu0
        %807 = vmatprep.mubr.bf16.mxu0 0
        %808 = vmatmul.mubr.bf16.gmra.mrb[0].mxu0 %v673
        %v809 = vpop.f32.mrb[0].mxu0
        %v810 = vadd.f32 0.0, %v809
        %v811 = vpop.f32.mrb[0].mxu0
        %v812 = vpop.f32.mrb[0].mxu0
        %v813 = vadd.f32 0.0, %v812
        %v814 = vpop.f32.mrb[0].mxu0
        %815 = vmatprep.mubr.bf16.mxu0 0
        %816 = vmatmul.mubr.bf16.gmra.mrb[0].mxu0 %v676
        %v817 = vpop.f32.mrb[0].mxu0
        %v818 = vadd.f32 0.0, %v817
        %v819 = vpop.f32.mrb[0].mxu0
        %v820 = vpop.f32.mrb[0].mxu0
        %v821 = vadd.f32 0.0, %v820
        %v822 = vpop.f32.mrb[0].mxu0
        %823 = vmatprep.mubr.bf16.mxu0 0
        %824 = vmatmul.mubr.bf16.gmra.mrb[0].mxu0 %v679
        %v825 = vpop.f32.mrb[0].mxu0
        %v826 = vadd.f32 0.0, %v825
        %v827 = vpop.f32.mrb[0].mxu0
        %v828 = vpop.f32.mrb[0].mxu0
        %v829 = vadd.f32 0.0, %v828
        %v830 = vpop.f32.mrb[0].mxu0
        %831 = vmatprep.mubr.bf16.mxu0 0
        %832 = vmatmul.mubr.bf16.gmra.mrb[0].mxu0 %v682
        %v833 = vpop.f32.mrb[0].mxu0
        %v834 = vadd.f32 0.0, %v833
        %v835 = vpop.f32.mrb[0].mxu0
        %v836 = vpop.f32.mrb[0].mxu0
        %v837 = vadd.f32 0.0, %v836
        %v838 = vpop.f32.mrb[0].mxu0
        %839 = vmatprep.mubr.bf16.mxu0 0
        %840 = vmatmul.mubr.bf16.gmra.mrb[0].mxu0 %v685
        %v841 = vpop.f32.mrb[0].mxu0
        %v842 = vadd.f32 0.0, %v841
        %v843 = vpop.f32.mrb[0].mxu0
        %v844 = vpop.f32.mrb[0].mxu0
        %v845 = vadd.f32 0.0, %v844
        %v846 = vpop.f32.mrb[0].mxu0
        %847 = vdwg.mxu0
        %v848 = vld [vmem:[%s2] sm:$0x1]
        %v850 = vlaneseq
        %v851 = vshrl.u32 %v850, 7
        %v852 = vsub.s32 0, %v851
        %v853 = vrot.slane %v848, %v852
        %v855 = vmul.f32 %v722, %v853
        %v856 = vmul.f32 %v725, %v853
        %v857 = vmul.f32 %v730, %v853
        %v858 = vmul.f32 %v733, %v853
        %v859 = vmul.f32 %v738, %v853
        %v860 = vmul.f32 %v741, %v853
        %v861 = vmul.f32 %v746, %v853
        %v862 = vmul.f32 %v749, %v853
        %v863 = vmul.f32 %v754, %v853
        %v864 = vmul.f32 %v757, %v853
        %v865 = vmul.f32 %v762, %v853
        %v866 = vmul.f32 %v765, %v853
        %v867 = vmul.f32 %v770, %v853
        %v868 = vmul.f32 %v773, %v853
        %v869 = vmul.f32 %v778, %v853
        %v870 = vmul.f32 %v781, %v853
        %v871 = vmul.f32 %v786, %v853
        %v872 = vmul.f32 %v789, %v853
        %v873 = vmul.f32 %v794, %v853
        %v874 = vmul.f32 %v797, %v853
        %v875 = vmul.f32 %v802, %v853
        %v876 = vmul.f32 %v805, %v853
        %v877 = vmul.f32 %v810, %v853
        %v878 = vmul.f32 %v813, %v853
        %v879 = vmul.f32 %v818, %v853
        %v880 = vmul.f32 %v821, %v853
        %v881 = vmul.f32 %v826, %v853
        %v882 = vmul.f32 %v829, %v853
        %v883 = vmul.f32 %v834, %v853
        %v884 = vmul.f32 %v837, %v853
        %v885 = vmul.f32 %v842, %v853
        %v886 = vmul.f32 %v845, %v853
        %v887 = vld [vmem:[%s3] sm:$0x1]
        %v889 = vlaneseq
        %v890 = vshrl.u32 %v889, 7
        %v891 = vsub.s32 0, %v890
        %v892 = vrot.slane %v887, %v891
        %v894 = vadd.f32 %v855, %v892
        %v895 = vadd.f32 %v856, %v892
        %v896 = vadd.f32 %v857, %v892
        %v897 = vadd.f32 %v858, %v892
        %v898 = vadd.f32 %v859, %v892
        %v899 = vadd.f32 %v860, %v892
        %v900 = vadd.f32 %v861, %v892
        %v901 = vadd.f32 %v862, %v892
        %v902 = vadd.f32 %v863, %v892
        %v903 = vadd.f32 %v864, %v892
        %v904 = vadd.f32 %v865, %v892
        %v905 = vadd.f32 %v866, %v892
        %v906 = vadd.f32 %v867, %v892
        %v907 = vadd.f32 %v868, %v892
        %v908 = vadd.f32 %v869, %v892
        %v909 = vadd.f32 %v870, %v892
        %v910 = vadd.f32 %v871, %v892
        %v911 = vadd.f32 %v872, %v892
        %v912 = vadd.f32 %v873, %v892
        %v913 = vadd.f32 %v874, %v892
        %v914 = vadd.f32 %v875, %v892
        %v915 = vadd.f32 %v876, %v892
        %v916 = vadd.f32 %v877, %v892
        %v917 = vadd.f32 %v878, %v892
        %v918 = vadd.f32 %v879, %v892
        %v919 = vadd.f32 %v880, %v892
        %v920 = vadd.f32 %v881, %v892
        %v921 = vadd.f32 %v882, %v892
        %v922 = vadd.f32 %v883, %v892
        %v923 = vadd.f32 %v884, %v892
        %v924 = vadd.f32 %v885, %v892
        %v925 = vadd.f32 %v886, %v892
        %v926 = vmax.f32 %v894, 0.0
        %v927 = vmax.f32 %v895, 0.0
        %v928 = vmax.f32 %v896, 0.0
        %v929 = vmax.f32 %v897, 0.0
        %v930 = vmax.f32 %v898, 0.0
        %v931 = vmax.f32 %v899, 0.0
        %v932 = vmax.f32 %v900, 0.0
        %v933 = vmax.f32 %v901, 0.0
        %v934 = vmax.f32 %v902, 0.0
        %v935 = vmax.f32 %v903, 0.0
        %v936 = vmax.f32 %v904, 0.0
        %v937 = vmax.f32 %v905, 0.0
        %v938 = vmax.f32 %v906, 0.0
        %v939 = vmax.f32 %v907, 0.0
        %v940 = vmax.f32 %v908, 0.0
        %v941 = vmax.f32 %v909, 0.0
        %v942 = vmax.f32 %v910, 0.0
        %v943 = vmax.f32 %v911, 0.0
        %v944 = vmax.f32 %v912, 0.0
        %v945 = vmax.f32 %v913, 0.0
        %v946 = vmax.f32 %v914, 0.0
        %v947 = vmax.f32 %v915, 0.0
        %v948 = vmax.f32 %v916, 0.0
        %v949 = vmax.f32 %v917, 0.0
        %v950 = vmax.f32 %v918, 0.0
        %v951 = vmax.f32 %v919, 0.0
        %v952 = vmax.f32 %v920, 0.0
        %v953 = vmax.f32 %v921, 0.0
        %v954 = vmax.f32 %v922, 0.0
        %v955 = vmax.f32 %v923, 0.0
        %v956 = vmax.f32 %v924, 0.0
        %v957 = vmax.f32 %v925, 0.0
        %v958 = vpack.c.bf16 %v927, %v926
        %v959 = vpack.c.bf16 %v929, %v928
        %v960 = vpack.c.bf16 %v931, %v930
        %v961 = vpack.c.bf16 %v933, %v932
        %v962 = vpack.c.bf16 %v935, %v934
        %v963 = vpack.c.bf16 %v937, %v936
        %v964 = vpack.c.bf16 %v939, %v938
        %v965 = vpack.c.bf16 %v941, %v940
        %v966 = vpack.c.bf16 %v943, %v942
        %v967 = vpack.c.bf16 %v945, %v944
        %v968 = vpack.c.bf16 %v947, %v946
        %v969 = vpack.c.bf16 %v949, %v948
        %v970 = vpack.c.bf16 %v951, %v950
        %v971 = vpack.c.bf16 %v953, %v952
        %v972 = vpack.c.bf16 %v955, %v954
        %v973 = vpack.c.bf16 %v957, %v956
        %v990 = vunpack.c.l.b16 %v958
        %v991 = vunpack.c.h.b16 %v958
        %v992 = vunpack.c.l.b16 %v959
        %v993 = vunpack.c.h.b16 %v959
        %v994 = vunpack.c.l.b16 %v960
        %v995 = vunpack.c.h.b16 %v960
        %v996 = vunpack.c.l.b16 %v961
        %v997 = vunpack.c.h.b16 %v961
        %v998 = vunpack.c.l.b16 %v962
        %v999 = vunpack.c.h.b16 %v962
        %v1000 = vunpack.c.l.b16 %v963
        %v1001 = vunpack.c.h.b16 %v963
        %v1002 = vunpack.c.l.b16 %v964
        %v1003 = vunpack.c.h.b16 %v964
        %v1004 = vunpack.c.l.b16 %v965
        %v1005 = vunpack.c.h.b16 %v965
        %v1006 = vunpack.c.l.b16 %v966
        %v1007 = vunpack.c.h.b16 %v966
        %v1008 = vunpack.c.l.b16 %v967
        %v1009 = vunpack.c.h.b16 %v967
        %v1010 = vunpack.c.l.b16 %v968
        %v1011 = vunpack.c.h.b16 %v968
        %v1012 = vunpack.c.l.b16 %v969
        %v1013 = vunpack.c.h.b16 %v969
        %v1014 = vunpack.c.l.b16 %v970
        %v1015 = vunpack.c.h.b16 %v970
        %v1016 = vunpack.c.l.b16 %v971
        %v1017 = vunpack.c.h.b16 %v971
        %v1018 = vunpack.c.l.b16 %v972
        %v1019 = vunpack.c.h.b16 %v972
        %v1020 = vunpack.c.l.b16 %v973
        %v1021 = vunpack.c.h.b16 %v973
        %v1022 = vpack.c.b16 %v990, %v990
        %v1023 = vpack.c.b16 %v991, %v991
        %v1024 = vpack.c.b16 %v992, %v992
        %v1025 = vpack.c.b16 %v993, %v993
        %v1026 = vpack.c.b16 %v994, %v994
        %v1027 = vpack.c.b16 %v995, %v995
        %v1028 = vpack.c.b16 %v996, %v996
        %v1029 = vpack.c.b16 %v997, %v997
        %v1030 = vpack.c.b16 %v998, %v998
        %v1031 = vpack.c.b16 %v999, %v999
        %v1032 = vpack.c.b16 %v1000, %v1000
        %v1033 = vpack.c.b16 %v1001, %v1001
        %v1034 = vpack.c.b16 %v1002, %v1002
        %v1035 = vpack.c.b16 %v1003, %v1003
        %v1036 = vpack.c.b16 %v1004, %v1004
        %v1037 = vpack.c.b16 %v1005, %v1005
        %v1038 = vpack.c.b16 %v1006, %v1006
        %v1039 = vpack.c.b16 %v1007, %v1007
        %v1040 = vpack.c.b16 %v1008, %v1008
        %v1041 = vpack.c.b16 %v1009, %v1009
        %v1042 = vpack.c.b16 %v1010, %v1010
        %v1043 = vpack.c.b16 %v1011, %v1011
        %v1044 = vpack.c.b16 %v1012, %v1012
        %v1045 = vpack.c.b16 %v1013, %v1013
        %v1046 = vpack.c.b16 %v1014, %v1014
        %v1047 = vpack.c.b16 %v1015, %v1015
        %v1048 = vpack.c.b16 %v1016, %v1016
        %v1049 = vpack.c.b16 %v1017, %v1017
        %v1050 = vpack.c.b16 %v1018, %v1018
        %v1051 = vpack.c.b16 %v1019, %v1019
        %v1052 = vpack.c.b16 %v1020, %v1020
        %v1053 = vpack.c.b16 %v1021, %v1021
        %vm1054 = vsmask.f32 256
        %vm1055 = vsmask.f32 4368
        %vm1056 = vmor %vm1054, %vm1055
        %v1058 = vshrl.u32 %v1022, 16
        %v1060 = vrot.slane %v1058, 7
        %v1061 = vshll.u32 %v1022, 16
        %v1063 = vor.u32 %v1060, %v1061
        %v1064 = vrot.slane %v1060, 4
        %v1066 = vshrl.u32 %v1023, 16
        %v1068 = vrot.slane %v1066, 7
        %v1069 = vshll.u32 %v1023, 16
        %v1071 = vor.u32 %v1068, %v1069
        %v1072 = vsel %vm1056, %v1064, %v1071
        %v1073 = vrot.slane %v1068, 4
        %v1075 = vshrl.u32 %v1024, 16
        %v1077 = vrot.slane %v1075, 7
        %v1078 = vshll.u32 %v1024, 16
        %v1080 = vor.u32 %v1077, %v1078
        %v1081 = vrot.slane %v1077, 4
        %v1083 = vshrl.u32 %v1025, 16
        %v1085 = vrot.slane %v1083, 7
        %v1086 = vshll.u32 %v1025, 16
        %v1088 = vor.u32 %v1085, %v1086
        %v1089 = vsel %vm1056, %v1081, %v1088
        %v1090 = vrot.slane %v1085, 4
        %v1092 = vshrl.u32 %v1026, 16
        %v1094 = vrot.slane %v1092, 7
        %v1095 = vshll.u32 %v1026, 16
        %v1097 = vor.u32 %v1094, %v1095
        %v1098 = vrot.slane %v1094, 4
        %v1100 = vshrl.u32 %v1027, 16
        %v1102 = vrot.slane %v1100, 7
        %v1103 = vshll.u32 %v1027, 16
        %v1105 = vor.u32 %v1102, %v1103
        %v1106 = vsel %vm1056, %v1098, %v1105
        %v1107 = vrot.slane %v1102, 4
        %v1109 = vshrl.u32 %v1028, 16
        %v1111 = vrot.slane %v1109, 7
        %v1112 = vshll.u32 %v1028, 16
        %v1114 = vor.u32 %v1111, %v1112
        %v1115 = vrot.slane %v1111, 4
        %v1117 = vshrl.u32 %v1029, 16
        %v1119 = vrot.slane %v1117, 7
        %v1120 = vshll.u32 %v1029, 16
        %v1122 = vor.u32 %v1119, %v1120
        %v1123 = vsel %vm1056, %v1115, %v1122
        %v1124 = vrot.slane %v1119, 4
        %v1126 = vshrl.u32 %v1030, 16
        %v1128 = vrot.slane %v1126, 7
        %v1129 = vshll.u32 %v1030, 16
        %v1131 = vor.u32 %v1128, %v1129
        %v1132 = vrot.slane %v1128, 4
        %v1134 = vshrl.u32 %v1031, 16
        %v1136 = vrot.slane %v1134, 7
        %v1137 = vshll.u32 %v1031, 16
        %v1139 = vor.u32 %v1136, %v1137
        %v1140 = vsel %vm1056, %v1132, %v1139
        %v1141 = vrot.slane %v1136, 4
        %v1143 = vshrl.u32 %v1032, 16
        %v1145 = vrot.slane %v1143, 7
        %v1146 = vshll.u32 %v1032, 16
        %v1148 = vor.u32 %v1145, %v1146
        %v1149 = vrot.slane %v1145, 4
        %v1151 = vshrl.u32 %v1033, 16
        %v1153 = vrot.slane %v1151, 7
        %v1154 = vshll.u32 %v1033, 16
        %v1156 = vor.u32 %v1153, %v1154
        %v1157 = vsel %vm1056, %v1149, %v1156
        %v1158 = vrot.slane %v1153, 4
        %v1160 = vshrl.u32 %v1034, 16
        %v1162 = vrot.slane %v1160, 7
        %v1163 = vshll.u32 %v1034, 16
        %v1165 = vor.u32 %v1162, %v1163
        %v1166 = vrot.slane %v1162, 4
        %v1168 = vshrl.u32 %v1035, 16
        %v1170 = vrot.slane %v1168, 7
        %v1171 = vshll.u32 %v1035, 16
        %v1173 = vor.u32 %v1170, %v1171
        %v1174 = vsel %vm1056, %v1166, %v1173
        %v1175 = vrot.slane %v1170, 4
        %v1177 = vshrl.u32 %v1036, 16
        %v1179 = vrot.slane %v1177, 7
        %v1180 = vshll.u32 %v1036, 16
        %v1182 = vor.u32 %v1179, %v1180
        %v1183 = vrot.slane %v1179, 4
        %v1185 = vshrl.u32 %v1037, 16
        %v1187 = vrot.slane %v1185, 7
        %v1188 = vshll.u32 %v1037, 16
        %v1190 = vor.u32 %v1187, %v1188
        %v1191 = vsel %vm1056, %v1183, %v1190
        %v1192 = vrot.slane %v1187, 4
        %v1194 = vshrl.u32 %v1038, 16
        %v1196 = vrot.slane %v1194, 7
        %v1197 = vshll.u32 %v1038, 16
        %v1199 = vor.u32 %v1196, %v1197
        %v1200 = vrot.slane %v1196, 4
        %v1202 = vshrl.u32 %v1039, 16
        %v1204 = vrot.slane %v1202, 7
        %v1205 = vshll.u32 %v1039, 16
        %v1207 = vor.u32 %v1204, %v1205
        %v1208 = vsel %vm1056, %v1200, %v1207
        %v1209 = vrot.slane %v1204, 4
        %v1211 = vshrl.u32 %v1040, 16
        %v1213 = vrot.slane %v1211, 7
        %v1214 = vshll.u32 %v1040, 16
        %v1216 = vor.u32 %v1213, %v1214
        %v1217 = vrot.slane %v1213, 4
        %v1219 = vshrl.u32 %v1041, 16
        %v1221 = vrot.slane %v1219, 7
        %v1222 = vshll.u32 %v1041, 16
        %v1224 = vor.u32 %v1221, %v1222
        %v1225 = vsel %vm1056, %v1217, %v1224
        %v1226 = vrot.slane %v1221, 4
        %v1228 = vshrl.u32 %v1042, 16
        %v1230 = vrot.slane %v1228, 7
        %v1231 = vshll.u32 %v1042, 16
        %v1233 = vor.u32 %v1230, %v1231
        %v1234 = vrot.slane %v1230, 4
        %v1236 = vshrl.u32 %v1043, 16
        %v1238 = vrot.slane %v1236, 7
        %v1239 = vshll.u32 %v1043, 16
        %v1241 = vor.u32 %v1238, %v1239
        %v1242 = vsel %vm1056, %v1234, %v1241
        %v1243 = vrot.slane %v1238, 4
        %v1245 = vshrl.u32 %v1044, 16
        %v1247 = vrot.slane %v1245, 7
        %v1248 = vshll.u32 %v1044, 16
        %v1250 = vor.u32 %v1247, %v1248
        %v1251 = vrot.slane %v1247, 4
        %v1253 = vshrl.u32 %v1045, 16
        %v1255 = vrot.slane %v1253, 7
        %v1256 = vshll.u32 %v1045, 16
        %v1258 = vor.u32 %v1255, %v1256
        %v1259 = vsel %vm1056, %v1251, %v1258
        %v1260 = vrot.slane %v1255, 4
        %v1262 = vshrl.u32 %v1046, 16
        %v1264 = vrot.slane %v1262, 7
        %v1265 = vshll.u32 %v1046, 16
        %v1267 = vor.u32 %v1264, %v1265
        %v1268 = vrot.slane %v1264, 4
        %v1270 = vshrl.u32 %v1047, 16
        %v1272 = vrot.slane %v1270, 7
        %v1273 = vshll.u32 %v1047, 16
        %v1275 = vor.u32 %v1272, %v1273
        %v1276 = vsel %vm1056, %v1268, %v1275
        %v1277 = vrot.slane %v1272, 4
        %v1279 = vshrl.u32 %v1048, 16
        %v1281 = vrot.slane %v1279, 7
        %v1282 = vshll.u32 %v1048, 16
        %v1284 = vor.u32 %v1281, %v1282
        %v1285 = vrot.slane %v1281, 4
        %v1287 = vshrl.u32 %v1049, 16
        %v1289 = vrot.slane %v1287, 7
        %v1290 = vshll.u32 %v1049, 16
        %v1292 = vor.u32 %v1289, %v1290
        %v1293 = vsel %vm1056, %v1285, %v1292
        %v1294 = vrot.slane %v1289, 4
        %v1296 = vshrl.u32 %v1050, 16
        %v1298 = vrot.slane %v1296, 7
        %v1299 = vshll.u32 %v1050, 16
        %v1301 = vor.u32 %v1298, %v1299
        %v1302 = vrot.slane %v1298, 4
        %v1304 = vshrl.u32 %v1051, 16
        %v1306 = vrot.slane %v1304, 7
        %v1307 = vshll.u32 %v1051, 16
        %v1309 = vor.u32 %v1306, %v1307
        %v1310 = vsel %vm1056, %v1302, %v1309
        %v1311 = vrot.slane %v1306, 4
        %v1313 = vshrl.u32 %v1052, 16
        %v1315 = vrot.slane %v1313, 7
        %v1316 = vshll.u32 %v1052, 16
        %v1318 = vor.u32 %v1315, %v1316
        %v1319 = vrot.slane %v1315, 4
        %v1321 = vshrl.u32 %v1053, 16
        %v1323 = vrot.slane %v1321, 7
        %v1324 = vshll.u32 %v1053, 16
        %v1326 = vor.u32 %v1323, %v1324
        %v1327 = vsel %vm1056, %v1319, %v1326
        %v1328 = vrot.slane %v1323, 4
        %s1377 = scalar_lea.vmem [#allocation2], 12
        %vm1378 = vcmask 1043456
        %vm1379 = vsmask.f32 7938
        %vm1380 = vmand %vm1378, %vm1379
        %v1381 = vld [vmem:[%s1377] sm:$0xf]
        %v1382 = vsel %vm1380, %v1063, %v1381
        %1383 = vst [vmem:[%s1377] sm:$0xf] %v1382
        %1384 = vst [vmem:[%s1377 + $0x4] sm:$0xf] %v1072
        %vm1385 = vcmask 1040384
        %vm1386 = vmand %vm1385, %vm1054
        %v1387 = vld [vmem:[%s1377 + $0x8] sm:$0x1]
        %v1388 = vsel %vm1386, %v1073, %v1387
        %1389 = vst [vmem:[%s1377 + $0x8] sm:$0x1] %v1388
        %v1390 = vld [vmem:[%s1377 + $0xc] sm:$0xf]
        %v1391 = vsel %vm1380, %v1080, %v1390
        %1392 = vst [vmem:[%s1377 + $0xc] sm:$0xf] %v1391
        %1393 = vst [vmem:[%s1377 + $0x10] sm:$0xf] %v1089
        %v1394 = vld [vmem:[%s1377 + $0x14] sm:$0x1]
        %v1395 = vsel %vm1386, %v1090, %v1394
        %1396 = vst [vmem:[%s1377 + $0x14] sm:$0x1] %v1395
        %v1397 = vld [vmem:[%s1377 + $0x18] sm:$0xf]
        %v1398 = vsel %vm1380, %v1097, %v1397
        %1399 = vst [vmem:[%s1377 + $0x18] sm:$0xf] %v1398
        %1400 = vst [vmem:[%s1377 + $0x1c] sm:$0xf] %v1106
        %v1401 = vld [vmem:[%s1377 + $0x20] sm:$0x1]
        %v1402 = vsel %vm1386, %v1107, %v1401
        %1403 = vst [vmem:[%s1377 + $0x20] sm:$0x1] %v1402
        %v1404 = vld [vmem:[%s1377 + $0x24] sm:$0xf]
        %v1405 = vsel %vm1380, %v1114, %v1404
        %1406 = vst [vmem:[%s1377 + $0x24] sm:$0xf] %v1405
        %1407 = vst [vmem:[%s1377 + $0x28] sm:$0xf] %v1123
        %v1408 = vld [vmem:[%s1377 + $0x2c] sm:$0x1]
        %v1409 = vsel %vm1386, %v1124, %v1408
        %1410 = vst [vmem:[%s1377 + $0x2c] sm:$0x1] %v1409
        %v1411 = vld [vmem:[%s1377 + $0x30] sm:$0xf]
        %v1412 = vsel %vm1380, %v1131, %v1411
        %1413 = vst [vmem:[%s1377 + $0x30] sm:$0xf] %v1412
        %1414 = vst [vmem:[%s1377 + $0x34] sm:$0xf] %v1140
        %v1415 = vld [vmem:[%s1377 + $0x38] sm:$0x1]
        %v1416 = vsel %vm1386, %v1141, %v1415
        %1417 = vst [vmem:[%s1377 + $0x38] sm:$0x1] %v1416
        %v1418 = vld [vmem:[%s1377 + $0x3c] sm:$0xf]
        %v1419 = vsel %vm1380, %v1148, %v1418
        %1420 = vst [vmem:[%s1377 + $0x3c] sm:$0xf] %v1419
        %1421 = vst [vmem:[%s1377 + $0x40] sm:$0xf] %v1157
        %v1422 = vld [vmem:[%s1377 + $0x44] sm:$0x1]
        %v1423 = vsel %vm1386, %v1158, %v1422
        %1424 = vst [vmem:[%s1377 + $0x44] sm:$0x1] %v1423
        %v1425 = vld [vmem:[%s1377 + $0x48] sm:$0xf]
        %v1426 = vsel %vm1380, %v1165, %v1425
        %1427 = vst [vmem:[%s1377 + $0x48] sm:$0xf] %v1426
        %1428 = vst [vmem:[%s1377 + $0x4c] sm:$0xf] %v1174
        %v1429 = vld [vmem:[%s1377 + $0x50] sm:$0x1]
        %v1430 = vsel %vm1386, %v1175, %v1429
        %1431 = vst [vmem:[%s1377 + $0x50] sm:$0x1] %v1430
        %v1432 = vld [vmem:[%s1377 + $0x54] sm:$0xf]
        %v1433 = vsel %vm1380, %v1182, %v1432
        %1434 = vst [vmem:[%s1377 + $0x54] sm:$0xf] %v1433
        %1435 = vst [vmem:[%s1377 + $0x58] sm:$0xf] %v1191
        %v1436 = vld [vmem:[%s1377 + $0x5c] sm:$0x1]
        %v1437 = vsel %vm1386, %v1192, %v1436
        %1438 = vst [vmem:[%s1377 + $0x5c] sm:$0x1] %v1437
        %v1439 = vld [vmem:[%s1377 + $0x60] sm:$0xf]
        %v1440 = vsel %vm1380, %v1199, %v1439
        %1441 = vst [vmem:[%s1377 + $0x60] sm:$0xf] %v1440
        %1442 = vst [vmem:[%s1377 + $0x64] sm:$0xf] %v1208
        %v1443 = vld [vmem:[%s1377 + $0x68] sm:$0x1]
        %v1444 = vsel %vm1386, %v1209, %v1443
        %1445 = vst [vmem:[%s1377 + $0x68] sm:$0x1] %v1444
        %v1446 = vld [vmem:[%s1377 + $0x6c] sm:$0xf]
        %v1447 = vsel %vm1380, %v1216, %v1446
        %1448 = vst [vmem:[%s1377 + $0x6c] sm:$0xf] %v1447
        %1449 = vst [vmem:[%s1377 + $0x70] sm:$0xf] %v1225
        %v1450 = vld [vmem:[%s1377 + $0x74] sm:$0x1]
        %v1451 = vsel %vm1386, %v1226, %v1450
        %1452 = vst [vmem:[%s1377 + $0x74] sm:$0x1] %v1451
        %v1453 = vld [vmem:[%s1377 + $0x78] sm:$0xf]
        %v1454 = vsel %vm1380, %v1233, %v1453
        %1455 = vst [vmem:[%s1377 + $0x78] sm:$0xf] %v1454
        %1456 = vst [vmem:[%s1377 + $0x7c] sm:$0xf] %v1242
        %v1457 = vld [vmem:[%s1377 + $0x80] sm:$0x1]
        %v1458 = vsel %vm1386, %v1243, %v1457
        %1459 = vst [vmem:[%s1377 + $0x80] sm:$0x1] %v1458
        %v1460 = vld [vmem:[%s1377 + $0x84] sm:$0xf]
        %v1461 = vsel %vm1380, %v1250, %v1460
        %1462 = vst [vmem:[%s1377 + $0x84] sm:$0xf] %v1461
        %1463 = vst [vmem:[%s1377 + $0x88] sm:$0xf] %v1259
        %v1464 = vld [vmem:[%s1377 + $0x8c] sm:$0x1]
        %v1465 = vsel %vm1386, %v1260, %v1464
        %1466 = vst [vmem:[%s1377 + $0x8c] sm:$0x1] %v1465
        %v1467 = vld [vmem:[%s1377 + $0x90] sm:$0xf]
        %v1468 = vsel %vm1380, %v1267, %v1467
        %1469 = vst [vmem:[%s1377 + $0x90] sm:$0xf] %v1468
        %1470 = vst [vmem:[%s1377 + $0x94] sm:$0xf] %v1276
        %v1471 = vld [vmem:[%s1377 + $0x98] sm:$0x1]
        %v1472 = vsel %vm1386, %v1277, %v1471
        %1473 = vst [vmem:[%s1377 + $0x98] sm:$0x1] %v1472
        %v1474 = vld [vmem:[%s1377 + $0x9c] sm:$0xf]
        %v1475 = vsel %vm1380, %v1284, %v1474
        %1476 = vst [vmem:[%s1377 + $0x9c] sm:$0xf] %v1475
        %1477 = vst [vmem:[%s1377 + $0xa0] sm:$0xf] %v1293
        %v1478 = vld [vmem:[%s1377 + $0xa4] sm:$0x1]
        %v1479 = vsel %vm1386, %v1294, %v1478
        %1480 = vst [vmem:[%s1377 + $0xa4] sm:$0x1] %v1479
        %v1481 = vld [vmem:[%s1377 + $0xa8] sm:$0xf]
        %v1482 = vsel %vm1380, %v1301, %v1481
        %1483 = vst [vmem:[%s1377 + $0xa8] sm:$0xf] %v1482
        %1484 = vst [vmem:[%s1377 + $0xac] sm:$0xf] %v1310
        %v1485 = vld [vmem:[%s1377 + $0xb0] sm:$0x1]
        %v1486 = vsel %vm1386, %v1311, %v1485
        %1487 = vst [vmem:[%s1377 + $0xb0] sm:$0x1] %v1486
        %v1488 = vld [vmem:[%s1377 + $0xb4] sm:$0xf]
        %v1489 = vsel %vm1380, %v1318, %v1488
        %1490 = vst [vmem:[%s1377 + $0xb4] sm:$0xf] %v1489
        %1491 = vst [vmem:[%s1377 + $0xb8] sm:$0xf] %v1327
        %v1492 = vld [vmem:[%s1377 + $0xbc] sm:$0x1]
        %v1493 = vsel %vm1386, %v1328, %v1492
        %1494 = vst [vmem:[%s1377 + $0xbc] sm:$0x1] %v1493
        %v1495 = vld [vmem:[#allocation2] sm:$0xf]
        %v1496 = vld [vmem:[#allocation2 + $0x4] sm:$0xf]
        %v1497 = vld [vmem:[#allocation2 + $0xc] sm:$0xf]
        %v1498 = vld [vmem:[#allocation2 + $0x10] sm:$0xf]
        %v1499 = vld [vmem:[#allocation2 + $0x18] sm:$0xf]
        %v1500 = vld [vmem:[#allocation2 + $0x1c] sm:$0xf]
        %v1501 = vld [vmem:[#allocation2 + $0x24] sm:$0xf]
        %v1502 = vld [vmem:[#allocation2 + $0x28] sm:$0xf]
        %v1503 = vld [vmem:[#allocation2 + $0x30] sm:$0xf]
        %v1504 = vld [vmem:[#allocation2 + $0x34] sm:$0xf]
        %v1505 = vld [vmem:[#allocation2 + $0x3c] sm:$0xf]
        %v1506 = vld [vmem:[#allocation2 + $0x40] sm:$0xf]
        %v1507 = vld [vmem:[#allocation2 + $0x48] sm:$0xf]
        %v1508 = vld [vmem:[#allocation2 + $0x4c] sm:$0xf]
        %v1509 = vld [vmem:[#allocation2 + $0x54] sm:$0xf]
        %v1510 = vld [vmem:[#allocation2 + $0x58] sm:$0xf]
        %v1511 = vld [vmem:[#allocation2 + $0x60] sm:$0xf]
        %v1512 = vld [vmem:[#allocation2 + $0x64] sm:$0xf]
        %v1513 = vld [vmem:[#allocation2 + $0x6c] sm:$0xf]
        %v1514 = vld [vmem:[#allocation2 + $0x70] sm:$0xf]
        %v1515 = vld [vmem:[#allocation2 + $0x78] sm:$0xf]
        %v1516 = vld [vmem:[#allocation2 + $0x7c] sm:$0xf]
        %v1517 = vld [vmem:[#allocation2 + $0x84] sm:$0xf]
        %v1518 = vld [vmem:[#allocation2 + $0x88] sm:$0xf]
        %v1519 = vld [vmem:[#allocation2 + $0x90] sm:$0xf]
        %v1520 = vld [vmem:[#allocation2 + $0x94] sm:$0xf]
        %v1521 = vld [vmem:[#allocation2 + $0x9c] sm:$0xf]
        %v1522 = vld [vmem:[#allocation2 + $0xa0] sm:$0xf]
        %v1523 = vld [vmem:[#allocation2 + $0xa8] sm:$0xf]
        %v1524 = vld [vmem:[#allocation2 + $0xac] sm:$0xf]
        %v1525 = vld [vmem:[#allocation2 + $0xb4] sm:$0xf]
        %v1526 = vld [vmem:[#allocation2 + $0xb8] sm:$0xf]
        %v1527 = vld [vmem:[%s4] sm:$0xf]
        %v1528 = vld [vmem:[%s4 + $0x4] sm:$0xf]
        %v1529 = vld [vmem:[%s4 + $0x8] sm:$0xf]
        %v1530 = vld [vmem:[%s4 + $0xc] sm:$0xf]
        %v1531 = vld [vmem:[%s4 + $0x10] sm:$0xf]
        %v1532 = vld [vmem:[%s4 + $0x14] sm:$0xf]
        %v1533 = vld [vmem:[%s4 + $0x18] sm:$0xf]
        %v1534 = vld [vmem:[%s4 + $0x1c] sm:$0xf]
        %v1535 = vld [vmem:[%s4 + $0x20] sm:$0xf]
        %v1536 = vld [vmem:[%s4 + $0x24] sm:$0xf]
        %v1537 = vld [vmem:[%s4 + $0x28] sm:$0xf]
        %v1538 = vld [vmem:[%s4 + $0x2c] sm:$0xf]
        %v1539 = vld [vmem:[%s4 + $0x30] sm:$0xf]
        %v1540 = vld [vmem:[%s4 + $0x34] sm:$0xf]
        %v1541 = vld [vmem:[%s4 + $0x38] sm:$0xf]
        %v1542 = vld [vmem:[%s4 + $0x3c] sm:$0xf]
        %v1543 = vld [vmem:[#allocation2 + $0x8] sm:$0x1]
        %v1544 = vld [vmem:[#allocation2 + $0x14] sm:$0x1]
        %v1545 = vld [vmem:[#allocation2 + $0x20] sm:$0x1]
        %v1546 = vld [vmem:[#allocation2 + $0x2c] sm:$0x1]
        %v1547 = vld [vmem:[#allocation2 + $0x38] sm:$0x1]
        %v1548 = vld [vmem:[#allocation2 + $0x44] sm:$0x1]
        %v1549 = vld [vmem:[#allocation2 + $0x50] sm:$0x1]
        %v1550 = vld [vmem:[#allocation2 + $0x5c] sm:$0x1]
        %v1551 = vld [vmem:[#allocation2 + $0x68] sm:$0x1]
        %v1552 = vld [vmem:[#allocation2 + $0x74] sm:$0x1]
        %v1553 = vld [vmem:[#allocation2 + $0x80] sm:$0x1]
        %v1554 = vld [vmem:[#allocation2 + $0x8c] sm:$0x1]
        %v1555 = vld [vmem:[#allocation2 + $0x98] sm:$0x1]
        %v1556 = vld [vmem:[#allocation2 + $0xa4] sm:$0x1]
        %v1557 = vld [vmem:[#allocation2 + $0xb0] sm:$0x1]
        %v1558 = vld [vmem:[#allocation2 + $0xbc] sm:$0x1]
        %vm1559 = vsmask.f32 3328
        %vm1560 = vsmask.f32 7440
        %vm1561 = vmor %vm1559, %vm1560
        %v1563 = vshrl.u32 %v1495, 16
        %v1565 = vrot.slane %v1563, 4
        %v1566 = vshll.u32 %v1495, 16
        %v1568 = vrot.slane %v1566, 5
        %v1569 = vor.u32 %v1565, %v1568
        %v1570 = vrot.slane %v1569, 4
        %v1572 = vshll.u32 %v1496, 16
        %v1574 = vrot.slane %v1572, 5
        %v1575 = vsel %vm1561, %v1570, %v1574
        %v1576 = vshrl.u32 %v1496, 16
        %v1578 = vrot.slane %v1576, 4
        %v1579 = vor.u32 %v1578, %v1574
        %v1580 = vrot.slane %v1579, 4
        %v1582 = vshll.u32 %v1543, 16
        %v1584 = vrot.slane %v1582, 5
        %v1585 = vsel %vm1561, %v1580, %v1584
        %v1587 = vshrl.u32 %v1497, 16
        %v1589 = vrot.slane %v1587, 4
        %v1590 = vshll.u32 %v1497, 16
        %v1592 = vrot.slane %v1590, 5
        %v1593 = vor.u32 %v1589, %v1592
        %v1594 = vrot.slane %v1593, 4
        %v1596 = vshll.u32 %v1498, 16
        %v1598 = vrot.slane %v1596, 5
        %v1599 = vsel %vm1561, %v1594, %v1598
        %v1600 = vshrl.u32 %v1498, 16
        %v1602 = vrot.slane %v1600, 4
        %v1603 = vor.u32 %v1602, %v1598
        %v1604 = vrot.slane %v1603, 4
        %v1606 = vshll.u32 %v1544, 16
        %v1608 = vrot.slane %v1606, 5
        %v1609 = vsel %vm1561, %v1604, %v1608
        %v1611 = vshrl.u32 %v1499, 16
        %v1613 = vrot.slane %v1611, 4
        %v1614 = vshll.u32 %v1499, 16
        %v1616 = vrot.slane %v1614, 5
        %v1617 = vor.u32 %v1613, %v1616
        %v1618 = vrot.slane %v1617, 4
        %v1620 = vshll.u32 %v1500, 16
        %v1622 = vrot.slane %v1620, 5
        %v1623 = vsel %vm1561, %v1618, %v1622
        %v1624 = vshrl.u32 %v1500, 16
        %v1626 = vrot.slane %v1624, 4
        %v1627 = vor.u32 %v1626, %v1622
        %v1628 = vrot.slane %v1627, 4
        %v1630 = vshll.u32 %v1545, 16
        %v1632 = vrot.slane %v1630, 5
        %v1633 = vsel %vm1561, %v1628, %v1632
        %v1635 = vshrl.u32 %v1501, 16
        %v1637 = vrot.slane %v1635, 4
        %v1638 = vshll.u32 %v1501, 16
        %v1640 = vrot.slane %v1638, 5
        %v1641 = vor.u32 %v1637, %v1640
        %v1642 = vrot.slane %v1641, 4
        %v1644 = vshll.u32 %v1502, 16
        %v1646 = vrot.slane %v1644, 5
        %v1647 = vsel %vm1561, %v1642, %v1646
        %v1648 = vshrl.u32 %v1502, 16
        %v1650 = vrot.slane %v1648, 4
        %v1651 = vor.u32 %v1650, %v1646
        %v1652 = vrot.slane %v1651, 4
        %v1654 = vshll.u32 %v1546, 16
        %v1656 = vrot.slane %v1654, 5
        %v1657 = vsel %vm1561, %v1652, %v1656
        %v1659 = vshrl.u32 %v1503, 16
        %v1661 = vrot.slane %v1659, 4
        %v1662 = vshll.u32 %v1503, 16
        %v1664 = vrot.slane %v1662, 5
        %v1665 = vor.u32 %v1661, %v1664
        %v1666 = vrot.slane %v1665, 4
        %v1668 = vshll.u32 %v1504, 16
        %v1670 = vrot.slane %v1668, 5
        %v1671 = vsel %vm1561, %v1666, %v1670
        %v1672 = vshrl.u32 %v1504, 16
        %v1674 = vrot.slane %v1672, 4
        %v1675 = vor.u32 %v1674, %v1670
        %v1676 = vrot.slane %v1675, 4
        %v1678 = vshll.u32 %v1547, 16
        %v1680 = vrot.slane %v1678, 5
        %v1681 = vsel %vm1561, %v1676, %v1680
        %v1683 = vshrl.u32 %v1505, 16
        %v1685 = vrot.slane %v1683, 4
        %v1686 = vshll.u32 %v1505, 16
        %v1688 = vrot.slane %v1686, 5
        %v1689 = vor.u32 %v1685, %v1688
        %v1690 = vrot.slane %v1689, 4
        %v1692 = vshll.u32 %v1506, 16
        %v1694 = vrot.slane %v1692, 5
        %v1695 = vsel %vm1561, %v1690, %v1694
        %v1696 = vshrl.u32 %v1506, 16
        %v1698 = vrot.slane %v1696, 4
        %v1699 = vor.u32 %v1698, %v1694
        %v1700 = vrot.slane %v1699, 4
        %v1702 = vshll.u32 %v1548, 16
        %v1704 = vrot.slane %v1702, 5
        %v1705 = vsel %vm1561, %v1700, %v1704
        %v1707 = vshrl.u32 %v1507, 16
        %v1709 = vrot.slane %v1707, 4
        %v1710 = vshll.u32 %v1507, 16
        %v1712 = vrot.slane %v1710, 5
        %v1713 = vor.u32 %v1709, %v1712
        %v1714 = vrot.slane %v1713, 4
        %v1716 = vshll.u32 %v1508, 16
        %v1718 = vrot.slane %v1716, 5
        %v1719 = vsel %vm1561, %v1714, %v1718
        %v1720 = vshrl.u32 %v1508, 16
        %v1722 = vrot.slane %v1720, 4
        %v1723 = vor.u32 %v1722, %v1718
        %v1724 = vrot.slane %v1723, 4
        %v1726 = vshll.u32 %v1549, 16
        %v1728 = vrot.slane %v1726, 5
        %v1729 = vsel %vm1561, %v1724, %v1728
        %v1731 = vshrl.u32 %v1509, 16
        %v1733 = vrot.slane %v1731, 4
        %v1734 = vshll.u32 %v1509, 16
        %v1736 = vrot.slane %v1734, 5
        %v1737 = vor.u32 %v1733, %v1736
        %v1738 = vrot.slane %v1737, 4
        %v1740 = vshll.u32 %v1510, 16
        %v1742 = vrot.slane %v1740, 5
        %v1743 = vsel %vm1561, %v1738, %v1742
        %v1744 = vshrl.u32 %v1510, 16
        %v1746 = vrot.slane %v1744, 4
        %v1747 = vor.u32 %v1746, %v1742
        %v1748 = vrot.slane %v1747, 4
        %v1750 = vshll.u32 %v1550, 16
        %v1752 = vrot.slane %v1750, 5
        %v1753 = vsel %vm1561, %v1748, %v1752
        %v1755 = vshrl.u32 %v1511, 16
        %v1757 = vrot.slane %v1755, 4
        %v1758 = vshll.u32 %v1511, 16
        %v1760 = vrot.slane %v1758, 5
        %v1761 = vor.u32 %v1757, %v1760
        %v1762 = vrot.slane %v1761, 4
        %v1764 = vshll.u32 %v1512, 16
        %v1766 = vrot.slane %v1764, 5
        %v1767 = vsel %vm1561, %v1762, %v1766
        %v1768 = vshrl.u32 %v1512, 16
        %v1770 = vrot.slane %v1768, 4
        %v1771 = vor.u32 %v1770, %v1766
        %v1772 = vrot.slane %v1771, 4
        %v1774 = vshll.u32 %v1551, 16
        %v1776 = vrot.slane %v1774, 5
        %v1777 = vsel %vm1561, %v1772, %v1776
        %v1779 = vshrl.u32 %v1513, 16
        %v1781 = vrot.slane %v1779, 4
        %v1782 = vshll.u32 %v1513, 16
        %v1784 = vrot.slane %v1782, 5
        %v1785 = vor.u32 %v1781, %v1784
        %v1786 = vrot.slane %v1785, 4
        %v1788 = vshll.u32 %v1514, 16
        %v1790 = vrot.slane %v1788, 5
        %v1791 = vsel %vm1561, %v1786, %v1790
        %v1792 = vshrl.u32 %v1514, 16
        %v1794 = vrot.slane %v1792, 4
        %v1795 = vor.u32 %v1794, %v1790
        %v1796 = vrot.slane %v1795, 4
        %v1798 = vshll.u32 %v1552, 16
        %v1800 = vrot.slane %v1798, 5
        %v1801 = vsel %vm1561, %v1796, %v1800
        %v1803 = vshrl.u32 %v1515, 16
        %v1805 = vrot.slane %v1803, 4
        %v1806 = vshll.u32 %v1515, 16
        %v1808 = vrot.slane %v1806, 5
        %v1809 = vor.u32 %v1805, %v1808
        %v1810 = vrot.slane %v1809, 4
        %v1812 = vshll.u32 %v1516, 16
        %v1814 = vrot.slane %v1812, 5
        %v1815 = vsel %vm1561, %v1810, %v1814
        %v1816 = vshrl.u32 %v1516, 16
        %v1818 = vrot.slane %v1816, 4
        %v1819 = vor.u32 %v1818, %v1814
        %v1820 = vrot.slane %v1819, 4
        %v1822 = vshll.u32 %v1553, 16
        %v1824 = vrot.slane %v1822, 5
        %v1825 = vsel %vm1561, %v1820, %v1824
        %v1827 = vshrl.u32 %v1517, 16
        %v1829 = vrot.slane %v1827, 4
        %v1830 = vshll.u32 %v1517, 16
        %v1832 = vrot.slane %v1830, 5
        %v1833 = vor.u32 %v1829, %v1832
        %v1834 = vrot.slane %v1833, 4
        %v1836 = vshll.u32 %v1518, 16
        %v1838 = vrot.slane %v1836, 5
        %v1839 = vsel %vm1561, %v1834, %v1838
        %v1840 = vshrl.u32 %v1518, 16
        %v1842 = vrot.slane %v1840, 4
        %v1843 = vor.u32 %v1842, %v1838
        %v1844 = vrot.slane %v1843, 4
        %v1846 = vshll.u32 %v1554, 16
        %v1848 = vrot.slane %v1846, 5
        %v1849 = vsel %vm1561, %v1844, %v1848
        %v1851 = vshrl.u32 %v1519, 16
        %v1853 = vrot.slane %v1851, 4
        %v1854 = vshll.u32 %v1519, 16
        %v1856 = vrot.slane %v1854, 5
        %v1857 = vor.u32 %v1853, %v1856
        %v1858 = vrot.slane %v1857, 4
        %v1860 = vshll.u32 %v1520, 16
        %v1862 = vrot.slane %v1860, 5
        %v1863 = vsel %vm1561, %v1858, %v1862
        %v1864 = vshrl.u32 %v1520, 16
        %v1866 = vrot.slane %v1864, 4
        %v1867 = vor.u32 %v1866, %v1862
        %v1868 = vrot.slane %v1867, 4
        %v1870 = vshll.u32 %v1555, 16
        %v1872 = vrot.slane %v1870, 5
        %v1873 = vsel %vm1561, %v1868, %v1872
        %v1875 = vshrl.u32 %v1521, 16
        %v1877 = vrot.slane %v1875, 4
        %v1878 = vshll.u32 %v1521, 16
        %v1880 = vrot.slane %v1878, 5
        %v1881 = vor.u32 %v1877, %v1880
        %v1882 = vrot.slane %v1881, 4
        %v1884 = vshll.u32 %v1522, 16
        %v1886 = vrot.slane %v1884, 5
        %v1887 = vsel %vm1561, %v1882, %v1886
        %v1888 = vshrl.u32 %v1522, 16
        %v1890 = vrot.slane %v1888, 4
        %v1891 = vor.u32 %v1890, %v1886
        %v1892 = vrot.slane %v1891, 4
        %v1894 = vshll.u32 %v1556, 16
        %v1896 = vrot.slane %v1894, 5
        %v1897 = vsel %vm1561, %v1892, %v1896
        %v1899 = vshrl.u32 %v1523, 16
        %v1901 = vrot.slane %v1899, 4
        %v1902 = vshll.u32 %v1523, 16
        %v1904 = vrot.slane %v1902, 5
        %v1905 = vor.u32 %v1901, %v1904
        %v1906 = vrot.slane %v1905, 4
        %v1908 = vshll.u32 %v1524, 16
        %v1910 = vrot.slane %v1908, 5
        %v1911 = vsel %vm1561, %v1906, %v1910
        %v1912 = vshrl.u32 %v1524, 16
        %v1914 = vrot.slane %v1912, 4
        %v1915 = vor.u32 %v1914, %v1910
        %v1916 = vrot.slane %v1915, 4
        %v1918 = vshll.u32 %v1557, 16
        %v1920 = vrot.slane %v1918, 5
        %v1921 = vsel %vm1561, %v1916, %v1920
        %v1923 = vshrl.u32 %v1525, 16
        %v1925 = vrot.slane %v1923, 4
        %v1926 = vshll.u32 %v1525, 16
        %v1928 = vrot.slane %v1926, 5
        %v1929 = vor.u32 %v1925, %v1928
        %v1930 = vrot.slane %v1929, 4
        %v1932 = vshll.u32 %v1526, 16
        %v1934 = vrot.slane %v1932, 5
        %v1935 = vsel %vm1561, %v1930, %v1934
        %v1936 = vshrl.u32 %v1526, 16
        %v1938 = vrot.slane %v1936, 4
        %v1939 = vor.u32 %v1938, %v1934
        %v1940 = vrot.slane %v1939, 4
        %v1942 = vshll.u32 %v1558, 16
        %v1944 = vrot.slane %v1942, 5
        %v1945 = vsel %vm1561, %v1940, %v1944
        %s1946 = scalar_lea.vmem %s4, 64
        %v1947 = vld [vmem:[%s1946] sm:$0xf]
        %v1948 = vld [vmem:[%s1946 + $0x4] sm:$0xf]
        %v1949 = vld [vmem:[%s1946 + $0x8] sm:$0xf]
        %v1950 = vld [vmem:[%s1946 + $0xc] sm:$0xf]
        %v1951 = vld [vmem:[%s1946 + $0x10] sm:$0xf]
        %v1952 = vld [vmem:[%s1946 + $0x14] sm:$0xf]
        %v1953 = vld [vmem:[%s1946 + $0x18] sm:$0xf]
        %v1954 = vld [vmem:[%s1946 + $0x1c] sm:$0xf]
        %v1955 = vld [vmem:[%s1946 + $0x20] sm:$0xf]
        %v1956 = vld [vmem:[%s1946 + $0x24] sm:$0xf]
        %v1957 = vld [vmem:[%s1946 + $0x28] sm:$0xf]
        %v1958 = vld [vmem:[%s1946 + $0x2c] sm:$0xf]
        %v1959 = vld [vmem:[%s1946 + $0x30] sm:$0xf]
        %v1960 = vld [vmem:[%s1946 + $0x34] sm:$0xf]
        %v1961 = vld [vmem:[%s1946 + $0x38] sm:$0xf]
        %v1962 = vld [vmem:[%s1946 + $0x3c] sm:$0xf]
        %v1963 = vunpack.c.l.b16 %v1575
        %v1964 = vunpack.c.l.b16 %v1585
        %v1965 = vunpack.c.l.b16 %v1599
        %v1966 = vunpack.c.l.b16 %v1609
        %v1967 = vunpack.c.l.b16 %v1623
        %v1968 = vunpack.c.l.b16 %v1633
        %v1969 = vunpack.c.l.b16 %v1647
        %v1970 = vunpack.c.l.b16 %v1657
        %v1971 = vunpack.c.l.b16 %v1671
        %v1972 = vunpack.c.l.b16 %v1681
        %v1973 = vunpack.c.l.b16 %v1695
        %v1974 = vunpack.c.l.b16 %v1705
        %v1975 = vunpack.c.l.b16 %v1719
        %v1976 = vunpack.c.l.b16 %v1729
        %v1977 = vunpack.c.l.b16 %v1743
        %v1978 = vunpack.c.l.b16 %v1753
        %v1979 = vunpack.c.l.b16 %v1767
        %v1980 = vunpack.c.l.b16 %v1777
        %v1981 = vunpack.c.l.b16 %v1791
        %v1982 = vunpack.c.l.b16 %v1801
        %v1983 = vunpack.c.l.b16 %v1815
        %v1984 = vunpack.c.l.b16 %v1825
        %v1985 = vunpack.c.l.b16 %v1839
        %v1986 = vunpack.c.l.b16 %v1849
        %v1987 = vunpack.c.l.b16 %v1863
        %v1988 = vunpack.c.l.b16 %v1873
        %v1989 = vunpack.c.l.b16 %v1887
        %v1990 = vunpack.c.l.b16 %v1897
        %v1991 = vunpack.c.l.b16 %v1911
        %v1992 = vunpack.c.l.b16 %v1921
        %v1993 = vunpack.c.l.b16 %v1935
        %v1994 = vunpack.c.l.b16 %v1945
        %v1995 = vpack.c.b16 %v1964, %v1963
        %v1996 = vpack.c.b16 %v1966, %v1965
        %v1997 = vpack.c.b16 %v1968, %v1967
        %v1998 = vpack.c.b16 %v1970, %v1969
        %v1999 = vpack.c.b16 %v1972, %v1971
        %v2000 = vpack.c.b16 %v1974, %v1973
        %v2001 = vpack.c.b16 %v1976, %v1975
        %v2002 = vpack.c.b16 %v1978, %v1977
        %v2003 = vpack.c.b16 %v1980, %v1979
        %v2004 = vpack.c.b16 %v1982, %v1981
        %v2005 = vpack.c.b16 %v1984, %v1983
        %v2006 = vpack.c.b16 %v1986, %v1985
        %v2007 = vpack.c.b16 %v1988, %v1987
        %v2008 = vpack.c.b16 %v1990, %v1989
        %v2009 = vpack.c.b16 %v1992, %v1991
        %v2010 = vpack.c.b16 %v1994, %v1993
        %v2043 = vunpack.c.l.b16 %v1947
        %v2044 = vunpack.c.l.b16 %v1948
        %v2045 = vunpack.c.l.b16 %v1949
        %v2046 = vunpack.c.l.b16 %v1950
        %v2047 = vunpack.c.l.b16 %v1951
        %v2048 = vunpack.c.l.b16 %v1952
        %v2049 = vunpack.c.l.b16 %v1953
        %v2050 = vunpack.c.l.b16 %v1954
        %v2051 = vunpack.c.l.b16 %v1955
        %v2052 = vunpack.c.l.b16 %v1956
        %v2053 = vunpack.c.l.b16 %v1957
        %v2054 = vunpack.c.l.b16 %v1958
        %v2055 = vunpack.c.l.b16 %v1959
        %v2056 = vunpack.c.l.b16 %v1960
        %v2057 = vunpack.c.l.b16 %v1961
        %v2058 = vunpack.c.l.b16 %v1962
        %v2059 = vpack.c.b16 %v2044, %v2043
        %v2060 = vpack.c.b16 %v2046, %v2045
        %v2061 = vpack.c.b16 %v2048, %v2047
        %v2062 = vpack.c.b16 %v2050, %v2049
        %v2063 = vpack.c.b16 %v2052, %v2051
        %v2064 = vpack.c.b16 %v2054, %v2053
        %v2065 = vpack.c.b16 %v2056, %v2055
        %v2066 = vpack.c.b16 %v2058, %v2057
        %2075 = vmatprep.subr.bf16.mxu0 0
        %2076 = vmatpush1.bf16.msra.mxu0 %v2059
        %2077 = vmatprep.subr.bf16.mxu0 0
        %2078 = vmatpush1.bf16.msra.mxu0 %v2060
        %2079 = vmatprep.subr.bf16.mxu0 0
        %2080 = vmatpush1.bf16.msra.mxu0 %v2061
        %2081 = vmatprep.subr.bf16.mxu0 0
        %2082 = vmatpush1.bf16.msra.mxu0 %v2062
        %2083 = vmatprep.subr.bf16.mxu0 0
        %2084 = vmatpush1.bf16.msra.mxu0 %v2063
        %2085 = vmatprep.subr.bf16.mxu0 0
        %2086 = vmatpush1.bf16.msra.mxu0 %v2064
        %2087 = vmatprep.subr.bf16.mxu0 0
        %2088 = vmatpush1.bf16.msra.mxu0 %v2065
        %2089 = vmatprep.subr.bf16.mxu0 0
        %2090 = vmatpush1.bf16.msra.mxu0 %v2066
        %2091 = vmatprep.subr.bf16.mxu0 0
        %2092 = vmatpush1.bf16.msra.mxu0 0
        %2093 = vmatprep.subr.bf16.mxu0 0
        %2094 = vmatpush1.bf16.msra.mxu0 0
        %2095 = vmatprep.subr.bf16.mxu0 0
        %2096 = vmatpush1.bf16.msra.mxu0 0
        %2097 = vmatprep.subr.bf16.mxu0 0
        %2098 = vmatpush1.bf16.msra.mxu0 0
        %2099 = vmatprep.subr.bf16.mxu0 0
        %2100 = vmatpush1.bf16.msra.mxu0 0
        %2101 = vmatprep.subr.bf16.mxu0 0
        %2102 = vmatpush1.bf16.msra.mxu0 0
        %2103 = vmatprep.subr.bf16.mxu0 0
        %2104 = vmatpush1.bf16.msra.mxu0 0
        %2105 = vmatprep.subr.bf16.mxu0 0
        %2106 = vmatpush1.bf16.msra.mxu0 0
        %2107 = vmatprep.mubr.bf16.mxu0 0
        %2108 = vmatmul.mubr.bf16.gmra.mrb[0].mxu0 %v1995
        %v2109 = vpop.f32.mrb[0].mxu0
        %v2110 = vadd.f32 0.0, %v2109
        %v2111 = vpop.f32.mrb[0].mxu0
        %v2112 = vpop.f32.mrb[0].mxu0
        %v2113 = vadd.f32 0.0, %v2112
        %v2114 = vpop.f32.mrb[0].mxu0
        %2115 = vmatprep.mubr.bf16.mxu0 0
        %2116 = vmatmul.mubr.bf16.gmra.mrb[0].mxu0 %v1996
        %v2117 = vpop.f32.mrb[0].mxu0
        %v2118 = vadd.f32 0.0, %v2117
        %v2119 = vpop.f32.mrb[0].mxu0
        %v2120 = vpop.f32.mrb[0].mxu0
        %v2121 = vadd.f32 0.0, %v2120
        %v2122 = vpop.f32.mrb[0].mxu0
        %2123 = vmatprep.mubr.bf16.mxu0 0
        %2124 = vmatmul.mubr.bf16.gmra.mrb[0].mxu0 %v1997
        %v2125 = vpop.f32.mrb[0].mxu0
        %v2126 = vadd.f32 0.0, %v2125
        %v2127 = vpop.f32.mrb[0].mxu0
        %v2128 = vpop.f32.mrb[0].mxu0
        %v2129 = vadd.f32 0.0, %v2128
        %v2130 = vpop.f32.mrb[0].mxu0
        %2131 = vmatprep.mubr.bf16.mxu0 0
        %2132 = vmatmul.mubr.bf16.gmra.mrb[0].mxu0 %v1998
        %v2133 = vpop.f32.mrb[0].mxu0
        %v2134 = vadd.f32 0.0, %v2133
        %v2135 = vpop.f32.mrb[0].mxu0
        %v2136 = vpop.f32.mrb[0].mxu0
        %v2137 = vadd.f32 0.0, %v2136
        %v2138 = vpop.f32.mrb[0].mxu0
        %2139 = vmatprep.mubr.bf16.mxu0 0
        %2140 = vmatmul.mubr.bf16.gmra.mrb[0].mxu0 %v1999
        %v2141 = vpop.f32.mrb[0].mxu0
        %v2142 = vadd.f32 0.0, %v2141
        %v2143 = vpop.f32.mrb[0].mxu0
        %v2144 = vpop.f32.mrb[0].mxu0
        %v2145 = vadd.f32 0.0, %v2144
        %v2146 = vpop.f32.mrb[0].mxu0
        %2147 = vmatprep.mubr.bf16.mxu0 0
        %2148 = vmatmul.mubr.bf16.gmra.mrb[0].mxu0 %v2000
        %v2149 = vpop.f32.mrb[0].mxu0
        %v2150 = vadd.f32 0.0, %v2149
        %v2151 = vpop.f32.mrb[0].mxu0
        %v2152 = vpop.f32.mrb[0].mxu0
        %v2153 = vadd.f32 0.0, %v2152
        %v2154 = vpop.f32.mrb[0].mxu0
        %2155 = vmatprep.mubr.bf16.mxu0 0
        %2156 = vmatmul.mubr.bf16.gmra.mrb[0].mxu0 %v2001
        %v2157 = vpop.f32.mrb[0].mxu0
        %v2158 = vadd.f32 0.0, %v2157
        %v2159 = vpop.f32.mrb[0].mxu0
        %v2160 = vpop.f32.mrb[0].mxu0
        %v2161 = vadd.f32 0.0, %v2160
        %v2162 = vpop.f32.mrb[0].mxu0
        %2163 = vmatprep.mubr.bf16.mxu0 0
        %2164 = vmatmul.mubr.bf16.gmra.mrb[0].mxu0 %v2002
        %v2165 = vpop.f32.mrb[0].mxu0
        %v2166 = vadd.f32 0.0, %v2165
        %v2167 = vpop.f32.mrb[0].mxu0
        %v2168 = vpop.f32.mrb[0].mxu0
        %v2169 = vadd.f32 0.0, %v2168
        %v2170 = vpop.f32.mrb[0].mxu0
        %2171 = vmatprep.mubr.bf16.mxu0 0
        %2172 = vmatmul.mubr.bf16.gmra.mrb[0].mxu0 %v2003
        %v2173 = vpop.f32.mrb[0].mxu0
        %v2174 = vadd.f32 0.0, %v2173
        %v2175 = vpop.f32.mrb[0].mxu0
        %v2176 = vpop.f32.mrb[0].mxu0
        %v2177 = vadd.f32 0.0, %v2176
        %v2178 = vpop.f32.mrb[0].mxu0
        %2179 = vmatprep.mubr.bf16.mxu0 0
        %2180 = vmatmul.mubr.bf16.gmra.mrb[0].mxu0 %v2004
        %v2181 = vpop.f32.mrb[0].mxu0
        %v2182 = vadd.f32 0.0, %v2181
        %v2183 = vpop.f32.mrb[0].mxu0
        %v2184 = vpop.f32.mrb[0].mxu0
        %v2185 = vadd.f32 0.0, %v2184
        %v2186 = vpop.f32.mrb[0].mxu0
        %2187 = vmatprep.mubr.bf16.mxu0 0
        %2188 = vmatmul.mubr.bf16.gmra.mrb[0].mxu0 %v2005
        %v2189 = vpop.f32.mrb[0].mxu0
        %v2190 = vadd.f32 0.0, %v2189
        %v2191 = vpop.f32.mrb[0].mxu0
        %v2192 = vpop.f32.mrb[0].mxu0
        %v2193 = vadd.f32 0.0, %v2192
        %v2194 = vpop.f32.mrb[0].mxu0
        %2195 = vmatprep.mubr.bf16.mxu0 0
        %2196 = vmatmul.mubr.bf16.gmra.mrb[0].mxu0 %v2006
        %v2197 = vpop.f32.mrb[0].mxu0
        %v2198 = vadd.f32 0.0, %v2197
        %v2199 = vpop.f32.mrb[0].mxu0
        %v2200 = vpop.f32.mrb[0].mxu0
        %v2201 = vadd.f32 0.0, %v2200
        %v2202 = vpop.f32.mrb[0].mxu0
        %2203 = vmatprep.mubr.bf16.mxu0 0
        %2204 = vmatmul.mubr.bf16.gmra.mrb[0].mxu0 %v2007
        %v2205 = vpop.f32.mrb[0].mxu0
        %v2206 = vadd.f32 0.0, %v2205
        %v2207 = vpop.f32.mrb[0].mxu0
        %v2208 = vpop.f32.mrb[0].mxu0
        %v2209 = vadd.f32 0.0, %v2208
        %v2210 = vpop.f32.mrb[0].mxu0
        %2211 = vmatprep.mubr.bf16.mxu0 0
        %2212 = vmatmul.mubr.bf16.gmra.mrb[0].mxu0 %v2008
        %v2213 = vpop.f32.mrb[0].mxu0
        %v2214 = vadd.f32 0.0, %v2213
        %v2215 = vpop.f32.mrb[0].mxu0
        %v2216 = vpop.f32.mrb[0].mxu0
        %v2217 = vadd.f32 0.0, %v2216
        %v2218 = vpop.f32.mrb[0].mxu0
        %2219 = vmatprep.mubr.bf16.mxu0 0
        %2220 = vmatmul.mubr.bf16.gmra.mrb[0].mxu0 %v2009
        %v2221 = vpop.f32.mrb[0].mxu0
        %v2222 = vadd.f32 0.0, %v2221
        %v2223 = vpop.f32.mrb[0].mxu0
        %v2224 = vpop.f32.mrb[0].mxu0
        %v2225 = vadd.f32 0.0, %v2224
        %v2226 = vpop.f32.mrb[0].mxu0
        %2227 = vmatprep.mubr.bf16.mxu0 0
        %2228 = vmatmul.mubr.bf16.gmra.mrb[0].mxu0 %v2010
        %v2229 = vpop.f32.mrb[0].mxu0
        %v2230 = vadd.f32 0.0, %v2229
        %v2231 = vpop.f32.mrb[0].mxu0
        %v2232 = vpop.f32.mrb[0].mxu0
        %v2233 = vadd.f32 0.0, %v2232
        %v2234 = vpop.f32.mrb[0].mxu0
        %2235 = vdwg.mxu0
        %v2268 = vunpack.c.l.b16 %v1495
        %v2269 = vunpack.c.l.b16 %v1496
        %v2270 = vunpack.c.l.b16 %v1497
        %v2271 = vunpack.c.l.b16 %v1498
        %v2272 = vunpack.c.l.b16 %v1499
        %v2273 = vunpack.c.l.b16 %v1500
        %v2274 = vunpack.c.l.b16 %v1501
        %v2275 = vunpack.c.l.b16 %v1502
        %v2276 = vunpack.c.l.b16 %v1503
        %v2277 = vunpack.c.l.b16 %v1504
        %v2278 = vunpack.c.l.b16 %v1505
        %v2279 = vunpack.c.l.b16 %v1506
        %v2280 = vunpack.c.l.b16 %v1507
        %v2281 = vunpack.c.l.b16 %v1508
        %v2282 = vunpack.c.l.b16 %v1509
        %v2283 = vunpack.c.l.b16 %v1510
        %v2284 = vunpack.c.l.b16 %v1511
        %v2285 = vunpack.c.l.b16 %v1512
        %v2286 = vunpack.c.l.b16 %v1513
        %v2287 = vunpack.c.l.b16 %v1514
        %v2288 = vunpack.c.l.b16 %v1515
        %v2289 = vunpack.c.l.b16 %v1516
        %v2290 = vunpack.c.l.b16 %v1517
        %v2291 = vunpack.c.l.b16 %v1518
        %v2292 = vunpack.c.l.b16 %v1519
        %v2293 = vunpack.c.l.b16 %v1520
        %v2294 = vunpack.c.l.b16 %v1521
        %v2295 = vunpack.c.l.b16 %v1522
        %v2296 = vunpack.c.l.b16 %v1523
        %v2297 = vunpack.c.l.b16 %v1524
        %v2298 = vunpack.c.l.b16 %v1525
        %v2299 = vunpack.c.l.b16 %v1526
        %v2300 = vpack.c.b16 %v2269, %v2268
        %v2301 = vpack.c.b16 %v2271, %v2270
        %v2302 = vpack.c.b16 %v2273, %v2272
        %v2303 = vpack.c.b16 %v2275, %v2274
        %v2304 = vpack.c.b16 %v2277, %v2276
        %v2305 = vpack.c.b16 %v2279, %v2278
        %v2306 = vpack.c.b16 %v2281, %v2280
        %v2307 = vpack.c.b16 %v2283, %v2282
        %v2308 = vpack.c.b16 %v2285, %v2284
        %v2309 = vpack.c.b16 %v2287, %v2286
        %v2310 = vpack.c.b16 %v2289, %v2288
        %v2311 = vpack.c.b16 %v2291, %v2290
        %v2312 = vpack.c.b16 %v2293, %v2292
        %v2313 = vpack.c.b16 %v2295, %v2294
        %v2314 = vpack.c.b16 %v2297, %v2296
        %v2315 = vpack.c.b16 %v2299, %v2298
        %v2348 = vunpack.c.l.b16 %v1527
        %v2349 = vunpack.c.l.b16 %v1528
        %v2350 = vunpack.c.l.b16 %v1529
        %v2351 = vunpack.c.l.b16 %v1530
        %v2352 = vunpack.c.l.b16 %v1531
        %v2353 = vunpack.c.l.b16 %v1532
        %v2354 = vunpack.c.l.b16 %v1533
        %v2355 = vunpack.c.l.b16 %v1534
        %v2356 = vunpack.c.l.b16 %v1535
        %v2357 = vunpack.c.l.b16 %v1536
        %v2358 = vunpack.c.l.b16 %v1537
        %v2359 = vunpack.c.l.b16 %v1538
        %v2360 = vunpack.c.l.b16 %v1539
        %v2361 = vunpack.c.l.b16 %v1540
        %v2362 = vunpack.c.l.b16 %v1541
        %v2363 = vunpack.c.l.b16 %v1542
        %v2364 = vpack.c.b16 %v2349, %v2348
        %v2365 = vpack.c.b16 %v2351, %v2350
        %v2366 = vpack.c.b16 %v2353, %v2352
        %v2367 = vpack.c.b16 %v2355, %v2354
        %v2368 = vpack.c.b16 %v2357, %v2356
        %v2369 = vpack.c.b16 %v2359, %v2358
        %v2370 = vpack.c.b16 %v2361, %v2360
        %v2371 = vpack.c.b16 %v2363, %v2362
        %2380 = vmatprep.subr.bf16.mxu0 0
        %2381 = vmatpush1.bf16.msra.mxu0 %v2364
        %2382 = vmatprep.subr.bf16.mxu0 0
        %2383 = vmatpush1.bf16.msra.mxu0 %v2365
        %2384 = vmatprep.subr.bf16.mxu0 0
        %2385 = vmatpush1.bf16.msra.mxu0 %v2366
        %2386 = vmatprep.subr.bf16.mxu0 0
        %2387 = vmatpush1.bf16.msra.mxu0 %v2367
        %2388 = vmatprep.subr.bf16.mxu0 0
        %2389 = vmatpush1.bf16.msra.mxu0 %v2368
        %2390 = vmatprep.subr.bf16.mxu0 0
        %2391 = vmatpush1.bf16.msra.mxu0 %v2369
        %2392 = vmatprep.subr.bf16.mxu0 0
        %2393 = vmatpush1.bf16.msra.mxu0 %v2370
        %2394 = vmatprep.subr.bf16.mxu0 0
        %2395 = vmatpush1.bf16.msra.mxu0 %v2371
        %2396 = vmatprep.subr.bf16.mxu0 0
        %2397 = vmatpush1.bf16.msra.mxu0 0
        %2398 = vmatprep.subr.bf16.mxu0 0
        %2399 = vmatpush1.bf16.msra.mxu0 0
        %2400 = vmatprep.subr.bf16.mxu0 0
        %2401 = vmatpush1.bf16.msra.mxu0 0
        %2402 = vmatprep.subr.bf16.mxu0 0
        %2403 = vmatpush1.bf16.msra.mxu0 0
        %2404 = vmatprep.subr.bf16.mxu0 0
        %2405 = vmatpush1.bf16.msra.mxu0 0
        %2406 = vmatprep.subr.bf16.mxu0 0
        %2407 = vmatpush1.bf16.msra.mxu0 0
        %2408 = vmatprep.subr.bf16.mxu0 0
        %2409 = vmatpush1.bf16.msra.mxu0 0
        %2410 = vmatprep.subr.bf16.mxu0 0
        %2411 = vmatpush1.bf16.msra.mxu0 0
        %2412 = vmatprep.mubr.bf16.mxu0 0
        %2413 = vmatmul.mubr.bf16.gmra.mrb[0].mxu0 %v2300
        %v2414 = vpop.f32.mrb[0].mxu0
        %v2415 = vadd.f32 %v2110, %v2414
        %v2416 = vpop.f32.mrb[0].mxu0
        %v2417 = vpop.f32.mrb[0].mxu0
        %v2418 = vadd.f32 %v2113, %v2417
        %v2419 = vpop.f32.mrb[0].mxu0
        %2420 = vmatprep.mubr.bf16.mxu0 0
        %2421 = vmatmul.mubr.bf16.gmra.mrb[0].mxu0 %v2301
        %v2422 = vpop.f32.mrb[0].mxu0
        %v2423 = vadd.f32 %v2118, %v2422
        %v2424 = vpop.f32.mrb[0].mxu0
        %v2425 = vpop.f32.mrb[0].mxu0
        %v2426 = vadd.f32 %v2121, %v2425
        %v2427 = vpop.f32.mrb[0].mxu0
        %2428 = vmatprep.mubr.bf16.mxu0 0
        %2429 = vmatmul.mubr.bf16.gmra.mrb[0].mxu0 %v2302
        %v2430 = vpop.f32.mrb[0].mxu0
        %v2431 = vadd.f32 %v2126, %v2430
        %v2432 = vpop.f32.mrb[0].mxu0
        %v2433 = vpop.f32.mrb[0].mxu0
        %v2434 = vadd.f32 %v2129, %v2433
        %v2435 = vpop.f32.mrb[0].mxu0
        %2436 = vmatprep.mubr.bf16.mxu0 0
        %2437 = vmatmul.mubr.bf16.gmra.mrb[0].mxu0 %v2303
        %v2438 = vpop.f32.mrb[0].mxu0
        %v2439 = vadd.f32 %v2134, %v2438
        %v2440 = vpop.f32.mrb[0].mxu0
        %v2441 = vpop.f32.mrb[0].mxu0
        %v2442 = vadd.f32 %v2137, %v2441
        %v2443 = vpop.f32.mrb[0].mxu0
        %2444 = vmatprep.mubr.bf16.mxu0 0
        %2445 = vmatmul.mubr.bf16.gmra.mrb[0].mxu0 %v2304
        %v2446 = vpop.f32.mrb[0].mxu0
        %v2447 = vadd.f32 %v2142, %v2446
        %v2448 = vpop.f32.mrb[0].mxu0
        %v2449 = vpop.f32.mrb[0].mxu0
        %v2450 = vadd.f32 %v2145, %v2449
        %v2451 = vpop.f32.mrb[0].mxu0
        %2452 = vmatprep.mubr.bf16.mxu0 0
        %2453 = vmatmul.mubr.bf16.gmra.mrb[0].mxu0 %v2305
        %v2454 = vpop.f32.mrb[0].mxu0
        %v2455 = vadd.f32 %v2150, %v2454
        %v2456 = vpop.f32.mrb[0].mxu0
        %v2457 = vpop.f32.mrb[0].mxu0
        %v2458 = vadd.f32 %v2153, %v2457
        %v2459 = vpop.f32.mrb[0].mxu0
        %2460 = vmatprep.mubr.bf16.mxu0 0
        %2461 = vmatmul.mubr.bf16.gmra.mrb[0].mxu0 %v2306
        %v2462 = vpop.f32.mrb[0].mxu0
        %v2463 = vadd.f32 %v2158, %v2462
        %v2464 = vpop.f32.mrb[0].mxu0
        %v2465 = vpop.f32.mrb[0].mxu0
        %v2466 = vadd.f32 %v2161, %v2465
        %v2467 = vpop.f32.mrb[0].mxu0
        %2468 = vmatprep.mubr.bf16.mxu0 0
        %2469 = vmatmul.mubr.bf16.gmra.mrb[0].mxu0 %v2307
        %v2470 = vpop.f32.mrb[0].mxu0
        %v2471 = vadd.f32 %v2166, %v2470
        %v2472 = vpop.f32.mrb[0].mxu0
        %v2473 = vpop.f32.mrb[0].mxu0
        %v2474 = vadd.f32 %v2169, %v2473
        %v2475 = vpop.f32.mrb[0].mxu0
        %2476 = vmatprep.mubr.bf16.mxu0 0
        %2477 = vmatmul.mubr.bf16.gmra.mrb[0].mxu0 %v2308
        %v2478 = vpop.f32.mrb[0].mxu0
        %v2479 = vadd.f32 %v2174, %v2478
        %v2480 = vpop.f32.mrb[0].mxu0
        %v2481 = vpop.f32.mrb[0].mxu0
        %v2482 = vadd.f32 %v2177, %v2481
        %v2483 = vpop.f32.mrb[0].mxu0
        %2484 = vmatprep.mubr.bf16.mxu0 0
        %2485 = vmatmul.mubr.bf16.gmra.mrb[0].mxu0 %v2309
        %v2486 = vpop.f32.mrb[0].mxu0
        %v2487 = vadd.f32 %v2182, %v2486
        %v2488 = vpop.f32.mrb[0].mxu0
        %v2489 = vpop.f32.mrb[0].mxu0
        %v2490 = vadd.f32 %v2185, %v2489
        %v2491 = vpop.f32.mrb[0].mxu0
        %2492 = vmatprep.mubr.bf16.mxu0 0
        %2493 = vmatmul.mubr.bf16.gmra.mrb[0].mxu0 %v2310
        %v2494 = vpop.f32.mrb[0].mxu0
        %v2495 = vadd.f32 %v2190, %v2494
        %v2496 = vpop.f32.mrb[0].mxu0
        %v2497 = vpop.f32.mrb[0].mxu0
        %v2498 = vadd.f32 %v2193, %v2497
        %v2499 = vpop.f32.mrb[0].mxu0
        %2500 = vmatprep.mubr.bf16.mxu0 0
        %2501 = vmatmul.mubr.bf16.gmra.mrb[0].mxu0 %v2311
        %v2502 = vpop.f32.mrb[0].mxu0
        %v2503 = vadd.f32 %v2198, %v2502
        %v2504 = vpop.f32.mrb[0].mxu0
        %v2505 = vpop.f32.mrb[0].mxu0
        %v2506 = vadd.f32 %v2201, %v2505
        %v2507 = vpop.f32.mrb[0].mxu0
        %2508 = vmatprep.mubr.bf16.mxu0 0
        %2509 = vmatmul.mubr.bf16.gmra.mrb[0].mxu0 %v2312
        %v2510 = vpop.f32.mrb[0].mxu0
        %v2511 = vadd.f32 %v2206, %v2510
        %v2512 = vpop.f32.mrb[0].mxu0
        %v2513 = vpop.f32.mrb[0].mxu0
        %v2514 = vadd.f32 %v2209, %v2513
        %v2515 = vpop.f32.mrb[0].mxu0
        %2516 = vmatprep.mubr.bf16.mxu0 0
        %2517 = vmatmul.mubr.bf16.gmra.mrb[0].mxu0 %v2313
        %v2518 = vpop.f32.mrb[0].mxu0
        %v2519 = vadd.f32 %v2214, %v2518
        %v2520 = vpop.f32.mrb[0].mxu0
        %v2521 = vpop.f32.mrb[0].mxu0
        %v2522 = vadd.f32 %v2217, %v2521
        %v2523 = vpop.f32.mrb[0].mxu0
        %2524 = vmatprep.mubr.bf16.mxu0 0
        %2525 = vmatmul.mubr.bf16.gmra.mrb[0].mxu0 %v2314
        %v2526 = vpop.f32.mrb[0].mxu0
        %v2527 = vadd.f32 %v2222, %v2526
        %v2528 = vpop.f32.mrb[0].mxu0
        %v2529 = vpop.f32.mrb[0].mxu0
        %v2530 = vadd.f32 %v2225, %v2529
        %v2531 = vpop.f32.mrb[0].mxu0
        %2532 = vmatprep.mubr.bf16.mxu0 0
        %2533 = vmatmul.mubr.bf16.gmra.mrb[0].mxu0 %v2315
        %v2534 = vpop.f32.mrb[0].mxu0
        %v2535 = vadd.f32 %v2230, %v2534
        %v2536 = vpop.f32.mrb[0].mxu0
        %v2537 = vpop.f32.mrb[0].mxu0
        %v2538 = vadd.f32 %v2233, %v2537
        %v2539 = vpop.f32.mrb[0].mxu0
        %2540 = vdwg.mxu0
        %v2541 = vld [vmem:[#allocation2] sm:$0xe]
        %v2542 = vld [vmem:[#allocation2 + $0xc] sm:$0xe]
        %v2543 = vld [vmem:[#allocation2 + $0x18] sm:$0xe]
        %v2544 = vld [vmem:[#allocation2 + $0x24] sm:$0xe]
        %v2545 = vld [vmem:[#allocation2 + $0x30] sm:$0xe]
        %v2546 = vld [vmem:[#allocation2 + $0x3c] sm:$0xe]
        %v2547 = vld [vmem:[#allocation2 + $0x48] sm:$0xe]
        %v2548 = vld [vmem:[#allocation2 + $0x54] sm:$0xe]
        %v2549 = vld [vmem:[#allocation2 + $0x60] sm:$0xe]
        %v2550 = vld [vmem:[#allocation2 + $0x6c] sm:$0xe]
        %v2551 = vld [vmem:[#allocation2 + $0x78] sm:$0xe]
        %v2552 = vld [vmem:[#allocation2 + $0x84] sm:$0xe]
        %v2553 = vld [vmem:[#allocation2 + $0x90] sm:$0xe]
        %v2554 = vld [vmem:[#allocation2 + $0x9c] sm:$0xe]
        %v2555 = vld [vmem:[#allocation2 + $0xa8] sm:$0xe]
        %v2556 = vld [vmem:[#allocation2 + $0xb4] sm:$0xe]
        %vm2589 = vcmask 1042432
        %vm2590 = vcmask 1046532
        %vm2591 = vmor %vm2589, %vm2590
        %v2592 = vrot.slane %v2541, 5
        %v2593 = vrot.slane %v2592, 4
        %v2594 = vrot.slane %v1496, 5
        %v2595 = vsel %vm2591, %v2593, %v2594
        %v2596 = vrot.slane %v2594, 4
        %v2597 = vrot.slane %v1543, 5
        %v2598 = vsel %vm2591, %v2596, %v2597
        %v2599 = vrot.slane %v2542, 5
        %v2600 = vrot.slane %v2599, 4
        %v2601 = vrot.slane %v1498, 5
        %v2602 = vsel %vm2591, %v2600, %v2601
        %v2603 = vrot.slane %v2601, 4
        %v2604 = vrot.slane %v1544, 5
        %v2605 = vsel %vm2591, %v2603, %v2604
        %v2606 = vrot.slane %v2543, 5
        %v2607 = vrot.slane %v2606, 4
        %v2608 = vrot.slane %v1500, 5
        %v2609 = vsel %vm2591, %v2607, %v2608
        %v2610 = vrot.slane %v2608, 4
        %v2611 = vrot.slane %v1545, 5
        %v2612 = vsel %vm2591, %v2610, %v2611
        %v2613 = vrot.slane %v2544, 5
        %v2614 = vrot.slane %v2613, 4
        %v2615 = vrot.slane %v1502, 5
        %v2616 = vsel %vm2591, %v2614, %v2615
        %v2617 = vrot.slane %v2615, 4
        %v2618 = vrot.slane %v1546, 5
        %v2619 = vsel %vm2591, %v2617, %v2618
        %v2620 = vrot.slane %v2545, 5
        %v2621 = vrot.slane %v2620, 4
        %v2622 = vrot.slane %v1504, 5
        %v2623 = vsel %vm2591, %v2621, %v2622
        %v2624 = vrot.slane %v2622, 4
        %v2625 = vrot.slane %v1547, 5
        %v2626 = vsel %vm2591, %v2624, %v2625
        %v2627 = vrot.slane %v2546, 5
        %v2628 = vrot.slane %v2627, 4
        %v2629 = vrot.slane %v1506, 5
        %v2630 = vsel %vm2591, %v2628, %v2629
        %v2631 = vrot.slane %v2629, 4
        %v2632 = vrot.slane %v1548, 5
        %v2633 = vsel %vm2591, %v2631, %v2632
        %v2634 = vrot.slane %v2547, 5
        %v2635 = vrot.slane %v2634, 4
        %v2636 = vrot.slane %v1508, 5
        %v2637 = vsel %vm2591, %v2635, %v2636
        %v2638 = vrot.slane %v2636, 4
        %v2639 = vrot.slane %v1549, 5
        %v2640 = vsel %vm2591, %v2638, %v2639
        %v2641 = vrot.slane %v2548, 5
        %v2642 = vrot.slane %v2641, 4
        %v2643 = vrot.slane %v1510, 5
        %v2644 = vsel %vm2591, %v2642, %v2643
        %v2645 = vrot.slane %v2643, 4
        %v2646 = vrot.slane %v1550, 5
        %v2647 = vsel %vm2591, %v2645, %v2646
        %v2648 = vrot.slane %v2549, 5
        %v2649 = vrot.slane %v2648, 4
        %v2650 = vrot.slane %v1512, 5
        %v2651 = vsel %vm2591, %v2649, %v2650
        %v2652 = vrot.slane %v2650, 4
        %v2653 = vrot.slane %v1551, 5
        %v2654 = vsel %vm2591, %v2652, %v2653
        %v2655 = vrot.slane %v2550, 5
        %v2656 = vrot.slane %v2655, 4
        %v2657 = vrot.slane %v1514, 5
        %v2658 = vsel %vm2591, %v2656, %v2657
        %v2659 = vrot.slane %v2657, 4
        %v2660 = vrot.slane %v1552, 5
        %v2661 = vsel %vm2591, %v2659, %v2660
        %v2662 = vrot.slane %v2551, 5
        %v2663 = vrot.slane %v2662, 4
        %v2664 = vrot.slane %v1516, 5
        %v2665 = vsel %vm2591, %v2663, %v2664
        %v2666 = vrot.slane %v2664, 4
        %v2667 = vrot.slane %v1553, 5
        %v2668 = vsel %vm2591, %v2666, %v2667
        %v2669 = vrot.slane %v2552, 5
        %v2670 = vrot.slane %v2669, 4
        %v2671 = vrot.slane %v1518, 5
        %v2672 = vsel %vm2591, %v2670, %v2671
        %v2673 = vrot.slane %v2671, 4
        %v2674 = vrot.slane %v1554, 5
        %v2675 = vsel %vm2591, %v2673, %v2674
        %v2676 = vrot.slane %v2553, 5
        %v2677 = vrot.slane %v2676, 4
        %v2678 = vrot.slane %v1520, 5
        %v2679 = vsel %vm2591, %v2677, %v2678
        %v2680 = vrot.slane %v2678, 4
        %v2681 = vrot.slane %v1555, 5
        %v2682 = vsel %vm2591, %v2680, %v2681
        %v2683 = vrot.slane %v2554, 5
        %v2684 = vrot.slane %v2683, 4
        %v2685 = vrot.slane %v1522, 5
        %v2686 = vsel %vm2591, %v2684, %v2685
        %v2687 = vrot.slane %v2685, 4
        %v2688 = vrot.slane %v1556, 5
        %v2689 = vsel %vm2591, %v2687, %v2688
        %v2690 = vrot.slane %v2555, 5
        %v2691 = vrot.slane %v2690, 4
        %v2692 = vrot.slane %v1524, 5
        %v2693 = vsel %vm2591, %v2691, %v2692
        %v2694 = vrot.slane %v2692, 4
        %v2695 = vrot.slane %v1557, 5
        %v2696 = vsel %vm2591, %v2694, %v2695
        %v2697 = vrot.slane %v2556, 5
        %v2698 = vrot.slane %v2697, 4
        %v2699 = vrot.slane %v1526, 5
        %v2700 = vsel %vm2591, %v2698, %v2699
        %v2701 = vrot.slane %v2699, 4
        %v2702 = vrot.slane %v1558, 5
        %v2703 = vsel %vm2591, %v2701, %v2702
        %s2704 = scalar_lea.vmem %s4, 128
        %v2705 = vld [vmem:[%s2704] sm:$0xf]
        %v2706 = vld [vmem:[%s2704 + $0x4] sm:$0xf]
        %v2707 = vld [vmem:[%s2704 + $0x8] sm:$0xf]
        %v2708 = vld [vmem:[%s2704 + $0xc] sm:$0xf]
        %v2709 = vld [vmem:[%s2704 + $0x10] sm:$0xf]
        %v2710 = vld [vmem:[%s2704 + $0x14] sm:$0xf]
        %v2711 = vld [vmem:[%s2704 + $0x18] sm:$0xf]
        %v2712 = vld [vmem:[%s2704 + $0x1c] sm:$0xf]
        %v2713 = vld [vmem:[%s2704 + $0x20] sm:$0xf]
        %v2714 = vld [vmem:[%s2704 + $0x24] sm:$0xf]
        %v2715 = vld [vmem:[%s2704 + $0x28] sm:$0xf]
        %v2716 = vld [vmem:[%s2704 + $0x2c] sm:$0xf]
        %v2717 = vld [vmem:[%s2704 + $0x30] sm:$0xf]
        %v2718 = vld [vmem:[%s2704 + $0x34] sm:$0xf]
        %v2719 = vld [vmem:[%s2704 + $0x38] sm:$0xf]
        %v2720 = vld [vmem:[%s2704 + $0x3c] sm:$0xf]
        %v2721 = vunpack.c.l.b16 %v2595
        %v2722 = vunpack.c.l.b16 %v2598
        %v2723 = vunpack.c.l.b16 %v2602
        %v2724 = vunpack.c.l.b16 %v2605
        %v2725 = vunpack.c.l.b16 %v2609
        %v2726 = vunpack.c.l.b16 %v2612
        %v2727 = vunpack.c.l.b16 %v2616
        %v2728 = vunpack.c.l.b16 %v2619
        %v2729 = vunpack.c.l.b16 %v2623
        %v2730 = vunpack.c.l.b16 %v2626
        %v2731 = vunpack.c.l.b16 %v2630
        %v2732 = vunpack.c.l.b16 %v2633
        %v2733 = vunpack.c.l.b16 %v2637
        %v2734 = vunpack.c.l.b16 %v2640
        %v2735 = vunpack.c.l.b16 %v2644
        %v2736 = vunpack.c.l.b16 %v2647
        %v2737 = vunpack.c.l.b16 %v2651
        %v2738 = vunpack.c.l.b16 %v2654
        %v2739 = vunpack.c.l.b16 %v2658
        %v2740 = vunpack.c.l.b16 %v2661
        %v2741 = vunpack.c.l.b16 %v2665
        %v2742 = vunpack.c.l.b16 %v2668
        %v2743 = vunpack.c.l.b16 %v2672
        %v2744 = vunpack.c.l.b16 %v2675
        %v2745 = vunpack.c.l.b16 %v2679
        %v2746 = vunpack.c.l.b16 %v2682
        %v2747 = vunpack.c.l.b16 %v2686
        %v2748 = vunpack.c.l.b16 %v2689
        %v2749 = vunpack.c.l.b16 %v2693
        %v2750 = vunpack.c.l.b16 %v2696
        %v2751 = vunpack.c.l.b16 %v2700
        %v2752 = vunpack.c.l.b16 %v2703
        %v2753 = vpack.c.b16 %v2722, %v2721
        %v2754 = vpack.c.b16 %v2724, %v2723
        %v2755 = vpack.c.b16 %v2726, %v2725
        %v2756 = vpack.c.b16 %v2728, %v2727
        %v2757 = vpack.c.b16 %v2730, %v2729
        %v2758 = vpack.c.b16 %v2732, %v2731
        %v2759 = vpack.c.b16 %v2734, %v2733
        %v2760 = vpack.c.b16 %v2736, %v2735
        %v2761 = vpack.c.b16 %v2738, %v2737
        %v2762 = vpack.c.b16 %v2740, %v2739
        %v2763 = vpack.c.b16 %v2742, %v2741
        %v2764 = vpack.c.b16 %v2744, %v2743
        %v2765 = vpack.c.b16 %v2746, %v2745
        %v2766 = vpack.c.b16 %v2748, %v2747
        %v2767 = vpack.c.b16 %v2750, %v2749
        %v2768 = vpack.c.b16 %v2752, %v2751
        %v2801 = vunpack.c.l.b16 %v2705
        %v2802 = vunpack.c.l.b16 %v2706
        %v2803 = vunpack.c.l.b16 %v2707
        %v2804 = vunpack.c.l.b16 %v2708
        %v2805 = vunpack.c.l.b16 %v2709
        %v2806 = vunpack.c.l.b16 %v2710
        %v2807 = vunpack.c.l.b16 %v2711
        %v2808 = vunpack.c.l.b16 %v2712
        %v2809 = vunpack.c.l.b16 %v2713
        %v2810 = vunpack.c.l.b16 %v2714
        %v2811 = vunpack.c.l.b16 %v2715
        %v2812 = vunpack.c.l.b16 %v2716
        %v2813 = vunpack.c.l.b16 %v2717
        %v2814 = vunpack.c.l.b16 %v2718
        %v2815 = vunpack.c.l.b16 %v2719
        %v2816 = vunpack.c.l.b16 %v2720
        %v2817 = vpack.c.b16 %v2802, %v2801
        %v2818 = vpack.c.b16 %v2804, %v2803
        %v2819 = vpack.c.b16 %v2806, %v2805
        %v2820 = vpack.c.b16 %v2808, %v2807
        %v2821 = vpack.c.b16 %v2810, %v2809
        %v2822 = vpack.c.b16 %v2812, %v2811
        %v2823 = vpack.c.b16 %v2814, %v2813
        %v2824 = vpack.c.b16 %v2816, %v2815
        %2833 = vmatprep.subr.bf16.mxu0 0
        %2834 = vmatpush1.bf16.msra.mxu0 %v2817
        %2835 = vmatprep.subr.bf16.mxu0 0
        %2836 = vmatpush1.bf16.msra.mxu0 %v2818
        %2837 = vmatprep.subr.bf16.mxu0 0
        %2838 = vmatpush1.bf16.msra.mxu0 %v2819
        %2839 = vmatprep.subr.bf16.mxu0 0
        %2840 = vmatpush1.bf16.msra.mxu0 %v2820
        %2841 = vmatprep.subr.bf16.mxu0 0
        %2842 = vmatpush1.bf16.msra.mxu0 %v2821
        %2843 = vmatprep.subr.bf16.mxu0 0
        %2844 = vmatpush1.bf16.msra.mxu0 %v2822
        %2845 = vmatprep.subr.bf16.mxu0 0
        %2846 = vmatpush1.bf16.msra.mxu0 %v2823
        %2847 = vmatprep.subr.bf16.mxu0 0
        %2848 = vmatpush1.bf16.msra.mxu0 %v2824
        %2849 = vmatprep.subr.bf16.mxu0 0
        %2850 = vmatpush1.bf16.msra.mxu0 0
        %2851 = vmatprep.subr.bf16.mxu0 0
        %2852 = vmatpush1.bf16.msra.mxu0 0
        %2853 = vmatprep.subr.bf16.mxu0 0
        %2854 = vmatpush1.bf16.msra.mxu0 0
        %2855 = vmatprep.subr.bf16.mxu0 0
        %2856 = vmatpush1.bf16.msra.mxu0 0
        %2857 = vmatprep.subr.bf16.mxu0 0
        %2858 = vmatpush1.bf16.msra.mxu0 0
        %2859 = vmatprep.subr.bf16.mxu0 0
        %2860 = vmatpush1.bf16.msra.mxu0 0
        %2861 = vmatprep.subr.bf16.mxu0 0
        %2862 = vmatpush1.bf16.msra.mxu0 0
        %2863 = vmatprep.subr.bf16.mxu0 0
        %2864 = vmatpush1.bf16.msra.mxu0 0
        %2865 = vmatprep.mubr.bf16.mxu0 0
        %2866 = vmatmul.mubr.bf16.gmra.mrb[0].mxu0 %v2753
        %v2867 = vpop.f32.mrb[0].mxu0
        %v2868 = vadd.f32 0.0, %v2867
        %v2869 = vpop.f32.mrb[0].mxu0
        %v2870 = vpop.f32.mrb[0].mxu0
        %v2871 = vadd.f32 0.0, %v2870
        %v2872 = vpop.f32.mrb[0].mxu0
        %2873 = vmatprep.mubr.bf16.mxu0 0
        %2874 = vmatmul.mubr.bf16.gmra.mrb[0].mxu0 %v2754
        %v2875 = vpop.f32.mrb[0].mxu0
        %v2876 = vadd.f32 0.0, %v2875
        %v2877 = vpop.f32.mrb[0].mxu0
        %v2878 = vpop.f32.mrb[0].mxu0
        %v2879 = vadd.f32 0.0, %v2878
        %v2880 = vpop.f32.mrb[0].mxu0
        %2881 = vmatprep.mubr.bf16.mxu0 0
        %2882 = vmatmul.mubr.bf16.gmra.mrb[0].mxu0 %v2755
        %v2883 = vpop.f32.mrb[0].mxu0
        %v2884 = vadd.f32 0.0, %v2883
        %v2885 = vpop.f32.mrb[0].mxu0
        %v2886 = vpop.f32.mrb[0].mxu0
        %v2887 = vadd.f32 0.0, %v2886
        %v2888 = vpop.f32.mrb[0].mxu0
        %2889 = vmatprep.mubr.bf16.mxu0 0
        %2890 = vmatmul.mubr.bf16.gmra.mrb[0].mxu0 %v2756
        %v2891 = vpop.f32.mrb[0].mxu0
        %v2892 = vadd.f32 0.0, %v2891
        %v2893 = vpop.f32.mrb[0].mxu0
        %v2894 = vpop.f32.mrb[0].mxu0
        %v2895 = vadd.f32 0.0, %v2894
        %v2896 = vpop.f32.mrb[0].mxu0
        %2897 = vmatprep.mubr.bf16.mxu0 0
        %2898 = vmatmul.mubr.bf16.gmra.mrb[0].mxu0 %v2757
        %v2899 = vpop.f32.mrb[0].mxu0
        %v2900 = vadd.f32 0.0, %v2899
        %v2901 = vpop.f32.mrb[0].mxu0
        %v2902 = vpop.f32.mrb[0].mxu0
        %v2903 = vadd.f32 0.0, %v2902
        %v2904 = vpop.f32.mrb[0].mxu0
        %2905 = vmatprep.mubr.bf16.mxu0 0
        %2906 = vmatmul.mubr.bf16.gmra.mrb[0].mxu0 %v2758
        %v2907 = vpop.f32.mrb[0].mxu0
        %v2908 = vadd.f32 0.0, %v2907
        %v2909 = vpop.f32.mrb[0].mxu0
        %v2910 = vpop.f32.mrb[0].mxu0
        %v2911 = vadd.f32 0.0, %v2910
        %v2912 = vpop.f32.mrb[0].mxu0
        %2913 = vmatprep.mubr.bf16.mxu0 0
        %2914 = vmatmul.mubr.bf16.gmra.mrb[0].mxu0 %v2759
        %v2915 = vpop.f32.mrb[0].mxu0
        %v2916 = vadd.f32 0.0, %v2915
        %v2917 = vpop.f32.mrb[0].mxu0
        %v2918 = vpop.f32.mrb[0].mxu0
        %v2919 = vadd.f32 0.0, %v2918
        %v2920 = vpop.f32.mrb[0].mxu0
        %2921 = vmatprep.mubr.bf16.mxu0 0
        %2922 = vmatmul.mubr.bf16.gmra.mrb[0].mxu0 %v2760
        %v2923 = vpop.f32.mrb[0].mxu0
        %v2924 = vadd.f32 0.0, %v2923
        %v2925 = vpop.f32.mrb[0].mxu0
        %v2926 = vpop.f32.mrb[0].mxu0
        %v2927 = vadd.f32 0.0, %v2926
        %v2928 = vpop.f32.mrb[0].mxu0
        %2929 = vmatprep.mubr.bf16.mxu0 0
        %2930 = vmatmul.mubr.bf16.gmra.mrb[0].mxu0 %v2761
        %v2931 = vpop.f32.mrb[0].mxu0
        %v2932 = vadd.f32 0.0, %v2931
        %v2933 = vpop.f32.mrb[0].mxu0
        %v2934 = vpop.f32.mrb[0].mxu0
        %v2935 = vadd.f32 0.0, %v2934
        %v2936 = vpop.f32.mrb[0].mxu0
        %2937 = vmatprep.mubr.bf16.mxu0 0
        %2938 = vmatmul.mubr.bf16.gmra.mrb[0].mxu0 %v2762
        %v2939 = vpop.f32.mrb[0].mxu0
        %v2940 = vadd.f32 0.0, %v2939
        %v2941 = vpop.f32.mrb[0].mxu0
        %v2942 = vpop.f32.mrb[0].mxu0
        %v2943 = vadd.f32 0.0, %v2942
        %v2944 = vpop.f32.mrb[0].mxu0
        %2945 = vmatprep.mubr.bf16.mxu0 0
        %2946 = vmatmul.mubr.bf16.gmra.mrb[0].mxu0 %v2763
        %v2947 = vpop.f32.mrb[0].mxu0
        %v2948 = vadd.f32 0.0, %v2947
        %v2949 = vpop.f32.mrb[0].mxu0
        %v2950 = vpop.f32.mrb[0].mxu0
        %v2951 = vadd.f32 0.0, %v2950
        %v2952 = vpop.f32.mrb[0].mxu0
        %2953 = vmatprep.mubr.bf16.mxu0 0
        %2954 = vmatmul.mubr.bf16.gmra.mrb[0].mxu0 %v2764
        %v2955 = vpop.f32.mrb[0].mxu0
        %v2956 = vadd.f32 0.0, %v2955
        %v2957 = vpop.f32.mrb[0].mxu0
        %v2958 = vpop.f32.mrb[0].mxu0
        %v2959 = vadd.f32 0.0, %v2958
        %v2960 = vpop.f32.mrb[0].mxu0
        %2961 = vmatprep.mubr.bf16.mxu0 0
        %2962 = vmatmul.mubr.bf16.gmra.mrb[0].mxu0 %v2765
        %v2963 = vpop.f32.mrb[0].mxu0
        %v2964 = vadd.f32 0.0, %v2963
        %v2965 = vpop.f32.mrb[0].mxu0
        %v2966 = vpop.f32.mrb[0].mxu0
        %v2967 = vadd.f32 0.0, %v2966
        %v2968 = vpop.f32.mrb[0].mxu0
        %2969 = vmatprep.mubr.bf16.mxu0 0
        %2970 = vmatmul.mubr.bf16.gmra.mrb[0].mxu0 %v2766
        %v2971 = vpop.f32.mrb[0].mxu0
        %v2972 = vadd.f32 0.0, %v2971
        %v2973 = vpop.f32.mrb[0].mxu0
        %v2974 = vpop.f32.mrb[0].mxu0
        %v2975 = vadd.f32 0.0, %v2974
        %v2976 = vpop.f32.mrb[0].mxu0
        %2977 = vmatprep.mubr.bf16.mxu0 0
        %2978 = vmatmul.mubr.bf16.gmra.mrb[0].mxu0 %v2767
        %v2979 = vpop.f32.mrb[0].mxu0
        %v2980 = vadd.f32 0.0, %v2979
        %v2981 = vpop.f32.mrb[0].mxu0
        %v2982 = vpop.f32.mrb[0].mxu0
        %v2983 = vadd.f32 0.0, %v2982
        %v2984 = vpop.f32.mrb[0].mxu0
        %2985 = vmatprep.mubr.bf16.mxu0 0
        %2986 = vmatmul.mubr.bf16.gmra.mrb[0].mxu0 %v2768
        %v2987 = vpop.f32.mrb[0].mxu0
        %v2988 = vadd.f32 0.0, %v2987
        %v2989 = vpop.f32.mrb[0].mxu0
        %v2990 = vpop.f32.mrb[0].mxu0
        %v2991 = vadd.f32 0.0, %v2990
        %v2992 = vpop.f32.mrb[0].mxu0
        %2993 = vdwg.mxu0
        %v2994 = vadd.f32 %v2415, %v2868
        %v2995 = vadd.f32 %v2418, %v2871
        %v2996 = vadd.f32 %v2423, %v2876
        %v2997 = vadd.f32 %v2426, %v2879
        %v2998 = vadd.f32 %v2431, %v2884
        %v2999 = vadd.f32 %v2434, %v2887
        %v3000 = vadd.f32 %v2439, %v2892
        %v3001 = vadd.f32 %v2442, %v2895
        %v3002 = vadd.f32 %v2447, %v2900
        %v3003 = vadd.f32 %v2450, %v2903
        %v3004 = vadd.f32 %v2455, %v2908
        %v3005 = vadd.f32 %v2458, %v2911
        %v3006 = vadd.f32 %v2463, %v2916
        %v3007 = vadd.f32 %v2466, %v2919
        %v3008 = vadd.f32 %v2471, %v2924
        %v3009 = vadd.f32 %v2474, %v2927
        %v3010 = vadd.f32 %v2479, %v2932
        %v3011 = vadd.f32 %v2482, %v2935
        %v3012 = vadd.f32 %v2487, %v2940
        %v3013 = vadd.f32 %v2490, %v2943
        %v3014 = vadd.f32 %v2495, %v2948
        %v3015 = vadd.f32 %v2498, %v2951
        %v3016 = vadd.f32 %v2503, %v2956
        %v3017 = vadd.f32 %v2506, %v2959
        %v3018 = vadd.f32 %v2511, %v2964
        %v3019 = vadd.f32 %v2514, %v2967
        %v3020 = vadd.f32 %v2519, %v2972
        %v3021 = vadd.f32 %v2522, %v2975
        %v3022 = vadd.f32 %v2527, %v2980
        %v3023 = vadd.f32 %v2530, %v2983
        %v3024 = vadd.f32 %v2535, %v2988
        %v3025 = vadd.f32 %v2538, %v2991
        %v3026 = vld [vmem:[%s1377] sm:$0xf]
        %v3027 = vld [vmem:[%s1377 + $0x4] sm:$0xf]
        %v3028 = vld [vmem:[%s1377 + $0xc] sm:$0xf]
        %v3029 = vld [vmem:[%s1377 + $0x10] sm:$0xf]
        %v3030 = vld [vmem:[%s1377 + $0x18] sm:$0xf]
        %v3031 = vld [vmem:[%s1377 + $0x1c] sm:$0xf]
        %v3032 = vld [vmem:[%s1377 + $0x24] sm:$0xf]
        %v3033 = vld [vmem:[%s1377 + $0x28] sm:$0xf]
        %v3034 = vld [vmem:[%s1377 + $0x30] sm:$0xf]
        %v3035 = vld [vmem:[%s1377 + $0x34] sm:$0xf]
        %v3036 = vld [vmem:[%s1377 + $0x3c] sm:$0xf]
        %v3037 = vld [vmem:[%s1377 + $0x40] sm:$0xf]
        %v3038 = vld [vmem:[%s1377 + $0x48] sm:$0xf]
        %v3039 = vld [vmem:[%s1377 + $0x4c] sm:$0xf]
        %v3040 = vld [vmem:[%s1377 + $0x54] sm:$0xf]
        %v3041 = vld [vmem:[%s1377 + $0x58] sm:$0xf]
        %v3042 = vld [vmem:[%s1377 + $0x60] sm:$0xf]
        %v3043 = vld [vmem:[%s1377 + $0x64] sm:$0xf]
        %v3044 = vld [vmem:[%s1377 + $0x6c] sm:$0xf]
        %v3045 = vld [vmem:[%s1377 + $0x70] sm:$0xf]
        %v3046 = vld [vmem:[%s1377 + $0x78] sm:$0xf]
        %v3047 = vld [vmem:[%s1377 + $0x7c] sm:$0xf]
        %v3048 = vld [vmem:[%s1377 + $0x84] sm:$0xf]
        %v3049 = vld [vmem:[%s1377 + $0x88] sm:$0xf]
        %v3050 = vld [vmem:[%s1377 + $0x90] sm:$0xf]
        %v3051 = vld [vmem:[%s1377 + $0x94] sm:$0xf]
        %v3052 = vld [vmem:[%s1377 + $0x9c] sm:$0xf]
        %v3053 = vld [vmem:[%s1377 + $0xa0] sm:$0xf]
        %v3054 = vld [vmem:[%s1377 + $0xa8] sm:$0xf]
        %v3055 = vld [vmem:[%s1377 + $0xac] sm:$0xf]
        %v3056 = vld [vmem:[%s1377 + $0xb4] sm:$0xf]
        %v3057 = vld [vmem:[%s1377 + $0xb8] sm:$0xf]
        %s3058 = scalar_lea.vmem %s4, 192
        %v3059 = vld [vmem:[%s3058] sm:$0xf]
        %v3060 = vld [vmem:[%s3058 + $0x4] sm:$0xf]
        %v3061 = vld [vmem:[%s3058 + $0x8] sm:$0xf]
        %v3062 = vld [vmem:[%s3058 + $0xc] sm:$0xf]
        %v3063 = vld [vmem:[%s3058 + $0x10] sm:$0xf]
        %v3064 = vld [vmem:[%s3058 + $0x14] sm:$0xf]
        %v3065 = vld [vmem:[%s3058 + $0x18] sm:$0xf]
        %v3066 = vld [vmem:[%s3058 + $0x1c] sm:$0xf]
        %v3067 = vld [vmem:[%s3058 + $0x20] sm:$0xf]
        %v3068 = vld [vmem:[%s3058 + $0x24] sm:$0xf]
        %v3069 = vld [vmem:[%s3058 + $0x28] sm:$0xf]
        %v3070 = vld [vmem:[%s3058 + $0x2c] sm:$0xf]
        %v3071 = vld [vmem:[%s3058 + $0x30] sm:$0xf]
        %v3072 = vld [vmem:[%s3058 + $0x34] sm:$0xf]
        %v3073 = vld [vmem:[%s3058 + $0x38] sm:$0xf]
        %v3074 = vld [vmem:[%s3058 + $0x3c] sm:$0xf]
        %v3107 = vunpack.c.l.b16 %v3026
        %v3108 = vunpack.c.l.b16 %v3027
        %v3109 = vunpack.c.l.b16 %v3028
        %v3110 = vunpack.c.l.b16 %v3029
        %v3111 = vunpack.c.l.b16 %v3030
        %v3112 = vunpack.c.l.b16 %v3031
        %v3113 = vunpack.c.l.b16 %v3032
        %v3114 = vunpack.c.l.b16 %v3033
        %v3115 = vunpack.c.l.b16 %v3034
        %v3116 = vunpack.c.l.b16 %v3035
        %v3117 = vunpack.c.l.b16 %v3036
        %v3118 = vunpack.c.l.b16 %v3037
        %v3119 = vunpack.c.l.b16 %v3038
        %v3120 = vunpack.c.l.b16 %v3039
        %v3121 = vunpack.c.l.b16 %v3040
        %v3122 = vunpack.c.l.b16 %v3041
        %v3123 = vunpack.c.l.b16 %v3042
        %v3124 = vunpack.c.l.b16 %v3043
        %v3125 = vunpack.c.l.b16 %v3044
        %v3126 = vunpack.c.l.b16 %v3045
        %v3127 = vunpack.c.l.b16 %v3046
        %v3128 = vunpack.c.l.b16 %v3047
        %v3129 = vunpack.c.l.b16 %v3048
        %v3130 = vunpack.c.l.b16 %v3049
        %v3131 = vunpack.c.l.b16 %v3050
        %v3132 = vunpack.c.l.b16 %v3051
        %v3133 = vunpack.c.l.b16 %v3052
        %v3134 = vunpack.c.l.b16 %v3053
        %v3135 = vunpack.c.l.b16 %v3054
        %v3136 = vunpack.c.l.b16 %v3055
        %v3137 = vunpack.c.l.b16 %v3056
        %v3138 = vunpack.c.l.b16 %v3057
        %v3139 = vpack.c.b16 %v3108, %v3107
        %v3140 = vpack.c.b16 %v3110, %v3109
        %v3141 = vpack.c.b16 %v3112, %v3111
        %v3142 = vpack.c.b16 %v3114, %v3113
        %v3143 = vpack.c.b16 %v3116, %v3115
        %v3144 = vpack.c.b16 %v3118, %v3117
        %v3145 = vpack.c.b16 %v3120, %v3119
        %v3146 = vpack.c.b16 %v3122, %v3121
        %v3147 = vpack.c.b16 %v3124, %v3123
        %v3148 = vpack.c.b16 %v3126, %v3125
        %v3149 = vpack.c.b16 %v3128, %v3127
        %v3150 = vpack.c.b16 %v3130, %v3129
        %v3151 = vpack.c.b16 %v3132, %v3131
        %v3152 = vpack.c.b16 %v3134, %v3133
        %v3153 = vpack.c.b16 %v3136, %v3135
        %v3154 = vpack.c.b16 %v3138, %v3137
        %v3187 = vunpack.c.l.b16 %v3059
        %v3188 = vunpack.c.l.b16 %v3060
        %v3189 = vunpack.c.l.b16 %v3061
        %v3190 = vunpack.c.l.b16 %v3062
        %v3191 = vunpack.c.l.b16 %v3063
        %v3192 = vunpack.c.l.b16 %v3064
        %v3193 = vunpack.c.l.b16 %v3065
        %v3194 = vunpack.c.l.b16 %v3066
        %v3195 = vunpack.c.l.b16 %v3067
        %v3196 = vunpack.c.l.b16 %v3068
        %v3197 = vunpack.c.l.b16 %v3069
        %v3198 = vunpack.c.l.b16 %v3070
        %v3199 = vunpack.c.l.b16 %v3071
        %v3200 = vunpack.c.l.b16 %v3072
        %v3201 = vunpack.c.l.b16 %v3073
        %v3202 = vunpack.c.l.b16 %v3074
        %v3203 = vpack.c.b16 %v3188, %v3187
        %v3204 = vpack.c.b16 %v3190, %v3189
        %v3205 = vpack.c.b16 %v3192, %v3191
        %v3206 = vpack.c.b16 %v3194, %v3193
        %v3207 = vpack.c.b16 %v3196, %v3195
        %v3208 = vpack.c.b16 %v3198, %v3197
        %v3209 = vpack.c.b16 %v3200, %v3199
        %v3210 = vpack.c.b16 %v3202, %v3201
        %3219 = vmatprep.subr.bf16.mxu0 0
        %3220 = vmatpush1.bf16.msra.mxu0 %v3203
        %3221 = vmatprep.subr.bf16.mxu0 0
        %3222 = vmatpush1.bf16.msra.mxu0 %v3204
        %3223 = vmatprep.subr.bf16.mxu0 0
        %3224 = vmatpush1.bf16.msra.mxu0 %v3205
        %3225 = vmatprep.subr.bf16.mxu0 0
        %3226 = vmatpush1.bf16.msra.mxu0 %v3206
        %3227 = vmatprep.subr.bf16.mxu0 0
        %3228 = vmatpush1.bf16.msra.mxu0 %v3207
        %3229 = vmatprep.subr.bf16.mxu0 0
        %3230 = vmatpush1.bf16.msra.mxu0 %v3208
        %3231 = vmatprep.subr.bf16.mxu0 0
        %3232 = vmatpush1.bf16.msra.mxu0 %v3209
        %3233 = vmatprep.subr.bf16.mxu0 0
        %3234 = vmatpush1.bf16.msra.mxu0 %v3210
        %3235 = vmatprep.subr.bf16.mxu0 0
        %3236 = vmatpush1.bf16.msra.mxu0 0
        %3237 = vmatprep.subr.bf16.mxu0 0
        %3238 = vmatpush1.bf16.msra.mxu0 0
        %3239 = vmatprep.subr.bf16.mxu0 0
        %3240 = vmatpush1.bf16.msra.mxu0 0
        %3241 = vmatprep.subr.bf16.mxu0 0
        %3242 = vmatpush1.bf16.msra.mxu0 0
        %3243 = vmatprep.subr.bf16.mxu0 0
        %3244 = vmatpush1.bf16.msra.mxu0 0
        %3245 = vmatprep.subr.bf16.mxu0 0
        %3246 = vmatpush1.bf16.msra.mxu0 0
        %3247 = vmatprep.subr.bf16.mxu0 0
        %3248 = vmatpush1.bf16.msra.mxu0 0
        %3249 = vmatprep.subr.bf16.mxu0 0
        %3250 = vmatpush1.bf16.msra.mxu0 0
        %3251 = vmatprep.mubr.bf16.mxu0 0
        %3252 = vmatmul.mubr.bf16.gmra.mrb[0].mxu0 %v3139
        %v3253 = vpop.f32.mrb[0].mxu0
        %v3254 = vadd.f32 0.0, %v3253
        %v3255 = vpop.f32.mrb[0].mxu0
        %v3256 = vpop.f32.mrb[0].mxu0
        %v3257 = vadd.f32 0.0, %v3256
        %v3258 = vpop.f32.mrb[0].mxu0
        %3259 = vmatprep.mubr.bf16.mxu0 0
        %3260 = vmatmul.mubr.bf16.gmra.mrb[0].mxu0 %v3140
        %v3261 = vpop.f32.mrb[0].mxu0
        %v3262 = vadd.f32 0.0, %v3261
        %v3263 = vpop.f32.mrb[0].mxu0
        %v3264 = vpop.f32.mrb[0].mxu0
        %v3265 = vadd.f32 0.0, %v3264
        %v3266 = vpop.f32.mrb[0].mxu0
        %3267 = vmatprep.mubr.bf16.mxu0 0
        %3268 = vmatmul.mubr.bf16.gmra.mrb[0].mxu0 %v3141
        %v3269 = vpop.f32.mrb[0].mxu0
        %v3270 = vadd.f32 0.0, %v3269
        %v3271 = vpop.f32.mrb[0].mxu0
        %v3272 = vpop.f32.mrb[0].mxu0
        %v3273 = vadd.f32 0.0, %v3272
        %v3274 = vpop.f32.mrb[0].mxu0
        %3275 = vmatprep.mubr.bf16.mxu0 0
        %3276 = vmatmul.mubr.bf16.gmra.mrb[0].mxu0 %v3142
        %v3277 = vpop.f32.mrb[0].mxu0
        %v3278 = vadd.f32 0.0, %v3277
        %v3279 = vpop.f32.mrb[0].mxu0
        %v3280 = vpop.f32.mrb[0].mxu0
        %v3281 = vadd.f32 0.0, %v3280
        %v3282 = vpop.f32.mrb[0].mxu0
        %3283 = vmatprep.mubr.bf16.mxu0 0
        %3284 = vmatmul.mubr.bf16.gmra.mrb[0].mxu0 %v3143
        %v3285 = vpop.f32.mrb[0].mxu0
        %v3286 = vadd.f32 0.0, %v3285
        %v3287 = vpop.f32.mrb[0].mxu0
        %v3288 = vpop.f32.mrb[0].mxu0
        %v3289 = vadd.f32 0.0, %v3288
        %v3290 = vpop.f32.mrb[0].mxu0
        %3291 = vmatprep.mubr.bf16.mxu0 0
        %3292 = vmatmul.mubr.bf16.gmra.mrb[0].mxu0 %v3144
        %v3293 = vpop.f32.mrb[0].mxu0
        %v3294 = vadd.f32 0.0, %v3293
        %v3295 = vpop.f32.mrb[0].mxu0
        %v3296 = vpop.f32.mrb[0].mxu0
        %v3297 = vadd.f32 0.0, %v3296
        %v3298 = vpop.f32.mrb[0].mxu0
        %3299 = vmatprep.mubr.bf16.mxu0 0
        %3300 = vmatmul.mubr.bf16.gmra.mrb[0].mxu0 %v3145
        %v3301 = vpop.f32.mrb[0].mxu0
        %v3302 = vadd.f32 0.0, %v3301
        %v3303 = vpop.f32.mrb[0].mxu0
        %v3304 = vpop.f32.mrb[0].mxu0
        %v3305 = vadd.f32 0.0, %v3304
        %v3306 = vpop.f32.mrb[0].mxu0
        %3307 = vmatprep.mubr.bf16.mxu0 0
        %3308 = vmatmul.mubr.bf16.gmra.mrb[0].mxu0 %v3146
        %v3309 = vpop.f32.mrb[0].mxu0
        %v3310 = vadd.f32 0.0, %v3309
        %v3311 = vpop.f32.mrb[0].mxu0
        %v3312 = vpop.f32.mrb[0].mxu0
        %v3313 = vadd.f32 0.0, %v3312
        %v3314 = vpop.f32.mrb[0].mxu0
        %3315 = vmatprep.mubr.bf16.mxu0 0
        %3316 = vmatmul.mubr.bf16.gmra.mrb[0].mxu0 %v3147
        %v3317 = vpop.f32.mrb[0].mxu0
        %v3318 = vadd.f32 0.0, %v3317
        %v3319 = vpop.f32.mrb[0].mxu0
        %v3320 = vpop.f32.mrb[0].mxu0
        %v3321 = vadd.f32 0.0, %v3320
        %v3322 = vpop.f32.mrb[0].mxu0
        %3323 = vmatprep.mubr.bf16.mxu0 0
        %3324 = vmatmul.mubr.bf16.gmra.mrb[0].mxu0 %v3148
        %v3325 = vpop.f32.mrb[0].mxu0
        %v3326 = vadd.f32 0.0, %v3325
        %v3327 = vpop.f32.mrb[0].mxu0
        %v3328 = vpop.f32.mrb[0].mxu0
        %v3329 = vadd.f32 0.0, %v3328
        %v3330 = vpop.f32.mrb[0].mxu0
        %3331 = vmatprep.mubr.bf16.mxu0 0
        %3332 = vmatmul.mubr.bf16.gmra.mrb[0].mxu0 %v3149
        %v3333 = vpop.f32.mrb[0].mxu0
        %v3334 = vadd.f32 0.0, %v3333
        %v3335 = vpop.f32.mrb[0].mxu0
        %v3336 = vpop.f32.mrb[0].mxu0
        %v3337 = vadd.f32 0.0, %v3336
        %v3338 = vpop.f32.mrb[0].mxu0
        %3339 = vmatprep.mubr.bf16.mxu0 0
        %3340 = vmatmul.mubr.bf16.gmra.mrb[0].mxu0 %v3150
        %v3341 = vpop.f32.mrb[0].mxu0
        %v3342 = vadd.f32 0.0, %v3341
        %v3343 = vpop.f32.mrb[0].mxu0
        %v3344 = vpop.f32.mrb[0].mxu0
        %v3345 = vadd.f32 0.0, %v3344
        %v3346 = vpop.f32.mrb[0].mxu0
        %3347 = vmatprep.mubr.bf16.mxu0 0
        %3348 = vmatmul.mubr.bf16.gmra.mrb[0].mxu0 %v3151
        %v3349 = vpop.f32.mrb[0].mxu0
        %v3350 = vadd.f32 0.0, %v3349
        %v3351 = vpop.f32.mrb[0].mxu0
        %v3352 = vpop.f32.mrb[0].mxu0
        %v3353 = vadd.f32 0.0, %v3352
        %v3354 = vpop.f32.mrb[0].mxu0
        %3355 = vmatprep.mubr.bf16.mxu0 0
        %3356 = vmatmul.mubr.bf16.gmra.mrb[0].mxu0 %v3152
        %v3357 = vpop.f32.mrb[0].mxu0
        %v3358 = vadd.f32 0.0, %v3357
        %v3359 = vpop.f32.mrb[0].mxu0
        %v3360 = vpop.f32.mrb[0].mxu0
        %v3361 = vadd.f32 0.0, %v3360
        %v3362 = vpop.f32.mrb[0].mxu0
        %3363 = vmatprep.mubr.bf16.mxu0 0
        %3364 = vmatmul.mubr.bf16.gmra.mrb[0].mxu0 %v3153
        %v3365 = vpop.f32.mrb[0].mxu0
        %v3366 = vadd.f32 0.0, %v3365
        %v3367 = vpop.f32.mrb[0].mxu0
        %v3368 = vpop.f32.mrb[0].mxu0
        %v3369 = vadd.f32 0.0, %v3368
        %v3370 = vpop.f32.mrb[0].mxu0
        %3371 = vmatprep.mubr.bf16.mxu0 0
        %3372 = vmatmul.mubr.bf16.gmra.mrb[0].mxu0 %v3154
        %v3373 = vpop.f32.mrb[0].mxu0
        %v3374 = vadd.f32 0.0, %v3373
        %v3375 = vpop.f32.mrb[0].mxu0
        %v3376 = vpop.f32.mrb[0].mxu0
        %v3377 = vadd.f32 0.0, %v3376
        %v3378 = vpop.f32.mrb[0].mxu0
        %3379 = vdwg.mxu0
        %v3380 = vadd.f32 %v2994, %v3254
        %v3381 = vadd.f32 %v2995, %v3257
        %v3382 = vadd.f32 %v2996, %v3262
        %v3383 = vadd.f32 %v2997, %v3265
        %v3384 = vadd.f32 %v2998, %v3270
        %v3385 = vadd.f32 %v2999, %v3273
        %v3386 = vadd.f32 %v3000, %v3278
        %v3387 = vadd.f32 %v3001, %v3281
        %v3388 = vadd.f32 %v3002, %v3286
        %v3389 = vadd.f32 %v3003, %v3289
        %v3390 = vadd.f32 %v3004, %v3294
        %v3391 = vadd.f32 %v3005, %v3297
        %v3392 = vadd.f32 %v3006, %v3302
        %v3393 = vadd.f32 %v3007, %v3305
        %v3394 = vadd.f32 %v3008, %v3310
        %v3395 = vadd.f32 %v3009, %v3313
        %v3396 = vadd.f32 %v3010, %v3318
        %v3397 = vadd.f32 %v3011, %v3321
        %v3398 = vadd.f32 %v3012, %v3326
        %v3399 = vadd.f32 %v3013, %v3329
        %v3400 = vadd.f32 %v3014, %v3334
        %v3401 = vadd.f32 %v3015, %v3337
        %v3402 = vadd.f32 %v3016, %v3342
        %v3403 = vadd.f32 %v3017, %v3345
        %v3404 = vadd.f32 %v3018, %v3350
        %v3405 = vadd.f32 %v3019, %v3353
        %v3406 = vadd.f32 %v3020, %v3358
        %v3407 = vadd.f32 %v3021, %v3361
        %v3408 = vadd.f32 %v3022, %v3366
        %v3409 = vadd.f32 %v3023, %v3369
        %v3410 = vadd.f32 %v3024, %v3374
        %v3411 = vadd.f32 %v3025, %v3377
        %v3412 = vld [vmem:[%s1377] sm:$0xf]
        %v3413 = vld [vmem:[%s1377 + $0x4] sm:$0xf]
        %v3414 = vld [vmem:[%s1377 + $0x8] sm:$0x1]
        %v3415 = vld [vmem:[%s1377 + $0xc] sm:$0xf]
        %v3416 = vld [vmem:[%s1377 + $0x10] sm:$0xf]
        %v3417 = vld [vmem:[%s1377 + $0x14] sm:$0x1]
        %v3418 = vld [vmem:[%s1377 + $0x18] sm:$0xf]
        %v3419 = vld [vmem:[%s1377 + $0x1c] sm:$0xf]
        %v3420 = vld [vmem:[%s1377 + $0x20] sm:$0x1]
        %v3421 = vld [vmem:[%s1377 + $0x24] sm:$0xf]
        %v3422 = vld [vmem:[%s1377 + $0x28] sm:$0xf]
        %v3423 = vld [vmem:[%s1377 + $0x2c] sm:$0x1]
        %v3424 = vld [vmem:[%s1377 + $0x30] sm:$0xf]
        %v3425 = vld [vmem:[%s1377 + $0x34] sm:$0xf]
        %v3426 = vld [vmem:[%s1377 + $0x38] sm:$0x1]
        %v3427 = vld [vmem:[%s1377 + $0x3c] sm:$0xf]
        %v3428 = vld [vmem:[%s1377 + $0x40] sm:$0xf]
        %v3429 = vld [vmem:[%s1377 + $0x44] sm:$0x1]
        %v3430 = vld [vmem:[%s1377 + $0x48] sm:$0xf]
        %v3431 = vld [vmem:[%s1377 + $0x4c] sm:$0xf]
        %v3432 = vld [vmem:[%s1377 + $0x50] sm:$0x1]
        %v3433 = vld [vmem:[%s1377 + $0x54] sm:$0xf]
        %v3434 = vld [vmem:[%s1377 + $0x58] sm:$0xf]
        %v3435 = vld [vmem:[%s1377 + $0x5c] sm:$0x1]
        %v3436 = vld [vmem:[%s1377 + $0x60] sm:$0xf]
        %v3437 = vld [vmem:[%s1377 + $0x64] sm:$0xf]
        %v3438 = vld [vmem:[%s1377 + $0x68] sm:$0x1]
        %v3439 = vld [vmem:[%s1377 + $0x6c] sm:$0xf]
        %v3440 = vld [vmem:[%s1377 + $0x70] sm:$0xf]
        %v3441 = vld [vmem:[%s1377 + $0x74] sm:$0x1]
        %v3442 = vld [vmem:[%s1377 + $0x78] sm:$0xf]
        %v3443 = vld [vmem:[%s1377 + $0x7c] sm:$0xf]
        %v3444 = vld [vmem:[%s1377 + $0x80] sm:$0x1]
        %v3445 = vld [vmem:[%s1377 + $0x84] sm:$0xf]
        %v3446 = vld [vmem:[%s1377 + $0x88] sm:$0xf]
        %v3447 = vld [vmem:[%s1377 + $0x8c] sm:$0x1]
        %v3448 = vld [vmem:[%s1377 + $0x90] sm:$0xf]
        %v3449 = vld [vmem:[%s1377 + $0x94] sm:$0xf]
        %v3450 = vld [vmem:[%s1377 + $0x98] sm:$0x1]
        %v3451 = vld [vmem:[%s1377 + $0x9c] sm:$0xf]
        %v3452 = vld [vmem:[%s1377 + $0xa0] sm:$0xf]
        %v3453 = vld [vmem:[%s1377 + $0xa4] sm:$0x1]
        %v3454 = vld [vmem:[%s1377 + $0xa8] sm:$0xf]
        %v3455 = vld [vmem:[%s1377 + $0xac] sm:$0xf]
        %v3456 = vld [vmem:[%s1377 + $0xb0] sm:$0x1]
        %v3457 = vld [vmem:[%s1377 + $0xb4] sm:$0xf]
        %v3458 = vld [vmem:[%s1377 + $0xb8] sm:$0xf]
        %v3459 = vld [vmem:[%s1377 + $0xbc] sm:$0x1]
        %v3461 = vshrl.u32 %v3412, 16
        %v3463 = vrot.slane %v3461, 4
        %v3464 = vshll.u32 %v3412, 16
        %v3466 = vrot.slane %v3464, 5
        %v3467 = vor.u32 %v3463, %v3466
        %v3468 = vrot.slane %v3467, 4
        %v3470 = vshll.u32 %v3413, 16
        %v3472 = vrot.slane %v3470, 5
        %v3473 = vsel %vm1561, %v3468, %v3472
        %v3474 = vshrl.u32 %v3413, 16
        %v3476 = vrot.slane %v3474, 4
        %v3477 = vor.u32 %v3476, %v3472
        %v3478 = vrot.slane %v3477, 4
        %v3480 = vshll.u32 %v3414, 16
        %v3482 = vrot.slane %v3480, 5
        %v3483 = vsel %vm1561, %v3478, %v3482
        %v3485 = vshrl.u32 %v3415, 16
        %v3487 = vrot.slane %v3485, 4
        %v3488 = vshll.u32 %v3415, 16
        %v3490 = vrot.slane %v3488, 5
        %v3491 = vor.u32 %v3487, %v3490
        %v3492 = vrot.slane %v3491, 4
        %v3494 = vshll.u32 %v3416, 16
        %v3496 = vrot.slane %v3494, 5
        %v3497 = vsel %vm1561, %v3492, %v3496
        %v3498 = vshrl.u32 %v3416, 16
        %v3500 = vrot.slane %v3498, 4
        %v3501 = vor.u32 %v3500, %v3496
        %v3502 = vrot.slane %v3501, 4
        %v3504 = vshll.u32 %v3417, 16
        %v3506 = vrot.slane %v3504, 5
        %v3507 = vsel %vm1561, %v3502, %v3506
        %v3509 = vshrl.u32 %v3418, 16
        %v3511 = vrot.slane %v3509, 4
        %v3512 = vshll.u32 %v3418, 16
        %v3514 = vrot.slane %v3512, 5
        %v3515 = vor.u32 %v3511, %v3514
        %v3516 = vrot.slane %v3515, 4
        %v3518 = vshll.u32 %v3419, 16
        %v3520 = vrot.slane %v3518, 5
        %v3521 = vsel %vm1561, %v3516, %v3520
        %v3522 = vshrl.u32 %v3419, 16
        %v3524 = vrot.slane %v3522, 4
        %v3525 = vor.u32 %v3524, %v3520
        %v3526 = vrot.slane %v3525, 4
        %v3528 = vshll.u32 %v3420, 16
        %v3530 = vrot.slane %v3528, 5
        %v3531 = vsel %vm1561, %v3526, %v3530
        %v3533 = vshrl.u32 %v3421, 16
        %v3535 = vrot.slane %v3533, 4
        %v3536 = vshll.u32 %v3421, 16
        %v3538 = vrot.slane %v3536, 5
        %v3539 = vor.u32 %v3535, %v3538
        %v3540 = vrot.slane %v3539, 4
        %v3542 = vshll.u32 %v3422, 16
        %v3544 = vrot.slane %v3542, 5
        %v3545 = vsel %vm1561, %v3540, %v3544
        %v3546 = vshrl.u32 %v3422, 16
        %v3548 = vrot.slane %v3546, 4
        %v3549 = vor.u32 %v3548, %v3544
        %v3550 = vrot.slane %v3549, 4
        %v3552 = vshll.u32 %v3423, 16
        %v3554 = vrot.slane %v3552, 5
        %v3555 = vsel %vm1561, %v3550, %v3554
        %v3557 = vshrl.u32 %v3424, 16
        %v3559 = vrot.slane %v3557, 4
        %v3560 = vshll.u32 %v3424, 16
        %v3562 = vrot.slane %v3560, 5
        %v3563 = vor.u32 %v3559, %v3562
        %v3564 = vrot.slane %v3563, 4
        %v3566 = vshll.u32 %v3425, 16
        %v3568 = vrot.slane %v3566, 5
        %v3569 = vsel %vm1561, %v3564, %v3568
        %v3570 = vshrl.u32 %v3425, 16
        %v3572 = vrot.slane %v3570, 4
        %v3573 = vor.u32 %v3572, %v3568
        %v3574 = vrot.slane %v3573, 4
        %v3576 = vshll.u32 %v3426, 16
        %v3578 = vrot.slane %v3576, 5
        %v3579 = vsel %vm1561, %v3574, %v3578
        %v3581 = vshrl.u32 %v3427, 16
        %v3583 = vrot.slane %v3581, 4
        %v3584 = vshll.u32 %v3427, 16
        %v3586 = vrot.slane %v3584, 5
        %v3587 = vor.u32 %v3583, %v3586
        %v3588 = vrot.slane %v3587, 4
        %v3590 = vshll.u32 %v3428, 16
        %v3592 = vrot.slane %v3590, 5
        %v3593 = vsel %vm1561, %v3588, %v3592
        %v3594 = vshrl.u32 %v3428, 16
        %v3596 = vrot.slane %v3594, 4
        %v3597 = vor.u32 %v3596, %v3592
        %v3598 = vrot.slane %v3597, 4
        %v3600 = vshll.u32 %v3429, 16
        %v3602 = vrot.slane %v3600, 5
        %v3603 = vsel %vm1561, %v3598, %v3602
        %v3605 = vshrl.u32 %v3430, 16
        %v3607 = vrot.slane %v3605, 4
        %v3608 = vshll.u32 %v3430, 16
        %v3610 = vrot.slane %v3608, 5
        %v3611 = vor.u32 %v3607, %v3610
        %v3612 = vrot.slane %v3611, 4
        %v3614 = vshll.u32 %v3431, 16
        %v3616 = vrot.slane %v3614, 5
        %v3617 = vsel %vm1561, %v3612, %v3616
        %v3618 = vshrl.u32 %v3431, 16
        %v3620 = vrot.slane %v3618, 4
        %v3621 = vor.u32 %v3620, %v3616
        %v3622 = vrot.slane %v3621, 4
        %v3624 = vshll.u32 %v3432, 16
        %v3626 = vrot.slane %v3624, 5
        %v3627 = vsel %vm1561, %v3622, %v3626
        %v3629 = vshrl.u32 %v3433, 16
        %v3631 = vrot.slane %v3629, 4
        %v3632 = vshll.u32 %v3433, 16
        %v3634 = vrot.slane %v3632, 5
        %v3635 = vor.u32 %v3631, %v3634
        %v3636 = vrot.slane %v3635, 4
        %v3638 = vshll.u32 %v3434, 16
        %v3640 = vrot.slane %v3638, 5
        %v3641 = vsel %vm1561, %v3636, %v3640
        %v3642 = vshrl.u32 %v3434, 16
        %v3644 = vrot.slane %v3642, 4
        %v3645 = vor.u32 %v3644, %v3640
        %v3646 = vrot.slane %v3645, 4
        %v3648 = vshll.u32 %v3435, 16
        %v3650 = vrot.slane %v3648, 5
        %v3651 = vsel %vm1561, %v3646, %v3650
        %v3653 = vshrl.u32 %v3436, 16
        %v3655 = vrot.slane %v3653, 4
        %v3656 = vshll.u32 %v3436, 16
        %v3658 = vrot.slane %v3656, 5
        %v3659 = vor.u32 %v3655, %v3658
        %v3660 = vrot.slane %v3659, 4
        %v3662 = vshll.u32 %v3437, 16
        %v3664 = vrot.slane %v3662, 5
        %v3665 = vsel %vm1561, %v3660, %v3664
        %v3666 = vshrl.u32 %v3437, 16
        %v3668 = vrot.slane %v3666, 4
        %v3669 = vor.u32 %v3668, %v3664
        %v3670 = vrot.slane %v3669, 4
        %v3672 = vshll.u32 %v3438, 16
        %v3674 = vrot.slane %v3672, 5
        %v3675 = vsel %vm1561, %v3670, %v3674
        %v3677 = vshrl.u32 %v3439, 16
        %v3679 = vrot.slane %v3677, 4
        %v3680 = vshll.u32 %v3439, 16
        %v3682 = vrot.slane %v3680, 5
        %v3683 = vor.u32 %v3679, %v3682
        %v3684 = vrot.slane %v3683, 4
        %v3686 = vshll.u32 %v3440, 16
        %v3688 = vrot.slane %v3686, 5
        %v3689 = vsel %vm1561, %v3684, %v3688
        %v3690 = vshrl.u32 %v3440, 16
        %v3692 = vrot.slane %v3690, 4
        %v3693 = vor.u32 %v3692, %v3688
        %v3694 = vrot.slane %v3693, 4
        %v3696 = vshll.u32 %v3441, 16
        %v3698 = vrot.slane %v3696, 5
        %v3699 = vsel %vm1561, %v3694, %v3698
        %v3701 = vshrl.u32 %v3442, 16
        %v3703 = vrot.slane %v3701, 4
        %v3704 = vshll.u32 %v3442, 16
        %v3706 = vrot.slane %v3704, 5
        %v3707 = vor.u32 %v3703, %v3706
        %v3708 = vrot.slane %v3707, 4
        %v3710 = vshll.u32 %v3443, 16
        %v3712 = vrot.slane %v3710, 5
        %v3713 = vsel %vm1561, %v3708, %v3712
        %v3714 = vshrl.u32 %v3443, 16
        %v3716 = vrot.slane %v3714, 4
        %v3717 = vor.u32 %v3716, %v3712
        %v3718 = vrot.slane %v3717, 4
        %v3720 = vshll.u32 %v3444, 16
        %v3722 = vrot.slane %v3720, 5
        %v3723 = vsel %vm1561, %v3718, %v3722
        %v3725 = vshrl.u32 %v3445, 16
        %v3727 = vrot.slane %v3725, 4
        %v3728 = vshll.u32 %v3445, 16
        %v3730 = vrot.slane %v3728, 5
        %v3731 = vor.u32 %v3727, %v3730
        %v3732 = vrot.slane %v3731, 4
        %v3734 = vshll.u32 %v3446, 16
        %v3736 = vrot.slane %v3734, 5
        %v3737 = vsel %vm1561, %v3732, %v3736
        %v3738 = vshrl.u32 %v3446, 16
        %v3740 = vrot.slane %v3738, 4
        %v3741 = vor.u32 %v3740, %v3736
        %v3742 = vrot.slane %v3741, 4
        %v3744 = vshll.u32 %v3447, 16
        %v3746 = vrot.slane %v3744, 5
        %v3747 = vsel %vm1561, %v3742, %v3746
        %v3749 = vshrl.u32 %v3448, 16
        %v3751 = vrot.slane %v3749, 4
        %v3752 = vshll.u32 %v3448, 16
        %v3754 = vrot.slane %v3752, 5
        %v3755 = vor.u32 %v3751, %v3754
        %v3756 = vrot.slane %v3755, 4
        %v3758 = vshll.u32 %v3449, 16
        %v3760 = vrot.slane %v3758, 5
        %v3761 = vsel %vm1561, %v3756, %v3760
        %v3762 = vshrl.u32 %v3449, 16
        %v3764 = vrot.slane %v3762, 4
        %v3765 = vor.u32 %v3764, %v3760
        %v3766 = vrot.slane %v3765, 4
        %v3768 = vshll.u32 %v3450, 16
        %v3770 = vrot.slane %v3768, 5
        %v3771 = vsel %vm1561, %v3766, %v3770
        %v3773 = vshrl.u32 %v3451, 16
        %v3775 = vrot.slane %v3773, 4
        %v3776 = vshll.u32 %v3451, 16
        %v3778 = vrot.slane %v3776, 5
        %v3779 = vor.u32 %v3775, %v3778
        %v3780 = vrot.slane %v3779, 4
        %v3782 = vshll.u32 %v3452, 16
        %v3784 = vrot.slane %v3782, 5
        %v3785 = vsel %vm1561, %v3780, %v3784
        %v3786 = vshrl.u32 %v3452, 16
        %v3788 = vrot.slane %v3786, 4
        %v3789 = vor.u32 %v3788, %v3784
        %v3790 = vrot.slane %v3789, 4
        %v3792 = vshll.u32 %v3453, 16
        %v3794 = vrot.slane %v3792, 5
        %v3795 = vsel %vm1561, %v3790, %v3794
        %v3797 = vshrl.u32 %v3454, 16
        %v3799 = vrot.slane %v3797, 4
        %v3800 = vshll.u32 %v3454, 16
        %v3802 = vrot.slane %v3800, 5
        %v3803 = vor.u32 %v3799, %v3802
        %v3804 = vrot.slane %v3803, 4
        %v3806 = vshll.u32 %v3455, 16
        %v3808 = vrot.slane %v3806, 5
        %v3809 = vsel %vm1561, %v3804, %v3808
        %v3810 = vshrl.u32 %v3455, 16
        %v3812 = vrot.slane %v3810, 4
        %v3813 = vor.u32 %v3812, %v3808
        %v3814 = vrot.slane %v3813, 4
        %v3816 = vshll.u32 %v3456, 16
        %v3818 = vrot.slane %v3816, 5
        %v3819 = vsel %vm1561, %v3814, %v3818
        %v3821 = vshrl.u32 %v3457, 16
        %v3823 = vrot.slane %v3821, 4
        %v3824 = vshll.u32 %v3457, 16
        %v3826 = vrot.slane %v3824, 5
        %v3827 = vor.u32 %v3823, %v3826
        %v3828 = vrot.slane %v3827, 4
        %v3830 = vshll.u32 %v3458, 16
        %v3832 = vrot.slane %v3830, 5
        %v3833 = vsel %vm1561, %v3828, %v3832
        %v3834 = vshrl.u32 %v3458, 16
        %v3836 = vrot.slane %v3834, 4
        %v3837 = vor.u32 %v3836, %v3832
        %v3838 = vrot.slane %v3837, 4
        %v3840 = vshll.u32 %v3459, 16
        %v3842 = vrot.slane %v3840, 5
        %v3843 = vsel %vm1561, %v3838, %v3842
        %s3844 = scalar_lea.vmem %s4, 256
        %v3845 = vld [vmem:[%s3844] sm:$0xf]
        %v3846 = vld [vmem:[%s3844 + $0x4] sm:$0xf]
        %v3847 = vld [vmem:[%s3844 + $0x8] sm:$0xf]
        %v3848 = vld [vmem:[%s3844 + $0xc] sm:$0xf]
        %v3849 = vld [vmem:[%s3844 + $0x10] sm:$0xf]
        %v3850 = vld [vmem:[%s3844 + $0x14] sm:$0xf]
        %v3851 = vld [vmem:[%s3844 + $0x18] sm:$0xf]
        %v3852 = vld [vmem:[%s3844 + $0x1c] sm:$0xf]
        %v3853 = vld [vmem:[%s3844 + $0x20] sm:$0xf]
        %v3854 = vld [vmem:[%s3844 + $0x24] sm:$0xf]
        %v3855 = vld [vmem:[%s3844 + $0x28] sm:$0xf]
        %v3856 = vld [vmem:[%s3844 + $0x2c] sm:$0xf]
        %v3857 = vld [vmem:[%s3844 + $0x30] sm:$0xf]
        %v3858 = vld [vmem:[%s3844 + $0x34] sm:$0xf]
        %v3859 = vld [vmem:[%s3844 + $0x38] sm:$0xf]
        %v3860 = vld [vmem:[%s3844 + $0x3c] sm:$0xf]
        %v3861 = vunpack.c.l.b16 %v3473
        %v3862 = vunpack.c.l.b16 %v3483
        %v3863 = vunpack.c.l.b16 %v3497
        %v3864 = vunpack.c.l.b16 %v3507
        %v3865 = vunpack.c.l.b16 %v3521
        %v3866 = vunpack.c.l.b16 %v3531
        %v3867 = vunpack.c.l.b16 %v3545
        %v3868 = vunpack.c.l.b16 %v3555
        %v3869 = vunpack.c.l.b16 %v3569
        %v3870 = vunpack.c.l.b16 %v3579
        %v3871 = vunpack.c.l.b16 %v3593
        %v3872 = vunpack.c.l.b16 %v3603
        %v3873 = vunpack.c.l.b16 %v3617
        %v3874 = vunpack.c.l.b16 %v3627
        %v3875 = vunpack.c.l.b16 %v3641
        %v3876 = vunpack.c.l.b16 %v3651
        %v3877 = vunpack.c.l.b16 %v3665
        %v3878 = vunpack.c.l.b16 %v3675
        %v3879 = vunpack.c.l.b16 %v3689
        %v3880 = vunpack.c.l.b16 %v3699
        %v3881 = vunpack.c.l.b16 %v3713
        %v3882 = vunpack.c.l.b16 %v3723
        %v3883 = vunpack.c.l.b16 %v3737
        %v3884 = vunpack.c.l.b16 %v3747
        %v3885 = vunpack.c.l.b16 %v3761
        %v3886 = vunpack.c.l.b16 %v3771
        %v3887 = vunpack.c.l.b16 %v3785
        %v3888 = vunpack.c.l.b16 %v3795
        %v3889 = vunpack.c.l.b16 %v3809
        %v3890 = vunpack.c.l.b16 %v3819
        %v3891 = vunpack.c.l.b16 %v3833
        %v3892 = vunpack.c.l.b16 %v3843
        %v3893 = vpack.c.b16 %v3862, %v3861
        %v3894 = vpack.c.b16 %v3864, %v3863
        %v3895 = vpack.c.b16 %v3866, %v3865
        %v3896 = vpack.c.b16 %v3868, %v3867
        %v3897 = vpack.c.b16 %v3870, %v3869
        %v3898 = vpack.c.b16 %v3872, %v3871
        %v3899 = vpack.c.b16 %v3874, %v3873
        %v3900 = vpack.c.b16 %v3876, %v3875
        %v3901 = vpack.c.b16 %v3878, %v3877
        %v3902 = vpack.c.b16 %v3880, %v3879
        %v3903 = vpack.c.b16 %v3882, %v3881
        %v3904 = vpack.c.b16 %v3884, %v3883
        %v3905 = vpack.c.b16 %v3886, %v3885
        %v3906 = vpack.c.b16 %v3888, %v3887
        %v3907 = vpack.c.b16 %v3890, %v3889
        %v3908 = vpack.c.b16 %v3892, %v3891
        %v3941 = vunpack.c.l.b16 %v3845
        %v3942 = vunpack.c.l.b16 %v3846
        %v3943 = vunpack.c.l.b16 %v3847
        %v3944 = vunpack.c.l.b16 %v3848
        %v3945 = vunpack.c.l.b16 %v3849
        %v3946 = vunpack.c.l.b16 %v3850
        %v3947 = vunpack.c.l.b16 %v3851
        %v3948 = vunpack.c.l.b16 %v3852
        %v3949 = vunpack.c.l.b16 %v3853
        %v3950 = vunpack.c.l.b16 %v3854
        %v3951 = vunpack.c.l.b16 %v3855
        %v3952 = vunpack.c.l.b16 %v3856
        %v3953 = vunpack.c.l.b16 %v3857
        %v3954 = vunpack.c.l.b16 %v3858
        %v3955 = vunpack.c.l.b16 %v3859
        %v3956 = vunpack.c.l.b16 %v3860
        %v3957 = vpack.c.b16 %v3942, %v3941
        %v3958 = vpack.c.b16 %v3944, %v3943
        %v3959 = vpack.c.b16 %v3946, %v3945
        %v3960 = vpack.c.b16 %v3948, %v3947
        %v3961 = vpack.c.b16 %v3950, %v3949
        %v3962 = vpack.c.b16 %v3952, %v3951
        %v3963 = vpack.c.b16 %v3954, %v3953
        %v3964 = vpack.c.b16 %v3956, %v3955
        %3973 = vmatprep.subr.bf16.mxu0 0
        %3974 = vmatpush1.bf16.msra.mxu0 %v3957
        %3975 = vmatprep.subr.bf16.mxu0 0
        %3976 = vmatpush1.bf16.msra.mxu0 %v3958
        %3977 = vmatprep.subr.bf16.mxu0 0
        %3978 = vmatpush1.bf16.msra.mxu0 %v3959
        %3979 = vmatprep.subr.bf16.mxu0 0
        %3980 = vmatpush1.bf16.msra.mxu0 %v3960
        %3981 = vmatprep.subr.bf16.mxu0 0
        %3982 = vmatpush1.bf16.msra.mxu0 %v3961
        %3983 = vmatprep.subr.bf16.mxu0 0
        %3984 = vmatpush1.bf16.msra.mxu0 %v3962
        %3985 = vmatprep.subr.bf16.mxu0 0
        %3986 = vmatpush1.bf16.msra.mxu0 %v3963
        %3987 = vmatprep.subr.bf16.mxu0 0
        %3988 = vmatpush1.bf16.msra.mxu0 %v3964
        %3989 = vmatprep.subr.bf16.mxu0 0
        %3990 = vmatpush1.bf16.msra.mxu0 0
        %3991 = vmatprep.subr.bf16.mxu0 0
        %3992 = vmatpush1.bf16.msra.mxu0 0
        %3993 = vmatprep.subr.bf16.mxu0 0
        %3994 = vmatpush1.bf16.msra.mxu0 0
        %3995 = vmatprep.subr.bf16.mxu0 0
        %3996 = vmatpush1.bf16.msra.mxu0 0
        %3997 = vmatprep.subr.bf16.mxu0 0
        %3998 = vmatpush1.bf16.msra.mxu0 0
        %3999 = vmatprep.subr.bf16.mxu0 0
        %4000 = vmatpush1.bf16.msra.mxu0 0
        %4001 = vmatprep.subr.bf16.mxu0 0
        %4002 = vmatpush1.bf16.msra.mxu0 0
        %4003 = vmatprep.subr.bf16.mxu0 0
        %4004 = vmatpush1.bf16.msra.mxu0 0
        %4005 = vmatprep.mubr.bf16.mxu0 0
        %4006 = vmatmul.mubr.bf16.gmra.mrb[0].mxu0 %v3893
        %v4007 = vpop.f32.mrb[0].mxu0
        %v4008 = vadd.f32 0.0, %v4007
        %v4009 = vpop.f32.mrb[0].mxu0
        %v4010 = vpop.f32.mrb[0].mxu0
        %v4011 = vadd.f32 0.0, %v4010
        %v4012 = vpop.f32.mrb[0].mxu0
        %4013 = vmatprep.mubr.bf16.mxu0 0
        %4014 = vmatmul.mubr.bf16.gmra.mrb[0].mxu0 %v3894
        %v4015 = vpop.f32.mrb[0].mxu0
        %v4016 = vadd.f32 0.0, %v4015
        %v4017 = vpop.f32.mrb[0].mxu0
        %v4018 = vpop.f32.mrb[0].mxu0
        %v4019 = vadd.f32 0.0, %v4018
        %v4020 = vpop.f32.mrb[0].mxu0
        %4021 = vmatprep.mubr.bf16.mxu0 0
        %4022 = vmatmul.mubr.bf16.gmra.mrb[0].mxu0 %v3895
        %v4023 = vpop.f32.mrb[0].mxu0
        %v4024 = vadd.f32 0.0, %v4023
        %v4025 = vpop.f32.mrb[0].mxu0
        %v4026 = vpop.f32.mrb[0].mxu0
        %v4027 = vadd.f32 0.0, %v4026
        %v4028 = vpop.f32.mrb[0].mxu0
        %4029 = vmatprep.mubr.bf16.mxu0 0
        %4030 = vmatmul.mubr.bf16.gmra.mrb[0].mxu0 %v3896
        %v4031 = vpop.f32.mrb[0].mxu0
        %v4032 = vadd.f32 0.0, %v4031
        %v4033 = vpop.f32.mrb[0].mxu0
        %v4034 = vpop.f32.mrb[0].mxu0
        %v4035 = vadd.f32 0.0, %v4034
        %v4036 = vpop.f32.mrb[0].mxu0
        %4037 = vmatprep.mubr.bf16.mxu0 0
        %4038 = vmatmul.mubr.bf16.gmra.mrb[0].mxu0 %v3897
        %v4039 = vpop.f32.mrb[0].mxu0
        %v4040 = vadd.f32 0.0, %v4039
        %v4041 = vpop.f32.mrb[0].mxu0
        %v4042 = vpop.f32.mrb[0].mxu0
        %v4043 = vadd.f32 0.0, %v4042
        %v4044 = vpop.f32.mrb[0].mxu0
        %4045 = vmatprep.mubr.bf16.mxu0 0
        %4046 = vmatmul.mubr.bf16.gmra.mrb[0].mxu0 %v3898
        %v4047 = vpop.f32.mrb[0].mxu0
        %v4048 = vadd.f32 0.0, %v4047
        %v4049 = vpop.f32.mrb[0].mxu0
        %v4050 = vpop.f32.mrb[0].mxu0
        %v4051 = vadd.f32 0.0, %v4050
        %v4052 = vpop.f32.mrb[0].mxu0
        %4053 = vmatprep.mubr.bf16.mxu0 0
        %4054 = vmatmul.mubr.bf16.gmra.mrb[0].mxu0 %v3899
        %v4055 = vpop.f32.mrb[0].mxu0
        %v4056 = vadd.f32 0.0, %v4055
        %v4057 = vpop.f32.mrb[0].mxu0
        %v4058 = vpop.f32.mrb[0].mxu0
        %v4059 = vadd.f32 0.0, %v4058
        %v4060 = vpop.f32.mrb[0].mxu0
        %4061 = vmatprep.mubr.bf16.mxu0 0
        %4062 = vmatmul.mubr.bf16.gmra.mrb[0].mxu0 %v3900
        %v4063 = vpop.f32.mrb[0].mxu0
        %v4064 = vadd.f32 0.0, %v4063
        %v4065 = vpop.f32.mrb[0].mxu0
        %v4066 = vpop.f32.mrb[0].mxu0
        %v4067 = vadd.f32 0.0, %v4066
        %v4068 = vpop.f32.mrb[0].mxu0
        %4069 = vmatprep.mubr.bf16.mxu0 0
        %4070 = vmatmul.mubr.bf16.gmra.mrb[0].mxu0 %v3901
        %v4071 = vpop.f32.mrb[0].mxu0
        %v4072 = vadd.f32 0.0, %v4071
        %v4073 = vpop.f32.mrb[0].mxu0
        %v4074 = vpop.f32.mrb[0].mxu0
        %v4075 = vadd.f32 0.0, %v4074
        %v4076 = vpop.f32.mrb[0].mxu0
        %4077 = vmatprep.mubr.bf16.mxu0 0
        %4078 = vmatmul.mubr.bf16.gmra.mrb[0].mxu0 %v3902
        %v4079 = vpop.f32.mrb[0].mxu0
        %v4080 = vadd.f32 0.0, %v4079
        %v4081 = vpop.f32.mrb[0].mxu0
        %v4082 = vpop.f32.mrb[0].mxu0
        %v4083 = vadd.f32 0.0, %v4082
        %v4084 = vpop.f32.mrb[0].mxu0
        %4085 = vmatprep.mubr.bf16.mxu0 0
        %4086 = vmatmul.mubr.bf16.gmra.mrb[0].mxu0 %v3903
        %v4087 = vpop.f32.mrb[0].mxu0
        %v4088 = vadd.f32 0.0, %v4087
        %v4089 = vpop.f32.mrb[0].mxu0
        %v4090 = vpop.f32.mrb[0].mxu0
        %v4091 = vadd.f32 0.0, %v4090
        %v4092 = vpop.f32.mrb[0].mxu0
        %4093 = vmatprep.mubr.bf16.mxu0 0
        %4094 = vmatmul.mubr.bf16.gmra.mrb[0].mxu0 %v3904
        %v4095 = vpop.f32.mrb[0].mxu0
        %v4096 = vadd.f32 0.0, %v4095
        %v4097 = vpop.f32.mrb[0].mxu0
        %v4098 = vpop.f32.mrb[0].mxu0
        %v4099 = vadd.f32 0.0, %v4098
        %v4100 = vpop.f32.mrb[0].mxu0
        %4101 = vmatprep.mubr.bf16.mxu0 0
        %4102 = vmatmul.mubr.bf16.gmra.mrb[0].mxu0 %v3905
        %v4103 = vpop.f32.mrb[0].mxu0
        %v4104 = vadd.f32 0.0, %v4103
        %v4105 = vpop.f32.mrb[0].mxu0
        %v4106 = vpop.f32.mrb[0].mxu0
        %v4107 = vadd.f32 0.0, %v4106
        %v4108 = vpop.f32.mrb[0].mxu0
        %4109 = vmatprep.mubr.bf16.mxu0 0
        %4110 = vmatmul.mubr.bf16.gmra.mrb[0].mxu0 %v3906
        %v4111 = vpop.f32.mrb[0].mxu0
        %v4112 = vadd.f32 0.0, %v4111
        %v4113 = vpop.f32.mrb[0].mxu0
        %v4114 = vpop.f32.mrb[0].mxu0
        %v4115 = vadd.f32 0.0, %v4114
        %v4116 = vpop.f32.mrb[0].mxu0
        %4117 = vmatprep.mubr.bf16.mxu0 0
        %4118 = vmatmul.mubr.bf16.gmra.mrb[0].mxu0 %v3907
        %v4119 = vpop.f32.mrb[0].mxu0
        %v4120 = vadd.f32 0.0, %v4119
        %v4121 = vpop.f32.mrb[0].mxu0
        %v4122 = vpop.f32.mrb[0].mxu0
        %v4123 = vadd.f32 0.0, %v4122
        %v4124 = vpop.f32.mrb[0].mxu0
        %4125 = vmatprep.mubr.bf16.mxu0 0
        %4126 = vmatmul.mubr.bf16.gmra.mrb[0].mxu0 %v3908
        %v4127 = vpop.f32.mrb[0].mxu0
        %v4128 = vadd.f32 0.0, %v4127
        %v4129 = vpop.f32.mrb[0].mxu0
        %v4130 = vpop.f32.mrb[0].mxu0
        %v4131 = vadd.f32 0.0, %v4130
        %v4132 = vpop.f32.mrb[0].mxu0
        %4133 = vdwg.mxu0
        %v4134 = vadd.f32 %v3380, %v4008
        %v4135 = vadd.f32 %v3381, %v4011
        %v4136 = vadd.f32 %v3382, %v4016
        %v4137 = vadd.f32 %v3383, %v4019
        %v4138 = vadd.f32 %v3384, %v4024
        %v4139 = vadd.f32 %v3385, %v4027
        %v4140 = vadd.f32 %v3386, %v4032
        %v4141 = vadd.f32 %v3387, %v4035
        %v4142 = vadd.f32 %v3388, %v4040
        %v4143 = vadd.f32 %v3389, %v4043
        %v4144 = vadd.f32 %v3390, %v4048
        %v4145 = vadd.f32 %v3391, %v4051
        %v4146 = vadd.f32 %v3392, %v4056
        %v4147 = vadd.f32 %v3393, %v4059
        %v4148 = vadd.f32 %v3394, %v4064
        %v4149 = vadd.f32 %v3395, %v4067
        %v4150 = vadd.f32 %v3396, %v4072
        %v4151 = vadd.f32 %v3397, %v4075
        %v4152 = vadd.f32 %v3398, %v4080
        %v4153 = vadd.f32 %v3399, %v4083
        %v4154 = vadd.f32 %v3400, %v4088
        %v4155 = vadd.f32 %v3401, %v4091
        %v4156 = vadd.f32 %v3402, %v4096
        %v4157 = vadd.f32 %v3403, %v4099
        %v4158 = vadd.f32 %v3404, %v4104
        %v4159 = vadd.f32 %v3405, %v4107
        %v4160 = vadd.f32 %v3406, %v4112
        %v4161 = vadd.f32 %v3407, %v4115
        %v4162 = vadd.f32 %v3408, %v4120
        %v4163 = vadd.f32 %v3409, %v4123
        %v4164 = vadd.f32 %v3410, %v4128
        %v4165 = vadd.f32 %v3411, %v4131
        %v4166 = vld [vmem:[%s1377] sm:$0xe]
        %v4167 = vld [vmem:[%s1377 + $0xc] sm:$0xe]
        %v4168 = vld [vmem:[%s1377 + $0x18] sm:$0xe]
        %v4169 = vld [vmem:[%s1377 + $0x24] sm:$0xe]
        %v4170 = vld [vmem:[%s1377 + $0x30] sm:$0xe]
        %v4171 = vld [vmem:[%s1377 + $0x3c] sm:$0xe]
        %v4172 = vld [vmem:[%s1377 + $0x48] sm:$0xe]
        %v4173 = vld [vmem:[%s1377 + $0x54] sm:$0xe]
        %v4174 = vld [vmem:[%s1377 + $0x60] sm:$0xe]
        %v4175 = vld [vmem:[%s1377 + $0x6c] sm:$0xe]
        %v4176 = vld [vmem:[%s1377 + $0x78] sm:$0xe]
        %v4177 = vld [vmem:[%s1377 + $0x84] sm:$0xe]
        %v4178 = vld [vmem:[%s1377 + $0x90] sm:$0xe]
        %v4179 = vld [vmem:[%s1377 + $0x9c] sm:$0xe]
        %v4180 = vld [vmem:[%s1377 + $0xa8] sm:$0xe]
        %v4181 = vld [vmem:[%s1377 + $0xb4] sm:$0xe]
        %v4230 = vrot.slane %v4166, 5
        %v4231 = vrot.slane %v4230, 4
        %v4232 = vrot.slane %v3413, 5
        %v4233 = vsel %vm2591, %v4231, %v4232
        %v4234 = vrot.slane %v4232, 4
        %v4235 = vrot.slane %v3414, 5
        %v4236 = vsel %vm2591, %v4234, %v4235
        %v4237 = vrot.slane %v4167, 5
        %v4238 = vrot.slane %v4237, 4
        %v4239 = vrot.slane %v3416, 5
        %v4240 = vsel %vm2591, %v4238, %v4239
        %v4241 = vrot.slane %v4239, 4
        %v4242 = vrot.slane %v3417, 5
        %v4243 = vsel %vm2591, %v4241, %v4242
        %v4244 = vrot.slane %v4168, 5
        %v4245 = vrot.slane %v4244, 4
        %v4246 = vrot.slane %v3419, 5
        %v4247 = vsel %vm2591, %v4245, %v4246
        %v4248 = vrot.slane %v4246, 4
        %v4249 = vrot.slane %v3420, 5
        %v4250 = vsel %vm2591, %v4248, %v4249
        %v4251 = vrot.slane %v4169, 5
        %v4252 = vrot.slane %v4251, 4
        %v4253 = vrot.slane %v3422, 5
        %v4254 = vsel %vm2591, %v4252, %v4253
        %v4255 = vrot.slane %v4253, 4
        %v4256 = vrot.slane %v3423, 5
        %v4257 = vsel %vm2591, %v4255, %v4256
        %v4258 = vrot.slane %v4170, 5
        %v4259 = vrot.slane %v4258, 4
        %v4260 = vrot.slane %v3425, 5
        %v4261 = vsel %vm2591, %v4259, %v4260
        %v4262 = vrot.slane %v4260, 4
        %v4263 = vrot.slane %v3426, 5
        %v4264 = vsel %vm2591, %v4262, %v4263
        %v4265 = vrot.slane %v4171, 5
        %v4266 = vrot.slane %v4265, 4
        %v4267 = vrot.slane %v3428, 5
        %v4268 = vsel %vm2591, %v4266, %v4267
        %v4269 = vrot.slane %v4267, 4
        %v4270 = vrot.slane %v3429, 5
        %v4271 = vsel %vm2591, %v4269, %v4270
        %v4272 = vrot.slane %v4172, 5
        %v4273 = vrot.slane %v4272, 4
        %v4274 = vrot.slane %v3431, 5
        %v4275 = vsel %vm2591, %v4273, %v4274
        %v4276 = vrot.slane %v4274, 4
        %v4277 = vrot.slane %v3432, 5
        %v4278 = vsel %vm2591, %v4276, %v4277
        %v4279 = vrot.slane %v4173, 5
        %v4280 = vrot.slane %v4279, 4
        %v4281 = vrot.slane %v3434, 5
        %v4282 = vsel %vm2591, %v4280, %v4281
        %v4283 = vrot.slane %v4281, 4
        %v4284 = vrot.slane %v3435, 5
        %v4285 = vsel %vm2591, %v4283, %v4284
        %v4286 = vrot.slane %v4174, 5
        %v4287 = vrot.slane %v4286, 4
        %v4288 = vrot.slane %v3437, 5
        %v4289 = vsel %vm2591, %v4287, %v4288
        %v4290 = vrot.slane %v4288, 4
        %v4291 = vrot.slane %v3438, 5
        %v4292 = vsel %vm2591, %v4290, %v4291
        %v4293 = vrot.slane %v4175, 5
        %v4294 = vrot.slane %v4293, 4
        %v4295 = vrot.slane %v3440, 5
        %v4296 = vsel %vm2591, %v4294, %v4295
        %v4297 = vrot.slane %v4295, 4
        %v4298 = vrot.slane %v3441, 5
        %v4299 = vsel %vm2591, %v4297, %v4298
        %v4300 = vrot.slane %v4176, 5
        %v4301 = vrot.slane %v4300, 4
        %v4302 = vrot.slane %v3443, 5
        %v4303 = vsel %vm2591, %v4301, %v4302
        %v4304 = vrot.slane %v4302, 4
        %v4305 = vrot.slane %v3444, 5
        %v4306 = vsel %vm2591, %v4304, %v4305
        %v4307 = vrot.slane %v4177, 5
        %v4308 = vrot.slane %v4307, 4
        %v4309 = vrot.slane %v3446, 5
        %v4310 = vsel %vm2591, %v4308, %v4309
        %v4311 = vrot.slane %v4309, 4
        %v4312 = vrot.slane %v3447, 5
        %v4313 = vsel %vm2591, %v4311, %v4312
        %v4314 = vrot.slane %v4178, 5
        %v4315 = vrot.slane %v4314, 4
        %v4316 = vrot.slane %v3449, 5
        %v4317 = vsel %vm2591, %v4315, %v4316
        %v4318 = vrot.slane %v4316, 4
        %v4319 = vrot.slane %v3450, 5
        %v4320 = vsel %vm2591, %v4318, %v4319
        %v4321 = vrot.slane %v4179, 5
        %v4322 = vrot.slane %v4321, 4
        %v4323 = vrot.slane %v3452, 5
        %v4324 = vsel %vm2591, %v4322, %v4323
        %v4325 = vrot.slane %v4323, 4
        %v4326 = vrot.slane %v3453, 5
        %v4327 = vsel %vm2591, %v4325, %v4326
        %v4328 = vrot.slane %v4180, 5
        %v4329 = vrot.slane %v4328, 4
        %v4330 = vrot.slane %v3455, 5
        %v4331 = vsel %vm2591, %v4329, %v4330
        %v4332 = vrot.slane %v4330, 4
        %v4333 = vrot.slane %v3456, 5
        %v4334 = vsel %vm2591, %v4332, %v4333
        %v4335 = vrot.slane %v4181, 5
        %v4336 = vrot.slane %v4335, 4
        %v4337 = vrot.slane %v3458, 5
        %v4338 = vsel %vm2591, %v4336, %v4337
        %v4339 = vrot.slane %v4337, 4
        %v4340 = vrot.slane %v3459, 5
        %v4341 = vsel %vm2591, %v4339, %v4340
        %s4342 = scalar_lea.vmem %s4, 320
        %v4343 = vld [vmem:[%s4342] sm:$0xf]
        %v4344 = vld [vmem:[%s4342 + $0x4] sm:$0xf]
        %v4345 = vld [vmem:[%s4342 + $0x8] sm:$0xf]
        %v4346 = vld [vmem:[%s4342 + $0xc] sm:$0xf]
        %v4347 = vld [vmem:[%s4342 + $0x10] sm:$0xf]
        %v4348 = vld [vmem:[%s4342 + $0x14] sm:$0xf]
        %v4349 = vld [vmem:[%s4342 + $0x18] sm:$0xf]
        %v4350 = vld [vmem:[%s4342 + $0x1c] sm:$0xf]
        %v4351 = vld [vmem:[%s4342 + $0x20] sm:$0xf]
        %v4352 = vld [vmem:[%s4342 + $0x24] sm:$0xf]
        %v4353 = vld [vmem:[%s4342 + $0x28] sm:$0xf]
        %v4354 = vld [vmem:[%s4342 + $0x2c] sm:$0xf]
        %v4355 = vld [vmem:[%s4342 + $0x30] sm:$0xf]
        %v4356 = vld [vmem:[%s4342 + $0x34] sm:$0xf]
        %v4357 = vld [vmem:[%s4342 + $0x38] sm:$0xf]
        %v4358 = vld [vmem:[%s4342 + $0x3c] sm:$0xf]
        %v4359 = vunpack.c.l.b16 %v4233
        %v4360 = vunpack.c.l.b16 %v4236
        %v4361 = vunpack.c.l.b16 %v4240
        %v4362 = vunpack.c.l.b16 %v4243
        %v4363 = vunpack.c.l.b16 %v4247
        %v4364 = vunpack.c.l.b16 %v4250
        %v4365 = vunpack.c.l.b16 %v4254
        %v4366 = vunpack.c.l.b16 %v4257
        %v4367 = vunpack.c.l.b16 %v4261
        %v4368 = vunpack.c.l.b16 %v4264
        %v4369 = vunpack.c.l.b16 %v4268
        %v4370 = vunpack.c.l.b16 %v4271
        %v4371 = vunpack.c.l.b16 %v4275
        %v4372 = vunpack.c.l.b16 %v4278
        %v4373 = vunpack.c.l.b16 %v4282
        %v4374 = vunpack.c.l.b16 %v4285
        %v4375 = vunpack.c.l.b16 %v4289
        %v4376 = vunpack.c.l.b16 %v4292
        %v4377 = vunpack.c.l.b16 %v4296
        %v4378 = vunpack.c.l.b16 %v4299
        %v4379 = vunpack.c.l.b16 %v4303
        %v4380 = vunpack.c.l.b16 %v4306
        %v4381 = vunpack.c.l.b16 %v4310
        %v4382 = vunpack.c.l.b16 %v4313
        %v4383 = vunpack.c.l.b16 %v4317
        %v4384 = vunpack.c.l.b16 %v4320
        %v4385 = vunpack.c.l.b16 %v4324
        %v4386 = vunpack.c.l.b16 %v4327
        %v4387 = vunpack.c.l.b16 %v4331
        %v4388 = vunpack.c.l.b16 %v4334
        %v4389 = vunpack.c.l.b16 %v4338
        %v4390 = vunpack.c.l.b16 %v4341
        %v4391 = vpack.c.b16 %v4360, %v4359
        %v4392 = vpack.c.b16 %v4362, %v4361
        %v4393 = vpack.c.b16 %v4364, %v4363
        %v4394 = vpack.c.b16 %v4366, %v4365
        %v4395 = vpack.c.b16 %v4368, %v4367
        %v4396 = vpack.c.b16 %v4370, %v4369
        %v4397 = vpack.c.b16 %v4372, %v4371
        %v4398 = vpack.c.b16 %v4374, %v4373
        %v4399 = vpack.c.b16 %v4376, %v4375
        %v4400 = vpack.c.b16 %v4378, %v4377
        %v4401 = vpack.c.b16 %v4380, %v4379
        %v4402 = vpack.c.b16 %v4382, %v4381
        %v4403 = vpack.c.b16 %v4384, %v4383
        %v4404 = vpack.c.b16 %v4386, %v4385
        %v4405 = vpack.c.b16 %v4388, %v4387
        %v4406 = vpack.c.b16 %v4390, %v4389
        %v4439 = vunpack.c.l.b16 %v4343
        %v4440 = vunpack.c.l.b16 %v4344
        %v4441 = vunpack.c.l.b16 %v4345
        %v4442 = vunpack.c.l.b16 %v4346
        %v4443 = vunpack.c.l.b16 %v4347
        %v4444 = vunpack.c.l.b16 %v4348
        %v4445 = vunpack.c.l.b16 %v4349
        %v4446 = vunpack.c.l.b16 %v4350
        %v4447 = vunpack.c.l.b16 %v4351
        %v4448 = vunpack.c.l.b16 %v4352
        %v4449 = vunpack.c.l.b16 %v4353
        %v4450 = vunpack.c.l.b16 %v4354
        %v4451 = vunpack.c.l.b16 %v4355
        %v4452 = vunpack.c.l.b16 %v4356
        %v4453 = vunpack.c.l.b16 %v4357
        %v4454 = vunpack.c.l.b16 %v4358
        %v4455 = vpack.c.b16 %v4440, %v4439
        %v4456 = vpack.c.b16 %v4442, %v4441
        %v4457 = vpack.c.b16 %v4444, %v4443
        %v4458 = vpack.c.b16 %v4446, %v4445
        %v4459 = vpack.c.b16 %v4448, %v4447
        %v4460 = vpack.c.b16 %v4450, %v4449
        %v4461 = vpack.c.b16 %v4452, %v4451
        %v4462 = vpack.c.b16 %v4454, %v4453
        %4471 = vmatprep.subr.bf16.mxu0 0
        %4472 = vmatpush1.bf16.msra.mxu0 %v4455
        %4473 = vmatprep.subr.bf16.mxu0 0
        %4474 = vmatpush1.bf16.msra.mxu0 %v4456
        %4475 = vmatprep.subr.bf16.mxu0 0
        %4476 = vmatpush1.bf16.msra.mxu0 %v4457
        %4477 = vmatprep.subr.bf16.mxu0 0
        %4478 = vmatpush1.bf16.msra.mxu0 %v4458
        %4479 = vmatprep.subr.bf16.mxu0 0
        %4480 = vmatpush1.bf16.msra.mxu0 %v4459
        %4481 = vmatprep.subr.bf16.mxu0 0
        %4482 = vmatpush1.bf16.msra.mxu0 %v4460
        %4483 = vmatprep.subr.bf16.mxu0 0
        %4484 = vmatpush1.bf16.msra.mxu0 %v4461
        %4485 = vmatprep.subr.bf16.mxu0 0
        %4486 = vmatpush1.bf16.msra.mxu0 %v4462
        %4487 = vmatprep.subr.bf16.mxu0 0
        %4488 = vmatpush1.bf16.msra.mxu0 0
        %4489 = vmatprep.subr.bf16.mxu0 0
        %4490 = vmatpush1.bf16.msra.mxu0 0
        %4491 = vmatprep.subr.bf16.mxu0 0
        %4492 = vmatpush1.bf16.msra.mxu0 0
        %4493 = vmatprep.subr.bf16.mxu0 0
        %4494 = vmatpush1.bf16.msra.mxu0 0
        %4495 = vmatprep.subr.bf16.mxu0 0
        %4496 = vmatpush1.bf16.msra.mxu0 0
        %4497 = vmatprep.subr.bf16.mxu0 0
        %4498 = vmatpush1.bf16.msra.mxu0 0
        %4499 = vmatprep.subr.bf16.mxu0 0
        %4500 = vmatpush1.bf16.msra.mxu0 0
        %4501 = vmatprep.subr.bf16.mxu0 0
        %4502 = vmatpush1.bf16.msra.mxu0 0
        %4503 = vmatprep.mubr.bf16.mxu0 0
        %4504 = vmatmul.mubr.bf16.gmra.mrb[0].mxu0 %v4391
        %v4505 = vpop.f32.mrb[0].mxu0
        %v4506 = vadd.f32 0.0, %v4505
        %v4507 = vpop.f32.mrb[0].mxu0
        %v4508 = vpop.f32.mrb[0].mxu0
        %v4509 = vadd.f32 0.0, %v4508
        %v4510 = vpop.f32.mrb[0].mxu0
        %4511 = vmatprep.mubr.bf16.mxu0 0
        %4512 = vmatmul.mubr.bf16.gmra.mrb[0].mxu0 %v4392
        %v4513 = vpop.f32.mrb[0].mxu0
        %v4514 = vadd.f32 0.0, %v4513
        %v4515 = vpop.f32.mrb[0].mxu0
        %v4516 = vpop.f32.mrb[0].mxu0
        %v4517 = vadd.f32 0.0, %v4516
        %v4518 = vpop.f32.mrb[0].mxu0
        %4519 = vmatprep.mubr.bf16.mxu0 0
        %4520 = vmatmul.mubr.bf16.gmra.mrb[0].mxu0 %v4393
        %v4521 = vpop.f32.mrb[0].mxu0
        %v4522 = vadd.f32 0.0, %v4521
        %v4523 = vpop.f32.mrb[0].mxu0
        %v4524 = vpop.f32.mrb[0].mxu0
        %v4525 = vadd.f32 0.0, %v4524
        %v4526 = vpop.f32.mrb[0].mxu0
        %4527 = vmatprep.mubr.bf16.mxu0 0
        %4528 = vmatmul.mubr.bf16.gmra.mrb[0].mxu0 %v4394
        %v4529 = vpop.f32.mrb[0].mxu0
        %v4530 = vadd.f32 0.0, %v4529
        %v4531 = vpop.f32.mrb[0].mxu0
        %v4532 = vpop.f32.mrb[0].mxu0
        %v4533 = vadd.f32 0.0, %v4532
        %v4534 = vpop.f32.mrb[0].mxu0
        %4535 = vmatprep.mubr.bf16.mxu0 0
        %4536 = vmatmul.mubr.bf16.gmra.mrb[0].mxu0 %v4395
        %v4537 = vpop.f32.mrb[0].mxu0
        %v4538 = vadd.f32 0.0, %v4537
        %v4539 = vpop.f32.mrb[0].mxu0
        %v4540 = vpop.f32.mrb[0].mxu0
        %v4541 = vadd.f32 0.0, %v4540
        %v4542 = vpop.f32.mrb[0].mxu0
        %4543 = vmatprep.mubr.bf16.mxu0 0
        %4544 = vmatmul.mubr.bf16.gmra.mrb[0].mxu0 %v4396
        %v4545 = vpop.f32.mrb[0].mxu0
        %v4546 = vadd.f32 0.0, %v4545
        %v4547 = vpop.f32.mrb[0].mxu0
        %v4548 = vpop.f32.mrb[0].mxu0
        %v4549 = vadd.f32 0.0, %v4548
        %v4550 = vpop.f32.mrb[0].mxu0
        %4551 = vmatprep.mubr.bf16.mxu0 0
        %4552 = vmatmul.mubr.bf16.gmra.mrb[0].mxu0 %v4397
        %v4553 = vpop.f32.mrb[0].mxu0
        %v4554 = vadd.f32 0.0, %v4553
        %v4555 = vpop.f32.mrb[0].mxu0
        %v4556 = vpop.f32.mrb[0].mxu0
        %v4557 = vadd.f32 0.0, %v4556
        %v4558 = vpop.f32.mrb[0].mxu0
        %4559 = vmatprep.mubr.bf16.mxu0 0
        %4560 = vmatmul.mubr.bf16.gmra.mrb[0].mxu0 %v4398
        %v4561 = vpop.f32.mrb[0].mxu0
        %v4562 = vadd.f32 0.0, %v4561
        %v4563 = vpop.f32.mrb[0].mxu0
        %v4564 = vpop.f32.mrb[0].mxu0
        %v4565 = vadd.f32 0.0, %v4564
        %v4566 = vpop.f32.mrb[0].mxu0
        %4567 = vmatprep.mubr.bf16.mxu0 0
        %4568 = vmatmul.mubr.bf16.gmra.mrb[0].mxu0 %v4399
        %v4569 = vpop.f32.mrb[0].mxu0
        %v4570 = vadd.f32 0.0, %v4569
        %v4571 = vpop.f32.mrb[0].mxu0
        %v4572 = vpop.f32.mrb[0].mxu0
        %v4573 = vadd.f32 0.0, %v4572
        %v4574 = vpop.f32.mrb[0].mxu0
        %4575 = vmatprep.mubr.bf16.mxu0 0
        %4576 = vmatmul.mubr.bf16.gmra.mrb[0].mxu0 %v4400
        %v4577 = vpop.f32.mrb[0].mxu0
        %v4578 = vadd.f32 0.0, %v4577
        %v4579 = vpop.f32.mrb[0].mxu0
        %v4580 = vpop.f32.mrb[0].mxu0
        %v4581 = vadd.f32 0.0, %v4580
        %v4582 = vpop.f32.mrb[0].mxu0
        %4583 = vmatprep.mubr.bf16.mxu0 0
        %4584 = vmatmul.mubr.bf16.gmra.mrb[0].mxu0 %v4401
        %v4585 = vpop.f32.mrb[0].mxu0
        %v4586 = vadd.f32 0.0, %v4585
        %v4587 = vpop.f32.mrb[0].mxu0
        %v4588 = vpop.f32.mrb[0].mxu0
        %v4589 = vadd.f32 0.0, %v4588
        %v4590 = vpop.f32.mrb[0].mxu0
        %4591 = vmatprep.mubr.bf16.mxu0 0
        %4592 = vmatmul.mubr.bf16.gmra.mrb[0].mxu0 %v4402
        %v4593 = vpop.f32.mrb[0].mxu0
        %v4594 = vadd.f32 0.0, %v4593
        %v4595 = vpop.f32.mrb[0].mxu0
        %v4596 = vpop.f32.mrb[0].mxu0
        %v4597 = vadd.f32 0.0, %v4596
        %v4598 = vpop.f32.mrb[0].mxu0
        %4599 = vmatprep.mubr.bf16.mxu0 0
        %4600 = vmatmul.mubr.bf16.gmra.mrb[0].mxu0 %v4403
        %v4601 = vpop.f32.mrb[0].mxu0
        %v4602 = vadd.f32 0.0, %v4601
        %v4603 = vpop.f32.mrb[0].mxu0
        %v4604 = vpop.f32.mrb[0].mxu0
        %v4605 = vadd.f32 0.0, %v4604
        %v4606 = vpop.f32.mrb[0].mxu0
        %4607 = vmatprep.mubr.bf16.mxu0 0
        %4608 = vmatmul.mubr.bf16.gmra.mrb[0].mxu0 %v4404
        %v4609 = vpop.f32.mrb[0].mxu0
        %v4610 = vadd.f32 0.0, %v4609
        %v4611 = vpop.f32.mrb[0].mxu0
        %v4612 = vpop.f32.mrb[0].mxu0
        %v4613 = vadd.f32 0.0, %v4612
        %v4614 = vpop.f32.mrb[0].mxu0
        %4615 = vmatprep.mubr.bf16.mxu0 0
        %4616 = vmatmul.mubr.bf16.gmra.mrb[0].mxu0 %v4405
        %v4617 = vpop.f32.mrb[0].mxu0
        %v4618 = vadd.f32 0.0, %v4617
        %v4619 = vpop.f32.mrb[0].mxu0
        %v4620 = vpop.f32.mrb[0].mxu0
        %v4621 = vadd.f32 0.0, %v4620
        %v4622 = vpop.f32.mrb[0].mxu0
        %4623 = vmatprep.mubr.bf16.mxu0 0
        %4624 = vmatmul.mubr.bf16.gmra.mrb[0].mxu0 %v4406
        %v4625 = vpop.f32.mrb[0].mxu0
        %v4626 = vadd.f32 0.0, %v4625
        %v4627 = vpop.f32.mrb[0].mxu0
        %v4628 = vpop.f32.mrb[0].mxu0
        %v4629 = vadd.f32 0.0, %v4628
        %v4630 = vpop.f32.mrb[0].mxu0
        %4631 = vdwg.mxu0
        %v4632 = vadd.f32 %v4134, %v4506
        %v4633 = vadd.f32 %v4135, %v4509
        %v4634 = vadd.f32 %v4136, %v4514
        %v4635 = vadd.f32 %v4137, %v4517
        %v4636 = vadd.f32 %v4138, %v4522
        %v4637 = vadd.f32 %v4139, %v4525
        %v4638 = vadd.f32 %v4140, %v4530
        %v4639 = vadd.f32 %v4141, %v4533
        %v4640 = vadd.f32 %v4142, %v4538
        %v4641 = vadd.f32 %v4143, %v4541
        %v4642 = vadd.f32 %v4144, %v4546
        %v4643 = vadd.f32 %v4145, %v4549
        %v4644 = vadd.f32 %v4146, %v4554
        %v4645 = vadd.f32 %v4147, %v4557
        %v4646 = vadd.f32 %v4148, %v4562
        %v4647 = vadd.f32 %v4149, %v4565
        %v4648 = vadd.f32 %v4150, %v4570
        %v4649 = vadd.f32 %v4151, %v4573
        %v4650 = vadd.f32 %v4152, %v4578
        %v4651 = vadd.f32 %v4153, %v4581
        %v4652 = vadd.f32 %v4154, %v4586
        %v4653 = vadd.f32 %v4155, %v4589
        %v4654 = vadd.f32 %v4156, %v4594
        %v4655 = vadd.f32 %v4157, %v4597
        %v4656 = vadd.f32 %v4158, %v4602
        %v4657 = vadd.f32 %v4159, %v4605
        %v4658 = vadd.f32 %v4160, %v4610
        %v4659 = vadd.f32 %v4161, %v4613
        %v4660 = vadd.f32 %v4162, %v4618
        %v4661 = vadd.f32 %v4163, %v4621
        %v4662 = vadd.f32 %v4164, %v4626
        %v4663 = vadd.f32 %v4165, %v4629
        %s4664 = scalar_lea.vmem [#allocation2], 24
        %v4665 = vld [vmem:[%s4664] sm:$0xf]
        %v4666 = vld [vmem:[%s4664 + $0x4] sm:$0xf]
        %v4667 = vld [vmem:[%s4664 + $0xc] sm:$0xf]
        %v4668 = vld [vmem:[%s4664 + $0x10] sm:$0xf]
        %v4669 = vld [vmem:[%s4664 + $0x18] sm:$0xf]
        %v4670 = vld [vmem:[%s4664 + $0x1c] sm:$0xf]
        %v4671 = vld [vmem:[%s4664 + $0x24] sm:$0xf]
        %v4672 = vld [vmem:[%s4664 + $0x28] sm:$0xf]
        %v4673 = vld [vmem:[%s4664 + $0x30] sm:$0xf]
        %v4674 = vld [vmem:[%s4664 + $0x34] sm:$0xf]
        %v4675 = vld [vmem:[%s4664 + $0x3c] sm:$0xf]
        %v4676 = vld [vmem:[%s4664 + $0x40] sm:$0xf]
        %v4677 = vld [vmem:[%s4664 + $0x48] sm:$0xf]
        %v4678 = vld [vmem:[%s4664 + $0x4c] sm:$0xf]
        %v4679 = vld [vmem:[%s4664 + $0x54] sm:$0xf]
        %v4680 = vld [vmem:[%s4664 + $0x58] sm:$0xf]
        %v4681 = vld [vmem:[%s4664 + $0x60] sm:$0xf]
        %v4682 = vld [vmem:[%s4664 + $0x64] sm:$0xf]
        %v4683 = vld [vmem:[%s4664 + $0x6c] sm:$0xf]
        %v4684 = vld [vmem:[%s4664 + $0x70] sm:$0xf]
        %v4685 = vld [vmem:[%s4664 + $0x78] sm:$0xf]
        %v4686 = vld [vmem:[%s4664 + $0x7c] sm:$0xf]
        %v4687 = vld [vmem:[%s4664 + $0x84] sm:$0xf]
        %v4688 = vld [vmem:[%s4664 + $0x88] sm:$0xf]
        %v4689 = vld [vmem:[%s4664 + $0x90] sm:$0xf]
        %v4690 = vld [vmem:[%s4664 + $0x94] sm:$0xf]
        %v4691 = vld [vmem:[%s4664 + $0x9c] sm:$0xf]
        %v4692 = vld [vmem:[%s4664 + $0xa0] sm:$0xf]
        %v4693 = vld [vmem:[%s4664 + $0xa8] sm:$0xf]
        %v4694 = vld [vmem:[%s4664 + $0xac] sm:$0xf]
        %v4695 = vld [vmem:[%s4664 + $0xb4] sm:$0xf]
        %v4696 = vld [vmem:[%s4664 + $0xb8] sm:$0xf]
        %s4697 = scalar_lea.vmem %s4, 384
        %v4698 = vld [vmem:[%s4697] sm:$0xf]
        %v4699 = vld [vmem:[%s4697 + $0x4] sm:$0xf]
        %v4700 = vld [vmem:[%s4697 + $0x8] sm:$0xf]
        %v4701 = vld [vmem:[%s4697 + $0xc] sm:$0xf]
        %v4702 = vld [vmem:[%s4697 + $0x10] sm:$0xf]
        %v4703 = vld [vmem:[%s4697 + $0x14] sm:$0xf]
        %v4704 = vld [vmem:[%s4697 + $0x18] sm:$0xf]
        %v4705 = vld [vmem:[%s4697 + $0x1c] sm:$0xf]
        %v4706 = vld [vmem:[%s4697 + $0x20] sm:$0xf]
        %v4707 = vld [vmem:[%s4697 + $0x24] sm:$0xf]
        %v4708 = vld [vmem:[%s4697 + $0x28] sm:$0xf]
        %v4709 = vld [vmem:[%s4697 + $0x2c] sm:$0xf]
        %v4710 = vld [vmem:[%s4697 + $0x30] sm:$0xf]
        %v4711 = vld [vmem:[%s4697 + $0x34] sm:$0xf]
        %v4712 = vld [vmem:[%s4697 + $0x38] sm:$0xf]
        %v4713 = vld [vmem:[%s4697 + $0x3c] sm:$0xf]
        %v4746 = vunpack.c.l.b16 %v4665
        %v4747 = vunpack.c.l.b16 %v4666
        %v4748 = vunpack.c.l.b16 %v4667
        %v4749 = vunpack.c.l.b16 %v4668
        %v4750 = vunpack.c.l.b16 %v4669
        %v4751 = vunpack.c.l.b16 %v4670
        %v4752 = vunpack.c.l.b16 %v4671
        %v4753 = vunpack.c.l.b16 %v4672
        %v4754 = vunpack.c.l.b16 %v4673
        %v4755 = vunpack.c.l.b16 %v4674
        %v4756 = vunpack.c.l.b16 %v4675
        %v4757 = vunpack.c.l.b16 %v4676
        %v4758 = vunpack.c.l.b16 %v4677
        %v4759 = vunpack.c.l.b16 %v4678
        %v4760 = vunpack.c.l.b16 %v4679
        %v4761 = vunpack.c.l.b16 %v4680
        %v4762 = vunpack.c.l.b16 %v4681
        %v4763 = vunpack.c.l.b16 %v4682
        %v4764 = vunpack.c.l.b16 %v4683
        %v4765 = vunpack.c.l.b16 %v4684
        %v4766 = vunpack.c.l.b16 %v4685
        %v4767 = vunpack.c.l.b16 %v4686
        %v4768 = vunpack.c.l.b16 %v4687
        %v4769 = vunpack.c.l.b16 %v4688
        %v4770 = vunpack.c.l.b16 %v4689
        %v4771 = vunpack.c.l.b16 %v4690
        %v4772 = vunpack.c.l.b16 %v4691
        %v4773 = vunpack.c.l.b16 %v4692
        %v4774 = vunpack.c.l.b16 %v4693
        %v4775 = vunpack.c.l.b16 %v4694
        %v4776 = vunpack.c.l.b16 %v4695
        %v4777 = vunpack.c.l.b16 %v4696
        %v4778 = vpack.c.b16 %v4747, %v4746
        %v4779 = vpack.c.b16 %v4749, %v4748
        %v4780 = vpack.c.b16 %v4751, %v4750
        %v4781 = vpack.c.b16 %v4753, %v4752
        %v4782 = vpack.c.b16 %v4755, %v4754
        %v4783 = vpack.c.b16 %v4757, %v4756
        %v4784 = vpack.c.b16 %v4759, %v4758
        %v4785 = vpack.c.b16 %v4761, %v4760
        %v4786 = vpack.c.b16 %v4763, %v4762
        %v4787 = vpack.c.b16 %v4765, %v4764
        %v4788 = vpack.c.b16 %v4767, %v4766
        %v4789 = vpack.c.b16 %v4769, %v4768
        %v4790 = vpack.c.b16 %v4771, %v4770
        %v4791 = vpack.c.b16 %v4773, %v4772
        %v4792 = vpack.c.b16 %v4775, %v4774
        %v4793 = vpack.c.b16 %v4777, %v4776
        %v4826 = vunpack.c.l.b16 %v4698
        %v4827 = vunpack.c.l.b16 %v4699
        %v4828 = vunpack.c.l.b16 %v4700
        %v4829 = vunpack.c.l.b16 %v4701
        %v4830 = vunpack.c.l.b16 %v4702
        %v4831 = vunpack.c.l.b16 %v4703
        %v4832 = vunpack.c.l.b16 %v4704
        %v4833 = vunpack.c.l.b16 %v4705
        %v4834 = vunpack.c.l.b16 %v4706
        %v4835 = vunpack.c.l.b16 %v4707
        %v4836 = vunpack.c.l.b16 %v4708
        %v4837 = vunpack.c.l.b16 %v4709
        %v4838 = vunpack.c.l.b16 %v4710
        %v4839 = vunpack.c.l.b16 %v4711
        %v4840 = vunpack.c.l.b16 %v4712
        %v4841 = vunpack.c.l.b16 %v4713
        %v4842 = vpack.c.b16 %v4827, %v4826
        %v4843 = vpack.c.b16 %v4829, %v4828
        %v4844 = vpack.c.b16 %v4831, %v4830
        %v4845 = vpack.c.b16 %v4833, %v4832
        %v4846 = vpack.c.b16 %v4835, %v4834
        %v4847 = vpack.c.b16 %v4837, %v4836
        %v4848 = vpack.c.b16 %v4839, %v4838
        %v4849 = vpack.c.b16 %v4841, %v4840
        %4858 = vmatprep.subr.bf16.mxu0 0
        %4859 = vmatpush1.bf16.msra.mxu0 %v4842
        %4860 = vmatprep.subr.bf16.mxu0 0
        %4861 = vmatpush1.bf16.msra.mxu0 %v4843
        %4862 = vmatprep.subr.bf16.mxu0 0
        %4863 = vmatpush1.bf16.msra.mxu0 %v4844
        %4864 = vmatprep.subr.bf16.mxu0 0
        %4865 = vmatpush1.bf16.msra.mxu0 %v4845
        %4866 = vmatprep.subr.bf16.mxu0 0
        %4867 = vmatpush1.bf16.msra.mxu0 %v4846
        %4868 = vmatprep.subr.bf16.mxu0 0
        %4869 = vmatpush1.bf16.msra.mxu0 %v4847
        %4870 = vmatprep.subr.bf16.mxu0 0
        %4871 = vmatpush1.bf16.msra.mxu0 %v4848
        %4872 = vmatprep.subr.bf16.mxu0 0
        %4873 = vmatpush1.bf16.msra.mxu0 %v4849
        %4874 = vmatprep.subr.bf16.mxu0 0
        %4875 = vmatpush1.bf16.msra.mxu0 0
        %4876 = vmatprep.subr.bf16.mxu0 0
        %4877 = vmatpush1.bf16.msra.mxu0 0
        %4878 = vmatprep.subr.bf16.mxu0 0
        %4879 = vmatpush1.bf16.msra.mxu0 0
        %4880 = vmatprep.subr.bf16.mxu0 0
        %4881 = vmatpush1.bf16.msra.mxu0 0
        %4882 = vmatprep.subr.bf16.mxu0 0
        %4883 = vmatpush1.bf16.msra.mxu0 0
        %4884 = vmatprep.subr.bf16.mxu0 0
        %4885 = vmatpush1.bf16.msra.mxu0 0
        %4886 = vmatprep.subr.bf16.mxu0 0
        %4887 = vmatpush1.bf16.msra.mxu0 0
        %4888 = vmatprep.subr.bf16.mxu0 0
        %4889 = vmatpush1.bf16.msra.mxu0 0
        %4890 = vmatprep.mubr.bf16.mxu0 0
        %4891 = vmatmul.mubr.bf16.gmra.mrb[0].mxu0 %v4778
        %v4892 = vpop.f32.mrb[0].mxu0
        %v4893 = vadd.f32 0.0, %v4892
        %v4894 = vpop.f32.mrb[0].mxu0
        %v4895 = vpop.f32.mrb[0].mxu0
        %v4896 = vadd.f32 0.0, %v4895
        %v4897 = vpop.f32.mrb[0].mxu0
        %4898 = vmatprep.mubr.bf16.mxu0 0
        %4899 = vmatmul.mubr.bf16.gmra.mrb[0].mxu0 %v4779
        %v4900 = vpop.f32.mrb[0].mxu0
        %v4901 = vadd.f32 0.0, %v4900
        %v4902 = vpop.f32.mrb[0].mxu0
        %v4903 = vpop.f32.mrb[0].mxu0
        %v4904 = vadd.f32 0.0, %v4903
        %v4905 = vpop.f32.mrb[0].mxu0
        %4906 = vmatprep.mubr.bf16.mxu0 0
        %4907 = vmatmul.mubr.bf16.gmra.mrb[0].mxu0 %v4780
        %v4908 = vpop.f32.mrb[0].mxu0
        %v4909 = vadd.f32 0.0, %v4908
        %v4910 = vpop.f32.mrb[0].mxu0
        %v4911 = vpop.f32.mrb[0].mxu0
        %v4912 = vadd.f32 0.0, %v4911
        %v4913 = vpop.f32.mrb[0].mxu0
        %4914 = vmatprep.mubr.bf16.mxu0 0
        %4915 = vmatmul.mubr.bf16.gmra.mrb[0].mxu0 %v4781
        %v4916 = vpop.f32.mrb[0].mxu0
        %v4917 = vadd.f32 0.0, %v4916
        %v4918 = vpop.f32.mrb[0].mxu0
        %v4919 = vpop.f32.mrb[0].mxu0
        %v4920 = vadd.f32 0.0, %v4919
        %v4921 = vpop.f32.mrb[0].mxu0
        %4922 = vmatprep.mubr.bf16.mxu0 0
        %4923 = vmatmul.mubr.bf16.gmra.mrb[0].mxu0 %v4782
        %v4924 = vpop.f32.mrb[0].mxu0
        %v4925 = vadd.f32 0.0, %v4924
        %v4926 = vpop.f32.mrb[0].mxu0
        %v4927 = vpop.f32.mrb[0].mxu0
        %v4928 = vadd.f32 0.0, %v4927
        %v4929 = vpop.f32.mrb[0].mxu0
        %4930 = vmatprep.mubr.bf16.mxu0 0
        %4931 = vmatmul.mubr.bf16.gmra.mrb[0].mxu0 %v4783
        %v4932 = vpop.f32.mrb[0].mxu0
        %v4933 = vadd.f32 0.0, %v4932
        %v4934 = vpop.f32.mrb[0].mxu0
        %v4935 = vpop.f32.mrb[0].mxu0
        %v4936 = vadd.f32 0.0, %v4935
        %v4937 = vpop.f32.mrb[0].mxu0
        %4938 = vmatprep.mubr.bf16.mxu0 0
        %4939 = vmatmul.mubr.bf16.gmra.mrb[0].mxu0 %v4784
        %v4940 = vpop.f32.mrb[0].mxu0
        %v4941 = vadd.f32 0.0, %v4940
        %v4942 = vpop.f32.mrb[0].mxu0
        %v4943 = vpop.f32.mrb[0].mxu0
        %v4944 = vadd.f32 0.0, %v4943
        %v4945 = vpop.f32.mrb[0].mxu0
        %4946 = vmatprep.mubr.bf16.mxu0 0
        %4947 = vmatmul.mubr.bf16.gmra.mrb[0].mxu0 %v4785
        %v4948 = vpop.f32.mrb[0].mxu0
        %v4949 = vadd.f32 0.0, %v4948
        %v4950 = vpop.f32.mrb[0].mxu0
        %v4951 = vpop.f32.mrb[0].mxu0
        %v4952 = vadd.f32 0.0, %v4951
        %v4953 = vpop.f32.mrb[0].mxu0
        %4954 = vmatprep.mubr.bf16.mxu0 0
        %4955 = vmatmul.mubr.bf16.gmra.mrb[0].mxu0 %v4786
        %v4956 = vpop.f32.mrb[0].mxu0
        %v4957 = vadd.f32 0.0, %v4956
        %v4958 = vpop.f32.mrb[0].mxu0
        %v4959 = vpop.f32.mrb[0].mxu0
        %v4960 = vadd.f32 0.0, %v4959
        %v4961 = vpop.f32.mrb[0].mxu0
        %4962 = vmatprep.mubr.bf16.mxu0 0
        %4963 = vmatmul.mubr.bf16.gmra.mrb[0].mxu0 %v4787
        %v4964 = vpop.f32.mrb[0].mxu0
        %v4965 = vadd.f32 0.0, %v4964
        %v4966 = vpop.f32.mrb[0].mxu0
        %v4967 = vpop.f32.mrb[0].mxu0
        %v4968 = vadd.f32 0.0, %v4967
        %v4969 = vpop.f32.mrb[0].mxu0
        %4970 = vmatprep.mubr.bf16.mxu0 0
        %4971 = vmatmul.mubr.bf16.gmra.mrb[0].mxu0 %v4788
        %v4972 = vpop.f32.mrb[0].mxu0
        %v4973 = vadd.f32 0.0, %v4972
        %v4974 = vpop.f32.mrb[0].mxu0
        %v4975 = vpop.f32.mrb[0].mxu0
        %v4976 = vadd.f32 0.0, %v4975
        %v4977 = vpop.f32.mrb[0].mxu0
        %4978 = vmatprep.mubr.bf16.mxu0 0
        %4979 = vmatmul.mubr.bf16.gmra.mrb[0].mxu0 %v4789
        %v4980 = vpop.f32.mrb[0].mxu0
        %v4981 = vadd.f32 0.0, %v4980
        %v4982 = vpop.f32.mrb[0].mxu0
        %v4983 = vpop.f32.mrb[0].mxu0
        %v4984 = vadd.f32 0.0, %v4983
        %v4985 = vpop.f32.mrb[0].mxu0
        %4986 = vmatprep.mubr.bf16.mxu0 0
        %4987 = vmatmul.mubr.bf16.gmra.mrb[0].mxu0 %v4790
        %v4988 = vpop.f32.mrb[0].mxu0
        %v4989 = vadd.f32 0.0, %v4988
        %v4990 = vpop.f32.mrb[0].mxu0
        %v4991 = vpop.f32.mrb[0].mxu0
        %v4992 = vadd.f32 0.0, %v4991
        %v4993 = vpop.f32.mrb[0].mxu0
        %4994 = vmatprep.mubr.bf16.mxu0 0
        %4995 = vmatmul.mubr.bf16.gmra.mrb[0].mxu0 %v4791
        %v4996 = vpop.f32.mrb[0].mxu0
        %v4997 = vadd.f32 0.0, %v4996
        %v4998 = vpop.f32.mrb[0].mxu0
        %v4999 = vpop.f32.mrb[0].mxu0
        %v5000 = vadd.f32 0.0, %v4999
        %v5001 = vpop.f32.mrb[0].mxu0
        %5002 = vmatprep.mubr.bf16.mxu0 0
        %5003 = vmatmul.mubr.bf16.gmra.mrb[0].mxu0 %v4792
        %v5004 = vpop.f32.mrb[0].mxu0
        %v5005 = vadd.f32 0.0, %v5004
        %v5006 = vpop.f32.mrb[0].mxu0
        %v5007 = vpop.f32.mrb[0].mxu0
        %v5008 = vadd.f32 0.0, %v5007
        %v5009 = vpop.f32.mrb[0].mxu0
        %5010 = vmatprep.mubr.bf16.mxu0 0
        %5011 = vmatmul.mubr.bf16.gmra.mrb[0].mxu0 %v4793
        %v5012 = vpop.f32.mrb[0].mxu0
        %v5013 = vadd.f32 0.0, %v5012
        %v5014 = vpop.f32.mrb[0].mxu0
        %v5015 = vpop.f32.mrb[0].mxu0
        %v5016 = vadd.f32 0.0, %v5015
        %v5017 = vpop.f32.mrb[0].mxu0
        %5018 = vdwg.mxu0
        %v5019 = vadd.f32 %v4632, %v4893
        %v5020 = vadd.f32 %v4633, %v4896
        %v5021 = vadd.f32 %v4634, %v4901
        %v5022 = vadd.f32 %v4635, %v4904
        %v5023 = vadd.f32 %v4636, %v4909
        %v5024 = vadd.f32 %v4637, %v4912
        %v5025 = vadd.f32 %v4638, %v4917
        %v5026 = vadd.f32 %v4639, %v4920
        %v5027 = vadd.f32 %v4640, %v4925
        %v5028 = vadd.f32 %v4641, %v4928
        %v5029 = vadd.f32 %v4642, %v4933
        %v5030 = vadd.f32 %v4643, %v4936
        %v5031 = vadd.f32 %v4644, %v4941
        %v5032 = vadd.f32 %v4645, %v4944
        %v5033 = vadd.f32 %v4646, %v4949
        %v5034 = vadd.f32 %v4647, %v4952
        %v5035 = vadd.f32 %v4648, %v4957
        %v5036 = vadd.f32 %v4649, %v4960
        %v5037 = vadd.f32 %v4650, %v4965
        %v5038 = vadd.f32 %v4651, %v4968
        %v5039 = vadd.f32 %v4652, %v4973
        %v5040 = vadd.f32 %v4653, %v4976
        %v5041 = vadd.f32 %v4654, %v4981
        %v5042 = vadd.f32 %v4655, %v4984
        %v5043 = vadd.f32 %v4656, %v4989
        %v5044 = vadd.f32 %v4657, %v4992
        %v5045 = vadd.f32 %v4658, %v4997
        %v5046 = vadd.f32 %v4659, %v5000
        %v5047 = vadd.f32 %v4660, %v5005
        %v5048 = vadd.f32 %v4661, %v5008
        %v5049 = vadd.f32 %v4662, %v5013
        %v5050 = vadd.f32 %v4663, %v5016
        %v5051 = vld [vmem:[%s4664] sm:$0xf]
        %v5052 = vld [vmem:[%s4664 + $0x4] sm:$0xf]
        %v5053 = vld [vmem:[%s4664 + $0x8] sm:$0x1]
        %v5054 = vld [vmem:[%s4664 + $0xc] sm:$0xf]
        %v5055 = vld [vmem:[%s4664 + $0x10] sm:$0xf]
        %v5056 = vld [vmem:[%s4664 + $0x14] sm:$0x1]
        %v5057 = vld [vmem:[%s4664 + $0x18] sm:$0xf]
        %v5058 = vld [vmem:[%s4664 + $0x1c] sm:$0xf]
        %v5059 = vld [vmem:[%s4664 + $0x20] sm:$0x1]
        %v5060 = vld [vmem:[%s4664 + $0x24] sm:$0xf]
        %v5061 = vld [vmem:[%s4664 + $0x28] sm:$0xf]
        %v5062 = vld [vmem:[%s4664 + $0x2c] sm:$0x1]
        %v5063 = vld [vmem:[%s4664 + $0x30] sm:$0xf]
        %v5064 = vld [vmem:[%s4664 + $0x34] sm:$0xf]
        %v5065 = vld [vmem:[%s4664 + $0x38] sm:$0x1]
        %v5066 = vld [vmem:[%s4664 + $0x3c] sm:$0xf]
        %v5067 = vld [vmem:[%s4664 + $0x40] sm:$0xf]
        %v5068 = vld [vmem:[%s4664 + $0x44] sm:$0x1]
        %v5069 = vld [vmem:[%s4664 + $0x48] sm:$0xf]
        %v5070 = vld [vmem:[%s4664 + $0x4c] sm:$0xf]
        %v5071 = vld [vmem:[%s4664 + $0x50] sm:$0x1]
        %v5072 = vld [vmem:[%s4664 + $0x54] sm:$0xf]
        %v5073 = vld [vmem:[%s4664 + $0x58] sm:$0xf]
        %v5074 = vld [vmem:[%s4664 + $0x5c] sm:$0x1]
        %v5075 = vld [vmem:[%s4664 + $0x60] sm:$0xf]
        %v5076 = vld [vmem:[%s4664 + $0x64] sm:$0xf]
        %v5077 = vld [vmem:[%s4664 + $0x68] sm:$0x1]
        %v5078 = vld [vmem:[%s4664 + $0x6c] sm:$0xf]
        %v5079 = vld [vmem:[%s4664 + $0x70] sm:$0xf]
        %v5080 = vld [vmem:[%s4664 + $0x74] sm:$0x1]
        %v5081 = vld [vmem:[%s4664 + $0x78] sm:$0xf]
        %v5082 = vld [vmem:[%s4664 + $0x7c] sm:$0xf]
        %v5083 = vld [vmem:[%s4664 + $0x80] sm:$0x1]
        %v5084 = vld [vmem:[%s4664 + $0x84] sm:$0xf]
        %v5085 = vld [vmem:[%s4664 + $0x88] sm:$0xf]
        %v5086 = vld [vmem:[%s4664 + $0x8c] sm:$0x1]
        %v5087 = vld [vmem:[%s4664 + $0x90] sm:$0xf]
        %v5088 = vld [vmem:[%s4664 + $0x94] sm:$0xf]
        %v5089 = vld [vmem:[%s4664 + $0x98] sm:$0x1]
        %v5090 = vld [vmem:[%s4664 + $0x9c] sm:$0xf]
        %v5091 = vld [vmem:[%s4664 + $0xa0] sm:$0xf]
        %v5092 = vld [vmem:[%s4664 + $0xa4] sm:$0x1]
        %v5093 = vld [vmem:[%s4664 + $0xa8] sm:$0xf]
        %v5094 = vld [vmem:[%s4664 + $0xac] sm:$0xf]
        %v5095 = vld [vmem:[%s4664 + $0xb0] sm:$0x1]
        %v5096 = vld [vmem:[%s4664 + $0xb4] sm:$0xf]
        %v5097 = vld [vmem:[%s4664 + $0xb8] sm:$0xf]
        %v5098 = vld [vmem:[%s4664 + $0xbc] sm:$0x1]
        %v5100 = vshrl.u32 %v5051, 16
        %v5102 = vrot.slane %v5100, 4
        %v5103 = vshll.u32 %v5051, 16
        %v5105 = vrot.slane %v5103, 5
        %v5106 = vor.u32 %v5102, %v5105
        %v5107 = vrot.slane %v5106, 4
        %v5109 = vshll.u32 %v5052, 16
        %v5111 = vrot.slane %v5109, 5
        %v5112 = vsel %vm1561, %v5107, %v5111
        %v5113 = vshrl.u32 %v5052, 16
        %v5115 = vrot.slane %v5113, 4
        %v5116 = vor.u32 %v5115, %v5111
        %v5117 = vrot.slane %v5116, 4
        %v5119 = vshll.u32 %v5053, 16
        %v5121 = vrot.slane %v5119, 5
        %v5122 = vsel %vm1561, %v5117, %v5121
        %v5124 = vshrl.u32 %v5054, 16
        %v5126 = vrot.slane %v5124, 4
        %v5127 = vshll.u32 %v5054, 16
        %v5129 = vrot.slane %v5127, 5
        %v5130 = vor.u32 %v5126, %v5129
        %v5131 = vrot.slane %v5130, 4
        %v5133 = vshll.u32 %v5055, 16
        %v5135 = vrot.slane %v5133, 5
        %v5136 = vsel %vm1561, %v5131, %v5135
        %v5137 = vshrl.u32 %v5055, 16
        %v5139 = vrot.slane %v5137, 4
        %v5140 = vor.u32 %v5139, %v5135
        %v5141 = vrot.slane %v5140, 4
        %v5143 = vshll.u32 %v5056, 16
        %v5145 = vrot.slane %v5143, 5
        %v5146 = vsel %vm1561, %v5141, %v5145
        %v5148 = vshrl.u32 %v5057, 16
        %v5150 = vrot.slane %v5148, 4
        %v5151 = vshll.u32 %v5057, 16
        %v5153 = vrot.slane %v5151, 5
        %v5154 = vor.u32 %v5150, %v5153
        %v5155 = vrot.slane %v5154, 4
        %v5157 = vshll.u32 %v5058, 16
        %v5159 = vrot.slane %v5157, 5
        %v5160 = vsel %vm1561, %v5155, %v5159
        %v5161 = vshrl.u32 %v5058, 16
        %v5163 = vrot.slane %v5161, 4
        %v5164 = vor.u32 %v5163, %v5159
        %v5165 = vrot.slane %v5164, 4
        %v5167 = vshll.u32 %v5059, 16
        %v5169 = vrot.slane %v5167, 5
        %v5170 = vsel %vm1561, %v5165, %v5169
        %v5172 = vshrl.u32 %v5060, 16
        %v5174 = vrot.slane %v5172, 4
        %v5175 = vshll.u32 %v5060, 16
        %v5177 = vrot.slane %v5175, 5
        %v5178 = vor.u32 %v5174, %v5177
        %v5179 = vrot.slane %v5178, 4
        %v5181 = vshll.u32 %v5061, 16
        %v5183 = vrot.slane %v5181, 5
        %v5184 = vsel %vm1561, %v5179, %v5183
        %v5185 = vshrl.u32 %v5061, 16
        %v5187 = vrot.slane %v5185, 4
        %v5188 = vor.u32 %v5187, %v5183
        %v5189 = vrot.slane %v5188, 4
        %v5191 = vshll.u32 %v5062, 16
        %v5193 = vrot.slane %v5191, 5
        %v5194 = vsel %vm1561, %v5189, %v5193
        %v5196 = vshrl.u32 %v5063, 16
        %v5198 = vrot.slane %v5196, 4
        %v5199 = vshll.u32 %v5063, 16
        %v5201 = vrot.slane %v5199, 5
        %v5202 = vor.u32 %v5198, %v5201
        %v5203 = vrot.slane %v5202, 4
        %v5205 = vshll.u32 %v5064, 16
        %v5207 = vrot.slane %v5205, 5
        %v5208 = vsel %vm1561, %v5203, %v5207
        %v5209 = vshrl.u32 %v5064, 16
        %v5211 = vrot.slane %v5209, 4
        %v5212 = vor.u32 %v5211, %v5207
        %v5213 = vrot.slane %v5212, 4
        %v5215 = vshll.u32 %v5065, 16
        %v5217 = vrot.slane %v5215, 5
        %v5218 = vsel %vm1561, %v5213, %v5217
        %v5220 = vshrl.u32 %v5066, 16
        %v5222 = vrot.slane %v5220, 4
        %v5223 = vshll.u32 %v5066, 16
        %v5225 = vrot.slane %v5223, 5
        %v5226 = vor.u32 %v5222, %v5225
        %v5227 = vrot.slane %v5226, 4
        %v5229 = vshll.u32 %v5067, 16
        %v5231 = vrot.slane %v5229, 5
        %v5232 = vsel %vm1561, %v5227, %v5231
        %v5233 = vshrl.u32 %v5067, 16
        %v5235 = vrot.slane %v5233, 4
        %v5236 = vor.u32 %v5235, %v5231
        %v5237 = vrot.slane %v5236, 4
        %v5239 = vshll.u32 %v5068, 16
        %v5241 = vrot.slane %v5239, 5
        %v5242 = vsel %vm1561, %v5237, %v5241
        %v5244 = vshrl.u32 %v5069, 16
        %v5246 = vrot.slane %v5244, 4
        %v5247 = vshll.u32 %v5069, 16
        %v5249 = vrot.slane %v5247, 5
        %v5250 = vor.u32 %v5246, %v5249
        %v5251 = vrot.slane %v5250, 4
        %v5253 = vshll.u32 %v5070, 16
        %v5255 = vrot.slane %v5253, 5
        %v5256 = vsel %vm1561, %v5251, %v5255
        %v5257 = vshrl.u32 %v5070, 16
        %v5259 = vrot.slane %v5257, 4
        %v5260 = vor.u32 %v5259, %v5255
        %v5261 = vrot.slane %v5260, 4
        %v5263 = vshll.u32 %v5071, 16
        %v5265 = vrot.slane %v5263, 5
        %v5266 = vsel %vm1561, %v5261, %v5265
        %v5268 = vshrl.u32 %v5072, 16
        %v5270 = vrot.slane %v5268, 4
        %v5271 = vshll.u32 %v5072, 16
        %v5273 = vrot.slane %v5271, 5
        %v5274 = vor.u32 %v5270, %v5273
        %v5275 = vrot.slane %v5274, 4
        %v5277 = vshll.u32 %v5073, 16
        %v5279 = vrot.slane %v5277, 5
        %v5280 = vsel %vm1561, %v5275, %v5279
        %v5281 = vshrl.u32 %v5073, 16
        %v5283 = vrot.slane %v5281, 4
        %v5284 = vor.u32 %v5283, %v5279
        %v5285 = vrot.slane %v5284, 4
        %v5287 = vshll.u32 %v5074, 16
        %v5289 = vrot.slane %v5287, 5
        %v5290 = vsel %vm1561, %v5285, %v5289
        %v5292 = vshrl.u32 %v5075, 16
        %v5294 = vrot.slane %v5292, 4
        %v5295 = vshll.u32 %v5075, 16
        %v5297 = vrot.slane %v5295, 5
        %v5298 = vor.u32 %v5294, %v5297
        %v5299 = vrot.slane %v5298, 4
        %v5301 = vshll.u32 %v5076, 16
        %v5303 = vrot.slane %v5301, 5
        %v5304 = vsel %vm1561, %v5299, %v5303
        %v5305 = vshrl.u32 %v5076, 16
        %v5307 = vrot.slane %v5305, 4
        %v5308 = vor.u32 %v5307, %v5303
        %v5309 = vrot.slane %v5308, 4
        %v5311 = vshll.u32 %v5077, 16
        %v5313 = vrot.slane %v5311, 5
        %v5314 = vsel %vm1561, %v5309, %v5313
        %v5316 = vshrl.u32 %v5078, 16
        %v5318 = vrot.slane %v5316, 4
        %v5319 = vshll.u32 %v5078, 16
        %v5321 = vrot.slane %v5319, 5
        %v5322 = vor.u32 %v5318, %v5321
        %v5323 = vrot.slane %v5322, 4
        %v5325 = vshll.u32 %v5079, 16
        %v5327 = vrot.slane %v5325, 5
        %v5328 = vsel %vm1561, %v5323, %v5327
        %v5329 = vshrl.u32 %v5079, 16
        %v5331 = vrot.slane %v5329, 4
        %v5332 = vor.u32 %v5331, %v5327
        %v5333 = vrot.slane %v5332, 4
        %v5335 = vshll.u32 %v5080, 16
        %v5337 = vrot.slane %v5335, 5
        %v5338 = vsel %vm1561, %v5333, %v5337
        %v5340 = vshrl.u32 %v5081, 16
        %v5342 = vrot.slane %v5340, 4
        %v5343 = vshll.u32 %v5081, 16
        %v5345 = vrot.slane %v5343, 5
        %v5346 = vor.u32 %v5342, %v5345
        %v5347 = vrot.slane %v5346, 4
        %v5349 = vshll.u32 %v5082, 16
        %v5351 = vrot.slane %v5349, 5
        %v5352 = vsel %vm1561, %v5347, %v5351
        %v5353 = vshrl.u32 %v5082, 16
        %v5355 = vrot.slane %v5353, 4
        %v5356 = vor.u32 %v5355, %v5351
        %v5357 = vrot.slane %v5356, 4
        %v5359 = vshll.u32 %v5083, 16
        %v5361 = vrot.slane %v5359, 5
        %v5362 = vsel %vm1561, %v5357, %v5361
        %v5364 = vshrl.u32 %v5084, 16
        %v5366 = vrot.slane %v5364, 4
        %v5367 = vshll.u32 %v5084, 16
        %v5369 = vrot.slane %v5367, 5
        %v5370 = vor.u32 %v5366, %v5369
        %v5371 = vrot.slane %v5370, 4
        %v5373 = vshll.u32 %v5085, 16
        %v5375 = vrot.slane %v5373, 5
        %v5376 = vsel %vm1561, %v5371, %v5375
        %v5377 = vshrl.u32 %v5085, 16
        %v5379 = vrot.slane %v5377, 4
        %v5380 = vor.u32 %v5379, %v5375
        %v5381 = vrot.slane %v5380, 4
        %v5383 = vshll.u32 %v5086, 16
        %v5385 = vrot.slane %v5383, 5
        %v5386 = vsel %vm1561, %v5381, %v5385
        %v5388 = vshrl.u32 %v5087, 16
        %v5390 = vrot.slane %v5388, 4
        %v5391 = vshll.u32 %v5087, 16
        %v5393 = vrot.slane %v5391, 5
        %v5394 = vor.u32 %v5390, %v5393
        %v5395 = vrot.slane %v5394, 4
        %v5397 = vshll.u32 %v5088, 16
        %v5399 = vrot.slane %v5397, 5
        %v5400 = vsel %vm1561, %v5395, %v5399
        %v5401 = vshrl.u32 %v5088, 16
        %v5403 = vrot.slane %v5401, 4
        %v5404 = vor.u32 %v5403, %v5399
        %v5405 = vrot.slane %v5404, 4
        %v5407 = vshll.u32 %v5089, 16
        %v5409 = vrot.slane %v5407, 5
        %v5410 = vsel %vm1561, %v5405, %v5409
        %v5412 = vshrl.u32 %v5090, 16
        %v5414 = vrot.slane %v5412, 4
        %v5415 = vshll.u32 %v5090, 16
        %v5417 = vrot.slane %v5415, 5
        %v5418 = vor.u32 %v5414, %v5417
        %v5419 = vrot.slane %v5418, 4
        %v5421 = vshll.u32 %v5091, 16
        %v5423 = vrot.slane %v5421, 5
        %v5424 = vsel %vm1561, %v5419, %v5423
        %v5425 = vshrl.u32 %v5091, 16
        %v5427 = vrot.slane %v5425, 4
        %v5428 = vor.u32 %v5427, %v5423
        %v5429 = vrot.slane %v5428, 4
        %v5431 = vshll.u32 %v5092, 16
        %v5433 = vrot.slane %v5431, 5
        %v5434 = vsel %vm1561, %v5429, %v5433
        %v5436 = vshrl.u32 %v5093, 16
        %v5438 = vrot.slane %v5436, 4
        %v5439 = vshll.u32 %v5093, 16
        %v5441 = vrot.slane %v5439, 5
        %v5442 = vor.u32 %v5438, %v5441
        %v5443 = vrot.slane %v5442, 4
        %v5445 = vshll.u32 %v5094, 16
        %v5447 = vrot.slane %v5445, 5
        %v5448 = vsel %vm1561, %v5443, %v5447
        %v5449 = vshrl.u32 %v5094, 16
        %v5451 = vrot.slane %v5449, 4
        %v5452 = vor.u32 %v5451, %v5447
        %v5453 = vrot.slane %v5452, 4
        %v5455 = vshll.u32 %v5095, 16
        %v5457 = vrot.slane %v5455, 5
        %v5458 = vsel %vm1561, %v5453, %v5457
        %v5460 = vshrl.u32 %v5096, 16
        %v5462 = vrot.slane %v5460, 4
        %v5463 = vshll.u32 %v5096, 16
        %v5465 = vrot.slane %v5463, 5
        %v5466 = vor.u32 %v5462, %v5465
        %v5467 = vrot.slane %v5466, 4
        %v5469 = vshll.u32 %v5097, 16
        %v5471 = vrot.slane %v5469, 5
        %v5472 = vsel %vm1561, %v5467, %v5471
        %v5473 = vshrl.u32 %v5097, 16
        %v5475 = vrot.slane %v5473, 4
        %v5476 = vor.u32 %v5475, %v5471
        %v5477 = vrot.slane %v5476, 4
        %v5479 = vshll.u32 %v5098, 16
        %v5481 = vrot.slane %v5479, 5
        %v5482 = vsel %vm1561, %v5477, %v5481
        %s5483 = scalar_lea.vmem %s4, 448
        %v5484 = vld [vmem:[%s5483] sm:$0xf]
        %v5485 = vld [vmem:[%s5483 + $0x4] sm:$0xf]
        %v5486 = vld [vmem:[%s5483 + $0x8] sm:$0xf]
        %v5487 = vld [vmem:[%s5483 + $0xc] sm:$0xf]
        %v5488 = vld [vmem:[%s5483 + $0x10] sm:$0xf]
        %v5489 = vld [vmem:[%s5483 + $0x14] sm:$0xf]
        %v5490 = vld [vmem:[%s5483 + $0x18] sm:$0xf]
        %v5491 = vld [vmem:[%s5483 + $0x1c] sm:$0xf]
        %v5492 = vld [vmem:[%s5483 + $0x20] sm:$0xf]
        %v5493 = vld [vmem:[%s5483 + $0x24] sm:$0xf]
        %v5494 = vld [vmem:[%s5483 + $0x28] sm:$0xf]
        %v5495 = vld [vmem:[%s5483 + $0x2c] sm:$0xf]
        %v5496 = vld [vmem:[%s5483 + $0x30] sm:$0xf]
        %v5497 = vld [vmem:[%s5483 + $0x34] sm:$0xf]
        %v5498 = vld [vmem:[%s5483 + $0x38] sm:$0xf]
        %v5499 = vld [vmem:[%s5483 + $0x3c] sm:$0xf]
        %v5500 = vunpack.c.l.b16 %v5112
        %v5501 = vunpack.c.l.b16 %v5122
        %v5502 = vunpack.c.l.b16 %v5136
        %v5503 = vunpack.c.l.b16 %v5146
        %v5504 = vunpack.c.l.b16 %v5160
        %v5505 = vunpack.c.l.b16 %v5170
        %v5506 = vunpack.c.l.b16 %v5184
        %v5507 = vunpack.c.l.b16 %v5194
        %v5508 = vunpack.c.l.b16 %v5208
        %v5509 = vunpack.c.l.b16 %v5218
        %v5510 = vunpack.c.l.b16 %v5232
        %v5511 = vunpack.c.l.b16 %v5242
        %v5512 = vunpack.c.l.b16 %v5256
        %v5513 = vunpack.c.l.b16 %v5266
        %v5514 = vunpack.c.l.b16 %v5280
        %v5515 = vunpack.c.l.b16 %v5290
        %v5516 = vunpack.c.l.b16 %v5304
        %v5517 = vunpack.c.l.b16 %v5314
        %v5518 = vunpack.c.l.b16 %v5328
        %v5519 = vunpack.c.l.b16 %v5338
        %v5520 = vunpack.c.l.b16 %v5352
        %v5521 = vunpack.c.l.b16 %v5362
        %v5522 = vunpack.c.l.b16 %v5376
        %v5523 = vunpack.c.l.b16 %v5386
        %v5524 = vunpack.c.l.b16 %v5400
        %v5525 = vunpack.c.l.b16 %v5410
        %v5526 = vunpack.c.l.b16 %v5424
        %v5527 = vunpack.c.l.b16 %v5434
        %v5528 = vunpack.c.l.b16 %v5448
        %v5529 = vunpack.c.l.b16 %v5458
        %v5530 = vunpack.c.l.b16 %v5472
        %v5531 = vunpack.c.l.b16 %v5482
        %v5532 = vpack.c.b16 %v5501, %v5500
        %v5533 = vpack.c.b16 %v5503, %v5502
        %v5534 = vpack.c.b16 %v5505, %v5504
        %v5535 = vpack.c.b16 %v5507, %v5506
        %v5536 = vpack.c.b16 %v5509, %v5508
        %v5537 = vpack.c.b16 %v5511, %v5510
        %v5538 = vpack.c.b16 %v5513, %v5512
        %v5539 = vpack.c.b16 %v5515, %v5514
        %v5540 = vpack.c.b16 %v5517, %v5516
        %v5541 = vpack.c.b16 %v5519, %v5518
        %v5542 = vpack.c.b16 %v5521, %v5520
        %v5543 = vpack.c.b16 %v5523, %v5522
        %v5544 = vpack.c.b16 %v5525, %v5524
        %v5545 = vpack.c.b16 %v5527, %v5526
        %v5546 = vpack.c.b16 %v5529, %v5528
        %v5547 = vpack.c.b16 %v5531, %v5530
        %v5580 = vunpack.c.l.b16 %v5484
        %v5581 = vunpack.c.l.b16 %v5485
        %v5582 = vunpack.c.l.b16 %v5486
        %v5583 = vunpack.c.l.b16 %v5487
        %v5584 = vunpack.c.l.b16 %v5488
        %v5585 = vunpack.c.l.b16 %v5489
        %v5586 = vunpack.c.l.b16 %v5490
        %v5587 = vunpack.c.l.b16 %v5491
        %v5588 = vunpack.c.l.b16 %v5492
        %v5589 = vunpack.c.l.b16 %v5493
        %v5590 = vunpack.c.l.b16 %v5494
        %v5591 = vunpack.c.l.b16 %v5495
        %v5592 = vunpack.c.l.b16 %v5496
        %v5593 = vunpack.c.l.b16 %v5497
        %v5594 = vunpack.c.l.b16 %v5498
        %v5595 = vunpack.c.l.b16 %v5499
        %v5596 = vpack.c.b16 %v5581, %v5580
        %v5597 = vpack.c.b16 %v5583, %v5582
        %v5598 = vpack.c.b16 %v5585, %v5584
        %v5599 = vpack.c.b16 %v5587, %v5586
        %v5600 = vpack.c.b16 %v5589, %v5588
        %v5601 = vpack.c.b16 %v5591, %v5590
        %v5602 = vpack.c.b16 %v5593, %v5592
        %v5603 = vpack.c.b16 %v5595, %v5594
        %5612 = vmatprep.subr.bf16.mxu0 0
        %5613 = vmatpush1.bf16.msra.mxu0 %v5596
        %5614 = vmatprep.subr.bf16.mxu0 0
        %5615 = vmatpush1.bf16.msra.mxu0 %v5597
        %5616 = vmatprep.subr.bf16.mxu0 0
        %5617 = vmatpush1.bf16.msra.mxu0 %v5598
        %5618 = vmatprep.subr.bf16.mxu0 0
        %5619 = vmatpush1.bf16.msra.mxu0 %v5599
        %5620 = vmatprep.subr.bf16.mxu0 0
        %5621 = vmatpush1.bf16.msra.mxu0 %v5600
        %5622 = vmatprep.subr.bf16.mxu0 0
        %5623 = vmatpush1.bf16.msra.mxu0 %v5601
        %5624 = vmatprep.subr.bf16.mxu0 0
        %5625 = vmatpush1.bf16.msra.mxu0 %v5602
        %5626 = vmatprep.subr.bf16.mxu0 0
        %5627 = vmatpush1.bf16.msra.mxu0 %v5603
        %5628 = vmatprep.subr.bf16.mxu0 0
        %5629 = vmatpush1.bf16.msra.mxu0 0
        %5630 = vmatprep.subr.bf16.mxu0 0
        %5631 = vmatpush1.bf16.msra.mxu0 0
        %5632 = vmatprep.subr.bf16.mxu0 0
        %5633 = vmatpush1.bf16.msra.mxu0 0
        %5634 = vmatprep.subr.bf16.mxu0 0
        %5635 = vmatpush1.bf16.msra.mxu0 0
        %5636 = vmatprep.subr.bf16.mxu0 0
        %5637 = vmatpush1.bf16.msra.mxu0 0
        %5638 = vmatprep.subr.bf16.mxu0 0
        %5639 = vmatpush1.bf16.msra.mxu0 0
        %5640 = vmatprep.subr.bf16.mxu0 0
        %5641 = vmatpush1.bf16.msra.mxu0 0
        %5642 = vmatprep.subr.bf16.mxu0 0
        %5643 = vmatpush1.bf16.msra.mxu0 0
        %5644 = vmatprep.mubr.bf16.mxu0 0
        %5645 = vmatmul.mubr.bf16.gmra.mrb[0].mxu0 %v5532
        %v5646 = vpop.f32.mrb[0].mxu0
        %v5647 = vadd.f32 0.0, %v5646
        %v5648 = vpop.f32.mrb[0].mxu0
        %v5649 = vpop.f32.mrb[0].mxu0
        %v5650 = vadd.f32 0.0, %v5649
        %v5651 = vpop.f32.mrb[0].mxu0
        %5652 = vmatprep.mubr.bf16.mxu0 0
        %5653 = vmatmul.mubr.bf16.gmra.mrb[0].mxu0 %v5533
        %v5654 = vpop.f32.mrb[0].mxu0
        %v5655 = vadd.f32 0.0, %v5654
        %v5656 = vpop.f32.mrb[0].mxu0
        %v5657 = vpop.f32.mrb[0].mxu0
        %v5658 = vadd.f32 0.0, %v5657
        %v5659 = vpop.f32.mrb[0].mxu0
        %5660 = vmatprep.mubr.bf16.mxu0 0
        %5661 = vmatmul.mubr.bf16.gmra.mrb[0].mxu0 %v5534
        %v5662 = vpop.f32.mrb[0].mxu0
        %v5663 = vadd.f32 0.0, %v5662
        %v5664 = vpop.f32.mrb[0].mxu0
        %v5665 = vpop.f32.mrb[0].mxu0
        %v5666 = vadd.f32 0.0, %v5665
        %v5667 = vpop.f32.mrb[0].mxu0
        %5668 = vmatprep.mubr.bf16.mxu0 0
        %5669 = vmatmul.mubr.bf16.gmra.mrb[0].mxu0 %v5535
        %v5670 = vpop.f32.mrb[0].mxu0
        %v5671 = vadd.f32 0.0, %v5670
        %v5672 = vpop.f32.mrb[0].mxu0
        %v5673 = vpop.f32.mrb[0].mxu0
        %v5674 = vadd.f32 0.0, %v5673
        %v5675 = vpop.f32.mrb[0].mxu0
        %5676 = vmatprep.mubr.bf16.mxu0 0
        %5677 = vmatmul.mubr.bf16.gmra.mrb[0].mxu0 %v5536
        %v5678 = vpop.f32.mrb[0].mxu0
        %v5679 = vadd.f32 0.0, %v5678
        %v5680 = vpop.f32.mrb[0].mxu0
        %v5681 = vpop.f32.mrb[0].mxu0
        %v5682 = vadd.f32 0.0, %v5681
        %v5683 = vpop.f32.mrb[0].mxu0
        %5684 = vmatprep.mubr.bf16.mxu0 0
        %5685 = vmatmul.mubr.bf16.gmra.mrb[0].mxu0 %v5537
        %v5686 = vpop.f32.mrb[0].mxu0
        %v5687 = vadd.f32 0.0, %v5686
        %v5688 = vpop.f32.mrb[0].mxu0
        %v5689 = vpop.f32.mrb[0].mxu0
        %v5690 = vadd.f32 0.0, %v5689
        %v5691 = vpop.f32.mrb[0].mxu0
        %5692 = vmatprep.mubr.bf16.mxu0 0
        %5693 = vmatmul.mubr.bf16.gmra.mrb[0].mxu0 %v5538
        %v5694 = vpop.f32.mrb[0].mxu0
        %v5695 = vadd.f32 0.0, %v5694
        %v5696 = vpop.f32.mrb[0].mxu0
        %v5697 = vpop.f32.mrb[0].mxu0
        %v5698 = vadd.f32 0.0, %v5697
        %v5699 = vpop.f32.mrb[0].mxu0
        %5700 = vmatprep.mubr.bf16.mxu0 0
        %5701 = vmatmul.mubr.bf16.gmra.mrb[0].mxu0 %v5539
        %v5702 = vpop.f32.mrb[0].mxu0
        %v5703 = vadd.f32 0.0, %v5702
        %v5704 = vpop.f32.mrb[0].mxu0
        %v5705 = vpop.f32.mrb[0].mxu0
        %v5706 = vadd.f32 0.0, %v5705
        %v5707 = vpop.f32.mrb[0].mxu0
        %5708 = vmatprep.mubr.bf16.mxu0 0
        %5709 = vmatmul.mubr.bf16.gmra.mrb[0].mxu0 %v5540
        %v5710 = vpop.f32.mrb[0].mxu0
        %v5711 = vadd.f32 0.0, %v5710
        %v5712 = vpop.f32.mrb[0].mxu0
        %v5713 = vpop.f32.mrb[0].mxu0
        %v5714 = vadd.f32 0.0, %v5713
        %v5715 = vpop.f32.mrb[0].mxu0
        %5716 = vmatprep.mubr.bf16.mxu0 0
        %5717 = vmatmul.mubr.bf16.gmra.mrb[0].mxu0 %v5541
        %v5718 = vpop.f32.mrb[0].mxu0
        %v5719 = vadd.f32 0.0, %v5718
        %v5720 = vpop.f32.mrb[0].mxu0
        %v5721 = vpop.f32.mrb[0].mxu0
        %v5722 = vadd.f32 0.0, %v5721
        %v5723 = vpop.f32.mrb[0].mxu0
        %5724 = vmatprep.mubr.bf16.mxu0 0
        %5725 = vmatmul.mubr.bf16.gmra.mrb[0].mxu0 %v5542
        %v5726 = vpop.f32.mrb[0].mxu0
        %v5727 = vadd.f32 0.0, %v5726
        %v5728 = vpop.f32.mrb[0].mxu0
        %v5729 = vpop.f32.mrb[0].mxu0
        %v5730 = vadd.f32 0.0, %v5729
        %v5731 = vpop.f32.mrb[0].mxu0
        %5732 = vmatprep.mubr.bf16.mxu0 0
        %5733 = vmatmul.mubr.bf16.gmra.mrb[0].mxu0 %v5543
        %v5734 = vpop.f32.mrb[0].mxu0
        %v5735 = vadd.f32 0.0, %v5734
        %v5736 = vpop.f32.mrb[0].mxu0
        %v5737 = vpop.f32.mrb[0].mxu0
        %v5738 = vadd.f32 0.0, %v5737
        %v5739 = vpop.f32.mrb[0].mxu0
        %5740 = vmatprep.mubr.bf16.mxu0 0
        %5741 = vmatmul.mubr.bf16.gmra.mrb[0].mxu0 %v5544
        %v5742 = vpop.f32.mrb[0].mxu0
        %v5743 = vadd.f32 0.0, %v5742
        %v5744 = vpop.f32.mrb[0].mxu0
        %v5745 = vpop.f32.mrb[0].mxu0
        %v5746 = vadd.f32 0.0, %v5745
        %v5747 = vpop.f32.mrb[0].mxu0
        %5748 = vmatprep.mubr.bf16.mxu0 0
        %5749 = vmatmul.mubr.bf16.gmra.mrb[0].mxu0 %v5545
        %v5750 = vpop.f32.mrb[0].mxu0
        %v5751 = vadd.f32 0.0, %v5750
        %v5752 = vpop.f32.mrb[0].mxu0
        %v5753 = vpop.f32.mrb[0].mxu0
        %v5754 = vadd.f32 0.0, %v5753
        %v5755 = vpop.f32.mrb[0].mxu0
        %5756 = vmatprep.mubr.bf16.mxu0 0
        %5757 = vmatmul.mubr.bf16.gmra.mrb[0].mxu0 %v5546
        %v5758 = vpop.f32.mrb[0].mxu0
        %v5759 = vadd.f32 0.0, %v5758
        %v5760 = vpop.f32.mrb[0].mxu0
        %v5761 = vpop.f32.mrb[0].mxu0
        %v5762 = vadd.f32 0.0, %v5761
        %v5763 = vpop.f32.mrb[0].mxu0
        %5764 = vmatprep.mubr.bf16.mxu0 0
        %5765 = vmatmul.mubr.bf16.gmra.mrb[0].mxu0 %v5547
        %v5766 = vpop.f32.mrb[0].mxu0
        %v5767 = vadd.f32 0.0, %v5766
        %v5768 = vpop.f32.mrb[0].mxu0
        %v5769 = vpop.f32.mrb[0].mxu0
        %v5770 = vadd.f32 0.0, %v5769
        %v5771 = vpop.f32.mrb[0].mxu0
        %5772 = vdwg.mxu0
        %v5773 = vadd.f32 %v5019, %v5647
        %v5774 = vadd.f32 %v5020, %v5650
        %v5775 = vadd.f32 %v5021, %v5655
        %v5776 = vadd.f32 %v5022, %v5658
        %v5777 = vadd.f32 %v5023, %v5663
        %v5778 = vadd.f32 %v5024, %v5666
        %v5779 = vadd.f32 %v5025, %v5671
        %v5780 = vadd.f32 %v5026, %v5674
        %v5781 = vadd.f32 %v5027, %v5679
        %v5782 = vadd.f32 %v5028, %v5682
        %v5783 = vadd.f32 %v5029, %v5687
        %v5784 = vadd.f32 %v5030, %v5690
        %v5785 = vadd.f32 %v5031, %v5695
        %v5786 = vadd.f32 %v5032, %v5698
        %v5787 = vadd.f32 %v5033, %v5703
        %v5788 = vadd.f32 %v5034, %v5706
        %v5789 = vadd.f32 %v5035, %v5711
        %v5790 = vadd.f32 %v5036, %v5714
        %v5791 = vadd.f32 %v5037, %v5719
        %v5792 = vadd.f32 %v5038, %v5722
        %v5793 = vadd.f32 %v5039, %v5727
        %v5794 = vadd.f32 %v5040, %v5730
        %v5795 = vadd.f32 %v5041, %v5735
        %v5796 = vadd.f32 %v5042, %v5738
        %v5797 = vadd.f32 %v5043, %v5743
        %v5798 = vadd.f32 %v5044, %v5746
        %v5799 = vadd.f32 %v5045, %v5751
        %v5800 = vadd.f32 %v5046, %v5754
        %v5801 = vadd.f32 %v5047, %v5759
        %v5802 = vadd.f32 %v5048, %v5762
        %v5803 = vadd.f32 %v5049, %v5767
        %v5804 = vadd.f32 %v5050, %v5770
        %v5805 = vld [vmem:[%s4664] sm:$0xe]
        %v5806 = vld [vmem:[%s4664 + $0xc] sm:$0xe]
        %v5807 = vld [vmem:[%s4664 + $0x18] sm:$0xe]
        %v5808 = vld [vmem:[%s4664 + $0x24] sm:$0xe]
        %v5809 = vld [vmem:[%s4664 + $0x30] sm:$0xe]
        %v5810 = vld [vmem:[%s4664 + $0x3c] sm:$0xe]
        %v5811 = vld [vmem:[%s4664 + $0x48] sm:$0xe]
        %v5812 = vld [vmem:[%s4664 + $0x54] sm:$0xe]
        %v5813 = vld [vmem:[%s4664 + $0x60] sm:$0xe]
        %v5814 = vld [vmem:[%s4664 + $0x6c] sm:$0xe]
        %v5815 = vld [vmem:[%s4664 + $0x78] sm:$0xe]
        %v5816 = vld [vmem:[%s4664 + $0x84] sm:$0xe]
        %v5817 = vld [vmem:[%s4664 + $0x90] sm:$0xe]
        %v5818 = vld [vmem:[%s4664 + $0x9c] sm:$0xe]
        %v5819 = vld [vmem:[%s4664 + $0xa8] sm:$0xe]
        %v5820 = vld [vmem:[%s4664 + $0xb4] sm:$0xe]
        %v5869 = vrot.slane %v5805, 5
        %v5870 = vrot.slane %v5869, 4
        %v5871 = vrot.slane %v5052, 5
        %v5872 = vsel %vm2591, %v5870, %v5871
        %v5873 = vrot.slane %v5871, 4
        %v5874 = vrot.slane %v5053, 5
        %v5875 = vsel %vm2591, %v5873, %v5874
        %v5876 = vrot.slane %v5806, 5
        %v5877 = vrot.slane %v5876, 4
        %v5878 = vrot.slane %v5055, 5
        %v5879 = vsel %vm2591, %v5877, %v5878
        %v5880 = vrot.slane %v5878, 4
        %v5881 = vrot.slane %v5056, 5
        %v5882 = vsel %vm2591, %v5880, %v5881
        %v5883 = vrot.slane %v5807, 5
        %v5884 = vrot.slane %v5883, 4
        %v5885 = vrot.slane %v5058, 5
        %v5886 = vsel %vm2591, %v5884, %v5885
        %v5887 = vrot.slane %v5885, 4
        %v5888 = vrot.slane %v5059, 5
        %v5889 = vsel %vm2591, %v5887, %v5888
        %v5890 = vrot.slane %v5808, 5
        %v5891 = vrot.slane %v5890, 4
        %v5892 = vrot.slane %v5061, 5
        %v5893 = vsel %vm2591, %v5891, %v5892
        %v5894 = vrot.slane %v5892, 4
        %v5895 = vrot.slane %v5062, 5
        %v5896 = vsel %vm2591, %v5894, %v5895
        %v5897 = vrot.slane %v5809, 5
        %v5898 = vrot.slane %v5897, 4
        %v5899 = vrot.slane %v5064, 5
        %v5900 = vsel %vm2591, %v5898, %v5899
        %v5901 = vrot.slane %v5899, 4
        %v5902 = vrot.slane %v5065, 5
        %v5903 = vsel %vm2591, %v5901, %v5902
        %v5904 = vrot.slane %v5810, 5
        %v5905 = vrot.slane %v5904, 4
        %v5906 = vrot.slane %v5067, 5
        %v5907 = vsel %vm2591, %v5905, %v5906
        %v5908 = vrot.slane %v5906, 4
        %v5909 = vrot.slane %v5068, 5
        %v5910 = vsel %vm2591, %v5908, %v5909
        %v5911 = vrot.slane %v5811, 5
        %v5912 = vrot.slane %v5911, 4
        %v5913 = vrot.slane %v5070, 5
        %v5914 = vsel %vm2591, %v5912, %v5913
        %v5915 = vrot.slane %v5913, 4
        %v5916 = vrot.slane %v5071, 5
        %v5917 = vsel %vm2591, %v5915, %v5916
        %v5918 = vrot.slane %v5812, 5
        %v5919 = vrot.slane %v5918, 4
        %v5920 = vrot.slane %v5073, 5
        %v5921 = vsel %vm2591, %v5919, %v5920
        %v5922 = vrot.slane %v5920, 4
        %v5923 = vrot.slane %v5074, 5
        %v5924 = vsel %vm2591, %v5922, %v5923
        %v5925 = vrot.slane %v5813, 5
        %v5926 = vrot.slane %v5925, 4
        %v5927 = vrot.slane %v5076, 5
        %v5928 = vsel %vm2591, %v5926, %v5927
        %v5929 = vrot.slane %v5927, 4
        %v5930 = vrot.slane %v5077, 5
        %v5931 = vsel %vm2591, %v5929, %v5930
        %v5932 = vrot.slane %v5814, 5
        %v5933 = vrot.slane %v5932, 4
        %v5934 = vrot.slane %v5079, 5
        %v5935 = vsel %vm2591, %v5933, %v5934
        %v5936 = vrot.slane %v5934, 4
        %v5937 = vrot.slane %v5080, 5
        %v5938 = vsel %vm2591, %v5936, %v5937
        %v5939 = vrot.slane %v5815, 5
        %v5940 = vrot.slane %v5939, 4
        %v5941 = vrot.slane %v5082, 5
        %v5942 = vsel %vm2591, %v5940, %v5941
        %v5943 = vrot.slane %v5941, 4
        %v5944 = vrot.slane %v5083, 5
        %v5945 = vsel %vm2591, %v5943, %v5944
        %v5946 = vrot.slane %v5816, 5
        %v5947 = vrot.slane %v5946, 4
        %v5948 = vrot.slane %v5085, 5
        %v5949 = vsel %vm2591, %v5947, %v5948
        %v5950 = vrot.slane %v5948, 4
        %v5951 = vrot.slane %v5086, 5
        %v5952 = vsel %vm2591, %v5950, %v5951
        %v5953 = vrot.slane %v5817, 5
        %v5954 = vrot.slane %v5953, 4
        %v5955 = vrot.slane %v5088, 5
        %v5956 = vsel %vm2591, %v5954, %v5955
        %v5957 = vrot.slane %v5955, 4
        %v5958 = vrot.slane %v5089, 5
        %v5959 = vsel %vm2591, %v5957, %v5958
        %v5960 = vrot.slane %v5818, 5
        %v5961 = vrot.slane %v5960, 4
        %v5962 = vrot.slane %v5091, 5
        %v5963 = vsel %vm2591, %v5961, %v5962
        %v5964 = vrot.slane %v5962, 4
        %v5965 = vrot.slane %v5092, 5
        %v5966 = vsel %vm2591, %v5964, %v5965
        %v5967 = vrot.slane %v5819, 5
        %v5968 = vrot.slane %v5967, 4
        %v5969 = vrot.slane %v5094, 5
        %v5970 = vsel %vm2591, %v5968, %v5969
        %v5971 = vrot.slane %v5969, 4
        %v5972 = vrot.slane %v5095, 5
        %v5973 = vsel %vm2591, %v5971, %v5972
        %v5974 = vrot.slane %v5820, 5
        %v5975 = vrot.slane %v5974, 4
        %v5976 = vrot.slane %v5097, 5
        %v5977 = vsel %vm2591, %v5975, %v5976
        %v5978 = vrot.slane %v5976, 4
        %v5979 = vrot.slane %v5098, 5
        %v5980 = vsel %vm2591, %v5978, %v5979
        %s5981 = scalar_lea.vmem %s4, 512
        %v5982 = vld [vmem:[%s5981] sm:$0xf]
        %v5983 = vld [vmem:[%s5981 + $0x4] sm:$0xf]
        %v5984 = vld [vmem:[%s5981 + $0x8] sm:$0xf]
        %v5985 = vld [vmem:[%s5981 + $0xc] sm:$0xf]
        %v5986 = vld [vmem:[%s5981 + $0x10] sm:$0xf]
        %v5987 = vld [vmem:[%s5981 + $0x14] sm:$0xf]
        %v5988 = vld [vmem:[%s5981 + $0x18] sm:$0xf]
        %v5989 = vld [vmem:[%s5981 + $0x1c] sm:$0xf]
        %v5990 = vld [vmem:[%s5981 + $0x20] sm:$0xf]
        %v5991 = vld [vmem:[%s5981 + $0x24] sm:$0xf]
        %v5992 = vld [vmem:[%s5981 + $0x28] sm:$0xf]
        %v5993 = vld [vmem:[%s5981 + $0x2c] sm:$0xf]
        %v5994 = vld [vmem:[%s5981 + $0x30] sm:$0xf]
        %v5995 = vld [vmem:[%s5981 + $0x34] sm:$0xf]
        %v5996 = vld [vmem:[%s5981 + $0x38] sm:$0xf]
        %v5997 = vld [vmem:[%s5981 + $0x3c] sm:$0xf]
        %v5998 = vunpack.c.l.b16 %v5872
        %v5999 = vunpack.c.l.b16 %v5875
        %v6000 = vunpack.c.l.b16 %v5879
        %v6001 = vunpack.c.l.b16 %v5882
        %v6002 = vunpack.c.l.b16 %v5886
        %v6003 = vunpack.c.l.b16 %v5889
        %v6004 = vunpack.c.l.b16 %v5893
        %v6005 = vunpack.c.l.b16 %v5896
        %v6006 = vunpack.c.l.b16 %v5900
        %v6007 = vunpack.c.l.b16 %v5903
        %v6008 = vunpack.c.l.b16 %v5907
        %v6009 = vunpack.c.l.b16 %v5910
        %v6010 = vunpack.c.l.b16 %v5914
        %v6011 = vunpack.c.l.b16 %v5917
        %v6012 = vunpack.c.l.b16 %v5921
        %v6013 = vunpack.c.l.b16 %v5924
        %v6014 = vunpack.c.l.b16 %v5928
        %v6015 = vunpack.c.l.b16 %v5931
        %v6016 = vunpack.c.l.b16 %v5935
        %v6017 = vunpack.c.l.b16 %v5938
        %v6018 = vunpack.c.l.b16 %v5942
        %v6019 = vunpack.c.l.b16 %v5945
        %v6020 = vunpack.c.l.b16 %v5949
        %v6021 = vunpack.c.l.b16 %v5952
        %v6022 = vunpack.c.l.b16 %v5956
        %v6023 = vunpack.c.l.b16 %v5959
        %v6024 = vunpack.c.l.b16 %v5963
        %v6025 = vunpack.c.l.b16 %v5966
        %v6026 = vunpack.c.l.b16 %v5970
        %v6027 = vunpack.c.l.b16 %v5973
        %v6028 = vunpack.c.l.b16 %v5977
        %v6029 = vunpack.c.l.b16 %v5980
        %v6030 = vpack.c.b16 %v5999, %v5998
        %v6031 = vpack.c.b16 %v6001, %v6000
        %v6032 = vpack.c.b16 %v6003, %v6002
        %v6033 = vpack.c.b16 %v6005, %v6004
        %v6034 = vpack.c.b16 %v6007, %v6006
        %v6035 = vpack.c.b16 %v6009, %v6008
        %v6036 = vpack.c.b16 %v6011, %v6010
        %v6037 = vpack.c.b16 %v6013, %v6012
        %v6038 = vpack.c.b16 %v6015, %v6014
        %v6039 = vpack.c.b16 %v6017, %v6016
        %v6040 = vpack.c.b16 %v6019, %v6018
        %v6041 = vpack.c.b16 %v6021, %v6020
        %v6042 = vpack.c.b16 %v6023, %v6022
        %v6043 = vpack.c.b16 %v6025, %v6024
        %v6044 = vpack.c.b16 %v6027, %v6026
        %v6045 = vpack.c.b16 %v6029, %v6028
        %v6078 = vunpack.c.l.b16 %v5982
        %v6079 = vunpack.c.l.b16 %v5983
        %v6080 = vunpack.c.l.b16 %v5984
        %v6081 = vunpack.c.l.b16 %v5985
        %v6082 = vunpack.c.l.b16 %v5986
        %v6083 = vunpack.c.l.b16 %v5987
        %v6084 = vunpack.c.l.b16 %v5988
        %v6085 = vunpack.c.l.b16 %v5989
        %v6086 = vunpack.c.l.b16 %v5990
        %v6087 = vunpack.c.l.b16 %v5991
        %v6088 = vunpack.c.l.b16 %v5992
        %v6089 = vunpack.c.l.b16 %v5993
        %v6090 = vunpack.c.l.b16 %v5994
        %v6091 = vunpack.c.l.b16 %v5995
        %v6092 = vunpack.c.l.b16 %v5996
        %v6093 = vunpack.c.l.b16 %v5997
        %v6094 = vpack.c.b16 %v6079, %v6078
        %v6095 = vpack.c.b16 %v6081, %v6080
        %v6096 = vpack.c.b16 %v6083, %v6082
        %v6097 = vpack.c.b16 %v6085, %v6084
        %v6098 = vpack.c.b16 %v6087, %v6086
        %v6099 = vpack.c.b16 %v6089, %v6088
        %v6100 = vpack.c.b16 %v6091, %v6090
        %v6101 = vpack.c.b16 %v6093, %v6092
        %6110 = vmatprep.subr.bf16.mxu0 0
        %6111 = vmatpush1.bf16.msra.mxu0 %v6094
        %6112 = vmatprep.subr.bf16.mxu0 0
        %6113 = vmatpush1.bf16.msra.mxu0 %v6095
        %6114 = vmatprep.subr.bf16.mxu0 0
        %6115 = vmatpush1.bf16.msra.mxu0 %v6096
        %6116 = vmatprep.subr.bf16.mxu0 0
        %6117 = vmatpush1.bf16.msra.mxu0 %v6097
        %6118 = vmatprep.subr.bf16.mxu0 0
        %6119 = vmatpush1.bf16.msra.mxu0 %v6098
        %6120 = vmatprep.subr.bf16.mxu0 0
        %6121 = vmatpush1.bf16.msra.mxu0 %v6099
        %6122 = vmatprep.subr.bf16.mxu0 0
        %6123 = vmatpush1.bf16.msra.mxu0 %v6100
        %6124 = vmatprep.subr.bf16.mxu0 0
        %6125 = vmatpush1.bf16.msra.mxu0 %v6101
        %6126 = vmatprep.subr.bf16.mxu0 0
        %6127 = vmatpush1.bf16.msra.mxu0 0
        %6128 = vmatprep.subr.bf16.mxu0 0
        %6129 = vmatpush1.bf16.msra.mxu0 0
        %6130 = vmatprep.subr.bf16.mxu0 0
        %6131 = vmatpush1.bf16.msra.mxu0 0
        %6132 = vmatprep.subr.bf16.mxu0 0
        %6133 = vmatpush1.bf16.msra.mxu0 0
        %6134 = vmatprep.subr.bf16.mxu0 0
        %6135 = vmatpush1.bf16.msra.mxu0 0
        %6136 = vmatprep.subr.bf16.mxu0 0
        %6137 = vmatpush1.bf16.msra.mxu0 0
        %6138 = vmatprep.subr.bf16.mxu0 0
        %6139 = vmatpush1.bf16.msra.mxu0 0
        %6140 = vmatprep.subr.bf16.mxu0 0
        %6141 = vmatpush1.bf16.msra.mxu0 0
        %6142 = vmatprep.mubr.bf16.mxu0 0
        %6143 = vmatmul.mubr.bf16.gmra.mrb[0].mxu0 %v6030
        %v6144 = vpop.f32.mrb[0].mxu0
        %v6145 = vadd.f32 0.0, %v6144
        %v6146 = vpop.f32.mrb[0].mxu0
        %v6147 = vpop.f32.mrb[0].mxu0
        %v6148 = vadd.f32 0.0, %v6147
        %v6149 = vpop.f32.mrb[0].mxu0
        %6150 = vmatprep.mubr.bf16.mxu0 0
        %6151 = vmatmul.mubr.bf16.gmra.mrb[0].mxu0 %v6031
        %v6152 = vpop.f32.mrb[0].mxu0
        %v6153 = vadd.f32 0.0, %v6152
        %v6154 = vpop.f32.mrb[0].mxu0
        %v6155 = vpop.f32.mrb[0].mxu0
        %v6156 = vadd.f32 0.0, %v6155
        %v6157 = vpop.f32.mrb[0].mxu0
        %6158 = vmatprep.mubr.bf16.mxu0 0
        %6159 = vmatmul.mubr.bf16.gmra.mrb[0].mxu0 %v6032
        %v6160 = vpop.f32.mrb[0].mxu0
        %v6161 = vadd.f32 0.0, %v6160
        %v6162 = vpop.f32.mrb[0].mxu0
        %v6163 = vpop.f32.mrb[0].mxu0
        %v6164 = vadd.f32 0.0, %v6163
        %v6165 = vpop.f32.mrb[0].mxu0
        %6166 = vmatprep.mubr.bf16.mxu0 0
        %6167 = vmatmul.mubr.bf16.gmra.mrb[0].mxu0 %v6033
        %v6168 = vpop.f32.mrb[0].mxu0
        %v6169 = vadd.f32 0.0, %v6168
        %v6170 = vpop.f32.mrb[0].mxu0
        %v6171 = vpop.f32.mrb[0].mxu0
        %v6172 = vadd.f32 0.0, %v6171
        %v6173 = vpop.f32.mrb[0].mxu0
        %6174 = vmatprep.mubr.bf16.mxu0 0
        %6175 = vmatmul.mubr.bf16.gmra.mrb[0].mxu0 %v6034
        %v6176 = vpop.f32.mrb[0].mxu0
        %v6177 = vadd.f32 0.0, %v6176
        %v6178 = vpop.f32.mrb[0].mxu0
        %v6179 = vpop.f32.mrb[0].mxu0
        %v6180 = vadd.f32 0.0, %v6179
        %v6181 = vpop.f32.mrb[0].mxu0
        %6182 = vmatprep.mubr.bf16.mxu0 0
        %6183 = vmatmul.mubr.bf16.gmra.mrb[0].mxu0 %v6035
        %v6184 = vpop.f32.mrb[0].mxu0
        %v6185 = vadd.f32 0.0, %v6184
        %v6186 = vpop.f32.mrb[0].mxu0
        %v6187 = vpop.f32.mrb[0].mxu0
        %v6188 = vadd.f32 0.0, %v6187
        %v6189 = vpop.f32.mrb[0].mxu0
        %6190 = vmatprep.mubr.bf16.mxu0 0
        %6191 = vmatmul.mubr.bf16.gmra.mrb[0].mxu0 %v6036
        %v6192 = vpop.f32.mrb[0].mxu0
        %v6193 = vadd.f32 0.0, %v6192
        %v6194 = vpop.f32.mrb[0].mxu0
        %v6195 = vpop.f32.mrb[0].mxu0
        %v6196 = vadd.f32 0.0, %v6195
        %v6197 = vpop.f32.mrb[0].mxu0
        %6198 = vmatprep.mubr.bf16.mxu0 0
        %6199 = vmatmul.mubr.bf16.gmra.mrb[0].mxu0 %v6037
        %v6200 = vpop.f32.mrb[0].mxu0
        %v6201 = vadd.f32 0.0, %v6200
        %v6202 = vpop.f32.mrb[0].mxu0
        %v6203 = vpop.f32.mrb[0].mxu0
        %v6204 = vadd.f32 0.0, %v6203
        %v6205 = vpop.f32.mrb[0].mxu0
        %6206 = vmatprep.mubr.bf16.mxu0 0
        %6207 = vmatmul.mubr.bf16.gmra.mrb[0].mxu0 %v6038
        %v6208 = vpop.f32.mrb[0].mxu0
        %v6209 = vadd.f32 0.0, %v6208
        %v6210 = vpop.f32.mrb[0].mxu0
        %v6211 = vpop.f32.mrb[0].mxu0
        %v6212 = vadd.f32 0.0, %v6211
        %v6213 = vpop.f32.mrb[0].mxu0
        %6214 = vmatprep.mubr.bf16.mxu0 0
        %6215 = vmatmul.mubr.bf16.gmra.mrb[0].mxu0 %v6039
        %v6216 = vpop.f32.mrb[0].mxu0
        %v6217 = vadd.f32 0.0, %v6216
        %v6218 = vpop.f32.mrb[0].mxu0
        %v6219 = vpop.f32.mrb[0].mxu0
        %v6220 = vadd.f32 0.0, %v6219
        %v6221 = vpop.f32.mrb[0].mxu0
        %6222 = vmatprep.mubr.bf16.mxu0 0
        %6223 = vmatmul.mubr.bf16.gmra.mrb[0].mxu0 %v6040
        %v6224 = vpop.f32.mrb[0].mxu0
        %v6225 = vadd.f32 0.0, %v6224
        %v6226 = vpop.f32.mrb[0].mxu0
        %v6227 = vpop.f32.mrb[0].mxu0
        %v6228 = vadd.f32 0.0, %v6227
        %v6229 = vpop.f32.mrb[0].mxu0
        %6230 = vmatprep.mubr.bf16.mxu0 0
        %6231 = vmatmul.mubr.bf16.gmra.mrb[0].mxu0 %v6041
        %v6232 = vpop.f32.mrb[0].mxu0
        %v6233 = vadd.f32 0.0, %v6232
        %v6234 = vpop.f32.mrb[0].mxu0
        %v6235 = vpop.f32.mrb[0].mxu0
        %v6236 = vadd.f32 0.0, %v6235
        %v6237 = vpop.f32.mrb[0].mxu0
        %6238 = vmatprep.mubr.bf16.mxu0 0
        %6239 = vmatmul.mubr.bf16.gmra.mrb[0].mxu0 %v6042
        %v6240 = vpop.f32.mrb[0].mxu0
        %v6241 = vadd.f32 0.0, %v6240
        %v6242 = vpop.f32.mrb[0].mxu0
        %v6243 = vpop.f32.mrb[0].mxu0
        %v6244 = vadd.f32 0.0, %v6243
        %v6245 = vpop.f32.mrb[0].mxu0
        %6246 = vmatprep.mubr.bf16.mxu0 0
        %6247 = vmatmul.mubr.bf16.gmra.mrb[0].mxu0 %v6043
        %v6248 = vpop.f32.mrb[0].mxu0
        %v6249 = vadd.f32 0.0, %v6248
        %v6250 = vpop.f32.mrb[0].mxu0
        %v6251 = vpop.f32.mrb[0].mxu0
        %v6252 = vadd.f32 0.0, %v6251
        %v6253 = vpop.f32.mrb[0].mxu0
        %6254 = vmatprep.mubr.bf16.mxu0 0
        %6255 = vmatmul.mubr.bf16.gmra.mrb[0].mxu0 %v6044
        %v6256 = vpop.f32.mrb[0].mxu0
        %v6257 = vadd.f32 0.0, %v6256
        %v6258 = vpop.f32.mrb[0].mxu0
        %v6259 = vpop.f32.mrb[0].mxu0
        %v6260 = vadd.f32 0.0, %v6259
        %v6261 = vpop.f32.mrb[0].mxu0
        %6262 = vmatprep.mubr.bf16.mxu0 0
        %6263 = vmatmul.mubr.bf16.gmra.mrb[0].mxu0 %v6045
        %v6264 = vpop.f32.mrb[0].mxu0
        %v6265 = vadd.f32 0.0, %v6264
        %v6266 = vpop.f32.mrb[0].mxu0
        %v6267 = vpop.f32.mrb[0].mxu0
        %v6268 = vadd.f32 0.0, %v6267
        %v6269 = vpop.f32.mrb[0].mxu0
        %6270 = vdwg.mxu0
        %v6271 = vadd.f32 %v5773, %v6145
        %v6272 = vadd.f32 %v5774, %v6148
        %v6273 = vadd.f32 %v5775, %v6153
        %v6274 = vadd.f32 %v5776, %v6156
        %v6275 = vadd.f32 %v5777, %v6161
        %v6276 = vadd.f32 %v5778, %v6164
        %v6277 = vadd.f32 %v5779, %v6169
        %v6278 = vadd.f32 %v5780, %v6172
        %v6279 = vadd.f32 %v5781, %v6177
        %v6280 = vadd.f32 %v5782, %v6180
        %v6281 = vadd.f32 %v5783, %v6185
        %v6282 = vadd.f32 %v5784, %v6188
        %v6283 = vadd.f32 %v5785, %v6193
        %v6284 = vadd.f32 %v5786, %v6196
        %v6285 = vadd.f32 %v5787, %v6201
        %v6286 = vadd.f32 %v5788, %v6204
        %v6287 = vadd.f32 %v5789, %v6209
        %v6288 = vadd.f32 %v5790, %v6212
        %v6289 = vadd.f32 %v5791, %v6217
        %v6290 = vadd.f32 %v5792, %v6220
        %v6291 = vadd.f32 %v5793, %v6225
        %v6292 = vadd.f32 %v5794, %v6228
        %v6293 = vadd.f32 %v5795, %v6233
        %v6294 = vadd.f32 %v5796, %v6236
        %v6295 = vadd.f32 %v5797, %v6241
        %v6296 = vadd.f32 %v5798, %v6244
        %v6297 = vadd.f32 %v5799, %v6249
        %v6298 = vadd.f32 %v5800, %v6252
        %v6299 = vadd.f32 %v5801, %v6257
        %v6300 = vadd.f32 %v5802, %v6260
        %v6301 = vadd.f32 %v5803, %v6265
        %v6302 = vadd.f32 %v5804, %v6268
        %v6303 = vld [vmem:[%s5] sm:$0x1]
        %v6305 = vlaneseq
        %v6306 = vshrl.u32 %v6305, 7
        %v6307 = vsub.s32 0, %v6306
        %v6308 = vrot.slane %v6303, %v6307
        %v6310 = vmul.f32 %v6271, %v6308
        %v6311 = vmul.f32 %v6272, %v6308
        %v6312 = vmul.f32 %v6273, %v6308
        %v6313 = vmul.f32 %v6274, %v6308
        %v6314 = vmul.f32 %v6275, %v6308
        %v6315 = vmul.f32 %v6276, %v6308
        %v6316 = vmul.f32 %v6277, %v6308
        %v6317 = vmul.f32 %v6278, %v6308
        %v6318 = vmul.f32 %v6279, %v6308
        %v6319 = vmul.f32 %v6280, %v6308
        %v6320 = vmul.f32 %v6281, %v6308
        %v6321 = vmul.f32 %v6282, %v6308
        %v6322 = vmul.f32 %v6283, %v6308
        %v6323 = vmul.f32 %v6284, %v6308
        %v6324 = vmul.f32 %v6285, %v6308
        %v6325 = vmul.f32 %v6286, %v6308
        %v6326 = vmul.f32 %v6287, %v6308
        %v6327 = vmul.f32 %v6288, %v6308
        %v6328 = vmul.f32 %v6289, %v6308
        %v6329 = vmul.f32 %v6290, %v6308
        %v6330 = vmul.f32 %v6291, %v6308
        %v6331 = vmul.f32 %v6292, %v6308
        %v6332 = vmul.f32 %v6293, %v6308
        %v6333 = vmul.f32 %v6294, %v6308
        %v6334 = vmul.f32 %v6295, %v6308
        %v6335 = vmul.f32 %v6296, %v6308
        %v6336 = vmul.f32 %v6297, %v6308
        %v6337 = vmul.f32 %v6298, %v6308
        %v6338 = vmul.f32 %v6299, %v6308
        %v6339 = vmul.f32 %v6300, %v6308
        %v6340 = vmul.f32 %v6301, %v6308
        %v6341 = vmul.f32 %v6302, %v6308
        %v6342 = vld [vmem:[%s6] sm:$0x1]
        %v6344 = vlaneseq
        %v6345 = vshrl.u32 %v6344, 7
        %v6346 = vsub.s32 0, %v6345
        %v6347 = vrot.slane %v6342, %v6346
        %v6349 = vadd.f32 %v6310, %v6347
        %v6350 = vadd.f32 %v6311, %v6347
        %v6351 = vadd.f32 %v6312, %v6347
        %v6352 = vadd.f32 %v6313, %v6347
        %v6353 = vadd.f32 %v6314, %v6347
        %v6354 = vadd.f32 %v6315, %v6347
        %v6355 = vadd.f32 %v6316, %v6347
        %v6356 = vadd.f32 %v6317, %v6347
        %v6357 = vadd.f32 %v6318, %v6347
        %v6358 = vadd.f32 %v6319, %v6347
        %v6359 = vadd.f32 %v6320, %v6347
        %v6360 = vadd.f32 %v6321, %v6347
        %v6361 = vadd.f32 %v6322, %v6347
        %v6362 = vadd.f32 %v6323, %v6347
        %v6363 = vadd.f32 %v6324, %v6347
        %v6364 = vadd.f32 %v6325, %v6347
        %v6365 = vadd.f32 %v6326, %v6347
        %v6366 = vadd.f32 %v6327, %v6347
        %v6367 = vadd.f32 %v6328, %v6347
        %v6368 = vadd.f32 %v6329, %v6347
        %v6369 = vadd.f32 %v6330, %v6347
        %v6370 = vadd.f32 %v6331, %v6347
        %v6371 = vadd.f32 %v6332, %v6347
        %v6372 = vadd.f32 %v6333, %v6347
        %v6373 = vadd.f32 %v6334, %v6347
        %v6374 = vadd.f32 %v6335, %v6347
        %v6375 = vadd.f32 %v6336, %v6347
        %v6376 = vadd.f32 %v6337, %v6347
        %v6377 = vadd.f32 %v6338, %v6347
        %v6378 = vadd.f32 %v6339, %v6347
        %v6379 = vadd.f32 %v6340, %v6347
        %v6380 = vadd.f32 %v6341, %v6347
        %v6381 = vmax.f32 %v6349, 0.0
        %v6382 = vmax.f32 %v6350, 0.0
        %v6383 = vmax.f32 %v6351, 0.0
        %v6384 = vmax.f32 %v6352, 0.0
        %v6385 = vmax.f32 %v6353, 0.0
        %v6386 = vmax.f32 %v6354, 0.0
        %v6387 = vmax.f32 %v6355, 0.0
        %v6388 = vmax.f32 %v6356, 0.0
        %v6389 = vmax.f32 %v6357, 0.0
        %v6390 = vmax.f32 %v6358, 0.0
        %v6391 = vmax.f32 %v6359, 0.0
        %v6392 = vmax.f32 %v6360, 0.0
        %v6393 = vmax.f32 %v6361, 0.0
        %v6394 = vmax.f32 %v6362, 0.0
        %v6395 = vmax.f32 %v6363, 0.0
        %v6396 = vmax.f32 %v6364, 0.0
        %v6397 = vmax.f32 %v6365, 0.0
        %v6398 = vmax.f32 %v6366, 0.0
        %v6399 = vmax.f32 %v6367, 0.0
        %v6400 = vmax.f32 %v6368, 0.0
        %v6401 = vmax.f32 %v6369, 0.0
        %v6402 = vmax.f32 %v6370, 0.0
        %v6403 = vmax.f32 %v6371, 0.0
        %v6404 = vmax.f32 %v6372, 0.0
        %v6405 = vmax.f32 %v6373, 0.0
        %v6406 = vmax.f32 %v6374, 0.0
        %v6407 = vmax.f32 %v6375, 0.0
        %v6408 = vmax.f32 %v6376, 0.0
        %v6409 = vmax.f32 %v6377, 0.0
        %v6410 = vmax.f32 %v6378, 0.0
        %v6411 = vmax.f32 %v6379, 0.0
        %v6412 = vmax.f32 %v6380, 0.0
        %v6413 = vpack.c.bf16 %v6382, %v6381
        %v6414 = vpack.c.bf16 %v6384, %v6383
        %v6415 = vpack.c.bf16 %v6386, %v6385
        %v6416 = vpack.c.bf16 %v6388, %v6387
        %v6417 = vpack.c.bf16 %v6390, %v6389
        %v6418 = vpack.c.bf16 %v6392, %v6391
        %v6419 = vpack.c.bf16 %v6394, %v6393
        %v6420 = vpack.c.bf16 %v6396, %v6395
        %v6421 = vpack.c.bf16 %v6398, %v6397
        %v6422 = vpack.c.bf16 %v6400, %v6399
        %v6423 = vpack.c.bf16 %v6402, %v6401
        %v6424 = vpack.c.bf16 %v6404, %v6403
        %v6425 = vpack.c.bf16 %v6406, %v6405
        %v6426 = vpack.c.bf16 %v6408, %v6407
        %v6427 = vpack.c.bf16 %v6410, %v6409
        %v6428 = vpack.c.bf16 %v6412, %v6411
        %v6429 = vld [vmem:[%s7] sm:$0xf]
        %v6430 = vld [vmem:[%s7 + $0x4] sm:$0xf]
        %v6431 = vld [vmem:[%s7 + $0x8] sm:$0xf]
        %v6432 = vld [vmem:[%s7 + $0xc] sm:$0xf]
        %v6433 = vld [vmem:[%s7 + $0x10] sm:$0xf]
        %v6434 = vld [vmem:[%s7 + $0x14] sm:$0xf]
        %v6435 = vld [vmem:[%s7 + $0x18] sm:$0xf]
        %v6436 = vld [vmem:[%s7 + $0x1c] sm:$0xf]
        %v6437 = vld [vmem:[%s7 + $0x20] sm:$0xf]
        %v6438 = vld [vmem:[%s7 + $0x24] sm:$0xf]
        %v6439 = vld [vmem:[%s7 + $0x28] sm:$0xf]
        %v6440 = vld [vmem:[%s7 + $0x2c] sm:$0xf]
        %v6441 = vld [vmem:[%s7 + $0x30] sm:$0xf]
        %v6442 = vld [vmem:[%s7 + $0x34] sm:$0xf]
        %v6443 = vld [vmem:[%s7 + $0x38] sm:$0xf]
        %v6444 = vld [vmem:[%s7 + $0x3c] sm:$0xf]
        %v6461 = vunpack.c.l.b16 %v6429
        %v6462 = vunpack.c.l.b16 %v6430
        %v6463 = vunpack.c.l.b16 %v6431
        %v6464 = vunpack.c.l.b16 %v6432
        %v6465 = vunpack.c.l.b16 %v6433
        %v6466 = vunpack.c.l.b16 %v6434
        %v6467 = vunpack.c.l.b16 %v6435
        %v6468 = vunpack.c.l.b16 %v6436
        %v6469 = vunpack.c.l.b16 %v6437
        %v6470 = vunpack.c.l.b16 %v6438
        %v6471 = vunpack.c.l.b16 %v6439
        %v6472 = vunpack.c.l.b16 %v6440
        %v6473 = vunpack.c.l.b16 %v6441
        %v6474 = vunpack.c.l.b16 %v6442
        %v6475 = vunpack.c.l.b16 %v6443
        %v6476 = vunpack.c.l.b16 %v6444
        %v6477 = vpack.c.b16 %v6462, %v6461
        %v6478 = vpack.c.b16 %v6464, %v6463
        %v6479 = vpack.c.b16 %v6466, %v6465
        %v6480 = vpack.c.b16 %v6468, %v6467
        %v6481 = vpack.c.b16 %v6470, %v6469
        %v6482 = vpack.c.b16 %v6472, %v6471
        %v6483 = vpack.c.b16 %v6474, %v6473
        %v6484 = vpack.c.b16 %v6476, %v6475
        %6493 = vmatprep.subr.bf16.mxu0 0
        %6494 = vmatpush1.bf16.msra.mxu0 %v6477
        %6495 = vmatprep.subr.bf16.mxu0 0
        %6496 = vmatpush1.bf16.msra.mxu0 %v6478
        %6497 = vmatprep.subr.bf16.mxu0 0
        %6498 = vmatpush1.bf16.msra.mxu0 %v6479
        %6499 = vmatprep.subr.bf16.mxu0 0
        %6500 = vmatpush1.bf16.msra.mxu0 %v6480
        %6501 = vmatprep.subr.bf16.mxu0 0
        %6502 = vmatpush1.bf16.msra.mxu0 %v6481
        %6503 = vmatprep.subr.bf16.mxu0 0
        %6504 = vmatpush1.bf16.msra.mxu0 %v6482
        %6505 = vmatprep.subr.bf16.mxu0 0
        %6506 = vmatpush1.bf16.msra.mxu0 %v6483
        %6507 = vmatprep.subr.bf16.mxu0 0
        %6508 = vmatpush1.bf16.msra.mxu0 %v6484
        %6509 = vmatprep.subr.bf16.mxu0 0
        %6510 = vmatpush1.bf16.msra.mxu0 0
        %6511 = vmatprep.subr.bf16.mxu0 0
        %6512 = vmatpush1.bf16.msra.mxu0 0
        %6513 = vmatprep.subr.bf16.mxu0 0
        %6514 = vmatpush1.bf16.msra.mxu0 0
        %6515 = vmatprep.subr.bf16.mxu0 0
        %6516 = vmatpush1.bf16.msra.mxu0 0
        %6517 = vmatprep.subr.bf16.mxu0 0
        %6518 = vmatpush1.bf16.msra.mxu0 0
        %6519 = vmatprep.subr.bf16.mxu0 0
        %6520 = vmatpush1.bf16.msra.mxu0 0
        %6521 = vmatprep.subr.bf16.mxu0 0
        %6522 = vmatpush1.bf16.msra.mxu0 0
        %6523 = vmatprep.subr.bf16.mxu0 0
        %6524 = vmatpush1.bf16.msra.mxu0 0
        %6525 = vmatprep.mubr.bf16.mxu0 0
        %6526 = vmatmul.mubr.bf16.gmra.mrb[0].mxu0 %v6413
        %v6527 = vpop.f32.mrb[0].mxu0
        %v6528 = vadd.f32 0.0, %v6527
        %v6529 = vpop.f32.mrb[0].mxu0
        %v6530 = vpop.f32.mrb[0].mxu0
        %v6531 = vadd.f32 0.0, %v6530
        %v6532 = vpop.f32.mrb[0].mxu0
        %6533 = vmatprep.mubr.bf16.mxu0 0
        %6534 = vmatmul.mubr.bf16.gmra.mrb[0].mxu0 %v6414
        %v6535 = vpop.f32.mrb[0].mxu0
        %v6536 = vadd.f32 0.0, %v6535
        %v6537 = vpop.f32.mrb[0].mxu0
        %v6538 = vpop.f32.mrb[0].mxu0
        %v6539 = vadd.f32 0.0, %v6538
        %v6540 = vpop.f32.mrb[0].mxu0
        %6541 = vmatprep.mubr.bf16.mxu0 0
        %6542 = vmatmul.mubr.bf16.gmra.mrb[0].mxu0 %v6415
        %v6543 = vpop.f32.mrb[0].mxu0
        %v6544 = vadd.f32 0.0, %v6543
        %v6545 = vpop.f32.mrb[0].mxu0
        %v6546 = vpop.f32.mrb[0].mxu0
        %v6547 = vadd.f32 0.0, %v6546
        %v6548 = vpop.f32.mrb[0].mxu0
        %6549 = vmatprep.mubr.bf16.mxu0 0
        %6550 = vmatmul.mubr.bf16.gmra.mrb[0].mxu0 %v6416
        %v6551 = vpop.f32.mrb[0].mxu0
        %v6552 = vadd.f32 0.0, %v6551
        %v6553 = vpop.f32.mrb[0].mxu0
        %v6554 = vpop.f32.mrb[0].mxu0
        %v6555 = vadd.f32 0.0, %v6554
        %v6556 = vpop.f32.mrb[0].mxu0
        %6557 = vmatprep.mubr.bf16.mxu0 0
        %6558 = vmatmul.mubr.bf16.gmra.mrb[0].mxu0 %v6417
        %v6559 = vpop.f32.mrb[0].mxu0
        %v6560 = vadd.f32 0.0, %v6559
        %v6561 = vpop.f32.mrb[0].mxu0
        %v6562 = vpop.f32.mrb[0].mxu0
        %v6563 = vadd.f32 0.0, %v6562
        %v6564 = vpop.f32.mrb[0].mxu0
        %6565 = vmatprep.mubr.bf16.mxu0 0
        %6566 = vmatmul.mubr.bf16.gmra.mrb[0].mxu0 %v6418
        %v6567 = vpop.f32.mrb[0].mxu0
        %v6568 = vadd.f32 0.0, %v6567
        %v6569 = vpop.f32.mrb[0].mxu0
        %v6570 = vpop.f32.mrb[0].mxu0
        %v6571 = vadd.f32 0.0, %v6570
        %v6572 = vpop.f32.mrb[0].mxu0
        %6573 = vmatprep.mubr.bf16.mxu0 0
        %6574 = vmatmul.mubr.bf16.gmra.mrb[0].mxu0 %v6419
        %v6575 = vpop.f32.mrb[0].mxu0
        %v6576 = vadd.f32 0.0, %v6575
        %v6577 = vpop.f32.mrb[0].mxu0
        %v6578 = vpop.f32.mrb[0].mxu0
        %v6579 = vadd.f32 0.0, %v6578
        %v6580 = vpop.f32.mrb[0].mxu0
        %6581 = vmatprep.mubr.bf16.mxu0 0
        %6582 = vmatmul.mubr.bf16.gmra.mrb[0].mxu0 %v6420
        %v6583 = vpop.f32.mrb[0].mxu0
        %v6584 = vadd.f32 0.0, %v6583
        %v6585 = vpop.f32.mrb[0].mxu0
        %v6586 = vpop.f32.mrb[0].mxu0
        %v6587 = vadd.f32 0.0, %v6586
        %v6588 = vpop.f32.mrb[0].mxu0
        %6589 = vmatprep.mubr.bf16.mxu0 0
        %6590 = vmatmul.mubr.bf16.gmra.mrb[0].mxu0 %v6421
        %v6591 = vpop.f32.mrb[0].mxu0
        %v6592 = vadd.f32 0.0, %v6591
        %v6593 = vpop.f32.mrb[0].mxu0
        %v6594 = vpop.f32.mrb[0].mxu0
        %v6595 = vadd.f32 0.0, %v6594
        %v6596 = vpop.f32.mrb[0].mxu0
        %6597 = vmatprep.mubr.bf16.mxu0 0
        %6598 = vmatmul.mubr.bf16.gmra.mrb[0].mxu0 %v6422
        %v6599 = vpop.f32.mrb[0].mxu0
        %v6600 = vadd.f32 0.0, %v6599
        %v6601 = vpop.f32.mrb[0].mxu0
        %v6602 = vpop.f32.mrb[0].mxu0
        %v6603 = vadd.f32 0.0, %v6602
        %v6604 = vpop.f32.mrb[0].mxu0
        %6605 = vmatprep.mubr.bf16.mxu0 0
        %6606 = vmatmul.mubr.bf16.gmra.mrb[0].mxu0 %v6423
        %v6607 = vpop.f32.mrb[0].mxu0
        %v6608 = vadd.f32 0.0, %v6607
        %v6609 = vpop.f32.mrb[0].mxu0
        %v6610 = vpop.f32.mrb[0].mxu0
        %v6611 = vadd.f32 0.0, %v6610
        %v6612 = vpop.f32.mrb[0].mxu0
        %6613 = vmatprep.mubr.bf16.mxu0 0
        %6614 = vmatmul.mubr.bf16.gmra.mrb[0].mxu0 %v6424
        %v6615 = vpop.f32.mrb[0].mxu0
        %v6616 = vadd.f32 0.0, %v6615
        %v6617 = vpop.f32.mrb[0].mxu0
        %v6618 = vpop.f32.mrb[0].mxu0
        %v6619 = vadd.f32 0.0, %v6618
        %v6620 = vpop.f32.mrb[0].mxu0
        %6621 = vmatprep.mubr.bf16.mxu0 0
        %6622 = vmatmul.mubr.bf16.gmra.mrb[0].mxu0 %v6425
        %v6623 = vpop.f32.mrb[0].mxu0
        %v6624 = vadd.f32 0.0, %v6623
        %v6625 = vpop.f32.mrb[0].mxu0
        %v6626 = vpop.f32.mrb[0].mxu0
        %v6627 = vadd.f32 0.0, %v6626
        %v6628 = vpop.f32.mrb[0].mxu0
        %6629 = vmatprep.mubr.bf16.mxu0 0
        %6630 = vmatmul.mubr.bf16.gmra.mrb[0].mxu0 %v6426
        %v6631 = vpop.f32.mrb[0].mxu0
        %v6632 = vadd.f32 0.0, %v6631
        %v6633 = vpop.f32.mrb[0].mxu0
        %v6634 = vpop.f32.mrb[0].mxu0
        %v6635 = vadd.f32 0.0, %v6634
        %v6636 = vpop.f32.mrb[0].mxu0
        %6637 = vmatprep.mubr.bf16.mxu0 0
        %6638 = vmatmul.mubr.bf16.gmra.mrb[0].mxu0 %v6427
        %v6639 = vpop.f32.mrb[0].mxu0
        %v6640 = vadd.f32 0.0, %v6639
        %v6641 = vpop.f32.mrb[0].mxu0
        %v6642 = vpop.f32.mrb[0].mxu0
        %v6643 = vadd.f32 0.0, %v6642
        %v6644 = vpop.f32.mrb[0].mxu0
        %6645 = vmatprep.mubr.bf16.mxu0 0
        %6646 = vmatmul.mubr.bf16.gmra.mrb[0].mxu0 %v6428
        %v6647 = vpop.f32.mrb[0].mxu0
        %v6648 = vadd.f32 0.0, %v6647
        %v6649 = vpop.f32.mrb[0].mxu0
        %v6650 = vpop.f32.mrb[0].mxu0
        %v6651 = vadd.f32 0.0, %v6650
        %v6652 = vpop.f32.mrb[0].mxu0
        %6653 = vdwg.mxu0
        %6654 = vst [vmem:[#allocation3] sm:$0xff] %v6528
        %6655 = vst [vmem:[#allocation3 + $0x8] sm:$0xff] %v6531
        %6656 = vst [vmem:[#allocation3 + $0x10] sm:$0xff] %v6536
        %6657 = vst [vmem:[#allocation3 + $0x18] sm:$0xff] %v6539
        %6658 = vst [vmem:[#allocation3 + $0x20] sm:$0xff] %v6544
        %6659 = vst [vmem:[#allocation3 + $0x28] sm:$0xff] %v6547
        %6660 = vst [vmem:[#allocation3 + $0x30] sm:$0xff] %v6552
        %6661 = vst [vmem:[#allocation3 + $0x38] sm:$0xff] %v6555
        %6662 = vst [vmem:[#allocation3 + $0x40] sm:$0xff] %v6560
        %6663 = vst [vmem:[#allocation3 + $0x48] sm:$0xff] %v6563
        %6664 = vst [vmem:[#allocation3 + $0x50] sm:$0xff] %v6568
        %6665 = vst [vmem:[#allocation3 + $0x58] sm:$0xff] %v6571
        %6666 = vst [vmem:[#allocation3 + $0x60] sm:$0xff] %v6576
        %6667 = vst [vmem:[#allocation3 + $0x68] sm:$0xff] %v6579
        %6668 = vst [vmem:[#allocation3 + $0x70] sm:$0xff] %v6584
        %6669 = vst [vmem:[#allocation3 + $0x78] sm:$0xff] %v6587
        %6670 = vst [vmem:[#allocation3 + $0x80] sm:$0xff] %v6592
        %6671 = vst [vmem:[#allocation3 + $0x88] sm:$0xff] %v6595
        %6672 = vst [vmem:[#allocation3 + $0x90] sm:$0xff] %v6600
        %6673 = vst [vmem:[#allocation3 + $0x98] sm:$0xff] %v6603
        %6674 = vst [vmem:[#allocation3 + $0xa0] sm:$0xff] %v6608
        %6675 = vst [vmem:[#allocation3 + $0xa8] sm:$0xff] %v6611
        %6676 = vst [vmem:[#allocation3 + $0xb0] sm:$0xff] %v6616
        %6677 = vst [vmem:[#allocation3 + $0xb8] sm:$0xff] %v6619
        %6678 = vst [vmem:[#allocation3 + $0xc0] sm:$0xff] %v6624
        %6679 = vst [vmem:[#allocation3 + $0xc8] sm:$0xff] %v6627
        %6680 = vst [vmem:[#allocation3 + $0xd0] sm:$0xff] %v6632
        %6681 = vst [vmem:[#allocation3 + $0xd8] sm:$0xff] %v6635
        %6682 = vst [vmem:[#allocation3 + $0xe0] sm:$0xff] %v6640
        %6683 = vst [vmem:[#allocation3 + $0xe8] sm:$0xff] %v6643
        %6684 = vst [vmem:[#allocation3 + $0xf0] sm:$0xff] %v6648
        %6685 = vst [vmem:[#allocation3 + $0xf8] sm:$0xff] %v6651
        %v6686 = vld [vmem:[%s10] sm:$0xf]
        %v6687 = vld [vmem:[%s10 + $0x4] sm:$0xf]
        %v6688 = vld [vmem:[%s10 + $0x8] sm:$0xf]
        %v6689 = vld [vmem:[%s10 + $0xc] sm:$0xf]
        %v6690 = vld [vmem:[%s10 + $0x10] sm:$0xf]
        %v6691 = vld [vmem:[%s10 + $0x14] sm:$0xf]
        %v6692 = vld [vmem:[%s10 + $0x18] sm:$0xf]
        %v6693 = vld [vmem:[%s10 + $0x1c] sm:$0xf]
        %v6702 = vunpack.c.l.b16 %v6686
        %v6703 = vunpack.c.l.b16 %v6687
        %v6704 = vunpack.c.l.b16 %v6688
        %v6705 = vunpack.c.l.b16 %v6689
        %v6706 = vunpack.c.l.b16 %v6690
        %v6707 = vunpack.c.l.b16 %v6691
        %v6708 = vunpack.c.l.b16 %v6692
        %v6709 = vunpack.c.l.b16 %v6693
        %v6710 = vpack.c.b16 %v6703, %v6702
        %v6711 = vpack.c.b16 %v6705, %v6704
        %v6712 = vpack.c.b16 %v6707, %v6706
        %v6713 = vpack.c.b16 %v6709, %v6708
        %6718 = vmatprep.subr.bf16.mxu0 0
        %6719 = vmatpush1.bf16.msra.mxu0 %v6710
        %6720 = vmatprep.subr.bf16.mxu0 0
        %6721 = vmatpush1.bf16.msra.mxu0 %v6711
        %6722 = vmatprep.subr.bf16.mxu0 0
        %6723 = vmatpush1.bf16.msra.mxu0 %v6712
        %6724 = vmatprep.subr.bf16.mxu0 0
        %6725 = vmatpush1.bf16.msra.mxu0 %v6713
        %6726 = vmatprep.subr.bf16.mxu0 0
        %6727 = vmatpush1.bf16.msra.mxu0 0
        %6728 = vmatprep.subr.bf16.mxu0 0
        %6729 = vmatpush1.bf16.msra.mxu0 0
        %6730 = vmatprep.subr.bf16.mxu0 0
        %6731 = vmatpush1.bf16.msra.mxu0 0
        %6732 = vmatprep.subr.bf16.mxu0 0
        %6733 = vmatpush1.bf16.msra.mxu0 0
        %6734 = vmatprep.subr.bf16.mxu0 0
        %6735 = vmatpush1.bf16.msra.mxu0 0
        %6736 = vmatprep.subr.bf16.mxu0 0
        %6737 = vmatpush1.bf16.msra.mxu0 0
        %6738 = vmatprep.subr.bf16.mxu0 0
        %6739 = vmatpush1.bf16.msra.mxu0 0
        %6740 = vmatprep.subr.bf16.mxu0 0
        %6741 = vmatpush1.bf16.msra.mxu0 0
        %6742 = vmatprep.subr.bf16.mxu0 0
        %6743 = vmatpush1.bf16.msra.mxu0 0
        %6744 = vmatprep.subr.bf16.mxu0 0
        %6745 = vmatpush1.bf16.msra.mxu0 0
        %6746 = vmatprep.subr.bf16.mxu0 0
        %6747 = vmatpush1.bf16.msra.mxu0 0
        %6748 = vmatprep.subr.bf16.mxu0 0
        %6749 = vmatpush1.bf16.msra.mxu0 0
        %6750 = vmatprep.mubr.bf16.mxu0 0
        %6751 = vmatmul.mubr.bf16.gmra.mrb[0].mxu0 %v640
        %v6752 = vpop.f32.mrb[0].mxu0
        %v6753 = vadd.f32 0.0, %v6752
        %v6754 = vpop.f32.mrb[0].mxu0
        %v6755 = vpop.f32.mrb[0].mxu0
        %v6756 = vadd.f32 0.0, %v6755
        %v6757 = vpop.f32.mrb[0].mxu0
        %6758 = vmatprep.mubr.bf16.mxu0 0
        %6759 = vmatmul.mubr.bf16.gmra.mrb[0].mxu0 %v643
        %v6760 = vpop.f32.mrb[0].mxu0
        %v6761 = vadd.f32 0.0, %v6760
        %v6762 = vpop.f32.mrb[0].mxu0
        %v6763 = vpop.f32.mrb[0].mxu0
        %v6764 = vadd.f32 0.0, %v6763
        %v6765 = vpop.f32.mrb[0].mxu0
        %6766 = vmatprep.mubr.bf16.mxu0 0
        %6767 = vmatmul.mubr.bf16.gmra.mrb[0].mxu0 %v646
        %v6768 = vpop.f32.mrb[0].mxu0
        %v6769 = vadd.f32 0.0, %v6768
        %v6770 = vpop.f32.mrb[0].mxu0
        %v6771 = vpop.f32.mrb[0].mxu0
        %v6772 = vadd.f32 0.0, %v6771
        %v6773 = vpop.f32.mrb[0].mxu0
        %6774 = vmatprep.mubr.bf16.mxu0 0
        %6775 = vmatmul.mubr.bf16.gmra.mrb[0].mxu0 %v649
        %v6776 = vpop.f32.mrb[0].mxu0
        %v6777 = vadd.f32 0.0, %v6776
        %v6778 = vpop.f32.mrb[0].mxu0
        %v6779 = vpop.f32.mrb[0].mxu0
        %v6780 = vadd.f32 0.0, %v6779
        %v6781 = vpop.f32.mrb[0].mxu0
        %6782 = vmatprep.mubr.bf16.mxu0 0
        %6783 = vmatmul.mubr.bf16.gmra.mrb[0].mxu0 %v652
        %v6784 = vpop.f32.mrb[0].mxu0
        %v6785 = vadd.f32 0.0, %v6784
        %v6786 = vpop.f32.mrb[0].mxu0
        %v6787 = vpop.f32.mrb[0].mxu0
        %v6788 = vadd.f32 0.0, %v6787
        %v6789 = vpop.f32.mrb[0].mxu0
        %6790 = vmatprep.mubr.bf16.mxu0 0
        %6791 = vmatmul.mubr.bf16.gmra.mrb[0].mxu0 %v655
        %v6792 = vpop.f32.mrb[0].mxu0
        %v6793 = vadd.f32 0.0, %v6792
        %v6794 = vpop.f32.mrb[0].mxu0
        %v6795 = vpop.f32.mrb[0].mxu0
        %v6796 = vadd.f32 0.0, %v6795
        %v6797 = vpop.f32.mrb[0].mxu0
        %6798 = vmatprep.mubr.bf16.mxu0 0
        %6799 = vmatmul.mubr.bf16.gmra.mrb[0].mxu0 %v658
        %v6800 = vpop.f32.mrb[0].mxu0
        %v6801 = vadd.f32 0.0, %v6800
        %v6802 = vpop.f32.mrb[0].mxu0
        %v6803 = vpop.f32.mrb[0].mxu0
        %v6804 = vadd.f32 0.0, %v6803
        %v6805 = vpop.f32.mrb[0].mxu0
        %6806 = vmatprep.mubr.bf16.mxu0 0
        %6807 = vmatmul.mubr.bf16.gmra.mrb[0].mxu0 %v661
        %v6808 = vpop.f32.mrb[0].mxu0
        %v6809 = vadd.f32 0.0, %v6808
        %v6810 = vpop.f32.mrb[0].mxu0
        %v6811 = vpop.f32.mrb[0].mxu0
        %v6812 = vadd.f32 0.0, %v6811
        %v6813 = vpop.f32.mrb[0].mxu0
        %6814 = vmatprep.mubr.bf16.mxu0 0
        %6815 = vmatmul.mubr.bf16.gmra.mrb[0].mxu0 %v664
        %v6816 = vpop.f32.mrb[0].mxu0
        %v6817 = vadd.f32 0.0, %v6816
        %v6818 = vpop.f32.mrb[0].mxu0
        %v6819 = vpop.f32.mrb[0].mxu0
        %v6820 = vadd.f32 0.0, %v6819
        %v6821 = vpop.f32.mrb[0].mxu0
        %6822 = vmatprep.mubr.bf16.mxu0 0
        %6823 = vmatmul.mubr.bf16.gmra.mrb[0].mxu0 %v667
        %v6824 = vpop.f32.mrb[0].mxu0
        %v6825 = vadd.f32 0.0, %v6824
        %v6826 = vpop.f32.mrb[0].mxu0
        %v6827 = vpop.f32.mrb[0].mxu0
        %v6828 = vadd.f32 0.0, %v6827
        %v6829 = vpop.f32.mrb[0].mxu0
        %6830 = vmatprep.mubr.bf16.mxu0 0
        %6831 = vmatmul.mubr.bf16.gmra.mrb[0].mxu0 %v670
        %v6832 = vpop.f32.mrb[0].mxu0
        %v6833 = vadd.f32 0.0, %v6832
        %v6834 = vpop.f32.mrb[0].mxu0
        %v6835 = vpop.f32.mrb[0].mxu0
        %v6836 = vadd.f32 0.0, %v6835
        %v6837 = vpop.f32.mrb[0].mxu0
        %6838 = vmatprep.mubr.bf16.mxu0 0
        %6839 = vmatmul.mubr.bf16.gmra.mrb[0].mxu0 %v673
        %v6840 = vpop.f32.mrb[0].mxu0
        %v6841 = vadd.f32 0.0, %v6840
        %v6842 = vpop.f32.mrb[0].mxu0
        %v6843 = vpop.f32.mrb[0].mxu0
        %v6844 = vadd.f32 0.0, %v6843
        %v6845 = vpop.f32.mrb[0].mxu0
        %6846 = vmatprep.mubr.bf16.mxu0 0
        %6847 = vmatmul.mubr.bf16.gmra.mrb[0].mxu0 %v676
        %v6848 = vpop.f32.mrb[0].mxu0
        %v6849 = vadd.f32 0.0, %v6848
        %v6850 = vpop.f32.mrb[0].mxu0
        %v6851 = vpop.f32.mrb[0].mxu0
        %v6852 = vadd.f32 0.0, %v6851
        %v6853 = vpop.f32.mrb[0].mxu0
        %6854 = vmatprep.mubr.bf16.mxu0 0
        %6855 = vmatmul.mubr.bf16.gmra.mrb[0].mxu0 %v679
        %v6856 = vpop.f32.mrb[0].mxu0
        %v6857 = vadd.f32 0.0, %v6856
        %v6858 = vpop.f32.mrb[0].mxu0
        %v6859 = vpop.f32.mrb[0].mxu0
        %v6860 = vadd.f32 0.0, %v6859
        %v6861 = vpop.f32.mrb[0].mxu0
        %6862 = vmatprep.mubr.bf16.mxu0 0
        %6863 = vmatmul.mubr.bf16.gmra.mrb[0].mxu0 %v682
        %v6864 = vpop.f32.mrb[0].mxu0
        %v6865 = vadd.f32 0.0, %v6864
        %v6866 = vpop.f32.mrb[0].mxu0
        %v6867 = vpop.f32.mrb[0].mxu0
        %v6868 = vadd.f32 0.0, %v6867
        %v6869 = vpop.f32.mrb[0].mxu0
        %6870 = vmatprep.mubr.bf16.mxu0 0
        %6871 = vmatmul.mubr.bf16.gmra.mrb[0].mxu0 %v685
        %v6872 = vpop.f32.mrb[0].mxu0
        %v6873 = vadd.f32 0.0, %v6872
        %v6874 = vpop.f32.mrb[0].mxu0
        %v6875 = vpop.f32.mrb[0].mxu0
        %v6876 = vadd.f32 0.0, %v6875
        %v6877 = vpop.f32.mrb[0].mxu0
        %6878 = vdwg.mxu0
        %v6879 = vld [vmem:[%s11] sm:$0x1]
        %v6881 = vlaneseq
        %v6882 = vshrl.u32 %v6881, 7
        %v6883 = vsub.s32 0, %v6882
        %v6884 = vrot.slane %v6879, %v6883
        %v6886 = vmul.f32 %v6753, %v6884
        %v6887 = vmul.f32 %v6756, %v6884
        %v6888 = vmul.f32 %v6761, %v6884
        %v6889 = vmul.f32 %v6764, %v6884
        %v6890 = vmul.f32 %v6769, %v6884
        %v6891 = vmul.f32 %v6772, %v6884
        %v6892 = vmul.f32 %v6777, %v6884
        %v6893 = vmul.f32 %v6780, %v6884
        %v6894 = vmul.f32 %v6785, %v6884
        %v6895 = vmul.f32 %v6788, %v6884
        %v6896 = vmul.f32 %v6793, %v6884
        %v6897 = vmul.f32 %v6796, %v6884
        %v6898 = vmul.f32 %v6801, %v6884
        %v6899 = vmul.f32 %v6804, %v6884
        %v6900 = vmul.f32 %v6809, %v6884
        %v6901 = vmul.f32 %v6812, %v6884
        %v6902 = vmul.f32 %v6817, %v6884
        %v6903 = vmul.f32 %v6820, %v6884
        %v6904 = vmul.f32 %v6825, %v6884
        %v6905 = vmul.f32 %v6828, %v6884
        %v6906 = vmul.f32 %v6833, %v6884
        %v6907 = vmul.f32 %v6836, %v6884
        %v6908 = vmul.f32 %v6841, %v6884
        %v6909 = vmul.f32 %v6844, %v6884
        %v6910 = vmul.f32 %v6849, %v6884
        %v6911 = vmul.f32 %v6852, %v6884
        %v6912 = vmul.f32 %v6857, %v6884
        %v6913 = vmul.f32 %v6860, %v6884
        %v6914 = vmul.f32 %v6865, %v6884
        %v6915 = vmul.f32 %v6868, %v6884
        %v6916 = vmul.f32 %v6873, %v6884
        %v6917 = vmul.f32 %v6876, %v6884
        %v6918 = vld [vmem:[%s12] sm:$0x1]
        %v6920 = vlaneseq
        %v6921 = vshrl.u32 %v6920, 7
        %v6922 = vsub.s32 0, %v6921
        %v6923 = vrot.slane %v6918, %v6922
        %v6925 = vadd.f32 %v6886, %v6923
        %v6926 = vadd.f32 %v6887, %v6923
        %v6927 = vadd.f32 %v6888, %v6923
        %v6928 = vadd.f32 %v6889, %v6923
        %v6929 = vadd.f32 %v6890, %v6923
        %v6930 = vadd.f32 %v6891, %v6923
        %v6931 = vadd.f32 %v6892, %v6923
        %v6932 = vadd.f32 %v6893, %v6923
        %v6933 = vadd.f32 %v6894, %v6923
        %v6934 = vadd.f32 %v6895, %v6923
        %v6935 = vadd.f32 %v6896, %v6923
        %v6936 = vadd.f32 %v6897, %v6923
        %v6937 = vadd.f32 %v6898, %v6923
        %v6938 = vadd.f32 %v6899, %v6923
        %v6939 = vadd.f32 %v6900, %v6923
        %v6940 = vadd.f32 %v6901, %v6923
        %v6941 = vadd.f32 %v6902, %v6923
        %v6942 = vadd.f32 %v6903, %v6923
        %v6943 = vadd.f32 %v6904, %v6923
        %v6944 = vadd.f32 %v6905, %v6923
        %v6945 = vadd.f32 %v6906, %v6923
        %v6946 = vadd.f32 %v6907, %v6923
        %v6947 = vadd.f32 %v6908, %v6923
        %v6948 = vadd.f32 %v6909, %v6923
        %v6949 = vadd.f32 %v6910, %v6923
        %v6950 = vadd.f32 %v6911, %v6923
        %v6951 = vadd.f32 %v6912, %v6923
        %v6952 = vadd.f32 %v6913, %v6923
        %v6953 = vadd.f32 %v6914, %v6923
        %v6954 = vadd.f32 %v6915, %v6923
        %v6955 = vadd.f32 %v6916, %v6923
        %v6956 = vadd.f32 %v6917, %v6923
        %v6957 = vld [vmem:[#allocation3] sm:$0xff]
        %v6958 = vld [vmem:[#allocation3 + $0x8] sm:$0xff]
        %v6959 = vld [vmem:[#allocation3 + $0x10] sm:$0xff]
        %v6960 = vld [vmem:[#allocation3 + $0x18] sm:$0xff]
        %v6961 = vld [vmem:[#allocation3 + $0x20] sm:$0xff]
        %v6962 = vld [vmem:[#allocation3 + $0x28] sm:$0xff]
        %v6963 = vld [vmem:[#allocation3 + $0x30] sm:$0xff]
        %v6964 = vld [vmem:[#allocation3 + $0x38] sm:$0xff]
        %v6965 = vld [vmem:[#allocation3 + $0x40] sm:$0xff]
        %v6966 = vld [vmem:[#allocation3 + $0x48] sm:$0xff]
        %v6967 = vld [vmem:[#allocation3 + $0x50] sm:$0xff]
        %v6968 = vld [vmem:[#allocation3 + $0x58] sm:$0xff]
        %v6969 = vld [vmem:[#allocation3 + $0x60] sm:$0xff]
        %v6970 = vld [vmem:[#allocation3 + $0x68] sm:$0xff]
        %v6971 = vld [vmem:[#allocation3 + $0x70] sm:$0xff]
        %v6972 = vld [vmem:[#allocation3 + $0x78] sm:$0xff]
        %v6973 = vld [vmem:[#allocation3 + $0x80] sm:$0xff]
        %v6974 = vld [vmem:[#allocation3 + $0x88] sm:$0xff]
        %v6975 = vld [vmem:[#allocation3 + $0x90] sm:$0xff]
        %v6976 = vld [vmem:[#allocation3 + $0x98] sm:$0xff]
        %v6977 = vld [vmem:[#allocation3 + $0xa0] sm:$0xff]
        %v6978 = vld [vmem:[#allocation3 + $0xa8] sm:$0xff]
        %v6979 = vld [vmem:[#allocation3 + $0xb0] sm:$0xff]
        %v6980 = vld [vmem:[#allocation3 + $0xb8] sm:$0xff]
        %v6981 = vld [vmem:[#allocation3 + $0xc0] sm:$0xff]
        %v6982 = vld [vmem:[#allocation3 + $0xc8] sm:$0xff]
        %v6983 = vld [vmem:[#allocation3 + $0xd0] sm:$0xff]
        %v6984 = vld [vmem:[#allocation3 + $0xd8] sm:$0xff]
        %v6985 = vld [vmem:[#allocation3 + $0xe0] sm:$0xff]
        %v6986 = vld [vmem:[#allocation3 + $0xe8] sm:$0xff]
        %v6987 = vld [vmem:[#allocation3 + $0xf0] sm:$0xff]
        %v6988 = vld [vmem:[#allocation3 + $0xf8] sm:$0xff]
        %v6989 = vld [vmem:[%s8] sm:$0x1]
        %v6991 = vlaneseq
        %v6992 = vshrl.u32 %v6991, 7
        %v6993 = vsub.s32 0, %v6992
        %v6994 = vrot.slane %v6989, %v6993
        %v6996 = vmul.f32 %v6957, %v6994
        %v6997 = vmul.f32 %v6958, %v6994
        %v6998 = vmul.f32 %v6959, %v6994
        %v6999 = vmul.f32 %v6960, %v6994
        %v7000 = vmul.f32 %v6961, %v6994
        %v7001 = vmul.f32 %v6962, %v6994
        %v7002 = vmul.f32 %v6963, %v6994
        %v7003 = vmul.f32 %v6964, %v6994
        %v7004 = vmul.f32 %v6965, %v6994
        %v7005 = vmul.f32 %v6966, %v6994
        %v7006 = vmul.f32 %v6967, %v6994
        %v7007 = vmul.f32 %v6968, %v6994
        %v7008 = vmul.f32 %v6969, %v6994
        %v7009 = vmul.f32 %v6970, %v6994
        %v7010 = vmul.f32 %v6971, %v6994
        %v7011 = vmul.f32 %v6972, %v6994
        %v7012 = vmul.f32 %v6973, %v6994
        %v7013 = vmul.f32 %v6974, %v6994
        %v7014 = vmul.f32 %v6975, %v6994
        %v7015 = vmul.f32 %v6976, %v6994
        %v7016 = vmul.f32 %v6977, %v6994
        %v7017 = vmul.f32 %v6978, %v6994
        %v7018 = vmul.f32 %v6979, %v6994
        %v7019 = vmul.f32 %v6980, %v6994
        %v7020 = vmul.f32 %v6981, %v6994
        %v7021 = vmul.f32 %v6982, %v6994
        %v7022 = vmul.f32 %v6983, %v6994
        %v7023 = vmul.f32 %v6984, %v6994
        %v7024 = vmul.f32 %v6985, %v6994
        %v7025 = vmul.f32 %v6986, %v6994
        %v7026 = vmul.f32 %v6987, %v6994
        %v7027 = vmul.f32 %v6988, %v6994
        %v7028 = vld [vmem:[%s9] sm:$0x1]
        %v7030 = vlaneseq
        %v7031 = vshrl.u32 %v7030, 7
        %v7032 = vsub.s32 0, %v7031
        %v7033 = vrot.slane %v7028, %v7032
        %v7035 = vadd.f32 %v6996, %v7033
        %v7036 = vadd.f32 %v6997, %v7033
        %v7037 = vadd.f32 %v6998, %v7033
        %v7038 = vadd.f32 %v6999, %v7033
        %v7039 = vadd.f32 %v7000, %v7033
        %v7040 = vadd.f32 %v7001, %v7033
        %v7041 = vadd.f32 %v7002, %v7033
        %v7042 = vadd.f32 %v7003, %v7033
        %v7043 = vadd.f32 %v7004, %v7033
        %v7044 = vadd.f32 %v7005, %v7033
        %v7045 = vadd.f32 %v7006, %v7033
        %v7046 = vadd.f32 %v7007, %v7033
        %v7047 = vadd.f32 %v7008, %v7033
        %v7048 = vadd.f32 %v7009, %v7033
        %v7049 = vadd.f32 %v7010, %v7033
        %v7050 = vadd.f32 %v7011, %v7033
        %v7051 = vadd.f32 %v7012, %v7033
        %v7052 = vadd.f32 %v7013, %v7033
        %v7053 = vadd.f32 %v7014, %v7033
        %v7054 = vadd.f32 %v7015, %v7033
        %v7055 = vadd.f32 %v7016, %v7033
        %v7056 = vadd.f32 %v7017, %v7033
        %v7057 = vadd.f32 %v7018, %v7033
        %v7058 = vadd.f32 %v7019, %v7033
        %v7059 = vadd.f32 %v7020, %v7033
        %v7060 = vadd.f32 %v7021, %v7033
        %v7061 = vadd.f32 %v7022, %v7033
        %v7062 = vadd.f32 %v7023, %v7033
        %v7063 = vadd.f32 %v7024, %v7033
        %v7064 = vadd.f32 %v7025, %v7033
        %v7065 = vadd.f32 %v7026, %v7033
        %v7066 = vadd.f32 %v7027, %v7033
        %v7067 = vadd.f32 %v7035, %v6925
        %v7068 = vadd.f32 %v7036, %v6926
        %v7069 = vadd.f32 %v7037, %v6927
        %v7070 = vadd.f32 %v7038, %v6928
        %v7071 = vadd.f32 %v7039, %v6929
        %v7072 = vadd.f32 %v7040, %v6930
        %v7073 = vadd.f32 %v7041, %v6931
        %v7074 = vadd.f32 %v7042, %v6932
        %v7075 = vadd.f32 %v7043, %v6933
        %v7076 = vadd.f32 %v7044, %v6934
        %v7077 = vadd.f32 %v7045, %v6935
        %v7078 = vadd.f32 %v7046, %v6936
        %v7079 = vadd.f32 %v7047, %v6937
        %v7080 = vadd.f32 %v7048, %v6938
        %v7081 = vadd.f32 %v7049, %v6939
        %v7082 = vadd.f32 %v7050, %v6940
        %v7083 = vadd.f32 %v7051, %v6941
        %v7084 = vadd.f32 %v7052, %v6942
        %v7085 = vadd.f32 %v7053, %v6943
        %v7086 = vadd.f32 %v7054, %v6944
        %v7087 = vadd.f32 %v7055, %v6945
        %v7088 = vadd.f32 %v7056, %v6946
        %v7089 = vadd.f32 %v7057, %v6947
        %v7090 = vadd.f32 %v7058, %v6948
        %v7091 = vadd.f32 %v7059, %v6949
        %v7092 = vadd.f32 %v7060, %v6950
        %v7093 = vadd.f32 %v7061, %v6951
        %v7094 = vadd.f32 %v7062, %v6952
        %v7095 = vadd.f32 %v7063, %v6953
        %v7096 = vadd.f32 %v7064, %v6954
        %v7097 = vadd.f32 %v7065, %v6955
        %v7098 = vadd.f32 %v7066, %v6956
        %v7099 = vmax.f32 %v7067, 0.0
        %v7100 = vmax.f32 %v7068, 0.0
        %v7101 = vmax.f32 %v7069, 0.0
        %v7102 = vmax.f32 %v7070, 0.0
        %v7103 = vmax.f32 %v7071, 0.0
        %v7104 = vmax.f32 %v7072, 0.0
        %v7105 = vmax.f32 %v7073, 0.0
        %v7106 = vmax.f32 %v7074, 0.0
        %v7107 = vmax.f32 %v7075, 0.0
        %v7108 = vmax.f32 %v7076, 0.0
        %v7109 = vmax.f32 %v7077, 0.0
        %v7110 = vmax.f32 %v7078, 0.0
        %v7111 = vmax.f32 %v7079, 0.0
        %v7112 = vmax.f32 %v7080, 0.0
        %v7113 = vmax.f32 %v7081, 0.0
        %v7114 = vmax.f32 %v7082, 0.0
        %v7115 = vmax.f32 %v7083, 0.0
        %v7116 = vmax.f32 %v7084, 0.0
        %v7117 = vmax.f32 %v7085, 0.0
        %v7118 = vmax.f32 %v7086, 0.0
        %v7119 = vmax.f32 %v7087, 0.0
        %v7120 = vmax.f32 %v7088, 0.0
        %v7121 = vmax.f32 %v7089, 0.0
        %v7122 = vmax.f32 %v7090, 0.0
        %v7123 = vmax.f32 %v7091, 0.0
        %v7124 = vmax.f32 %v7092, 0.0
        %v7125 = vmax.f32 %v7093, 0.0
        %v7126 = vmax.f32 %v7094, 0.0
        %v7127 = vmax.f32 %v7095, 0.0
        %v7128 = vmax.f32 %v7096, 0.0
        %v7129 = vmax.f32 %v7097, 0.0
        %v7130 = vmax.f32 %v7098, 0.0
        %7131 = vst [vmem:[%s433] sm:$0xff] %v7099
        %7132 = vst [vmem:[%s433 + $0x8] sm:$0xff] %v7100
        %7133 = vst [vmem:[%s433 + $0x10] sm:$0xff] %v7101
        %7134 = vst [vmem:[%s433 + $0x18] sm:$0xff] %v7102
        %7135 = vst [vmem:[%s433 + $0x20] sm:$0xff] %v7103
        %7136 = vst [vmem:[%s433 + $0x28] sm:$0xff] %v7104
        %7137 = vst [vmem:[%s433 + $0x30] sm:$0xff] %v7105
        %7138 = vst [vmem:[%s433 + $0x38] sm:$0xff] %v7106
        %7139 = vst [vmem:[%s433 + $0x40] sm:$0xff] %v7107
        %7140 = vst [vmem:[%s433 + $0x48] sm:$0xff] %v7108
        %7141 = vst [vmem:[%s433 + $0x50] sm:$0xff] %v7109
        %7142 = vst [vmem:[%s433 + $0x58] sm:$0xff] %v7110
        %7143 = vst [vmem:[%s433 + $0x60] sm:$0xff] %v7111
        %7144 = vst [vmem:[%s433 + $0x68] sm:$0xff] %v7112
        %7145 = vst [vmem:[%s433 + $0x70] sm:$0xff] %v7113
        %7146 = vst [vmem:[%s433 + $0x78] sm:$0xff] %v7114
        %7147 = vst [vmem:[%s433 + $0x80] sm:$0xff] %v7115
        %7148 = vst [vmem:[%s433 + $0x88] sm:$0xff] %v7116
        %7149 = vst [vmem:[%s433 + $0x90] sm:$0xff] %v7117
        %7150 = vst [vmem:[%s433 + $0x98] sm:$0xff] %v7118
        %7151 = vst [vmem:[%s433 + $0xa0] sm:$0xff] %v7119
        %7152 = vst [vmem:[%s433 + $0xa8] sm:$0xff] %v7120
        %7153 = vst [vmem:[%s433 + $0xb0] sm:$0xff] %v7121
        %7154 = vst [vmem:[%s433 + $0xb8] sm:$0xff] %v7122
        %7155 = vst [vmem:[%s433 + $0xc0] sm:$0xff] %v7123
        %7156 = vst [vmem:[%s433 + $0xc8] sm:$0xff] %v7124
        %7157 = vst [vmem:[%s433 + $0xd0] sm:$0xff] %v7125
        %7158 = vst [vmem:[%s433 + $0xd8] sm:$0xff] %v7126
        %7159 = vst [vmem:[%s433 + $0xe0] sm:$0xff] %v7127
        %7160 = vst [vmem:[%s433 + $0xe8] sm:$0xff] %v7128
        %7161 = vst [vmem:[%s433 + $0xf0] sm:$0xff] %v7129
        %7162 = vst [vmem:[%s433 + $0xf8] sm:$0xff] %v7130
        %s7163 = sand.u32 %s313, 1
        %s7164 = scalar_lea.sflag [#allocation5], %s7163
        %s7165 = sand.u32 %s313, 1
        %s7166 = smul.addr %s7165, 256
        %s7167 = scalar_lea.vmem [#allocation4], %s7166
        // Predicated region
        $region73: #{forward.1} parent=71 // pred_check
          %p7168 = pneg %p323
        $region74: #{forward.1} parent=71 // pred_check_branch
          %7170 = sbr.rel (%p7168) target = $region76
        $region75: #{forward.1} parent=71 // pred_region
          %s7172 = ssub.s32 4096, 4096
          %7173 = vsyncadd %s7164, %s7172
          %s7174 = smul.addr %s27, 32
          %s7175 = smul.addr %s7174, 128
          %s7176 = scalar_lea.hbm %s13, %s7175
          %s7177 = sshll.u32 %s7167, 4
          %s7178 = int_to_ptr.vmem [resolvable:$true] %s7177
          %7183 = dma.vmem_to_hbm [thread:$0]  %s7178, 4096, %s7176, %s7164, 128, 128, 8
        $region76: #{forward.1} parent=71 // pred_fallthru
          _
      $region72: #{forward.1} parent=5 // pred_fallthru
        _
      %p7184 = scmp.le.s32.totalorder 2, %s22
      // Predicated region
      $region77: #{forward.1} parent=5 // pred_check
        %p7185 = pneg %p7184
      $region78: #{forward.1} parent=5 // pred_check_branch
        %7187 = sbr.rel (%p7185) target = $region80
      $region79: #{forward.1} parent=5 // pred_region
        %s7188 = ssub.s32 %s22, 2
        // Predicated region
        $region81: #{forward.1} parent=79 // pred_check
          %p7189 = pneg %p329
        $region82: #{forward.1} parent=79 // pred_check_branch
          %7191 = sbr.rel (%p7189) target = $region84
        $region83: #{forward.1} parent=79 // pred_region
          %s7192 = sand.u32 %s314, 1
          %s7193 = scalar_lea.sflag [#allocation5], %s7192
          %s7194 = sand.u32 %s314, 1
          %s7195 = smul.addr %s7194, 256
          %s7196 = scalar_lea.vmem [#allocation4], %s7195
          %7197 = dma.done %s7193, 4096
        $region84: #{forward.1} parent=79 // pred_fallthru
          _
      $region80: #{forward.1} parent=5 // pred_fallthru
        _
    $region6: #{forward.1} parent=1 // loop_footer
      %s26 = sadd.s32 1, %s22
    $region7: #{forward.1} parent=1 // loop_footer_branch
      %21 = sbr.rel target = $region3
    $region8: #{forward.1} parent=1 // loop_exit
      _
    %7198 = vsyncpa [#allocation5], 1
    %s7199 = scalar_lea.sflag [#allocation5], 1
    %7200 = vsyncpa %s7199, 1

</llo_original>
